<compile_context>
chip_gen: v5e
topology: v5e:2x2
jax: 0.10.0
libtpu: 0.0.40
codegen_flags: <defaults>
</compile_context>

<pallas_src>
import functools

import jax
import jax.numpy as jnp
import numpy as np
from jax.experimental import pallas as pl
from jax.experimental.pallas import tpu as pltpu


def _pos_enc_kernel(x_ref, sel_ref, sinmask_ref, o_ref, *, in_features):
    """Positional encoding for one row tile.

    x_ref:       (tile_n, F)          float32  input coordinates
    sel_ref:     (F, 2*F*nf)          float32  sel[j, m] = 2^freq(m)*pi if column m reads feature j else 0
    sinmask_ref: (1, 2*F*nf)          float32  1.0 where column m is a sin column, 0.0 where cos
    o_ref:       (tile_n, F + 2*F*nf) float32  output tile
    """
    x = x_ref[...]                                  # (T, F)
    tile_n = x.shape[0]
    sel = sel_ref[...]                              # (F, n_enc)
    n_enc = sel.shape[1]

    # phases[:, m] = scale(m) * x[:, feat(m)].
    # Built with lane broadcasts + exact (*0 / *scale) multiplies, so the
    # result is bit-identical to a direct scalar multiply per column.
    phases = jnp.broadcast_to(x[:, 0:1], (tile_n, n_enc)) * sel[0:1, :]
    for j in range(1, in_features):
        phases = phases + (
            jnp.broadcast_to(x[:, j:j + 1], (tile_n, n_enc)) * sel[j:j + 1, :]
        )

    # One sin and one cos over the whole dense block (both <=128 lanes wide,
    # so each costs one vreg-row pass per 8 rows).
    s = jnp.sin(phases)
    c = jnp.cos(phases)
    enc = jnp.where(sinmask_ref[...] > 0.5, s, c)   # interleaved [sin, cos] columns

    # Single slab store of the full output tile.
    o_ref[...] = jnp.concatenate([x, enc], axis=-1)


def _round_up(v, m):
    return ((v + m - 1) // m) * m


def pos_encoding(coords, *, num_frequencies=13, tile_n=2048):
    """JAX wrapper matching PosEncoding.forward semantics.

    coords: (..., in_features) float32
    returns: (..., in_features + 2*in_features*num_frequencies) float32
    """
    coords = jnp.asarray(coords, jnp.float32)
    *lead, in_features = coords.shape
    n_enc = 2 * in_features * num_frequencies
    out_dim = in_features + n_enc

    x2d = coords.reshape(-1, in_features)
    n = x2d.shape[0]

    # Large row tile for throughput, but never bigger than the (8-row aligned)
    # problem size so small inputs avoid padding and the extra output slice.
    tile = max(8, min(tile_n, _round_up(n, 8)))
    n_pad = _round_up(n, tile)
    if n_pad != n:
        x2d = jnp.pad(x2d, ((0, n_pad - n), (0, 0)))

    # Trace-time per-column constants (exact f32 scales 2^i * pi, matching the
    # PyTorch module's effective f32 computation).
    m_idx = np.arange(n_enc)
    feat = (m_idx // 2) % in_features
    freq = (m_idx // 2) // in_features
    col_scale = ((2.0 ** freq) * np.pi).astype(np.float32)
    sel = np.zeros((in_features, n_enc), np.float32)
    sel[feat, m_idx] = col_scale
    sin_mask = ((m_idx % 2) == 0).astype(np.float32).reshape(1, n_enc)

    kernel = functools.partial(_pos_enc_kernel, in_features=in_features)

    cost = pl.CostEstimate(
        flops=6 * n_pad * n_enc,                    # broadcast / scale / select work
        transcendentals=2 * n_pad * n_enc,          # sin + cos over the dense block
        bytes_accessed=n_pad * (in_features + out_dim) * 4,
    )

    out = pl.pallas_call(
        kernel,
        out_shape=jax.ShapeDtypeStruct((n_pad, out_dim), jnp.float32),
        grid_spec=pltpu.PrefetchScalarGridSpec(
            num_scalar_prefetch=0,
            grid=(n_pad // tile,),
            in_specs=[
                pl.BlockSpec((tile, in_features), lambda i: (i, 0)),
                pl.BlockSpec((in_features, n_enc), lambda i: (0, 0)),
                pl.BlockSpec((1, n_enc), lambda i: (0, 0)),
            ],
            out_specs=pl.BlockSpec((tile, out_dim), lambda i: (i, 0)),
        ),
        compiler_params=pltpu.CompilerParams(
            dimension_semantics=("parallel",),
        ),
        cost_estimate=cost,
    )(x2d, jnp.asarray(sel), jnp.asarray(sin_mask))

    if n_pad != n:
        out = out[:n]
    return out.reshape(*lead, out_dim)


def _pos_encoding_ref(coords, num_frequencies=13):
    """Pure-JAX reference mirroring the PyTorch loop exactly."""
    coords = jnp.asarray(coords, jnp.float32)
    in_features = coords.shape[-1]
    pieces = [coords]
    for i in range(num_frequencies):
        for j in range(in_features):
            c = coords[..., j]
            pieces.append(jnp.sin((2.0 ** i) * np.pi * c)[..., None])
            pieces.append(jnp.cos((2.0 ** i) * np.pi * c)[..., None])
    return jnp.concatenate(pieces, axis=-1)


if __name__ == "__main__":
    key = jax.random.PRNGKey(0)
    key_a, key_b = jax.random.split(key)
    in_features = 3
    num_frequencies = 13
    expected_dim = in_features + 2 * in_features * num_frequencies

    # 2 rays x 128 samples of 3-D coordinates.
    coords = jax.random.uniform(
        key_a, (2, 128, in_features), dtype=jnp.float32, minval=-1.0, maxval=1.0
    )
    out = jax.block_until_ready(pos_encoding(coords, num_frequencies=num_frequencies))
    assert out.shape == (2, 128, expected_dim), out.shape
    ref = _pos_encoding_ref(coords, num_frequencies=num_frequencies)
    np.testing.assert_allclose(np.asarray(out), np.asarray(ref), atol=1e-5, rtol=1e-5)

    # Ragged row count (exercises the padded-tail path).
    coords2 = jax.random.uniform(
        key_b, (5, 7, in_features), dtype=jnp.float32, minval=-1.0, maxval=1.0
    )
    out2 = jax.block_until_ready(pos_encoding(coords2, num_frequencies=num_frequencies))
    assert out2.shape == (5, 7, expected_dim), out2.shape
    ref2 = _pos_encoding_ref(coords2, num_frequencies=num_frequencies)
    np.testing.assert_allclose(np.asarray(out2), np.asarray(ref2), atol=1e-5, rtol=1e-5)

    print("KERNEL_OK")
</pallas_src>

<mosaic_0001>
module attributes {stable_mosaic.version = 11 : i64} {
  func.func @_pos_enc_kernel(%arg0: i32, %arg1: memref<256x3xf32, #tpu.memory_space<vmem>>, %arg2: memref<3x78xf32, #tpu.memory_space<vmem>>, %arg3: memref<1x78xf32, #tpu.memory_space<vmem>>, %arg4: memref<256x81xf32, #tpu.memory_space<vmem>>) attributes {dimension_semantics = [#tpu.dimension_semantics<parallel>], iteration_bounds = array<i64: 1>, scalar_prefetch = 0 : i64, scratch_operands = 0 : i64, tpu.core_type = #tpu.core_type<tc>, window_params = [{transform_indices = @transform_0, window_bounds = array<i64: 256, 3>}, {pipeline_mode = #tpu.pipeline_mode<synchronous>, transform_indices = @transform_1, window_bounds = array<i64: 3, 78>}, {pipeline_mode = #tpu.pipeline_mode<synchronous>, transform_indices = @transform_2, window_bounds = array<i64: 1, 78>}, {transform_indices = @transform_3, window_bounds = array<i64: 256, 81>}]} {
    %c0 = arith.constant 0 : index
    %c0_0 = arith.constant 0 : index
    %0 = vector.load %arg1[%c0, %c0_0] : memref<256x3xf32, #tpu.memory_space<vmem>>, vector<256x3xf32>
    %c0_1 = arith.constant 0 : index
    %c0_2 = arith.constant 0 : index
    %1 = vector.load %arg2[%c0_1, %c0_2] : memref<3x78xf32, #tpu.memory_space<vmem>>, vector<3x78xf32>
    %2 = vector.extract_strided_slice %0 {offsets = [0, 0], sizes = [256, 1], strides = [1, 1]} : vector<256x3xf32> to vector<256x1xf32>
    %3 = vector.shape_cast %2 : vector<256x1xf32> to vector<256x1xf32>
    %4 = vector.broadcast %3 : vector<256x1xf32> to vector<256x78xf32>
    %5 = vector.extract_strided_slice %1 {offsets = [0, 0], sizes = [1, 78], strides = [1, 1]} : vector<3x78xf32> to vector<1x78xf32>
    %6 = vector.broadcast %5 : vector<1x78xf32> to vector<256x78xf32>
    %7 = arith.mulf %4, %6 : vector<256x78xf32>
    %8 = vector.extract_strided_slice %0 {offsets = [0, 1], sizes = [256, 1], strides = [1, 1]} : vector<256x3xf32> to vector<256x1xf32>
    %9 = vector.shape_cast %8 : vector<256x1xf32> to vector<256x1xf32>
    %10 = vector.broadcast %9 : vector<256x1xf32> to vector<256x78xf32>
    %11 = vector.extract_strided_slice %1 {offsets = [1, 0], sizes = [1, 78], strides = [1, 1]} : vector<3x78xf32> to vector<1x78xf32>
    %12 = vector.broadcast %11 : vector<1x78xf32> to vector<256x78xf32>
    %13 = arith.mulf %10, %12 : vector<256x78xf32>
    %14 = arith.addf %7, %13 : vector<256x78xf32>
    %15 = vector.extract_strided_slice %0 {offsets = [0, 2], sizes = [256, 1], strides = [1, 1]} : vector<256x3xf32> to vector<256x1xf32>
    %16 = vector.shape_cast %15 : vector<256x1xf32> to vector<256x1xf32>
    %17 = vector.broadcast %16 : vector<256x1xf32> to vector<256x78xf32>
    %18 = vector.extract_strided_slice %1 {offsets = [2, 0], sizes = [1, 78], strides = [1, 1]} : vector<3x78xf32> to vector<1x78xf32>
    %19 = vector.broadcast %18 : vector<1x78xf32> to vector<256x78xf32>
    %20 = arith.mulf %17, %19 : vector<256x78xf32>
    %21 = arith.addf %14, %20 : vector<256x78xf32>
    %22 = math.sin %21 : vector<256x78xf32>
    %23 = math.cos %21 : vector<256x78xf32>
    %c0_3 = arith.constant 0 : index
    %c0_4 = arith.constant 0 : index
    %24 = vector.load %arg3[%c0_3, %c0_4] : memref<1x78xf32, #tpu.memory_space<vmem>>, vector<1x78xf32>
    %cst = arith.constant 5.000000e-01 : f32
    %25 = vector.broadcast %cst : f32 to vector<1x78xf32>
    %26 = arith.cmpf ogt, %24, %25 : vector<1x78xf32>
    %27 = vector.shape_cast %26 : vector<1x78xi1> to vector<1x78xi1>
    %28 = vector.broadcast %27 : vector<1x78xi1> to vector<256x78xi1>
    %29 = arith.select %28, %22, %23 : vector<256x78xi1>, vector<256x78xf32>
    %30 = tpu.concatenate %0, %29 in 1 : vector<256x3xf32>, vector<256x78xf32> -> vector<256x81xf32>
    %c0_5 = arith.constant 0 : index
    %c0_6 = arith.constant 0 : index
    %31 = vector.load %arg4[%c0_5, %c0_6] : memref<256x81xf32, #tpu.memory_space<vmem>>, vector<256x81xf32>
    tpu.vector_store %arg4[%c0_5, %c0_6], %30 {strides = array<i32>} : memref<256x81xf32, #tpu.memory_space<vmem>>, vector<256x81xf32>,
    return
  }
  func.func @transform_0(%arg0: i32) -> (i32, i32) {
    %c0_i32 = arith.constant 0 : i32
    %c0_i32_0 = arith.constant 0 : i32
    return %arg0, %c0_i32 : i32, i32
  }
  func.func @transform_1(%arg0: i32) -> (i32, i32) {
    %c0_i32 = arith.constant 0 : i32
    %c0_i32_0 = arith.constant 0 : i32
    %c0_i32_1 = arith.constant 0 : i32
    return %c0_i32, %c0_i32_0 : i32, i32
  }
  func.func @transform_2(%arg0: i32) -> (i32, i32) {
    %c0_i32 = arith.constant 0 : i32
    %c0_i32_0 = arith.constant 0 : i32
    %c0_i32_1 = arith.constant 0 : i32
    return %c0_i32, %c0_i32_0 : i32, i32
  }
  func.func @transform_3(%arg0: i32) -> (i32, i32) {
    %c0_i32 = arith.constant 0 : i32
    %c0_i32_0 = arith.constant 0 : i32
    return %arg0, %c0_i32 : i32, i32
  }
}

</mosaic_0001>

<llo_original>
// kernel: tpu_custom_call.1
$region0: #{tpu_custom_call.1}
  #allocation0 [shape = 'u32[]', space=smem, size = 0x4, offset = 0x4, fixed_abs, tag = 'smem constant byte address 0x4 - core index']
  #allocation1 [shape = 'u32[72,128]{1,0:T(1,128)}', space=vmem, size = 0x9000, scoped, tag = 'internal scratch']
  %s0 = inlined_call_operand.vmem [shape: f32[256,3], index: 0, kind: input, shape index: {}]
  %s1 = inlined_call_operand.vmem [shape: f32[3,78], index: 1, kind: input, shape index: {}]
  %s2 = inlined_call_operand.vmem [shape: f32[1,78], index: 2, kind: input, shape index: {}]
  %s3 = inlined_call_operand.vmem [shape: f32[256,81], index: 3, kind: output, shape index: {}]
  %s4 = sld [smem:[#allocation0]]
  $region22: #{tpu_custom_call.1} parent=0
    _
  %s6 = ssub.s32 1, %s4
  %s7 = scalar_select 0, %s6, %s4
  // Predicated region
  $region2: #{tpu_custom_call.1} parent=0 // pred_check
    _
  $region3: #{tpu_custom_call.1} parent=0 // pred_check_branch
    %9 = sbr.rel (0) target = $region5
  $region4: #{tpu_custom_call.1} parent=0 // pred_region
    _
  $region5: #{tpu_custom_call.1} parent=0 // pred_fallthru
    _
  // Predicated region
  $region6: #{tpu_custom_call.1} parent=0 // pred_check
    _
  $region7: #{tpu_custom_call.1} parent=0 // pred_check_branch
    %11 = sbr.rel (0) target = $region9
  $region8: #{tpu_custom_call.1} parent=0 // pred_region
    _
  $region9: #{tpu_custom_call.1} parent=0 // pred_fallthru
    _
  // Predicated region
  $region10: #{tpu_custom_call.1} parent=0 // pred_check
    _
  $region11: #{tpu_custom_call.1} parent=0 // pred_check_branch
    %13 = sbr.rel (0) target = $region13
  $region12: #{tpu_custom_call.1} parent=0 // pred_region
    _
  $region13: #{tpu_custom_call.1} parent=0 // pred_fallthru
    _
  %v14 = vld [vmem:[%s0] sm:$0xff]
  %v15 = vld [vmem:[%s0 + $0x8] sm:$0xff]
  %v16 = vld [vmem:[%s0 + $0x10] sm:$0xff]
  %v17 = vld [vmem:[%s0 + $0x18] sm:$0xff]
  %v18 = vld [vmem:[%s0 + $0x20] sm:$0xff]
  %v19 = vld [vmem:[%s0 + $0x28] sm:$0xff]
  %v20 = vld [vmem:[%s0 + $0x30] sm:$0xff]
  %v21 = vld [vmem:[%s0 + $0x38] sm:$0xff]
  %v22 = vld [vmem:[%s0 + $0x40] sm:$0xff]
  %v23 = vld [vmem:[%s0 + $0x48] sm:$0xff]
  %v24 = vld [vmem:[%s0 + $0x50] sm:$0xff]
  %v25 = vld [vmem:[%s0 + $0x58] sm:$0xff]
  %v26 = vld [vmem:[%s0 + $0x60] sm:$0xff]
  %v27 = vld [vmem:[%s0 + $0x68] sm:$0xff]
  %v28 = vld [vmem:[%s0 + $0x70] sm:$0xff]
  %v29 = vld [vmem:[%s0 + $0x78] sm:$0xff]
  %v30 = vld [vmem:[%s0 + $0x80] sm:$0xff]
  %v31 = vld [vmem:[%s0 + $0x88] sm:$0xff]
  %v32 = vld [vmem:[%s0 + $0x90] sm:$0xff]
  %v33 = vld [vmem:[%s0 + $0x98] sm:$0xff]
  %v34 = vld [vmem:[%s0 + $0xa0] sm:$0xff]
  %v35 = vld [vmem:[%s0 + $0xa8] sm:$0xff]
  %v36 = vld [vmem:[%s0 + $0xb0] sm:$0xff]
  %v37 = vld [vmem:[%s0 + $0xb8] sm:$0xff]
  %v38 = vld [vmem:[%s0 + $0xc0] sm:$0xff]
  %v39 = vld [vmem:[%s0 + $0xc8] sm:$0xff]
  %v40 = vld [vmem:[%s0 + $0xd0] sm:$0xff]
  %v41 = vld [vmem:[%s0 + $0xd8] sm:$0xff]
  %v42 = vld [vmem:[%s0 + $0xe0] sm:$0xff]
  %v43 = vld [vmem:[%s0 + $0xe8] sm:$0xff]
  %v44 = vld [vmem:[%s0 + $0xf0] sm:$0xff]
  %v45 = vld [vmem:[%s0 + $0xf8] sm:$0xff]
  %v46 = vld [vmem:[%s1] sm:$0x7]
  %48 = vset.pattern.permute.xlu0 0
  %49 = vperm.xlu0 %48, %v14
  %v50 = vpop.permute.xlu0 %49
  %53 = vset.pattern.permute.xlu0 0
  %54 = vperm.xlu0 %53, %v15
  %v55 = vpop.permute.xlu0 %54
  %58 = vset.pattern.permute.xlu0 0
  %59 = vperm.xlu0 %58, %v16
  %v60 = vpop.permute.xlu0 %59
  %63 = vset.pattern.permute.xlu0 0
  %64 = vperm.xlu0 %63, %v17
  %v65 = vpop.permute.xlu0 %64
  %68 = vset.pattern.permute.xlu0 0
  %69 = vperm.xlu0 %68, %v18
  %v70 = vpop.permute.xlu0 %69
  %73 = vset.pattern.permute.xlu0 0
  %74 = vperm.xlu0 %73, %v19
  %v75 = vpop.permute.xlu0 %74
  %78 = vset.pattern.permute.xlu0 0
  %79 = vperm.xlu0 %78, %v20
  %v80 = vpop.permute.xlu0 %79
  %83 = vset.pattern.permute.xlu0 0
  %84 = vperm.xlu0 %83, %v21
  %v85 = vpop.permute.xlu0 %84
  %88 = vset.pattern.permute.xlu0 0
  %89 = vperm.xlu0 %88, %v22
  %v90 = vpop.permute.xlu0 %89
  %93 = vset.pattern.permute.xlu0 0
  %94 = vperm.xlu0 %93, %v23
  %v95 = vpop.permute.xlu0 %94
  %98 = vset.pattern.permute.xlu0 0
  %99 = vperm.xlu0 %98, %v24
  %v100 = vpop.permute.xlu0 %99
  %103 = vset.pattern.permute.xlu0 0
  %104 = vperm.xlu0 %103, %v25
  %v105 = vpop.permute.xlu0 %104
  %108 = vset.pattern.permute.xlu0 0
  %109 = vperm.xlu0 %108, %v26
  %v110 = vpop.permute.xlu0 %109
  %113 = vset.pattern.permute.xlu0 0
  %114 = vperm.xlu0 %113, %v27
  %v115 = vpop.permute.xlu0 %114
  %118 = vset.pattern.permute.xlu0 0
  %119 = vperm.xlu0 %118, %v28
  %v120 = vpop.permute.xlu0 %119
  %123 = vset.pattern.permute.xlu0 0
  %124 = vperm.xlu0 %123, %v29
  %v125 = vpop.permute.xlu0 %124
  %128 = vset.pattern.permute.xlu0 0
  %129 = vperm.xlu0 %128, %v30
  %v130 = vpop.permute.xlu0 %129
  %133 = vset.pattern.permute.xlu0 0
  %134 = vperm.xlu0 %133, %v31
  %v135 = vpop.permute.xlu0 %134
  %138 = vset.pattern.permute.xlu0 0
  %139 = vperm.xlu0 %138, %v32
  %v140 = vpop.permute.xlu0 %139
  %143 = vset.pattern.permute.xlu0 0
  %144 = vperm.xlu0 %143, %v33
  %v145 = vpop.permute.xlu0 %144
  %148 = vset.pattern.permute.xlu0 0
  %149 = vperm.xlu0 %148, %v34
  %v150 = vpop.permute.xlu0 %149
  %153 = vset.pattern.permute.xlu0 0
  %154 = vperm.xlu0 %153, %v35
  %v155 = vpop.permute.xlu0 %154
  %158 = vset.pattern.permute.xlu0 0
  %159 = vperm.xlu0 %158, %v36
  %v160 = vpop.permute.xlu0 %159
  %163 = vset.pattern.permute.xlu0 0
  %164 = vperm.xlu0 %163, %v37
  %v165 = vpop.permute.xlu0 %164
  %168 = vset.pattern.permute.xlu0 0
  %169 = vperm.xlu0 %168, %v38
  %v170 = vpop.permute.xlu0 %169
  %173 = vset.pattern.permute.xlu0 0
  %174 = vperm.xlu0 %173, %v39
  %v175 = vpop.permute.xlu0 %174
  %178 = vset.pattern.permute.xlu0 0
  %179 = vperm.xlu0 %178, %v40
  %v180 = vpop.permute.xlu0 %179
  %183 = vset.pattern.permute.xlu0 0
  %184 = vperm.xlu0 %183, %v41
  %v185 = vpop.permute.xlu0 %184
  %188 = vset.pattern.permute.xlu0 0
  %189 = vperm.xlu0 %188, %v42
  %v190 = vpop.permute.xlu0 %189
  %193 = vset.pattern.permute.xlu0 0
  %194 = vperm.xlu0 %193, %v43
  %v195 = vpop.permute.xlu0 %194
  %198 = vset.pattern.permute.xlu0 0
  %199 = vperm.xlu0 %198, %v44
  %v200 = vpop.permute.xlu0 %199
  %203 = vset.pattern.permute.xlu0 0
  %204 = vperm.xlu0 %203, %v45
  %v205 = vpop.permute.xlu0 %204
  %v207 = vperm.slane %v46, 0
  %v208 = vmul.f32 %v50, %v207
  %v209 = vmul.f32 %v55, %v207
  %v210 = vmul.f32 %v60, %v207
  %v211 = vmul.f32 %v65, %v207
  %v212 = vmul.f32 %v70, %v207
  %v213 = vmul.f32 %v75, %v207
  %v214 = vmul.f32 %v80, %v207
  %v215 = vmul.f32 %v85, %v207
  %v216 = vmul.f32 %v90, %v207
  %v217 = vmul.f32 %v95, %v207
  %v218 = vmul.f32 %v100, %v207
  %v219 = vmul.f32 %v105, %v207
  %v220 = vmul.f32 %v110, %v207
  %v221 = vmul.f32 %v115, %v207
  %v222 = vmul.f32 %v120, %v207
  %v223 = vmul.f32 %v125, %v207
  %v224 = vmul.f32 %v130, %v207
  %v225 = vmul.f32 %v135, %v207
  %v226 = vmul.f32 %v140, %v207
  %v227 = vmul.f32 %v145, %v207
  %v228 = vmul.f32 %v150, %v207
  %v229 = vmul.f32 %v155, %v207
  %v230 = vmul.f32 %v160, %v207
  %v231 = vmul.f32 %v165, %v207
  %v232 = vmul.f32 %v170, %v207
  %v233 = vmul.f32 %v175, %v207
  %v234 = vmul.f32 %v180, %v207
  %v235 = vmul.f32 %v185, %v207
  %v236 = vmul.f32 %v190, %v207
  %v237 = vmul.f32 %v195, %v207
  %v238 = vmul.f32 %v200, %v207
  %v239 = vmul.f32 %v205, %v207
  %240 = vset.pattern.permute.xlu0 1
  %241 = vperm.xlu0 %240, %v14
  %v242 = vpop.permute.xlu0 %241
  %244 = vset.pattern.permute.xlu0 1
  %245 = vperm.xlu0 %244, %v15
  %v246 = vpop.permute.xlu0 %245
  %248 = vset.pattern.permute.xlu0 1
  %249 = vperm.xlu0 %248, %v16
  %v250 = vpop.permute.xlu0 %249
  %252 = vset.pattern.permute.xlu0 1
  %253 = vperm.xlu0 %252, %v17
  %v254 = vpop.permute.xlu0 %253
  %256 = vset.pattern.permute.xlu0 1
  %257 = vperm.xlu0 %256, %v18
  %v258 = vpop.permute.xlu0 %257
  %260 = vset.pattern.permute.xlu0 1
  %261 = vperm.xlu0 %260, %v19
  %v262 = vpop.permute.xlu0 %261
  %264 = vset.pattern.permute.xlu0 1
  %265 = vperm.xlu0 %264, %v20
  %v266 = vpop.permute.xlu0 %265
  %268 = vset.pattern.permute.xlu0 1
  %269 = vperm.xlu0 %268, %v21
  %v270 = vpop.permute.xlu0 %269
  %272 = vset.pattern.permute.xlu0 1
  %273 = vperm.xlu0 %272, %v22
  %v274 = vpop.permute.xlu0 %273
  %276 = vset.pattern.permute.xlu0 1
  %277 = vperm.xlu0 %276, %v23
  %v278 = vpop.permute.xlu0 %277
  %280 = vset.pattern.permute.xlu0 1
  %281 = vperm.xlu0 %280, %v24
  %v282 = vpop.permute.xlu0 %281
  %284 = vset.pattern.permute.xlu0 1
  %285 = vperm.xlu0 %284, %v25
  %v286 = vpop.permute.xlu0 %285
  %288 = vset.pattern.permute.xlu0 1
  %289 = vperm.xlu0 %288, %v26
  %v290 = vpop.permute.xlu0 %289
  %292 = vset.pattern.permute.xlu0 1
  %293 = vperm.xlu0 %292, %v27
  %v294 = vpop.permute.xlu0 %293
  %296 = vset.pattern.permute.xlu0 1
  %297 = vperm.xlu0 %296, %v28
  %v298 = vpop.permute.xlu0 %297
  %300 = vset.pattern.permute.xlu0 1
  %301 = vperm.xlu0 %300, %v29
  %v302 = vpop.permute.xlu0 %301
  %304 = vset.pattern.permute.xlu0 1
  %305 = vperm.xlu0 %304, %v30
  %v306 = vpop.permute.xlu0 %305
  %308 = vset.pattern.permute.xlu0 1
  %309 = vperm.xlu0 %308, %v31
  %v310 = vpop.permute.xlu0 %309
  %312 = vset.pattern.permute.xlu0 1
  %313 = vperm.xlu0 %312, %v32
  %v314 = vpop.permute.xlu0 %313
  %316 = vset.pattern.permute.xlu0 1
  %317 = vperm.xlu0 %316, %v33
  %v318 = vpop.permute.xlu0 %317
  %320 = vset.pattern.permute.xlu0 1
  %321 = vperm.xlu0 %320, %v34
  %v322 = vpop.permute.xlu0 %321
  %324 = vset.pattern.permute.xlu0 1
  %325 = vperm.xlu0 %324, %v35
  %v326 = vpop.permute.xlu0 %325
  %328 = vset.pattern.permute.xlu0 1
  %329 = vperm.xlu0 %328, %v36
  %v330 = vpop.permute.xlu0 %329
  %332 = vset.pattern.permute.xlu0 1
  %333 = vperm.xlu0 %332, %v37
  %v334 = vpop.permute.xlu0 %333
  %336 = vset.pattern.permute.xlu0 1
  %337 = vperm.xlu0 %336, %v38
  %v338 = vpop.permute.xlu0 %337
  %340 = vset.pattern.permute.xlu0 1
  %341 = vperm.xlu0 %340, %v39
  %v342 = vpop.permute.xlu0 %341
  %344 = vset.pattern.permute.xlu0 1
  %345 = vperm.xlu0 %344, %v40
  %v346 = vpop.permute.xlu0 %345
  %348 = vset.pattern.permute.xlu0 1
  %349 = vperm.xlu0 %348, %v41
  %v350 = vpop.permute.xlu0 %349
  %352 = vset.pattern.permute.xlu0 1
  %353 = vperm.xlu0 %352, %v42
  %v354 = vpop.permute.xlu0 %353
  %356 = vset.pattern.permute.xlu0 1
  %357 = vperm.xlu0 %356, %v43
  %v358 = vpop.permute.xlu0 %357
  %360 = vset.pattern.permute.xlu0 1
  %361 = vperm.xlu0 %360, %v44
  %v362 = vpop.permute.xlu0 %361
  %364 = vset.pattern.permute.xlu0 1
  %365 = vperm.xlu0 %364, %v45
  %v366 = vpop.permute.xlu0 %365
  %v368 = vperm.slane %v46, 1
  %v369 = vmul.f32 %v242, %v368
  %v370 = vmul.f32 %v246, %v368
  %v371 = vmul.f32 %v250, %v368
  %v372 = vmul.f32 %v254, %v368
  %v373 = vmul.f32 %v258, %v368
  %v374 = vmul.f32 %v262, %v368
  %v375 = vmul.f32 %v266, %v368
  %v376 = vmul.f32 %v270, %v368
  %v377 = vmul.f32 %v274, %v368
  %v378 = vmul.f32 %v278, %v368
  %v379 = vmul.f32 %v282, %v368
  %v380 = vmul.f32 %v286, %v368
  %v381 = vmul.f32 %v290, %v368
  %v382 = vmul.f32 %v294, %v368
  %v383 = vmul.f32 %v298, %v368
  %v384 = vmul.f32 %v302, %v368
  %v385 = vmul.f32 %v306, %v368
  %v386 = vmul.f32 %v310, %v368
  %v387 = vmul.f32 %v314, %v368
  %v388 = vmul.f32 %v318, %v368
  %v389 = vmul.f32 %v322, %v368
  %v390 = vmul.f32 %v326, %v368
  %v391 = vmul.f32 %v330, %v368
  %v392 = vmul.f32 %v334, %v368
  %v393 = vmul.f32 %v338, %v368
  %v394 = vmul.f32 %v342, %v368
  %v395 = vmul.f32 %v346, %v368
  %v396 = vmul.f32 %v350, %v368
  %v397 = vmul.f32 %v354, %v368
  %v398 = vmul.f32 %v358, %v368
  %v399 = vmul.f32 %v362, %v368
  %v400 = vmul.f32 %v366, %v368
  %v401 = vadd.f32 %v208, %v369
  %v402 = vadd.f32 %v209, %v370
  %v403 = vadd.f32 %v210, %v371
  %v404 = vadd.f32 %v211, %v372
  %v405 = vadd.f32 %v212, %v373
  %v406 = vadd.f32 %v213, %v374
  %v407 = vadd.f32 %v214, %v375
  %v408 = vadd.f32 %v215, %v376
  %v409 = vadd.f32 %v216, %v377
  %v410 = vadd.f32 %v217, %v378
  %v411 = vadd.f32 %v218, %v379
  %v412 = vadd.f32 %v219, %v380
  %v413 = vadd.f32 %v220, %v381
  %v414 = vadd.f32 %v221, %v382
  %v415 = vadd.f32 %v222, %v383
  %v416 = vadd.f32 %v223, %v384
  %v417 = vadd.f32 %v224, %v385
  %v418 = vadd.f32 %v225, %v386
  %v419 = vadd.f32 %v226, %v387
  %v420 = vadd.f32 %v227, %v388
  %v421 = vadd.f32 %v228, %v389
  %v422 = vadd.f32 %v229, %v390
  %v423 = vadd.f32 %v230, %v391
  %v424 = vadd.f32 %v231, %v392
  %v425 = vadd.f32 %v232, %v393
  %v426 = vadd.f32 %v233, %v394
  %v427 = vadd.f32 %v234, %v395
  %v428 = vadd.f32 %v235, %v396
  %v429 = vadd.f32 %v236, %v397
  %v430 = vadd.f32 %v237, %v398
  %v431 = vadd.f32 %v238, %v399
  %v432 = vadd.f32 %v239, %v400
  %433 = vset.pattern.permute.xlu0 2
  %434 = vperm.xlu0 %433, %v14
  %v435 = vpop.permute.xlu0 %434
  %437 = vset.pattern.permute.xlu0 2
  %438 = vperm.xlu0 %437, %v15
  %v439 = vpop.permute.xlu0 %438
  %441 = vset.pattern.permute.xlu0 2
  %442 = vperm.xlu0 %441, %v16
  %v443 = vpop.permute.xlu0 %442
  %445 = vset.pattern.permute.xlu0 2
  %446 = vperm.xlu0 %445, %v17
  %v447 = vpop.permute.xlu0 %446
  %449 = vset.pattern.permute.xlu0 2
  %450 = vperm.xlu0 %449, %v18
  %v451 = vpop.permute.xlu0 %450
  %453 = vset.pattern.permute.xlu0 2
  %454 = vperm.xlu0 %453, %v19
  %v455 = vpop.permute.xlu0 %454
  %457 = vset.pattern.permute.xlu0 2
  %458 = vperm.xlu0 %457, %v20
  %v459 = vpop.permute.xlu0 %458
  %461 = vset.pattern.permute.xlu0 2
  %462 = vperm.xlu0 %461, %v21
  %v463 = vpop.permute.xlu0 %462
  %465 = vset.pattern.permute.xlu0 2
  %466 = vperm.xlu0 %465, %v22
  %v467 = vpop.permute.xlu0 %466
  %469 = vset.pattern.permute.xlu0 2
  %470 = vperm.xlu0 %469, %v23
  %v471 = vpop.permute.xlu0 %470
  %473 = vset.pattern.permute.xlu0 2
  %474 = vperm.xlu0 %473, %v24
  %v475 = vpop.permute.xlu0 %474
  %477 = vset.pattern.permute.xlu0 2
  %478 = vperm.xlu0 %477, %v25
  %v479 = vpop.permute.xlu0 %478
  %481 = vset.pattern.permute.xlu0 2
  %482 = vperm.xlu0 %481, %v26
  %v483 = vpop.permute.xlu0 %482
  %485 = vset.pattern.permute.xlu0 2
  %486 = vperm.xlu0 %485, %v27
  %v487 = vpop.permute.xlu0 %486
  %489 = vset.pattern.permute.xlu0 2
  %490 = vperm.xlu0 %489, %v28
  %v491 = vpop.permute.xlu0 %490
  %493 = vset.pattern.permute.xlu0 2
  %494 = vperm.xlu0 %493, %v29
  %v495 = vpop.permute.xlu0 %494
  %497 = vset.pattern.permute.xlu0 2
  %498 = vperm.xlu0 %497, %v30
  %v499 = vpop.permute.xlu0 %498
  %501 = vset.pattern.permute.xlu0 2
  %502 = vperm.xlu0 %501, %v31
  %v503 = vpop.permute.xlu0 %502
  %505 = vset.pattern.permute.xlu0 2
  %506 = vperm.xlu0 %505, %v32
  %v507 = vpop.permute.xlu0 %506
  %509 = vset.pattern.permute.xlu0 2
  %510 = vperm.xlu0 %509, %v33
  %v511 = vpop.permute.xlu0 %510
  %513 = vset.pattern.permute.xlu0 2
  %514 = vperm.xlu0 %513, %v34
  %v515 = vpop.permute.xlu0 %514
  %517 = vset.pattern.permute.xlu0 2
  %518 = vperm.xlu0 %517, %v35
  %v519 = vpop.permute.xlu0 %518
  %521 = vset.pattern.permute.xlu0 2
  %522 = vperm.xlu0 %521, %v36
  %v523 = vpop.permute.xlu0 %522
  %525 = vset.pattern.permute.xlu0 2
  %526 = vperm.xlu0 %525, %v37
  %v527 = vpop.permute.xlu0 %526
  %529 = vset.pattern.permute.xlu0 2
  %530 = vperm.xlu0 %529, %v38
  %v531 = vpop.permute.xlu0 %530
  %533 = vset.pattern.permute.xlu0 2
  %534 = vperm.xlu0 %533, %v39
  %v535 = vpop.permute.xlu0 %534
  %537 = vset.pattern.permute.xlu0 2
  %538 = vperm.xlu0 %537, %v40
  %v539 = vpop.permute.xlu0 %538
  %541 = vset.pattern.permute.xlu0 2
  %542 = vperm.xlu0 %541, %v41
  %v543 = vpop.permute.xlu0 %542
  %545 = vset.pattern.permute.xlu0 2
  %546 = vperm.xlu0 %545, %v42
  %v547 = vpop.permute.xlu0 %546
  %549 = vset.pattern.permute.xlu0 2
  %550 = vperm.xlu0 %549, %v43
  %v551 = vpop.permute.xlu0 %550
  %553 = vset.pattern.permute.xlu0 2
  %554 = vperm.xlu0 %553, %v44
  %v555 = vpop.permute.xlu0 %554
  %557 = vset.pattern.permute.xlu0 2
  %558 = vperm.xlu0 %557, %v45
  %v559 = vpop.permute.xlu0 %558
  %v561 = vperm.slane %v46, 2
  %v562 = vmul.f32 %v435, %v561
  %v563 = vmul.f32 %v439, %v561
  %v564 = vmul.f32 %v443, %v561
  %v565 = vmul.f32 %v447, %v561
  %v566 = vmul.f32 %v451, %v561
  %v567 = vmul.f32 %v455, %v561
  %v568 = vmul.f32 %v459, %v561
  %v569 = vmul.f32 %v463, %v561
  %v570 = vmul.f32 %v467, %v561
  %v571 = vmul.f32 %v471, %v561
  %v572 = vmul.f32 %v475, %v561
  %v573 = vmul.f32 %v479, %v561
  %v574 = vmul.f32 %v483, %v561
  %v575 = vmul.f32 %v487, %v561
  %v576 = vmul.f32 %v491, %v561
  %v577 = vmul.f32 %v495, %v561
  %v578 = vmul.f32 %v499, %v561
  %v579 = vmul.f32 %v503, %v561
  %v580 = vmul.f32 %v507, %v561
  %v581 = vmul.f32 %v511, %v561
  %v582 = vmul.f32 %v515, %v561
  %v583 = vmul.f32 %v519, %v561
  %v584 = vmul.f32 %v523, %v561
  %v585 = vmul.f32 %v527, %v561
  %v586 = vmul.f32 %v531, %v561
  %v587 = vmul.f32 %v535, %v561
  %v588 = vmul.f32 %v539, %v561
  %v589 = vmul.f32 %v543, %v561
  %v590 = vmul.f32 %v547, %v561
  %v591 = vmul.f32 %v551, %v561
  %v592 = vmul.f32 %v555, %v561
  %v593 = vmul.f32 %v559, %v561
  %v594 = vadd.f32 %v401, %v562
  %v595 = vadd.f32 %v402, %v563
  %v596 = vadd.f32 %v403, %v564
  %v597 = vadd.f32 %v404, %v565
  %v598 = vadd.f32 %v405, %v566
  %v599 = vadd.f32 %v406, %v567
  %v600 = vadd.f32 %v407, %v568
  %v601 = vadd.f32 %v408, %v569
  %v602 = vadd.f32 %v409, %v570
  %v603 = vadd.f32 %v410, %v571
  %v604 = vadd.f32 %v411, %v572
  %v605 = vadd.f32 %v412, %v573
  %v606 = vadd.f32 %v413, %v574
  %v607 = vadd.f32 %v414, %v575
  %v608 = vadd.f32 %v415, %v576
  %v609 = vadd.f32 %v416, %v577
  %v610 = vadd.f32 %v417, %v578
  %v611 = vadd.f32 %v418, %v579
  %v612 = vadd.f32 %v419, %v580
  %v613 = vadd.f32 %v420, %v581
  %v614 = vadd.f32 %v421, %v582
  %v615 = vadd.f32 %v422, %v583
  %v616 = vadd.f32 %v423, %v584
  %v617 = vadd.f32 %v424, %v585
  %v618 = vadd.f32 %v425, %v586
  %v619 = vadd.f32 %v426, %v587
  %v620 = vadd.f32 %v427, %v588
  %v621 = vadd.f32 %v428, %v589
  %v622 = vadd.f32 %v429, %v590
  %v623 = vadd.f32 %v430, %v591
  %v624 = vadd.f32 %v431, %v592
  %v625 = vadd.f32 %v432, %v593
  %v626 = vand.u32 2147483647, %v594
  %vm627 = vcmp.le.f32.partialorder %v626, 0.7853982
  %vm628 = vcmp.lt.s32.totalorder %v594, 0
  %v629 = vand.u32 %v594, 2139095040
  %v630 = vshrl.u32 %v629, 23
  %v631 = vsub.s32 %v630, 127
  %v632 = vand.u32 2147483647, %v594
  %v633 = vand.u32 %v632, 8388607
  %v634 = vor.u32 %v633, 8388608
  %v635 = vsub.s32 0, %v634
  %v636 = vadd.s32 %v631, 1
  %vm637 = vcmp.gt.s32.totalorder %v636, 0
  %v638 = vsel %vm637, %v636, 0
  %v639 = vshrl.u32 %v638, 5
  %v640 = vand.u32 %v638, 31
  %v641 = vsub.s32 32, %v640
  %v642 = vshrl.u32 683565275, %v641
  %v643 = vshll.u32 683565275, %v640
  %v644 = vshrl.u32 2475754826, %v641
  %v645 = vor.u32 %v643, %v644
  %v646 = vshll.u32 2475754826, %v640
  %v647 = vshrl.u32 2131351028, %v641
  %v648 = vor.u32 %v646, %v647
  %v649 = vshll.u32 2131351028, %v640
  %v650 = vshrl.u32 2102212464, %v641
  %v651 = vor.u32 %v649, %v650
  %v652 = vshll.u32 2102212464, %v640
  %v653 = vshrl.u32 920167782, %v641
  %v654 = vor.u32 %v652, %v653
  %v655 = vshll.u32 920167782, %v640
  %v656 = vshrl.u32 1326507024, %v641
  %v657 = vor.u32 %v655, %v656
  %vm658 = vcmp.lt.s32.totalorder %v639, 1
  %vm659 = vcmp.lt.s32.totalorder %v639, 2
  %vm660 = vcmp.lt.s32.totalorder %v639, 3
  %vm661 = vcmp.lt.s32.totalorder %v639, 4
  %v662 = vsel %vm658, %v642, %v645
  %v663 = vsel %vm661, %v651, 2102212464
  %v664 = vsel %vm660, %v648, %v663
  %v665 = vsel %vm659, %v662, %v664
  %v666 = vsel %vm658, %v645, %v648
  %v667 = vsel %vm661, %v654, 920167782
  %v668 = vsel %vm660, %v651, %v667
  %v669 = vsel %vm659, %v666, %v668
  %v670 = vsel %vm658, %v648, %v651
  %v671 = vsel %vm661, %v657, 1326507024
  %v672 = vsel %vm660, %v654, %v671
  %v673 = vsel %vm659, %v670, %v672
  %v674 = vshll.u32 %v634, 8
  %v675 = vand.u32 %v674, 65535
  %v676 = vshrl.u32 %v674, 16
  %v677 = vand.u32 %v673, 65535
  %v678 = vshrl.u32 %v673, 16
  %v679 = vmul.u32 %v675, %v677
  %v680 = vmul.u32 %v675, %v678
  %v681 = vmul.u32 %v676, %v677
  %v682 = vmul.u32 %v676, %v678
  %v683 = vshll.u32 %v680, 16
  %v684 = vshrl.u32 %v680, 16
  %v685 = vshll.u32 %v681, 16
  %v686 = vshrl.u32 %v681, 16
  %vm687 = vc.u32 %v679, %v683
  %v688 = vsel %vm687, 1, 0
  %v689 = vadd.s32 %v679, %v683
  %v690 = vadd.s32 %v682, %v688
  %vm691 = vc.u32 %v689, %v685
  %v692 = vsel %vm691, 1, 0
  %v693 = vadd.s32 %v689, %v685
  %v694 = vadd.s32 %v690, %v692
  %v695 = vadd.s32 %v694, %v684
  %v696 = vadd.s32 %v695, %v686
  %v697 = vand.u32 %v674, 65535
  %v698 = vshrl.u32 %v674, 16
  %v699 = vand.u32 %v669, 65535
  %v700 = vshrl.u32 %v669, 16
  %v701 = vmul.u32 %v697, %v699
  %v702 = vmul.u32 %v697, %v700
  %v703 = vmul.u32 %v698, %v699
  %v704 = vmul.u32 %v698, %v700
  %v705 = vshll.u32 %v702, 16
  %v706 = vshrl.u32 %v702, 16
  %v707 = vshll.u32 %v703, 16
  %v708 = vshrl.u32 %v703, 16
  %vm709 = vc.u32 %v701, %v705
  %v710 = vsel %vm709, 1, 0
  %v711 = vadd.s32 %v701, %v705
  %v712 = vadd.s32 %v704, %v710
  %vm713 = vc.u32 %v711, %v707
  %v714 = vsel %vm713, 1, 0
  %v715 = vadd.s32 %v711, %v707
  %v716 = vadd.s32 %v712, %v714
  %v717 = vadd.s32 %v716, %v706
  %v718 = vadd.s32 %v717, %v708
  %v719 = vmul.u32 %v674, %v665
  %v720 = vadd.s32 %v696, %v715
  %vm721 = vc.u32 %v696, %v715
  %v722 = vadd.s32 %v718, 1
  %v723 = vsel %vm721, %v722, %v718
  %v724 = vadd.s32 %v719, %v723
  %v725 = vadd.s32 %v724, 536870912
  %v726 = vshrl.u32 %v725, 30
  %v727 = vshll.u32 %v726, 30
  %v728 = vsub.s32 %v724, %v727
  %vm729 = vcmp.lt.s32.totalorder %v728, 0
  %v730 = vsub.s32 0, %v728
  %v731 = vsel %vm729, %v730, %v728
  %v732 = vclz %v731
  %v733 = vsub.s32 %v732, 2
  %vm734 = vcmp.gt.s32.totalorder 0, %v733
  %v735 = vsel %vm734, 0, %v733
  %v736 = vsub.s32 32, %v735
  %v737 = vshll.u32 %v728, %v735
  %v738 = vshrl.u32 %v720, %v736
  %v739 = vor.u32 %v737, %v738
  %v740 = vsub.s32 4294967266, %v735
  %v741 = vadd.s32 %v740, 127
  %v742 = vshll.u32 %v741, 23
  %v743 = vor.u32 4788187, %v742
  %v744 = vand.u32 2147483647, %v743
  %v746 = vcvt.s32.f32 %v739
  %v747 = vmul.f32 %v746, %v744
  %v748 = vxor.u32 %v747, 2147483648
  %v749 = vsel %vm628, %v748, %v747
  %v750 = vsub.s32 4, %v726
  %v751 = vsel %vm628, %v750, %v726
  %v752 = vsel %vm627, %v594, %v749
  %v753 = vsel %vm627, 0, %v751
  %v754 = vmul.f32 %v752, %v752
  %v755 = vmul.f32 %v754, -0.001358992
  %v756 = vadd.f32 %v755, 0.041655596
  %v757 = vmul.f32 %v754, %v756
  %v758 = vadd.f32 %v757, -0.4999988
  %v759 = vmul.f32 %v754, %v758
  %v760 = vadd.f32 1.0, %v759
  %v761 = vmul.f32 %v752, %v752
  %v762 = vmul.f32 %v761, -0.00019511016
  %v763 = vadd.f32 %v762, 0.008332121
  %v764 = vmul.f32 %v761, %v763
  %v765 = vadd.f32 %v764, -0.16666654
  %v766 = vmul.f32 %v761, %v765
  %v767 = vadd.f32 %v766, 1.0
  %v768 = vmul.f32 %v767, %v752
  %vm769 = vweird.f32 %v594
  %v770 = vadd.s32 %v753, 3
  %v771 = vand.u32 %v770, 3
  %vm772 = vcmp.lt.s32.totalorder %v771, 2
  %vm773 = vcmp.eq.s32.totalorder %v771, 0
  %v774 = vxor.u32 %v768, 2147483648
  %v775 = vsel %vm773, %v760, %v774
  %vm776 = vcmp.eq.s32.totalorder %v771, 2
  %v777 = vxor.u32 %v760, 2147483648
  %v778 = vsel %vm776, %v777, %v768
  %v779 = vsel %vm772, %v775, %v778
  %v780 = vsel %vm769, nan, %v779
  %v781 = vand.u32 2147483647, %v595
  %vm782 = vcmp.le.f32.partialorder %v781, 0.7853982
  %vm783 = vcmp.lt.s32.totalorder %v595, 0
  %v784 = vand.u32 %v595, 2139095040
  %v785 = vshrl.u32 %v784, 23
  %v786 = vsub.s32 %v785, 127
  %v787 = vand.u32 2147483647, %v595
  %v788 = vand.u32 %v787, 8388607
  %v789 = vor.u32 %v788, 8388608
  %v790 = vsub.s32 0, %v789
  %v791 = vadd.s32 %v786, 1
  %vm792 = vcmp.gt.s32.totalorder %v791, 0
  %v793 = vsel %vm792, %v791, 0
  %v794 = vshrl.u32 %v793, 5
  %v795 = vand.u32 %v793, 31
  %v796 = vsub.s32 32, %v795
  %v797 = vshrl.u32 683565275, %v796
  %v798 = vshll.u32 683565275, %v795
  %v799 = vshrl.u32 2475754826, %v796
  %v800 = vor.u32 %v798, %v799
  %v801 = vshll.u32 2475754826, %v795
  %v802 = vshrl.u32 2131351028, %v796
  %v803 = vor.u32 %v801, %v802
  %v804 = vshll.u32 2131351028, %v795
  %v805 = vshrl.u32 2102212464, %v796
  %v806 = vor.u32 %v804, %v805
  %v807 = vshll.u32 2102212464, %v795
  %v808 = vshrl.u32 920167782, %v796
  %v809 = vor.u32 %v807, %v808
  %v810 = vshll.u32 920167782, %v795
  %v811 = vshrl.u32 1326507024, %v796
  %v812 = vor.u32 %v810, %v811
  %vm813 = vcmp.lt.s32.totalorder %v794, 1
  %vm814 = vcmp.lt.s32.totalorder %v794, 2
  %vm815 = vcmp.lt.s32.totalorder %v794, 3
  %vm816 = vcmp.lt.s32.totalorder %v794, 4
  %v817 = vsel %vm813, %v797, %v800
  %v818 = vsel %vm816, %v806, 2102212464
  %v819 = vsel %vm815, %v803, %v818
  %v820 = vsel %vm814, %v817, %v819
  %v821 = vsel %vm813, %v800, %v803
  %v822 = vsel %vm816, %v809, 920167782
  %v823 = vsel %vm815, %v806, %v822
  %v824 = vsel %vm814, %v821, %v823
  %v825 = vsel %vm813, %v803, %v806
  %v826 = vsel %vm816, %v812, 1326507024
  %v827 = vsel %vm815, %v809, %v826
  %v828 = vsel %vm814, %v825, %v827
  %v829 = vshll.u32 %v789, 8
  %v830 = vand.u32 %v829, 65535
  %v831 = vshrl.u32 %v829, 16
  %v832 = vand.u32 %v828, 65535
  %v833 = vshrl.u32 %v828, 16
  %v834 = vmul.u32 %v830, %v832
  %v835 = vmul.u32 %v830, %v833
  %v836 = vmul.u32 %v831, %v832
  %v837 = vmul.u32 %v831, %v833
  %v838 = vshll.u32 %v835, 16
  %v839 = vshrl.u32 %v835, 16
  %v840 = vshll.u32 %v836, 16
  %v841 = vshrl.u32 %v836, 16
  %vm842 = vc.u32 %v834, %v838
  %v843 = vsel %vm842, 1, 0
  %v844 = vadd.s32 %v834, %v838
  %v845 = vadd.s32 %v837, %v843
  %vm846 = vc.u32 %v844, %v840
  %v847 = vsel %vm846, 1, 0
  %v848 = vadd.s32 %v844, %v840
  %v849 = vadd.s32 %v845, %v847
  %v850 = vadd.s32 %v849, %v839
  %v851 = vadd.s32 %v850, %v841
  %v852 = vand.u32 %v829, 65535
  %v853 = vshrl.u32 %v829, 16
  %v854 = vand.u32 %v824, 65535
  %v855 = vshrl.u32 %v824, 16
  %v856 = vmul.u32 %v852, %v854
  %v857 = vmul.u32 %v852, %v855
  %v858 = vmul.u32 %v853, %v854
  %v859 = vmul.u32 %v853, %v855
  %v860 = vshll.u32 %v857, 16
  %v861 = vshrl.u32 %v857, 16
  %v862 = vshll.u32 %v858, 16
  %v863 = vshrl.u32 %v858, 16
  %vm864 = vc.u32 %v856, %v860
  %v865 = vsel %vm864, 1, 0
  %v866 = vadd.s32 %v856, %v860
  %v867 = vadd.s32 %v859, %v865
  %vm868 = vc.u32 %v866, %v862
  %v869 = vsel %vm868, 1, 0
  %v870 = vadd.s32 %v866, %v862
  %v871 = vadd.s32 %v867, %v869
  %v872 = vadd.s32 %v871, %v861
  %v873 = vadd.s32 %v872, %v863
  %v874 = vmul.u32 %v829, %v820
  %v875 = vadd.s32 %v851, %v870
  %vm876 = vc.u32 %v851, %v870
  %v877 = vadd.s32 %v873, 1
  %v878 = vsel %vm876, %v877, %v873
  %v879 = vadd.s32 %v874, %v878
  %v880 = vadd.s32 %v879, 536870912
  %v881 = vshrl.u32 %v880, 30
  %v882 = vshll.u32 %v881, 30
  %v883 = vsub.s32 %v879, %v882
  %vm884 = vcmp.lt.s32.totalorder %v883, 0
  %v885 = vsub.s32 0, %v883
  %v886 = vsel %vm884, %v885, %v883
  %v887 = vclz %v886
  %v888 = vsub.s32 %v887, 2
  %vm889 = vcmp.gt.s32.totalorder 0, %v888
  %v890 = vsel %vm889, 0, %v888
  %v891 = vsub.s32 32, %v890
  %v892 = vshll.u32 %v883, %v890
  %v893 = vshrl.u32 %v875, %v891
  %v894 = vor.u32 %v892, %v893
  %v895 = vsub.s32 4294967266, %v890
  %v896 = vadd.s32 %v895, 127
  %v897 = vshll.u32 %v896, 23
  %v898 = vor.u32 4788187, %v897
  %v899 = vand.u32 2147483647, %v898
  %v901 = vcvt.s32.f32 %v894
  %v902 = vmul.f32 %v901, %v899
  %v903 = vxor.u32 %v902, 2147483648
  %v904 = vsel %vm783, %v903, %v902
  %v905 = vsub.s32 4, %v881
  %v906 = vsel %vm783, %v905, %v881
  %v907 = vsel %vm782, %v595, %v904
  %v908 = vsel %vm782, 0, %v906
  %v909 = vmul.f32 %v907, %v907
  %v910 = vmul.f32 %v909, -0.001358992
  %v911 = vadd.f32 %v910, 0.041655596
  %v912 = vmul.f32 %v909, %v911
  %v913 = vadd.f32 %v912, -0.4999988
  %v914 = vmul.f32 %v909, %v913
  %v915 = vadd.f32 1.0, %v914
  %v916 = vmul.f32 %v907, %v907
  %v917 = vmul.f32 %v916, -0.00019511016
  %v918 = vadd.f32 %v917, 0.008332121
  %v919 = vmul.f32 %v916, %v918
  %v920 = vadd.f32 %v919, -0.16666654
  %v921 = vmul.f32 %v916, %v920
  %v922 = vadd.f32 %v921, 1.0
  %v923 = vmul.f32 %v922, %v907
  %vm924 = vweird.f32 %v595
  %v925 = vadd.s32 %v908, 3
  %v926 = vand.u32 %v925, 3
  %vm927 = vcmp.lt.s32.totalorder %v926, 2
  %vm928 = vcmp.eq.s32.totalorder %v926, 0
  %v929 = vxor.u32 %v923, 2147483648
  %v930 = vsel %vm928, %v915, %v929
  %vm931 = vcmp.eq.s32.totalorder %v926, 2
  %v932 = vxor.u32 %v915, 2147483648
  %v933 = vsel %vm931, %v932, %v923
  %v934 = vsel %vm927, %v930, %v933
  %v935 = vsel %vm924, nan, %v934
  %v936 = vand.u32 2147483647, %v596
  %vm937 = vcmp.le.f32.partialorder %v936, 0.7853982
  %vm938 = vcmp.lt.s32.totalorder %v596, 0
  %v939 = vand.u32 %v596, 2139095040
  %v940 = vshrl.u32 %v939, 23
  %v941 = vsub.s32 %v940, 127
  %v942 = vand.u32 2147483647, %v596
  %v943 = vand.u32 %v942, 8388607
  %v944 = vor.u32 %v943, 8388608
  %v945 = vsub.s32 0, %v944
  %v946 = vadd.s32 %v941, 1
  %vm947 = vcmp.gt.s32.totalorder %v946, 0
  %v948 = vsel %vm947, %v946, 0
  %v949 = vshrl.u32 %v948, 5
  %v950 = vand.u32 %v948, 31
  %v951 = vsub.s32 32, %v950
  %v952 = vshrl.u32 683565275, %v951
  %v953 = vshll.u32 683565275, %v950
  %v954 = vshrl.u32 2475754826, %v951
  %v955 = vor.u32 %v953, %v954
  %v956 = vshll.u32 2475754826, %v950
  %v957 = vshrl.u32 2131351028, %v951
  %v958 = vor.u32 %v956, %v957
  %v959 = vshll.u32 2131351028, %v950
  %v960 = vshrl.u32 2102212464, %v951
  %v961 = vor.u32 %v959, %v960
  %v962 = vshll.u32 2102212464, %v950
  %v963 = vshrl.u32 920167782, %v951
  %v964 = vor.u32 %v962, %v963
  %v965 = vshll.u32 920167782, %v950
  %v966 = vshrl.u32 1326507024, %v951
  %v967 = vor.u32 %v965, %v966
  %vm968 = vcmp.lt.s32.totalorder %v949, 1
  %vm969 = vcmp.lt.s32.totalorder %v949, 2
  %vm970 = vcmp.lt.s32.totalorder %v949, 3
  %vm971 = vcmp.lt.s32.totalorder %v949, 4
  %v972 = vsel %vm968, %v952, %v955
  %v973 = vsel %vm971, %v961, 2102212464
  %v974 = vsel %vm970, %v958, %v973
  %v975 = vsel %vm969, %v972, %v974
  %v976 = vsel %vm968, %v955, %v958
  %v977 = vsel %vm971, %v964, 920167782
  %v978 = vsel %vm970, %v961, %v977
  %v979 = vsel %vm969, %v976, %v978
  %v980 = vsel %vm968, %v958, %v961
  %v981 = vsel %vm971, %v967, 1326507024
  %v982 = vsel %vm970, %v964, %v981
  %v983 = vsel %vm969, %v980, %v982
  %v984 = vshll.u32 %v944, 8
  %v985 = vand.u32 %v984, 65535
  %v986 = vshrl.u32 %v984, 16
  %v987 = vand.u32 %v983, 65535
  %v988 = vshrl.u32 %v983, 16
  %v989 = vmul.u32 %v985, %v987
  %v990 = vmul.u32 %v985, %v988
  %v991 = vmul.u32 %v986, %v987
  %v992 = vmul.u32 %v986, %v988
  %v993 = vshll.u32 %v990, 16
  %v994 = vshrl.u32 %v990, 16
  %v995 = vshll.u32 %v991, 16
  %v996 = vshrl.u32 %v991, 16
  %vm997 = vc.u32 %v989, %v993
  %v998 = vsel %vm997, 1, 0
  %v999 = vadd.s32 %v989, %v993
  %v1000 = vadd.s32 %v992, %v998
  %vm1001 = vc.u32 %v999, %v995
  %v1002 = vsel %vm1001, 1, 0
  %v1003 = vadd.s32 %v999, %v995
  %v1004 = vadd.s32 %v1000, %v1002
  %v1005 = vadd.s32 %v1004, %v994
  %v1006 = vadd.s32 %v1005, %v996
  %v1007 = vand.u32 %v984, 65535
  %v1008 = vshrl.u32 %v984, 16
  %v1009 = vand.u32 %v979, 65535
  %v1010 = vshrl.u32 %v979, 16
  %v1011 = vmul.u32 %v1007, %v1009
  %v1012 = vmul.u32 %v1007, %v1010
  %v1013 = vmul.u32 %v1008, %v1009
  %v1014 = vmul.u32 %v1008, %v1010
  %v1015 = vshll.u32 %v1012, 16
  %v1016 = vshrl.u32 %v1012, 16
  %v1017 = vshll.u32 %v1013, 16
  %v1018 = vshrl.u32 %v1013, 16
  %vm1019 = vc.u32 %v1011, %v1015
  %v1020 = vsel %vm1019, 1, 0
  %v1021 = vadd.s32 %v1011, %v1015
  %v1022 = vadd.s32 %v1014, %v1020
  %vm1023 = vc.u32 %v1021, %v1017
  %v1024 = vsel %vm1023, 1, 0
  %v1025 = vadd.s32 %v1021, %v1017
  %v1026 = vadd.s32 %v1022, %v1024
  %v1027 = vadd.s32 %v1026, %v1016
  %v1028 = vadd.s32 %v1027, %v1018
  %v1029 = vmul.u32 %v984, %v975
  %v1030 = vadd.s32 %v1006, %v1025
  %vm1031 = vc.u32 %v1006, %v1025
  %v1032 = vadd.s32 %v1028, 1
  %v1033 = vsel %vm1031, %v1032, %v1028
  %v1034 = vadd.s32 %v1029, %v1033
  %v1035 = vadd.s32 %v1034, 536870912
  %v1036 = vshrl.u32 %v1035, 30
  %v1037 = vshll.u32 %v1036, 30
  %v1038 = vsub.s32 %v1034, %v1037
  %vm1039 = vcmp.lt.s32.totalorder %v1038, 0
  %v1040 = vsub.s32 0, %v1038
  %v1041 = vsel %vm1039, %v1040, %v1038
  %v1042 = vclz %v1041
  %v1043 = vsub.s32 %v1042, 2
  %vm1044 = vcmp.gt.s32.totalorder 0, %v1043
  %v1045 = vsel %vm1044, 0, %v1043
  %v1046 = vsub.s32 32, %v1045
  %v1047 = vshll.u32 %v1038, %v1045
  %v1048 = vshrl.u32 %v1030, %v1046
  %v1049 = vor.u32 %v1047, %v1048
  %v1050 = vsub.s32 4294967266, %v1045
  %v1051 = vadd.s32 %v1050, 127
  %v1052 = vshll.u32 %v1051, 23
  %v1053 = vor.u32 4788187, %v1052
  %v1054 = vand.u32 2147483647, %v1053
  %v1056 = vcvt.s32.f32 %v1049
  %v1057 = vmul.f32 %v1056, %v1054
  %v1058 = vxor.u32 %v1057, 2147483648
  %v1059 = vsel %vm938, %v1058, %v1057
  %v1060 = vsub.s32 4, %v1036
  %v1061 = vsel %vm938, %v1060, %v1036
  %v1062 = vsel %vm937, %v596, %v1059
  %v1063 = vsel %vm937, 0, %v1061
  %v1064 = vmul.f32 %v1062, %v1062
  %v1065 = vmul.f32 %v1064, -0.001358992
  %v1066 = vadd.f32 %v1065, 0.041655596
  %v1067 = vmul.f32 %v1064, %v1066
  %v1068 = vadd.f32 %v1067, -0.4999988
  %v1069 = vmul.f32 %v1064, %v1068
  %v1070 = vadd.f32 1.0, %v1069
  %v1071 = vmul.f32 %v1062, %v1062
  %v1072 = vmul.f32 %v1071, -0.00019511016
  %v1073 = vadd.f32 %v1072, 0.008332121
  %v1074 = vmul.f32 %v1071, %v1073
  %v1075 = vadd.f32 %v1074, -0.16666654
  %v1076 = vmul.f32 %v1071, %v1075
  %v1077 = vadd.f32 %v1076, 1.0
  %v1078 = vmul.f32 %v1077, %v1062
  %vm1079 = vweird.f32 %v596
  %v1080 = vadd.s32 %v1063, 3
  %v1081 = vand.u32 %v1080, 3
  %vm1082 = vcmp.lt.s32.totalorder %v1081, 2
  %vm1083 = vcmp.eq.s32.totalorder %v1081, 0
  %v1084 = vxor.u32 %v1078, 2147483648
  %v1085 = vsel %vm1083, %v1070, %v1084
  %vm1086 = vcmp.eq.s32.totalorder %v1081, 2
  %v1087 = vxor.u32 %v1070, 2147483648
  %v1088 = vsel %vm1086, %v1087, %v1078
  %v1089 = vsel %vm1082, %v1085, %v1088
  %v1090 = vsel %vm1079, nan, %v1089
  %v1091 = vand.u32 2147483647, %v597
  %vm1092 = vcmp.le.f32.partialorder %v1091, 0.7853982
  %vm1093 = vcmp.lt.s32.totalorder %v597, 0
  %v1094 = vand.u32 %v597, 2139095040
  %v1095 = vshrl.u32 %v1094, 23
  %v1096 = vsub.s32 %v1095, 127
  %v1097 = vand.u32 2147483647, %v597
  %v1098 = vand.u32 %v1097, 8388607
  %v1099 = vor.u32 %v1098, 8388608
  %v1100 = vsub.s32 0, %v1099
  %v1101 = vadd.s32 %v1096, 1
  %vm1102 = vcmp.gt.s32.totalorder %v1101, 0
  %v1103 = vsel %vm1102, %v1101, 0
  %v1104 = vshrl.u32 %v1103, 5
  %v1105 = vand.u32 %v1103, 31
  %v1106 = vsub.s32 32, %v1105
  %v1107 = vshrl.u32 683565275, %v1106
  %v1108 = vshll.u32 683565275, %v1105
  %v1109 = vshrl.u32 2475754826, %v1106
  %v1110 = vor.u32 %v1108, %v1109
  %v1111 = vshll.u32 2475754826, %v1105
  %v1112 = vshrl.u32 2131351028, %v1106
  %v1113 = vor.u32 %v1111, %v1112
  %v1114 = vshll.u32 2131351028, %v1105
  %v1115 = vshrl.u32 2102212464, %v1106
  %v1116 = vor.u32 %v1114, %v1115
  %v1117 = vshll.u32 2102212464, %v1105
  %v1118 = vshrl.u32 920167782, %v1106
  %v1119 = vor.u32 %v1117, %v1118
  %v1120 = vshll.u32 920167782, %v1105
  %v1121 = vshrl.u32 1326507024, %v1106
  %v1122 = vor.u32 %v1120, %v1121
  %vm1123 = vcmp.lt.s32.totalorder %v1104, 1
  %vm1124 = vcmp.lt.s32.totalorder %v1104, 2
  %vm1125 = vcmp.lt.s32.totalorder %v1104, 3
  %vm1126 = vcmp.lt.s32.totalorder %v1104, 4
  %v1127 = vsel %vm1123, %v1107, %v1110
  %v1128 = vsel %vm1126, %v1116, 2102212464
  %v1129 = vsel %vm1125, %v1113, %v1128
  %v1130 = vsel %vm1124, %v1127, %v1129
  %v1131 = vsel %vm1123, %v1110, %v1113
  %v1132 = vsel %vm1126, %v1119, 920167782
  %v1133 = vsel %vm1125, %v1116, %v1132
  %v1134 = vsel %vm1124, %v1131, %v1133
  %v1135 = vsel %vm1123, %v1113, %v1116
  %v1136 = vsel %vm1126, %v1122, 1326507024
  %v1137 = vsel %vm1125, %v1119, %v1136
  %v1138 = vsel %vm1124, %v1135, %v1137
  %v1139 = vshll.u32 %v1099, 8
  %v1140 = vand.u32 %v1139, 65535
  %v1141 = vshrl.u32 %v1139, 16
  %v1142 = vand.u32 %v1138, 65535
  %v1143 = vshrl.u32 %v1138, 16
  %v1144 = vmul.u32 %v1140, %v1142
  %v1145 = vmul.u32 %v1140, %v1143
  %v1146 = vmul.u32 %v1141, %v1142
  %v1147 = vmul.u32 %v1141, %v1143
  %v1148 = vshll.u32 %v1145, 16
  %v1149 = vshrl.u32 %v1145, 16
  %v1150 = vshll.u32 %v1146, 16
  %v1151 = vshrl.u32 %v1146, 16
  %vm1152 = vc.u32 %v1144, %v1148
  %v1153 = vsel %vm1152, 1, 0
  %v1154 = vadd.s32 %v1144, %v1148
  %v1155 = vadd.s32 %v1147, %v1153
  %vm1156 = vc.u32 %v1154, %v1150
  %v1157 = vsel %vm1156, 1, 0
  %v1158 = vadd.s32 %v1154, %v1150
  %v1159 = vadd.s32 %v1155, %v1157
  %v1160 = vadd.s32 %v1159, %v1149
  %v1161 = vadd.s32 %v1160, %v1151
  %v1162 = vand.u32 %v1139, 65535
  %v1163 = vshrl.u32 %v1139, 16
  %v1164 = vand.u32 %v1134, 65535
  %v1165 = vshrl.u32 %v1134, 16
  %v1166 = vmul.u32 %v1162, %v1164
  %v1167 = vmul.u32 %v1162, %v1165
  %v1168 = vmul.u32 %v1163, %v1164
  %v1169 = vmul.u32 %v1163, %v1165
  %v1170 = vshll.u32 %v1167, 16
  %v1171 = vshrl.u32 %v1167, 16
  %v1172 = vshll.u32 %v1168, 16
  %v1173 = vshrl.u32 %v1168, 16
  %vm1174 = vc.u32 %v1166, %v1170
  %v1175 = vsel %vm1174, 1, 0
  %v1176 = vadd.s32 %v1166, %v1170
  %v1177 = vadd.s32 %v1169, %v1175
  %vm1178 = vc.u32 %v1176, %v1172
  %v1179 = vsel %vm1178, 1, 0
  %v1180 = vadd.s32 %v1176, %v1172
  %v1181 = vadd.s32 %v1177, %v1179
  %v1182 = vadd.s32 %v1181, %v1171
  %v1183 = vadd.s32 %v1182, %v1173
  %v1184 = vmul.u32 %v1139, %v1130
  %v1185 = vadd.s32 %v1161, %v1180
  %vm1186 = vc.u32 %v1161, %v1180
  %v1187 = vadd.s32 %v1183, 1
  %v1188 = vsel %vm1186, %v1187, %v1183
  %v1189 = vadd.s32 %v1184, %v1188
  %v1190 = vadd.s32 %v1189, 536870912
  %v1191 = vshrl.u32 %v1190, 30
  %v1192 = vshll.u32 %v1191, 30
  %v1193 = vsub.s32 %v1189, %v1192
  %vm1194 = vcmp.lt.s32.totalorder %v1193, 0
  %v1195 = vsub.s32 0, %v1193
  %v1196 = vsel %vm1194, %v1195, %v1193
  %v1197 = vclz %v1196
  %v1198 = vsub.s32 %v1197, 2
  %vm1199 = vcmp.gt.s32.totalorder 0, %v1198
  %v1200 = vsel %vm1199, 0, %v1198
  %v1201 = vsub.s32 32, %v1200
  %v1202 = vshll.u32 %v1193, %v1200
  %v1203 = vshrl.u32 %v1185, %v1201
  %v1204 = vor.u32 %v1202, %v1203
  %v1205 = vsub.s32 4294967266, %v1200
  %v1206 = vadd.s32 %v1205, 127
  %v1207 = vshll.u32 %v1206, 23
  %v1208 = vor.u32 4788187, %v1207
  %v1209 = vand.u32 2147483647, %v1208
  %v1211 = vcvt.s32.f32 %v1204
  %v1212 = vmul.f32 %v1211, %v1209
  %v1213 = vxor.u32 %v1212, 2147483648
  %v1214 = vsel %vm1093, %v1213, %v1212
  %v1215 = vsub.s32 4, %v1191
  %v1216 = vsel %vm1093, %v1215, %v1191
  %v1217 = vsel %vm1092, %v597, %v1214
  %v1218 = vsel %vm1092, 0, %v1216
  %v1219 = vmul.f32 %v1217, %v1217
  %v1220 = vmul.f32 %v1219, -0.001358992
  %v1221 = vadd.f32 %v1220, 0.041655596
  %v1222 = vmul.f32 %v1219, %v1221
  %v1223 = vadd.f32 %v1222, -0.4999988
  %v1224 = vmul.f32 %v1219, %v1223
  %v1225 = vadd.f32 1.0, %v1224
  %v1226 = vmul.f32 %v1217, %v1217
  %v1227 = vmul.f32 %v1226, -0.00019511016
  %v1228 = vadd.f32 %v1227, 0.008332121
  %v1229 = vmul.f32 %v1226, %v1228
  %v1230 = vadd.f32 %v1229, -0.16666654
  %v1231 = vmul.f32 %v1226, %v1230
  %v1232 = vadd.f32 %v1231, 1.0
  %v1233 = vmul.f32 %v1232, %v1217
  %vm1234 = vweird.f32 %v597
  %v1235 = vadd.s32 %v1218, 3
  %v1236 = vand.u32 %v1235, 3
  %vm1237 = vcmp.lt.s32.totalorder %v1236, 2
  %vm1238 = vcmp.eq.s32.totalorder %v1236, 0
  %v1239 = vxor.u32 %v1233, 2147483648
  %v1240 = vsel %vm1238, %v1225, %v1239
  %vm1241 = vcmp.eq.s32.totalorder %v1236, 2
  %v1242 = vxor.u32 %v1225, 2147483648
  %v1243 = vsel %vm1241, %v1242, %v1233
  %v1244 = vsel %vm1237, %v1240, %v1243
  %v1245 = vsel %vm1234, nan, %v1244
  %v1246 = vand.u32 2147483647, %v598
  %vm1247 = vcmp.le.f32.partialorder %v1246, 0.7853982
  %vm1248 = vcmp.lt.s32.totalorder %v598, 0
  %v1249 = vand.u32 %v598, 2139095040
  %v1250 = vshrl.u32 %v1249, 23
  %v1251 = vsub.s32 %v1250, 127
  %v1252 = vand.u32 2147483647, %v598
  %v1253 = vand.u32 %v1252, 8388607
  %v1254 = vor.u32 %v1253, 8388608
  %v1255 = vsub.s32 0, %v1254
  %v1256 = vadd.s32 %v1251, 1
  %vm1257 = vcmp.gt.s32.totalorder %v1256, 0
  %v1258 = vsel %vm1257, %v1256, 0
  %v1259 = vshrl.u32 %v1258, 5
  %v1260 = vand.u32 %v1258, 31
  %v1261 = vsub.s32 32, %v1260
  %v1262 = vshrl.u32 683565275, %v1261
  %v1263 = vshll.u32 683565275, %v1260
  %v1264 = vshrl.u32 2475754826, %v1261
  %v1265 = vor.u32 %v1263, %v1264
  %v1266 = vshll.u32 2475754826, %v1260
  %v1267 = vshrl.u32 2131351028, %v1261
  %v1268 = vor.u32 %v1266, %v1267
  %v1269 = vshll.u32 2131351028, %v1260
  %v1270 = vshrl.u32 2102212464, %v1261
  %v1271 = vor.u32 %v1269, %v1270
  %v1272 = vshll.u32 2102212464, %v1260
  %v1273 = vshrl.u32 920167782, %v1261
  %v1274 = vor.u32 %v1272, %v1273
  %v1275 = vshll.u32 920167782, %v1260
  %v1276 = vshrl.u32 1326507024, %v1261
  %v1277 = vor.u32 %v1275, %v1276
  %vm1278 = vcmp.lt.s32.totalorder %v1259, 1
  %vm1279 = vcmp.lt.s32.totalorder %v1259, 2
  %vm1280 = vcmp.lt.s32.totalorder %v1259, 3
  %vm1281 = vcmp.lt.s32.totalorder %v1259, 4
  %v1282 = vsel %vm1278, %v1262, %v1265
  %v1283 = vsel %vm1281, %v1271, 2102212464
  %v1284 = vsel %vm1280, %v1268, %v1283
  %v1285 = vsel %vm1279, %v1282, %v1284
  %v1286 = vsel %vm1278, %v1265, %v1268
  %v1287 = vsel %vm1281, %v1274, 920167782
  %v1288 = vsel %vm1280, %v1271, %v1287
  %v1289 = vsel %vm1279, %v1286, %v1288
  %v1290 = vsel %vm1278, %v1268, %v1271
  %v1291 = vsel %vm1281, %v1277, 1326507024
  %v1292 = vsel %vm1280, %v1274, %v1291
  %v1293 = vsel %vm1279, %v1290, %v1292
  %v1294 = vshll.u32 %v1254, 8
  %v1295 = vand.u32 %v1294, 65535
  %v1296 = vshrl.u32 %v1294, 16
  %v1297 = vand.u32 %v1293, 65535
  %v1298 = vshrl.u32 %v1293, 16
  %v1299 = vmul.u32 %v1295, %v1297
  %v1300 = vmul.u32 %v1295, %v1298
  %v1301 = vmul.u32 %v1296, %v1297
  %v1302 = vmul.u32 %v1296, %v1298
  %v1303 = vshll.u32 %v1300, 16
  %v1304 = vshrl.u32 %v1300, 16
  %v1305 = vshll.u32 %v1301, 16
  %v1306 = vshrl.u32 %v1301, 16
  %vm1307 = vc.u32 %v1299, %v1303
  %v1308 = vsel %vm1307, 1, 0
  %v1309 = vadd.s32 %v1299, %v1303
  %v1310 = vadd.s32 %v1302, %v1308
  %vm1311 = vc.u32 %v1309, %v1305
  %v1312 = vsel %vm1311, 1, 0
  %v1313 = vadd.s32 %v1309, %v1305
  %v1314 = vadd.s32 %v1310, %v1312
  %v1315 = vadd.s32 %v1314, %v1304
  %v1316 = vadd.s32 %v1315, %v1306
  %v1317 = vand.u32 %v1294, 65535
  %v1318 = vshrl.u32 %v1294, 16
  %v1319 = vand.u32 %v1289, 65535
  %v1320 = vshrl.u32 %v1289, 16
  %v1321 = vmul.u32 %v1317, %v1319
  %v1322 = vmul.u32 %v1317, %v1320
  %v1323 = vmul.u32 %v1318, %v1319
  %v1324 = vmul.u32 %v1318, %v1320
  %v1325 = vshll.u32 %v1322, 16
  %v1326 = vshrl.u32 %v1322, 16
  %v1327 = vshll.u32 %v1323, 16
  %v1328 = vshrl.u32 %v1323, 16
  %vm1329 = vc.u32 %v1321, %v1325
  %v1330 = vsel %vm1329, 1, 0
  %v1331 = vadd.s32 %v1321, %v1325
  %v1332 = vadd.s32 %v1324, %v1330
  %vm1333 = vc.u32 %v1331, %v1327
  %v1334 = vsel %vm1333, 1, 0
  %v1335 = vadd.s32 %v1331, %v1327
  %v1336 = vadd.s32 %v1332, %v1334
  %v1337 = vadd.s32 %v1336, %v1326
  %v1338 = vadd.s32 %v1337, %v1328
  %v1339 = vmul.u32 %v1294, %v1285
  %v1340 = vadd.s32 %v1316, %v1335
  %vm1341 = vc.u32 %v1316, %v1335
  %v1342 = vadd.s32 %v1338, 1
  %v1343 = vsel %vm1341, %v1342, %v1338
  %v1344 = vadd.s32 %v1339, %v1343
  %v1345 = vadd.s32 %v1344, 536870912
  %v1346 = vshrl.u32 %v1345, 30
  %v1347 = vshll.u32 %v1346, 30
  %v1348 = vsub.s32 %v1344, %v1347
  %vm1349 = vcmp.lt.s32.totalorder %v1348, 0
  %v1350 = vsub.s32 0, %v1348
  %v1351 = vsel %vm1349, %v1350, %v1348
  %v1352 = vclz %v1351
  %v1353 = vsub.s32 %v1352, 2
  %vm1354 = vcmp.gt.s32.totalorder 0, %v1353
  %v1355 = vsel %vm1354, 0, %v1353
  %v1356 = vsub.s32 32, %v1355
  %v1357 = vshll.u32 %v1348, %v1355
  %v1358 = vshrl.u32 %v1340, %v1356
  %v1359 = vor.u32 %v1357, %v1358
  %v1360 = vsub.s32 4294967266, %v1355
  %v1361 = vadd.s32 %v1360, 127
  %v1362 = vshll.u32 %v1361, 23
  %v1363 = vor.u32 4788187, %v1362
  %v1364 = vand.u32 2147483647, %v1363
  %v1366 = vcvt.s32.f32 %v1359
  %v1367 = vmul.f32 %v1366, %v1364
  %v1368 = vxor.u32 %v1367, 2147483648
  %v1369 = vsel %vm1248, %v1368, %v1367
  %v1370 = vsub.s32 4, %v1346
  %v1371 = vsel %vm1248, %v1370, %v1346
  %v1372 = vsel %vm1247, %v598, %v1369
  %v1373 = vsel %vm1247, 0, %v1371
  %v1374 = vmul.f32 %v1372, %v1372
  %v1375 = vmul.f32 %v1374, -0.001358992
  %v1376 = vadd.f32 %v1375, 0.041655596
  %v1377 = vmul.f32 %v1374, %v1376
  %v1378 = vadd.f32 %v1377, -0.4999988
  %v1379 = vmul.f32 %v1374, %v1378
  %v1380 = vadd.f32 1.0, %v1379
  %v1381 = vmul.f32 %v1372, %v1372
  %v1382 = vmul.f32 %v1381, -0.00019511016
  %v1383 = vadd.f32 %v1382, 0.008332121
  %v1384 = vmul.f32 %v1381, %v1383
  %v1385 = vadd.f32 %v1384, -0.16666654
  %v1386 = vmul.f32 %v1381, %v1385
  %v1387 = vadd.f32 %v1386, 1.0
  %v1388 = vmul.f32 %v1387, %v1372
  %vm1389 = vweird.f32 %v598
  %v1390 = vadd.s32 %v1373, 3
  %v1391 = vand.u32 %v1390, 3
  %vm1392 = vcmp.lt.s32.totalorder %v1391, 2
  %vm1393 = vcmp.eq.s32.totalorder %v1391, 0
  %v1394 = vxor.u32 %v1388, 2147483648
  %v1395 = vsel %vm1393, %v1380, %v1394
  %vm1396 = vcmp.eq.s32.totalorder %v1391, 2
  %v1397 = vxor.u32 %v1380, 2147483648
  %v1398 = vsel %vm1396, %v1397, %v1388
  %v1399 = vsel %vm1392, %v1395, %v1398
  %v1400 = vsel %vm1389, nan, %v1399
  %v1401 = vand.u32 2147483647, %v599
  %vm1402 = vcmp.le.f32.partialorder %v1401, 0.7853982
  %vm1403 = vcmp.lt.s32.totalorder %v599, 0
  %v1404 = vand.u32 %v599, 2139095040
  %v1405 = vshrl.u32 %v1404, 23
  %v1406 = vsub.s32 %v1405, 127
  %v1407 = vand.u32 2147483647, %v599
  %v1408 = vand.u32 %v1407, 8388607
  %v1409 = vor.u32 %v1408, 8388608
  %v1410 = vsub.s32 0, %v1409
  %v1411 = vadd.s32 %v1406, 1
  %vm1412 = vcmp.gt.s32.totalorder %v1411, 0
  %v1413 = vsel %vm1412, %v1411, 0
  %v1414 = vshrl.u32 %v1413, 5
  %v1415 = vand.u32 %v1413, 31
  %v1416 = vsub.s32 32, %v1415
  %v1417 = vshrl.u32 683565275, %v1416
  %v1418 = vshll.u32 683565275, %v1415
  %v1419 = vshrl.u32 2475754826, %v1416
  %v1420 = vor.u32 %v1418, %v1419
  %v1421 = vshll.u32 2475754826, %v1415
  %v1422 = vshrl.u32 2131351028, %v1416
  %v1423 = vor.u32 %v1421, %v1422
  %v1424 = vshll.u32 2131351028, %v1415
  %v1425 = vshrl.u32 2102212464, %v1416
  %v1426 = vor.u32 %v1424, %v1425
  %v1427 = vshll.u32 2102212464, %v1415
  %v1428 = vshrl.u32 920167782, %v1416
  %v1429 = vor.u32 %v1427, %v1428
  %v1430 = vshll.u32 920167782, %v1415
  %v1431 = vshrl.u32 1326507024, %v1416
  %v1432 = vor.u32 %v1430, %v1431
  %vm1433 = vcmp.lt.s32.totalorder %v1414, 1
  %vm1434 = vcmp.lt.s32.totalorder %v1414, 2
  %vm1435 = vcmp.lt.s32.totalorder %v1414, 3
  %vm1436 = vcmp.lt.s32.totalorder %v1414, 4
  %v1437 = vsel %vm1433, %v1417, %v1420
  %v1438 = vsel %vm1436, %v1426, 2102212464
  %v1439 = vsel %vm1435, %v1423, %v1438
  %v1440 = vsel %vm1434, %v1437, %v1439
  %v1441 = vsel %vm1433, %v1420, %v1423
  %v1442 = vsel %vm1436, %v1429, 920167782
  %v1443 = vsel %vm1435, %v1426, %v1442
  %v1444 = vsel %vm1434, %v1441, %v1443
  %v1445 = vsel %vm1433, %v1423, %v1426
  %v1446 = vsel %vm1436, %v1432, 1326507024
  %v1447 = vsel %vm1435, %v1429, %v1446
  %v1448 = vsel %vm1434, %v1445, %v1447
  %v1449 = vshll.u32 %v1409, 8
  %v1450 = vand.u32 %v1449, 65535
  %v1451 = vshrl.u32 %v1449, 16
  %v1452 = vand.u32 %v1448, 65535
  %v1453 = vshrl.u32 %v1448, 16
  %v1454 = vmul.u32 %v1450, %v1452
  %v1455 = vmul.u32 %v1450, %v1453
  %v1456 = vmul.u32 %v1451, %v1452
  %v1457 = vmul.u32 %v1451, %v1453
  %v1458 = vshll.u32 %v1455, 16
  %v1459 = vshrl.u32 %v1455, 16
  %v1460 = vshll.u32 %v1456, 16
  %v1461 = vshrl.u32 %v1456, 16
  %vm1462 = vc.u32 %v1454, %v1458
  %v1463 = vsel %vm1462, 1, 0
  %v1464 = vadd.s32 %v1454, %v1458
  %v1465 = vadd.s32 %v1457, %v1463
  %vm1466 = vc.u32 %v1464, %v1460
  %v1467 = vsel %vm1466, 1, 0
  %v1468 = vadd.s32 %v1464, %v1460
  %v1469 = vadd.s32 %v1465, %v1467
  %v1470 = vadd.s32 %v1469, %v1459
  %v1471 = vadd.s32 %v1470, %v1461
  %v1472 = vand.u32 %v1449, 65535
  %v1473 = vshrl.u32 %v1449, 16
  %v1474 = vand.u32 %v1444, 65535
  %v1475 = vshrl.u32 %v1444, 16
  %v1476 = vmul.u32 %v1472, %v1474
  %v1477 = vmul.u32 %v1472, %v1475
  %v1478 = vmul.u32 %v1473, %v1474
  %v1479 = vmul.u32 %v1473, %v1475
  %v1480 = vshll.u32 %v1477, 16
  %v1481 = vshrl.u32 %v1477, 16
  %v1482 = vshll.u32 %v1478, 16
  %v1483 = vshrl.u32 %v1478, 16
  %vm1484 = vc.u32 %v1476, %v1480
  %v1485 = vsel %vm1484, 1, 0
  %v1486 = vadd.s32 %v1476, %v1480
  %v1487 = vadd.s32 %v1479, %v1485
  %vm1488 = vc.u32 %v1486, %v1482
  %v1489 = vsel %vm1488, 1, 0
  %v1490 = vadd.s32 %v1486, %v1482
  %v1491 = vadd.s32 %v1487, %v1489
  %v1492 = vadd.s32 %v1491, %v1481
  %v1493 = vadd.s32 %v1492, %v1483
  %v1494 = vmul.u32 %v1449, %v1440
  %v1495 = vadd.s32 %v1471, %v1490
  %vm1496 = vc.u32 %v1471, %v1490
  %v1497 = vadd.s32 %v1493, 1
  %v1498 = vsel %vm1496, %v1497, %v1493
  %v1499 = vadd.s32 %v1494, %v1498
  %v1500 = vadd.s32 %v1499, 536870912
  %v1501 = vshrl.u32 %v1500, 30
  %v1502 = vshll.u32 %v1501, 30
  %v1503 = vsub.s32 %v1499, %v1502
  %vm1504 = vcmp.lt.s32.totalorder %v1503, 0
  %v1505 = vsub.s32 0, %v1503
  %v1506 = vsel %vm1504, %v1505, %v1503
  %v1507 = vclz %v1506
  %v1508 = vsub.s32 %v1507, 2
  %vm1509 = vcmp.gt.s32.totalorder 0, %v1508
  %v1510 = vsel %vm1509, 0, %v1508
  %v1511 = vsub.s32 32, %v1510
  %v1512 = vshll.u32 %v1503, %v1510
  %v1513 = vshrl.u32 %v1495, %v1511
  %v1514 = vor.u32 %v1512, %v1513
  %v1515 = vsub.s32 4294967266, %v1510
  %v1516 = vadd.s32 %v1515, 127
  %v1517 = vshll.u32 %v1516, 23
  %v1518 = vor.u32 4788187, %v1517
  %v1519 = vand.u32 2147483647, %v1518
  %v1521 = vcvt.s32.f32 %v1514
  %v1522 = vmul.f32 %v1521, %v1519
  %v1523 = vxor.u32 %v1522, 2147483648
  %v1524 = vsel %vm1403, %v1523, %v1522
  %v1525 = vsub.s32 4, %v1501
  %v1526 = vsel %vm1403, %v1525, %v1501
  %v1527 = vsel %vm1402, %v599, %v1524
  %v1528 = vsel %vm1402, 0, %v1526
  %v1529 = vmul.f32 %v1527, %v1527
  %v1530 = vmul.f32 %v1529, -0.001358992
  %v1531 = vadd.f32 %v1530, 0.041655596
  %v1532 = vmul.f32 %v1529, %v1531
  %v1533 = vadd.f32 %v1532, -0.4999988
  %v1534 = vmul.f32 %v1529, %v1533
  %v1535 = vadd.f32 1.0, %v1534
  %v1536 = vmul.f32 %v1527, %v1527
  %v1537 = vmul.f32 %v1536, -0.00019511016
  %v1538 = vadd.f32 %v1537, 0.008332121
  %v1539 = vmul.f32 %v1536, %v1538
  %v1540 = vadd.f32 %v1539, -0.16666654
  %v1541 = vmul.f32 %v1536, %v1540
  %v1542 = vadd.f32 %v1541, 1.0
  %v1543 = vmul.f32 %v1542, %v1527
  %vm1544 = vweird.f32 %v599
  %v1545 = vadd.s32 %v1528, 3
  %v1546 = vand.u32 %v1545, 3
  %vm1547 = vcmp.lt.s32.totalorder %v1546, 2
  %vm1548 = vcmp.eq.s32.totalorder %v1546, 0
  %v1549 = vxor.u32 %v1543, 2147483648
  %v1550 = vsel %vm1548, %v1535, %v1549
  %vm1551 = vcmp.eq.s32.totalorder %v1546, 2
  %v1552 = vxor.u32 %v1535, 2147483648
  %v1553 = vsel %vm1551, %v1552, %v1543
  %v1554 = vsel %vm1547, %v1550, %v1553
  %v1555 = vsel %vm1544, nan, %v1554
  %v1556 = vand.u32 2147483647, %v600
  %vm1557 = vcmp.le.f32.partialorder %v1556, 0.7853982
  %vm1558 = vcmp.lt.s32.totalorder %v600, 0
  %v1559 = vand.u32 %v600, 2139095040
  %v1560 = vshrl.u32 %v1559, 23
  %v1561 = vsub.s32 %v1560, 127
  %v1562 = vand.u32 2147483647, %v600
  %v1563 = vand.u32 %v1562, 8388607
  %v1564 = vor.u32 %v1563, 8388608
  %v1565 = vsub.s32 0, %v1564
  %v1566 = vadd.s32 %v1561, 1
  %vm1567 = vcmp.gt.s32.totalorder %v1566, 0
  %v1568 = vsel %vm1567, %v1566, 0
  %v1569 = vshrl.u32 %v1568, 5
  %v1570 = vand.u32 %v1568, 31
  %v1571 = vsub.s32 32, %v1570
  %v1572 = vshrl.u32 683565275, %v1571
  %v1573 = vshll.u32 683565275, %v1570
  %v1574 = vshrl.u32 2475754826, %v1571
  %v1575 = vor.u32 %v1573, %v1574
  %v1576 = vshll.u32 2475754826, %v1570
  %v1577 = vshrl.u32 2131351028, %v1571
  %v1578 = vor.u32 %v1576, %v1577
  %v1579 = vshll.u32 2131351028, %v1570
  %v1580 = vshrl.u32 2102212464, %v1571
  %v1581 = vor.u32 %v1579, %v1580
  %v1582 = vshll.u32 2102212464, %v1570
  %v1583 = vshrl.u32 920167782, %v1571
  %v1584 = vor.u32 %v1582, %v1583
  %v1585 = vshll.u32 920167782, %v1570
  %v1586 = vshrl.u32 1326507024, %v1571
  %v1587 = vor.u32 %v1585, %v1586
  %vm1588 = vcmp.lt.s32.totalorder %v1569, 1
  %vm1589 = vcmp.lt.s32.totalorder %v1569, 2
  %vm1590 = vcmp.lt.s32.totalorder %v1569, 3
  %vm1591 = vcmp.lt.s32.totalorder %v1569, 4
  %v1592 = vsel %vm1588, %v1572, %v1575
  %v1593 = vsel %vm1591, %v1581, 2102212464
  %v1594 = vsel %vm1590, %v1578, %v1593
  %v1595 = vsel %vm1589, %v1592, %v1594
  %v1596 = vsel %vm1588, %v1575, %v1578
  %v1597 = vsel %vm1591, %v1584, 920167782
  %v1598 = vsel %vm1590, %v1581, %v1597
  %v1599 = vsel %vm1589, %v1596, %v1598
  %v1600 = vsel %vm1588, %v1578, %v1581
  %v1601 = vsel %vm1591, %v1587, 1326507024
  %v1602 = vsel %vm1590, %v1584, %v1601
  %v1603 = vsel %vm1589, %v1600, %v1602
  %v1604 = vshll.u32 %v1564, 8
  %v1605 = vand.u32 %v1604, 65535
  %v1606 = vshrl.u32 %v1604, 16
  %v1607 = vand.u32 %v1603, 65535
  %v1608 = vshrl.u32 %v1603, 16
  %v1609 = vmul.u32 %v1605, %v1607
  %v1610 = vmul.u32 %v1605, %v1608
  %v1611 = vmul.u32 %v1606, %v1607
  %v1612 = vmul.u32 %v1606, %v1608
  %v1613 = vshll.u32 %v1610, 16
  %v1614 = vshrl.u32 %v1610, 16
  %v1615 = vshll.u32 %v1611, 16
  %v1616 = vshrl.u32 %v1611, 16
  %vm1617 = vc.u32 %v1609, %v1613
  %v1618 = vsel %vm1617, 1, 0
  %v1619 = vadd.s32 %v1609, %v1613
  %v1620 = vadd.s32 %v1612, %v1618
  %vm1621 = vc.u32 %v1619, %v1615
  %v1622 = vsel %vm1621, 1, 0
  %v1623 = vadd.s32 %v1619, %v1615
  %v1624 = vadd.s32 %v1620, %v1622
  %v1625 = vadd.s32 %v1624, %v1614
  %v1626 = vadd.s32 %v1625, %v1616
  %v1627 = vand.u32 %v1604, 65535
  %v1628 = vshrl.u32 %v1604, 16
  %v1629 = vand.u32 %v1599, 65535
  %v1630 = vshrl.u32 %v1599, 16
  %v1631 = vmul.u32 %v1627, %v1629
  %v1632 = vmul.u32 %v1627, %v1630
  %v1633 = vmul.u32 %v1628, %v1629
  %v1634 = vmul.u32 %v1628, %v1630
  %v1635 = vshll.u32 %v1632, 16
  %v1636 = vshrl.u32 %v1632, 16
  %v1637 = vshll.u32 %v1633, 16
  %v1638 = vshrl.u32 %v1633, 16
  %vm1639 = vc.u32 %v1631, %v1635
  %v1640 = vsel %vm1639, 1, 0
  %v1641 = vadd.s32 %v1631, %v1635
  %v1642 = vadd.s32 %v1634, %v1640
  %vm1643 = vc.u32 %v1641, %v1637
  %v1644 = vsel %vm1643, 1, 0
  %v1645 = vadd.s32 %v1641, %v1637
  %v1646 = vadd.s32 %v1642, %v1644
  %v1647 = vadd.s32 %v1646, %v1636
  %v1648 = vadd.s32 %v1647, %v1638
  %v1649 = vmul.u32 %v1604, %v1595
  %v1650 = vadd.s32 %v1626, %v1645
  %vm1651 = vc.u32 %v1626, %v1645
  %v1652 = vadd.s32 %v1648, 1
  %v1653 = vsel %vm1651, %v1652, %v1648
  %v1654 = vadd.s32 %v1649, %v1653
  %v1655 = vadd.s32 %v1654, 536870912
  %v1656 = vshrl.u32 %v1655, 30
  %v1657 = vshll.u32 %v1656, 30
  %v1658 = vsub.s32 %v1654, %v1657
  %vm1659 = vcmp.lt.s32.totalorder %v1658, 0
  %v1660 = vsub.s32 0, %v1658
  %v1661 = vsel %vm1659, %v1660, %v1658
  %v1662 = vclz %v1661
  %v1663 = vsub.s32 %v1662, 2
  %vm1664 = vcmp.gt.s32.totalorder 0, %v1663
  %v1665 = vsel %vm1664, 0, %v1663
  %v1666 = vsub.s32 32, %v1665
  %v1667 = vshll.u32 %v1658, %v1665
  %v1668 = vshrl.u32 %v1650, %v1666
  %v1669 = vor.u32 %v1667, %v1668
  %v1670 = vsub.s32 4294967266, %v1665
  %v1671 = vadd.s32 %v1670, 127
  %v1672 = vshll.u32 %v1671, 23
  %v1673 = vor.u32 4788187, %v1672
  %v1674 = vand.u32 2147483647, %v1673
  %v1676 = vcvt.s32.f32 %v1669
  %v1677 = vmul.f32 %v1676, %v1674
  %v1678 = vxor.u32 %v1677, 2147483648
  %v1679 = vsel %vm1558, %v1678, %v1677
  %v1680 = vsub.s32 4, %v1656
  %v1681 = vsel %vm1558, %v1680, %v1656
  %v1682 = vsel %vm1557, %v600, %v1679
  %v1683 = vsel %vm1557, 0, %v1681
  %v1684 = vmul.f32 %v1682, %v1682
  %v1685 = vmul.f32 %v1684, -0.001358992
  %v1686 = vadd.f32 %v1685, 0.041655596
  %v1687 = vmul.f32 %v1684, %v1686
  %v1688 = vadd.f32 %v1687, -0.4999988
  %v1689 = vmul.f32 %v1684, %v1688
  %v1690 = vadd.f32 1.0, %v1689
  %v1691 = vmul.f32 %v1682, %v1682
  %v1692 = vmul.f32 %v1691, -0.00019511016
  %v1693 = vadd.f32 %v1692, 0.008332121
  %v1694 = vmul.f32 %v1691, %v1693
  %v1695 = vadd.f32 %v1694, -0.16666654
  %v1696 = vmul.f32 %v1691, %v1695
  %v1697 = vadd.f32 %v1696, 1.0
  %v1698 = vmul.f32 %v1697, %v1682
  %vm1699 = vweird.f32 %v600
  %v1700 = vadd.s32 %v1683, 3
  %v1701 = vand.u32 %v1700, 3
  %vm1702 = vcmp.lt.s32.totalorder %v1701, 2
  %vm1703 = vcmp.eq.s32.totalorder %v1701, 0
  %v1704 = vxor.u32 %v1698, 2147483648
  %v1705 = vsel %vm1703, %v1690, %v1704
  %vm1706 = vcmp.eq.s32.totalorder %v1701, 2
  %v1707 = vxor.u32 %v1690, 2147483648
  %v1708 = vsel %vm1706, %v1707, %v1698
  %v1709 = vsel %vm1702, %v1705, %v1708
  %v1710 = vsel %vm1699, nan, %v1709
  %v1711 = vand.u32 2147483647, %v601
  %vm1712 = vcmp.le.f32.partialorder %v1711, 0.7853982
  %vm1713 = vcmp.lt.s32.totalorder %v601, 0
  %v1714 = vand.u32 %v601, 2139095040
  %v1715 = vshrl.u32 %v1714, 23
  %v1716 = vsub.s32 %v1715, 127
  %v1717 = vand.u32 2147483647, %v601
  %v1718 = vand.u32 %v1717, 8388607
  %v1719 = vor.u32 %v1718, 8388608
  %v1720 = vsub.s32 0, %v1719
  %v1721 = vadd.s32 %v1716, 1
  %vm1722 = vcmp.gt.s32.totalorder %v1721, 0
  %v1723 = vsel %vm1722, %v1721, 0
  %v1724 = vshrl.u32 %v1723, 5
  %v1725 = vand.u32 %v1723, 31
  %v1726 = vsub.s32 32, %v1725
  %v1727 = vshrl.u32 683565275, %v1726
  %v1728 = vshll.u32 683565275, %v1725
  %v1729 = vshrl.u32 2475754826, %v1726
  %v1730 = vor.u32 %v1728, %v1729
  %v1731 = vshll.u32 2475754826, %v1725
  %v1732 = vshrl.u32 2131351028, %v1726
  %v1733 = vor.u32 %v1731, %v1732
  %v1734 = vshll.u32 2131351028, %v1725
  %v1735 = vshrl.u32 2102212464, %v1726
  %v1736 = vor.u32 %v1734, %v1735
  %v1737 = vshll.u32 2102212464, %v1725
  %v1738 = vshrl.u32 920167782, %v1726
  %v1739 = vor.u32 %v1737, %v1738
  %v1740 = vshll.u32 920167782, %v1725
  %v1741 = vshrl.u32 1326507024, %v1726
  %v1742 = vor.u32 %v1740, %v1741
  %vm1743 = vcmp.lt.s32.totalorder %v1724, 1
  %vm1744 = vcmp.lt.s32.totalorder %v1724, 2
  %vm1745 = vcmp.lt.s32.totalorder %v1724, 3
  %vm1746 = vcmp.lt.s32.totalorder %v1724, 4
  %v1747 = vsel %vm1743, %v1727, %v1730
  %v1748 = vsel %vm1746, %v1736, 2102212464
  %v1749 = vsel %vm1745, %v1733, %v1748
  %v1750 = vsel %vm1744, %v1747, %v1749
  %v1751 = vsel %vm1743, %v1730, %v1733
  %v1752 = vsel %vm1746, %v1739, 920167782
  %v1753 = vsel %vm1745, %v1736, %v1752
  %v1754 = vsel %vm1744, %v1751, %v1753
  %v1755 = vsel %vm1743, %v1733, %v1736
  %v1756 = vsel %vm1746, %v1742, 1326507024
  %v1757 = vsel %vm1745, %v1739, %v1756
  %v1758 = vsel %vm1744, %v1755, %v1757
  %v1759 = vshll.u32 %v1719, 8
  %v1760 = vand.u32 %v1759, 65535
  %v1761 = vshrl.u32 %v1759, 16
  %v1762 = vand.u32 %v1758, 65535
  %v1763 = vshrl.u32 %v1758, 16
  %v1764 = vmul.u32 %v1760, %v1762
  %v1765 = vmul.u32 %v1760, %v1763
  %v1766 = vmul.u32 %v1761, %v1762
  %v1767 = vmul.u32 %v1761, %v1763
  %v1768 = vshll.u32 %v1765, 16
  %v1769 = vshrl.u32 %v1765, 16
  %v1770 = vshll.u32 %v1766, 16
  %v1771 = vshrl.u32 %v1766, 16
  %vm1772 = vc.u32 %v1764, %v1768
  %v1773 = vsel %vm1772, 1, 0
  %v1774 = vadd.s32 %v1764, %v1768
  %v1775 = vadd.s32 %v1767, %v1773
  %vm1776 = vc.u32 %v1774, %v1770
  %v1777 = vsel %vm1776, 1, 0
  %v1778 = vadd.s32 %v1774, %v1770
  %v1779 = vadd.s32 %v1775, %v1777
  %v1780 = vadd.s32 %v1779, %v1769
  %v1781 = vadd.s32 %v1780, %v1771
  %v1782 = vand.u32 %v1759, 65535
  %v1783 = vshrl.u32 %v1759, 16
  %v1784 = vand.u32 %v1754, 65535
  %v1785 = vshrl.u32 %v1754, 16
  %v1786 = vmul.u32 %v1782, %v1784
  %v1787 = vmul.u32 %v1782, %v1785
  %v1788 = vmul.u32 %v1783, %v1784
  %v1789 = vmul.u32 %v1783, %v1785
  %v1790 = vshll.u32 %v1787, 16
  %v1791 = vshrl.u32 %v1787, 16
  %v1792 = vshll.u32 %v1788, 16
  %v1793 = vshrl.u32 %v1788, 16
  %vm1794 = vc.u32 %v1786, %v1790
  %v1795 = vsel %vm1794, 1, 0
  %v1796 = vadd.s32 %v1786, %v1790
  %v1797 = vadd.s32 %v1789, %v1795
  %vm1798 = vc.u32 %v1796, %v1792
  %v1799 = vsel %vm1798, 1, 0
  %v1800 = vadd.s32 %v1796, %v1792
  %v1801 = vadd.s32 %v1797, %v1799
  %v1802 = vadd.s32 %v1801, %v1791
  %v1803 = vadd.s32 %v1802, %v1793
  %v1804 = vmul.u32 %v1759, %v1750
  %v1805 = vadd.s32 %v1781, %v1800
  %vm1806 = vc.u32 %v1781, %v1800
  %v1807 = vadd.s32 %v1803, 1
  %v1808 = vsel %vm1806, %v1807, %v1803
  %v1809 = vadd.s32 %v1804, %v1808
  %v1810 = vadd.s32 %v1809, 536870912
  %v1811 = vshrl.u32 %v1810, 30
  %v1812 = vshll.u32 %v1811, 30
  %v1813 = vsub.s32 %v1809, %v1812
  %vm1814 = vcmp.lt.s32.totalorder %v1813, 0
  %v1815 = vsub.s32 0, %v1813
  %v1816 = vsel %vm1814, %v1815, %v1813
  %v1817 = vclz %v1816
  %v1818 = vsub.s32 %v1817, 2
  %vm1819 = vcmp.gt.s32.totalorder 0, %v1818
  %v1820 = vsel %vm1819, 0, %v1818
  %v1821 = vsub.s32 32, %v1820
  %v1822 = vshll.u32 %v1813, %v1820
  %v1823 = vshrl.u32 %v1805, %v1821
  %v1824 = vor.u32 %v1822, %v1823
  %v1825 = vsub.s32 4294967266, %v1820
  %v1826 = vadd.s32 %v1825, 127
  %v1827 = vshll.u32 %v1826, 23
  %v1828 = vor.u32 4788187, %v1827
  %v1829 = vand.u32 2147483647, %v1828
  %v1831 = vcvt.s32.f32 %v1824
  %v1832 = vmul.f32 %v1831, %v1829
  %v1833 = vxor.u32 %v1832, 2147483648
  %v1834 = vsel %vm1713, %v1833, %v1832
  %v1835 = vsub.s32 4, %v1811
  %v1836 = vsel %vm1713, %v1835, %v1811
  %v1837 = vsel %vm1712, %v601, %v1834
  %v1838 = vsel %vm1712, 0, %v1836
  %v1839 = vmul.f32 %v1837, %v1837
  %v1840 = vmul.f32 %v1839, -0.001358992
  %v1841 = vadd.f32 %v1840, 0.041655596
  %v1842 = vmul.f32 %v1839, %v1841
  %v1843 = vadd.f32 %v1842, -0.4999988
  %v1844 = vmul.f32 %v1839, %v1843
  %v1845 = vadd.f32 1.0, %v1844
  %v1846 = vmul.f32 %v1837, %v1837
  %v1847 = vmul.f32 %v1846, -0.00019511016
  %v1848 = vadd.f32 %v1847, 0.008332121
  %v1849 = vmul.f32 %v1846, %v1848
  %v1850 = vadd.f32 %v1849, -0.16666654
  %v1851 = vmul.f32 %v1846, %v1850
  %v1852 = vadd.f32 %v1851, 1.0
  %v1853 = vmul.f32 %v1852, %v1837
  %vm1854 = vweird.f32 %v601
  %v1855 = vadd.s32 %v1838, 3
  %v1856 = vand.u32 %v1855, 3
  %vm1857 = vcmp.lt.s32.totalorder %v1856, 2
  %vm1858 = vcmp.eq.s32.totalorder %v1856, 0
  %v1859 = vxor.u32 %v1853, 2147483648
  %v1860 = vsel %vm1858, %v1845, %v1859
  %vm1861 = vcmp.eq.s32.totalorder %v1856, 2
  %v1862 = vxor.u32 %v1845, 2147483648
  %v1863 = vsel %vm1861, %v1862, %v1853
  %v1864 = vsel %vm1857, %v1860, %v1863
  %v1865 = vsel %vm1854, nan, %v1864
  %v1866 = vand.u32 2147483647, %v602
  %vm1867 = vcmp.le.f32.partialorder %v1866, 0.7853982
  %vm1868 = vcmp.lt.s32.totalorder %v602, 0
  %v1869 = vand.u32 %v602, 2139095040
  %v1870 = vshrl.u32 %v1869, 23
  %v1871 = vsub.s32 %v1870, 127
  %v1872 = vand.u32 2147483647, %v602
  %v1873 = vand.u32 %v1872, 8388607
  %v1874 = vor.u32 %v1873, 8388608
  %v1875 = vsub.s32 0, %v1874
  %v1876 = vadd.s32 %v1871, 1
  %vm1877 = vcmp.gt.s32.totalorder %v1876, 0
  %v1878 = vsel %vm1877, %v1876, 0
  %v1879 = vshrl.u32 %v1878, 5
  %v1880 = vand.u32 %v1878, 31
  %v1881 = vsub.s32 32, %v1880
  %v1882 = vshrl.u32 683565275, %v1881
  %v1883 = vshll.u32 683565275, %v1880
  %v1884 = vshrl.u32 2475754826, %v1881
  %v1885 = vor.u32 %v1883, %v1884
  %v1886 = vshll.u32 2475754826, %v1880
  %v1887 = vshrl.u32 2131351028, %v1881
  %v1888 = vor.u32 %v1886, %v1887
  %v1889 = vshll.u32 2131351028, %v1880
  %v1890 = vshrl.u32 2102212464, %v1881
  %v1891 = vor.u32 %v1889, %v1890
  %v1892 = vshll.u32 2102212464, %v1880
  %v1893 = vshrl.u32 920167782, %v1881
  %v1894 = vor.u32 %v1892, %v1893
  %v1895 = vshll.u32 920167782, %v1880
  %v1896 = vshrl.u32 1326507024, %v1881
  %v1897 = vor.u32 %v1895, %v1896
  %vm1898 = vcmp.lt.s32.totalorder %v1879, 1
  %vm1899 = vcmp.lt.s32.totalorder %v1879, 2
  %vm1900 = vcmp.lt.s32.totalorder %v1879, 3
  %vm1901 = vcmp.lt.s32.totalorder %v1879, 4
  %v1902 = vsel %vm1898, %v1882, %v1885
  %v1903 = vsel %vm1901, %v1891, 2102212464
  %v1904 = vsel %vm1900, %v1888, %v1903
  %v1905 = vsel %vm1899, %v1902, %v1904
  %v1906 = vsel %vm1898, %v1885, %v1888
  %v1907 = vsel %vm1901, %v1894, 920167782
  %v1908 = vsel %vm1900, %v1891, %v1907
  %v1909 = vsel %vm1899, %v1906, %v1908
  %v1910 = vsel %vm1898, %v1888, %v1891
  %v1911 = vsel %vm1901, %v1897, 1326507024
  %v1912 = vsel %vm1900, %v1894, %v1911
  %v1913 = vsel %vm1899, %v1910, %v1912
  %v1914 = vshll.u32 %v1874, 8
  %v1915 = vand.u32 %v1914, 65535
  %v1916 = vshrl.u32 %v1914, 16
  %v1917 = vand.u32 %v1913, 65535
  %v1918 = vshrl.u32 %v1913, 16
  %v1919 = vmul.u32 %v1915, %v1917
  %v1920 = vmul.u32 %v1915, %v1918
  %v1921 = vmul.u32 %v1916, %v1917
  %v1922 = vmul.u32 %v1916, %v1918
  %v1923 = vshll.u32 %v1920, 16
  %v1924 = vshrl.u32 %v1920, 16
  %v1925 = vshll.u32 %v1921, 16
  %v1926 = vshrl.u32 %v1921, 16
  %vm1927 = vc.u32 %v1919, %v1923
  %v1928 = vsel %vm1927, 1, 0
  %v1929 = vadd.s32 %v1919, %v1923
  %v1930 = vadd.s32 %v1922, %v1928
  %vm1931 = vc.u32 %v1929, %v1925
  %v1932 = vsel %vm1931, 1, 0
  %v1933 = vadd.s32 %v1929, %v1925
  %v1934 = vadd.s32 %v1930, %v1932
  %v1935 = vadd.s32 %v1934, %v1924
  %v1936 = vadd.s32 %v1935, %v1926
  %v1937 = vand.u32 %v1914, 65535
  %v1938 = vshrl.u32 %v1914, 16
  %v1939 = vand.u32 %v1909, 65535
  %v1940 = vshrl.u32 %v1909, 16
  %v1941 = vmul.u32 %v1937, %v1939
  %v1942 = vmul.u32 %v1937, %v1940
  %v1943 = vmul.u32 %v1938, %v1939
  %v1944 = vmul.u32 %v1938, %v1940
  %v1945 = vshll.u32 %v1942, 16
  %v1946 = vshrl.u32 %v1942, 16
  %v1947 = vshll.u32 %v1943, 16
  %v1948 = vshrl.u32 %v1943, 16
  %vm1949 = vc.u32 %v1941, %v1945
  %v1950 = vsel %vm1949, 1, 0
  %v1951 = vadd.s32 %v1941, %v1945
  %v1952 = vadd.s32 %v1944, %v1950
  %vm1953 = vc.u32 %v1951, %v1947
  %v1954 = vsel %vm1953, 1, 0
  %v1955 = vadd.s32 %v1951, %v1947
  %v1956 = vadd.s32 %v1952, %v1954
  %v1957 = vadd.s32 %v1956, %v1946
  %v1958 = vadd.s32 %v1957, %v1948
  %v1959 = vmul.u32 %v1914, %v1905
  %v1960 = vadd.s32 %v1936, %v1955
  %vm1961 = vc.u32 %v1936, %v1955
  %v1962 = vadd.s32 %v1958, 1
  %v1963 = vsel %vm1961, %v1962, %v1958
  %v1964 = vadd.s32 %v1959, %v1963
  %v1965 = vadd.s32 %v1964, 536870912
  %v1966 = vshrl.u32 %v1965, 30
  %v1967 = vshll.u32 %v1966, 30
  %v1968 = vsub.s32 %v1964, %v1967
  %vm1969 = vcmp.lt.s32.totalorder %v1968, 0
  %v1970 = vsub.s32 0, %v1968
  %v1971 = vsel %vm1969, %v1970, %v1968
  %v1972 = vclz %v1971
  %v1973 = vsub.s32 %v1972, 2
  %vm1974 = vcmp.gt.s32.totalorder 0, %v1973
  %v1975 = vsel %vm1974, 0, %v1973
  %v1976 = vsub.s32 32, %v1975
  %v1977 = vshll.u32 %v1968, %v1975
  %v1978 = vshrl.u32 %v1960, %v1976
  %v1979 = vor.u32 %v1977, %v1978
  %v1980 = vsub.s32 4294967266, %v1975
  %v1981 = vadd.s32 %v1980, 127
  %v1982 = vshll.u32 %v1981, 23
  %v1983 = vor.u32 4788187, %v1982
  %v1984 = vand.u32 2147483647, %v1983
  %v1986 = vcvt.s32.f32 %v1979
  %v1987 = vmul.f32 %v1986, %v1984
  %v1988 = vxor.u32 %v1987, 2147483648
  %v1989 = vsel %vm1868, %v1988, %v1987
  %v1990 = vsub.s32 4, %v1966
  %v1991 = vsel %vm1868, %v1990, %v1966
  %v1992 = vsel %vm1867, %v602, %v1989
  %v1993 = vsel %vm1867, 0, %v1991
  %v1994 = vmul.f32 %v1992, %v1992
  %v1995 = vmul.f32 %v1994, -0.001358992
  %v1996 = vadd.f32 %v1995, 0.041655596
  %v1997 = vmul.f32 %v1994, %v1996
  %v1998 = vadd.f32 %v1997, -0.4999988
  %v1999 = vmul.f32 %v1994, %v1998
  %v2000 = vadd.f32 1.0, %v1999
  %v2001 = vmul.f32 %v1992, %v1992
  %v2002 = vmul.f32 %v2001, -0.00019511016
  %v2003 = vadd.f32 %v2002, 0.008332121
  %v2004 = vmul.f32 %v2001, %v2003
  %v2005 = vadd.f32 %v2004, -0.16666654
  %v2006 = vmul.f32 %v2001, %v2005
  %v2007 = vadd.f32 %v2006, 1.0
  %v2008 = vmul.f32 %v2007, %v1992
  %vm2009 = vweird.f32 %v602
  %v2010 = vadd.s32 %v1993, 3
  %v2011 = vand.u32 %v2010, 3
  %vm2012 = vcmp.lt.s32.totalorder %v2011, 2
  %vm2013 = vcmp.eq.s32.totalorder %v2011, 0
  %v2014 = vxor.u32 %v2008, 2147483648
  %v2015 = vsel %vm2013, %v2000, %v2014
  %vm2016 = vcmp.eq.s32.totalorder %v2011, 2
  %v2017 = vxor.u32 %v2000, 2147483648
  %v2018 = vsel %vm2016, %v2017, %v2008
  %v2019 = vsel %vm2012, %v2015, %v2018
  %v2020 = vsel %vm2009, nan, %v2019
  %v2021 = vand.u32 2147483647, %v603
  %vm2022 = vcmp.le.f32.partialorder %v2021, 0.7853982
  %vm2023 = vcmp.lt.s32.totalorder %v603, 0
  %v2024 = vand.u32 %v603, 2139095040
  %v2025 = vshrl.u32 %v2024, 23
  %v2026 = vsub.s32 %v2025, 127
  %v2027 = vand.u32 2147483647, %v603
  %v2028 = vand.u32 %v2027, 8388607
  %v2029 = vor.u32 %v2028, 8388608
  %v2030 = vsub.s32 0, %v2029
  %v2031 = vadd.s32 %v2026, 1
  %vm2032 = vcmp.gt.s32.totalorder %v2031, 0
  %v2033 = vsel %vm2032, %v2031, 0
  %v2034 = vshrl.u32 %v2033, 5
  %v2035 = vand.u32 %v2033, 31
  %v2036 = vsub.s32 32, %v2035
  %v2037 = vshrl.u32 683565275, %v2036
  %v2038 = vshll.u32 683565275, %v2035
  %v2039 = vshrl.u32 2475754826, %v2036
  %v2040 = vor.u32 %v2038, %v2039
  %v2041 = vshll.u32 2475754826, %v2035
  %v2042 = vshrl.u32 2131351028, %v2036
  %v2043 = vor.u32 %v2041, %v2042
  %v2044 = vshll.u32 2131351028, %v2035
  %v2045 = vshrl.u32 2102212464, %v2036
  %v2046 = vor.u32 %v2044, %v2045
  %v2047 = vshll.u32 2102212464, %v2035
  %v2048 = vshrl.u32 920167782, %v2036
  %v2049 = vor.u32 %v2047, %v2048
  %v2050 = vshll.u32 920167782, %v2035
  %v2051 = vshrl.u32 1326507024, %v2036
  %v2052 = vor.u32 %v2050, %v2051
  %vm2053 = vcmp.lt.s32.totalorder %v2034, 1
  %vm2054 = vcmp.lt.s32.totalorder %v2034, 2
  %vm2055 = vcmp.lt.s32.totalorder %v2034, 3
  %vm2056 = vcmp.lt.s32.totalorder %v2034, 4
  %v2057 = vsel %vm2053, %v2037, %v2040
  %v2058 = vsel %vm2056, %v2046, 2102212464
  %v2059 = vsel %vm2055, %v2043, %v2058
  %v2060 = vsel %vm2054, %v2057, %v2059
  %v2061 = vsel %vm2053, %v2040, %v2043
  %v2062 = vsel %vm2056, %v2049, 920167782
  %v2063 = vsel %vm2055, %v2046, %v2062
  %v2064 = vsel %vm2054, %v2061, %v2063
  %v2065 = vsel %vm2053, %v2043, %v2046
  %v2066 = vsel %vm2056, %v2052, 1326507024
  %v2067 = vsel %vm2055, %v2049, %v2066
  %v2068 = vsel %vm2054, %v2065, %v2067
  %v2069 = vshll.u32 %v2029, 8
  %v2070 = vand.u32 %v2069, 65535
  %v2071 = vshrl.u32 %v2069, 16
  %v2072 = vand.u32 %v2068, 65535
  %v2073 = vshrl.u32 %v2068, 16
  %v2074 = vmul.u32 %v2070, %v2072
  %v2075 = vmul.u32 %v2070, %v2073
  %v2076 = vmul.u32 %v2071, %v2072
  %v2077 = vmul.u32 %v2071, %v2073
  %v2078 = vshll.u32 %v2075, 16
  %v2079 = vshrl.u32 %v2075, 16
  %v2080 = vshll.u32 %v2076, 16
  %v2081 = vshrl.u32 %v2076, 16
  %vm2082 = vc.u32 %v2074, %v2078
  %v2083 = vsel %vm2082, 1, 0
  %v2084 = vadd.s32 %v2074, %v2078
  %v2085 = vadd.s32 %v2077, %v2083
  %vm2086 = vc.u32 %v2084, %v2080
  %v2087 = vsel %vm2086, 1, 0
  %v2088 = vadd.s32 %v2084, %v2080
  %v2089 = vadd.s32 %v2085, %v2087
  %v2090 = vadd.s32 %v2089, %v2079
  %v2091 = vadd.s32 %v2090, %v2081
  %v2092 = vand.u32 %v2069, 65535
  %v2093 = vshrl.u32 %v2069, 16
  %v2094 = vand.u32 %v2064, 65535
  %v2095 = vshrl.u32 %v2064, 16
  %v2096 = vmul.u32 %v2092, %v2094
  %v2097 = vmul.u32 %v2092, %v2095
  %v2098 = vmul.u32 %v2093, %v2094
  %v2099 = vmul.u32 %v2093, %v2095
  %v2100 = vshll.u32 %v2097, 16
  %v2101 = vshrl.u32 %v2097, 16
  %v2102 = vshll.u32 %v2098, 16
  %v2103 = vshrl.u32 %v2098, 16
  %vm2104 = vc.u32 %v2096, %v2100
  %v2105 = vsel %vm2104, 1, 0
  %v2106 = vadd.s32 %v2096, %v2100
  %v2107 = vadd.s32 %v2099, %v2105
  %vm2108 = vc.u32 %v2106, %v2102
  %v2109 = vsel %vm2108, 1, 0
  %v2110 = vadd.s32 %v2106, %v2102
  %v2111 = vadd.s32 %v2107, %v2109
  %v2112 = vadd.s32 %v2111, %v2101
  %v2113 = vadd.s32 %v2112, %v2103
  %v2114 = vmul.u32 %v2069, %v2060
  %v2115 = vadd.s32 %v2091, %v2110
  %vm2116 = vc.u32 %v2091, %v2110
  %v2117 = vadd.s32 %v2113, 1
  %v2118 = vsel %vm2116, %v2117, %v2113
  %v2119 = vadd.s32 %v2114, %v2118
  %v2120 = vadd.s32 %v2119, 536870912
  %v2121 = vshrl.u32 %v2120, 30
  %v2122 = vshll.u32 %v2121, 30
  %v2123 = vsub.s32 %v2119, %v2122
  %vm2124 = vcmp.lt.s32.totalorder %v2123, 0
  %v2125 = vsub.s32 0, %v2123
  %v2126 = vsel %vm2124, %v2125, %v2123
  %v2127 = vclz %v2126
  %v2128 = vsub.s32 %v2127, 2
  %vm2129 = vcmp.gt.s32.totalorder 0, %v2128
  %v2130 = vsel %vm2129, 0, %v2128
  %v2131 = vsub.s32 32, %v2130
  %v2132 = vshll.u32 %v2123, %v2130
  %v2133 = vshrl.u32 %v2115, %v2131
  %v2134 = vor.u32 %v2132, %v2133
  %v2135 = vsub.s32 4294967266, %v2130
  %v2136 = vadd.s32 %v2135, 127
  %v2137 = vshll.u32 %v2136, 23
  %v2138 = vor.u32 4788187, %v2137
  %v2139 = vand.u32 2147483647, %v2138
  %v2141 = vcvt.s32.f32 %v2134
  %v2142 = vmul.f32 %v2141, %v2139
  %v2143 = vxor.u32 %v2142, 2147483648
  %v2144 = vsel %vm2023, %v2143, %v2142
  %v2145 = vsub.s32 4, %v2121
  %v2146 = vsel %vm2023, %v2145, %v2121
  %v2147 = vsel %vm2022, %v603, %v2144
  %v2148 = vsel %vm2022, 0, %v2146
  %v2149 = vmul.f32 %v2147, %v2147
  %v2150 = vmul.f32 %v2149, -0.001358992
  %v2151 = vadd.f32 %v2150, 0.041655596
  %v2152 = vmul.f32 %v2149, %v2151
  %v2153 = vadd.f32 %v2152, -0.4999988
  %v2154 = vmul.f32 %v2149, %v2153
  %v2155 = vadd.f32 1.0, %v2154
  %v2156 = vmul.f32 %v2147, %v2147
  %v2157 = vmul.f32 %v2156, -0.00019511016
  %v2158 = vadd.f32 %v2157, 0.008332121
  %v2159 = vmul.f32 %v2156, %v2158
  %v2160 = vadd.f32 %v2159, -0.16666654
  %v2161 = vmul.f32 %v2156, %v2160
  %v2162 = vadd.f32 %v2161, 1.0
  %v2163 = vmul.f32 %v2162, %v2147
  %vm2164 = vweird.f32 %v603
  %v2165 = vadd.s32 %v2148, 3
  %v2166 = vand.u32 %v2165, 3
  %vm2167 = vcmp.lt.s32.totalorder %v2166, 2
  %vm2168 = vcmp.eq.s32.totalorder %v2166, 0
  %v2169 = vxor.u32 %v2163, 2147483648
  %v2170 = vsel %vm2168, %v2155, %v2169
  %vm2171 = vcmp.eq.s32.totalorder %v2166, 2
  %v2172 = vxor.u32 %v2155, 2147483648
  %v2173 = vsel %vm2171, %v2172, %v2163
  %v2174 = vsel %vm2167, %v2170, %v2173
  %v2175 = vsel %vm2164, nan, %v2174
  %v2176 = vand.u32 2147483647, %v604
  %vm2177 = vcmp.le.f32.partialorder %v2176, 0.7853982
  %vm2178 = vcmp.lt.s32.totalorder %v604, 0
  %v2179 = vand.u32 %v604, 2139095040
  %v2180 = vshrl.u32 %v2179, 23
  %v2181 = vsub.s32 %v2180, 127
  %v2182 = vand.u32 2147483647, %v604
  %v2183 = vand.u32 %v2182, 8388607
  %v2184 = vor.u32 %v2183, 8388608
  %v2185 = vsub.s32 0, %v2184
  %v2186 = vadd.s32 %v2181, 1
  %vm2187 = vcmp.gt.s32.totalorder %v2186, 0
  %v2188 = vsel %vm2187, %v2186, 0
  %v2189 = vshrl.u32 %v2188, 5
  %v2190 = vand.u32 %v2188, 31
  %v2191 = vsub.s32 32, %v2190
  %v2192 = vshrl.u32 683565275, %v2191
  %v2193 = vshll.u32 683565275, %v2190
  %v2194 = vshrl.u32 2475754826, %v2191
  %v2195 = vor.u32 %v2193, %v2194
  %v2196 = vshll.u32 2475754826, %v2190
  %v2197 = vshrl.u32 2131351028, %v2191
  %v2198 = vor.u32 %v2196, %v2197
  %v2199 = vshll.u32 2131351028, %v2190
  %v2200 = vshrl.u32 2102212464, %v2191
  %v2201 = vor.u32 %v2199, %v2200
  %v2202 = vshll.u32 2102212464, %v2190
  %v2203 = vshrl.u32 920167782, %v2191
  %v2204 = vor.u32 %v2202, %v2203
  %v2205 = vshll.u32 920167782, %v2190
  %v2206 = vshrl.u32 1326507024, %v2191
  %v2207 = vor.u32 %v2205, %v2206
  %vm2208 = vcmp.lt.s32.totalorder %v2189, 1
  %vm2209 = vcmp.lt.s32.totalorder %v2189, 2
  %vm2210 = vcmp.lt.s32.totalorder %v2189, 3
  %vm2211 = vcmp.lt.s32.totalorder %v2189, 4
  %v2212 = vsel %vm2208, %v2192, %v2195
  %v2213 = vsel %vm2211, %v2201, 2102212464
  %v2214 = vsel %vm2210, %v2198, %v2213
  %v2215 = vsel %vm2209, %v2212, %v2214
  %v2216 = vsel %vm2208, %v2195, %v2198
  %v2217 = vsel %vm2211, %v2204, 920167782
  %v2218 = vsel %vm2210, %v2201, %v2217
  %v2219 = vsel %vm2209, %v2216, %v2218
  %v2220 = vsel %vm2208, %v2198, %v2201
  %v2221 = vsel %vm2211, %v2207, 1326507024
  %v2222 = vsel %vm2210, %v2204, %v2221
  %v2223 = vsel %vm2209, %v2220, %v2222
  %v2224 = vshll.u32 %v2184, 8
  %v2225 = vand.u32 %v2224, 65535
  %v2226 = vshrl.u32 %v2224, 16
  %v2227 = vand.u32 %v2223, 65535
  %v2228 = vshrl.u32 %v2223, 16
  %v2229 = vmul.u32 %v2225, %v2227
  %v2230 = vmul.u32 %v2225, %v2228
  %v2231 = vmul.u32 %v2226, %v2227
  %v2232 = vmul.u32 %v2226, %v2228
  %v2233 = vshll.u32 %v2230, 16
  %v2234 = vshrl.u32 %v2230, 16
  %v2235 = vshll.u32 %v2231, 16
  %v2236 = vshrl.u32 %v2231, 16
  %vm2237 = vc.u32 %v2229, %v2233
  %v2238 = vsel %vm2237, 1, 0
  %v2239 = vadd.s32 %v2229, %v2233
  %v2240 = vadd.s32 %v2232, %v2238
  %vm2241 = vc.u32 %v2239, %v2235
  %v2242 = vsel %vm2241, 1, 0
  %v2243 = vadd.s32 %v2239, %v2235
  %v2244 = vadd.s32 %v2240, %v2242
  %v2245 = vadd.s32 %v2244, %v2234
  %v2246 = vadd.s32 %v2245, %v2236
  %v2247 = vand.u32 %v2224, 65535
  %v2248 = vshrl.u32 %v2224, 16
  %v2249 = vand.u32 %v2219, 65535
  %v2250 = vshrl.u32 %v2219, 16
  %v2251 = vmul.u32 %v2247, %v2249
  %v2252 = vmul.u32 %v2247, %v2250
  %v2253 = vmul.u32 %v2248, %v2249
  %v2254 = vmul.u32 %v2248, %v2250
  %v2255 = vshll.u32 %v2252, 16
  %v2256 = vshrl.u32 %v2252, 16
  %v2257 = vshll.u32 %v2253, 16
  %v2258 = vshrl.u32 %v2253, 16
  %vm2259 = vc.u32 %v2251, %v2255
  %v2260 = vsel %vm2259, 1, 0
  %v2261 = vadd.s32 %v2251, %v2255
  %v2262 = vadd.s32 %v2254, %v2260
  %vm2263 = vc.u32 %v2261, %v2257
  %v2264 = vsel %vm2263, 1, 0
  %v2265 = vadd.s32 %v2261, %v2257
  %v2266 = vadd.s32 %v2262, %v2264
  %v2267 = vadd.s32 %v2266, %v2256
  %v2268 = vadd.s32 %v2267, %v2258
  %v2269 = vmul.u32 %v2224, %v2215
  %v2270 = vadd.s32 %v2246, %v2265
  %vm2271 = vc.u32 %v2246, %v2265
  %v2272 = vadd.s32 %v2268, 1
  %v2273 = vsel %vm2271, %v2272, %v2268
  %v2274 = vadd.s32 %v2269, %v2273
  %v2275 = vadd.s32 %v2274, 536870912
  %v2276 = vshrl.u32 %v2275, 30
  %v2277 = vshll.u32 %v2276, 30
  %v2278 = vsub.s32 %v2274, %v2277
  %vm2279 = vcmp.lt.s32.totalorder %v2278, 0
  %v2280 = vsub.s32 0, %v2278
  %v2281 = vsel %vm2279, %v2280, %v2278
  %v2282 = vclz %v2281
  %v2283 = vsub.s32 %v2282, 2
  %vm2284 = vcmp.gt.s32.totalorder 0, %v2283
  %v2285 = vsel %vm2284, 0, %v2283
  %v2286 = vsub.s32 32, %v2285
  %v2287 = vshll.u32 %v2278, %v2285
  %v2288 = vshrl.u32 %v2270, %v2286
  %v2289 = vor.u32 %v2287, %v2288
  %v2290 = vsub.s32 4294967266, %v2285
  %v2291 = vadd.s32 %v2290, 127
  %v2292 = vshll.u32 %v2291, 23
  %v2293 = vor.u32 4788187, %v2292
  %v2294 = vand.u32 2147483647, %v2293
  %v2296 = vcvt.s32.f32 %v2289
  %v2297 = vmul.f32 %v2296, %v2294
  %v2298 = vxor.u32 %v2297, 2147483648
  %v2299 = vsel %vm2178, %v2298, %v2297
  %v2300 = vsub.s32 4, %v2276
  %v2301 = vsel %vm2178, %v2300, %v2276
  %v2302 = vsel %vm2177, %v604, %v2299
  %v2303 = vsel %vm2177, 0, %v2301
  %v2304 = vmul.f32 %v2302, %v2302
  %v2305 = vmul.f32 %v2304, -0.001358992
  %v2306 = vadd.f32 %v2305, 0.041655596
  %v2307 = vmul.f32 %v2304, %v2306
  %v2308 = vadd.f32 %v2307, -0.4999988
  %v2309 = vmul.f32 %v2304, %v2308
  %v2310 = vadd.f32 1.0, %v2309
  %v2311 = vmul.f32 %v2302, %v2302
  %v2312 = vmul.f32 %v2311, -0.00019511016
  %v2313 = vadd.f32 %v2312, 0.008332121
  %v2314 = vmul.f32 %v2311, %v2313
  %v2315 = vadd.f32 %v2314, -0.16666654
  %v2316 = vmul.f32 %v2311, %v2315
  %v2317 = vadd.f32 %v2316, 1.0
  %v2318 = vmul.f32 %v2317, %v2302
  %vm2319 = vweird.f32 %v604
  %v2320 = vadd.s32 %v2303, 3
  %v2321 = vand.u32 %v2320, 3
  %vm2322 = vcmp.lt.s32.totalorder %v2321, 2
  %vm2323 = vcmp.eq.s32.totalorder %v2321, 0
  %v2324 = vxor.u32 %v2318, 2147483648
  %v2325 = vsel %vm2323, %v2310, %v2324
  %vm2326 = vcmp.eq.s32.totalorder %v2321, 2
  %v2327 = vxor.u32 %v2310, 2147483648
  %v2328 = vsel %vm2326, %v2327, %v2318
  %v2329 = vsel %vm2322, %v2325, %v2328
  %v2330 = vsel %vm2319, nan, %v2329
  %v2331 = vand.u32 2147483647, %v605
  %vm2332 = vcmp.le.f32.partialorder %v2331, 0.7853982
  %vm2333 = vcmp.lt.s32.totalorder %v605, 0
  %v2334 = vand.u32 %v605, 2139095040
  %v2335 = vshrl.u32 %v2334, 23
  %v2336 = vsub.s32 %v2335, 127
  %v2337 = vand.u32 2147483647, %v605
  %v2338 = vand.u32 %v2337, 8388607
  %v2339 = vor.u32 %v2338, 8388608
  %v2340 = vsub.s32 0, %v2339
  %v2341 = vadd.s32 %v2336, 1
  %vm2342 = vcmp.gt.s32.totalorder %v2341, 0
  %v2343 = vsel %vm2342, %v2341, 0
  %v2344 = vshrl.u32 %v2343, 5
  %v2345 = vand.u32 %v2343, 31
  %v2346 = vsub.s32 32, %v2345
  %v2347 = vshrl.u32 683565275, %v2346
  %v2348 = vshll.u32 683565275, %v2345
  %v2349 = vshrl.u32 2475754826, %v2346
  %v2350 = vor.u32 %v2348, %v2349
  %v2351 = vshll.u32 2475754826, %v2345
  %v2352 = vshrl.u32 2131351028, %v2346
  %v2353 = vor.u32 %v2351, %v2352
  %v2354 = vshll.u32 2131351028, %v2345
  %v2355 = vshrl.u32 2102212464, %v2346
  %v2356 = vor.u32 %v2354, %v2355
  %v2357 = vshll.u32 2102212464, %v2345
  %v2358 = vshrl.u32 920167782, %v2346
  %v2359 = vor.u32 %v2357, %v2358
  %v2360 = vshll.u32 920167782, %v2345
  %v2361 = vshrl.u32 1326507024, %v2346
  %v2362 = vor.u32 %v2360, %v2361
  %vm2363 = vcmp.lt.s32.totalorder %v2344, 1
  %vm2364 = vcmp.lt.s32.totalorder %v2344, 2
  %vm2365 = vcmp.lt.s32.totalorder %v2344, 3
  %vm2366 = vcmp.lt.s32.totalorder %v2344, 4
  %v2367 = vsel %vm2363, %v2347, %v2350
  %v2368 = vsel %vm2366, %v2356, 2102212464
  %v2369 = vsel %vm2365, %v2353, %v2368
  %v2370 = vsel %vm2364, %v2367, %v2369
  %v2371 = vsel %vm2363, %v2350, %v2353
  %v2372 = vsel %vm2366, %v2359, 920167782
  %v2373 = vsel %vm2365, %v2356, %v2372
  %v2374 = vsel %vm2364, %v2371, %v2373
  %v2375 = vsel %vm2363, %v2353, %v2356
  %v2376 = vsel %vm2366, %v2362, 1326507024
  %v2377 = vsel %vm2365, %v2359, %v2376
  %v2378 = vsel %vm2364, %v2375, %v2377
  %v2379 = vshll.u32 %v2339, 8
  %v2380 = vand.u32 %v2379, 65535
  %v2381 = vshrl.u32 %v2379, 16
  %v2382 = vand.u32 %v2378, 65535
  %v2383 = vshrl.u32 %v2378, 16
  %v2384 = vmul.u32 %v2380, %v2382
  %v2385 = vmul.u32 %v2380, %v2383
  %v2386 = vmul.u32 %v2381, %v2382
  %v2387 = vmul.u32 %v2381, %v2383
  %v2388 = vshll.u32 %v2385, 16
  %v2389 = vshrl.u32 %v2385, 16
  %v2390 = vshll.u32 %v2386, 16
  %v2391 = vshrl.u32 %v2386, 16
  %vm2392 = vc.u32 %v2384, %v2388
  %v2393 = vsel %vm2392, 1, 0
  %v2394 = vadd.s32 %v2384, %v2388
  %v2395 = vadd.s32 %v2387, %v2393
  %vm2396 = vc.u32 %v2394, %v2390
  %v2397 = vsel %vm2396, 1, 0
  %v2398 = vadd.s32 %v2394, %v2390
  %v2399 = vadd.s32 %v2395, %v2397
  %v2400 = vadd.s32 %v2399, %v2389
  %v2401 = vadd.s32 %v2400, %v2391
  %v2402 = vand.u32 %v2379, 65535
  %v2403 = vshrl.u32 %v2379, 16
  %v2404 = vand.u32 %v2374, 65535
  %v2405 = vshrl.u32 %v2374, 16
  %v2406 = vmul.u32 %v2402, %v2404
  %v2407 = vmul.u32 %v2402, %v2405
  %v2408 = vmul.u32 %v2403, %v2404
  %v2409 = vmul.u32 %v2403, %v2405
  %v2410 = vshll.u32 %v2407, 16
  %v2411 = vshrl.u32 %v2407, 16
  %v2412 = vshll.u32 %v2408, 16
  %v2413 = vshrl.u32 %v2408, 16
  %vm2414 = vc.u32 %v2406, %v2410
  %v2415 = vsel %vm2414, 1, 0
  %v2416 = vadd.s32 %v2406, %v2410
  %v2417 = vadd.s32 %v2409, %v2415
  %vm2418 = vc.u32 %v2416, %v2412
  %v2419 = vsel %vm2418, 1, 0
  %v2420 = vadd.s32 %v2416, %v2412
  %v2421 = vadd.s32 %v2417, %v2419
  %v2422 = vadd.s32 %v2421, %v2411
  %v2423 = vadd.s32 %v2422, %v2413
  %v2424 = vmul.u32 %v2379, %v2370
  %v2425 = vadd.s32 %v2401, %v2420
  %vm2426 = vc.u32 %v2401, %v2420
  %v2427 = vadd.s32 %v2423, 1
  %v2428 = vsel %vm2426, %v2427, %v2423
  %v2429 = vadd.s32 %v2424, %v2428
  %v2430 = vadd.s32 %v2429, 536870912
  %v2431 = vshrl.u32 %v2430, 30
  %v2432 = vshll.u32 %v2431, 30
  %v2433 = vsub.s32 %v2429, %v2432
  %vm2434 = vcmp.lt.s32.totalorder %v2433, 0
  %v2435 = vsub.s32 0, %v2433
  %v2436 = vsel %vm2434, %v2435, %v2433
  %v2437 = vclz %v2436
  %v2438 = vsub.s32 %v2437, 2
  %vm2439 = vcmp.gt.s32.totalorder 0, %v2438
  %v2440 = vsel %vm2439, 0, %v2438
  %v2441 = vsub.s32 32, %v2440
  %v2442 = vshll.u32 %v2433, %v2440
  %v2443 = vshrl.u32 %v2425, %v2441
  %v2444 = vor.u32 %v2442, %v2443
  %v2445 = vsub.s32 4294967266, %v2440
  %v2446 = vadd.s32 %v2445, 127
  %v2447 = vshll.u32 %v2446, 23
  %v2448 = vor.u32 4788187, %v2447
  %v2449 = vand.u32 2147483647, %v2448
  %v2451 = vcvt.s32.f32 %v2444
  %v2452 = vmul.f32 %v2451, %v2449
  %v2453 = vxor.u32 %v2452, 2147483648
  %v2454 = vsel %vm2333, %v2453, %v2452
  %v2455 = vsub.s32 4, %v2431
  %v2456 = vsel %vm2333, %v2455, %v2431
  %v2457 = vsel %vm2332, %v605, %v2454
  %v2458 = vsel %vm2332, 0, %v2456
  %v2459 = vmul.f32 %v2457, %v2457
  %v2460 = vmul.f32 %v2459, -0.001358992
  %v2461 = vadd.f32 %v2460, 0.041655596
  %v2462 = vmul.f32 %v2459, %v2461
  %v2463 = vadd.f32 %v2462, -0.4999988
  %v2464 = vmul.f32 %v2459, %v2463
  %v2465 = vadd.f32 1.0, %v2464
  %v2466 = vmul.f32 %v2457, %v2457
  %v2467 = vmul.f32 %v2466, -0.00019511016
  %v2468 = vadd.f32 %v2467, 0.008332121
  %v2469 = vmul.f32 %v2466, %v2468
  %v2470 = vadd.f32 %v2469, -0.16666654
  %v2471 = vmul.f32 %v2466, %v2470
  %v2472 = vadd.f32 %v2471, 1.0
  %v2473 = vmul.f32 %v2472, %v2457
  %vm2474 = vweird.f32 %v605
  %v2475 = vadd.s32 %v2458, 3
  %v2476 = vand.u32 %v2475, 3
  %vm2477 = vcmp.lt.s32.totalorder %v2476, 2
  %vm2478 = vcmp.eq.s32.totalorder %v2476, 0
  %v2479 = vxor.u32 %v2473, 2147483648
  %v2480 = vsel %vm2478, %v2465, %v2479
  %vm2481 = vcmp.eq.s32.totalorder %v2476, 2
  %v2482 = vxor.u32 %v2465, 2147483648
  %v2483 = vsel %vm2481, %v2482, %v2473
  %v2484 = vsel %vm2477, %v2480, %v2483
  %v2485 = vsel %vm2474, nan, %v2484
  %v2486 = vand.u32 2147483647, %v606
  %vm2487 = vcmp.le.f32.partialorder %v2486, 0.7853982
  %vm2488 = vcmp.lt.s32.totalorder %v606, 0
  %v2489 = vand.u32 %v606, 2139095040
  %v2490 = vshrl.u32 %v2489, 23
  %v2491 = vsub.s32 %v2490, 127
  %v2492 = vand.u32 2147483647, %v606
  %v2493 = vand.u32 %v2492, 8388607
  %v2494 = vor.u32 %v2493, 8388608
  %v2495 = vsub.s32 0, %v2494
  %v2496 = vadd.s32 %v2491, 1
  %vm2497 = vcmp.gt.s32.totalorder %v2496, 0
  %v2498 = vsel %vm2497, %v2496, 0
  %v2499 = vshrl.u32 %v2498, 5
  %v2500 = vand.u32 %v2498, 31
  %v2501 = vsub.s32 32, %v2500
  %v2502 = vshrl.u32 683565275, %v2501
  %v2503 = vshll.u32 683565275, %v2500
  %v2504 = vshrl.u32 2475754826, %v2501
  %v2505 = vor.u32 %v2503, %v2504
  %v2506 = vshll.u32 2475754826, %v2500
  %v2507 = vshrl.u32 2131351028, %v2501
  %v2508 = vor.u32 %v2506, %v2507
  %v2509 = vshll.u32 2131351028, %v2500
  %v2510 = vshrl.u32 2102212464, %v2501
  %v2511 = vor.u32 %v2509, %v2510
  %v2512 = vshll.u32 2102212464, %v2500
  %v2513 = vshrl.u32 920167782, %v2501
  %v2514 = vor.u32 %v2512, %v2513
  %v2515 = vshll.u32 920167782, %v2500
  %v2516 = vshrl.u32 1326507024, %v2501
  %v2517 = vor.u32 %v2515, %v2516
  %vm2518 = vcmp.lt.s32.totalorder %v2499, 1
  %vm2519 = vcmp.lt.s32.totalorder %v2499, 2
  %vm2520 = vcmp.lt.s32.totalorder %v2499, 3
  %vm2521 = vcmp.lt.s32.totalorder %v2499, 4
  %v2522 = vsel %vm2518, %v2502, %v2505
  %v2523 = vsel %vm2521, %v2511, 2102212464
  %v2524 = vsel %vm2520, %v2508, %v2523
  %v2525 = vsel %vm2519, %v2522, %v2524
  %v2526 = vsel %vm2518, %v2505, %v2508
  %v2527 = vsel %vm2521, %v2514, 920167782
  %v2528 = vsel %vm2520, %v2511, %v2527
  %v2529 = vsel %vm2519, %v2526, %v2528
  %v2530 = vsel %vm2518, %v2508, %v2511
  %v2531 = vsel %vm2521, %v2517, 1326507024
  %v2532 = vsel %vm2520, %v2514, %v2531
  %v2533 = vsel %vm2519, %v2530, %v2532
  %v2534 = vshll.u32 %v2494, 8
  %v2535 = vand.u32 %v2534, 65535
  %v2536 = vshrl.u32 %v2534, 16
  %v2537 = vand.u32 %v2533, 65535
  %v2538 = vshrl.u32 %v2533, 16
  %v2539 = vmul.u32 %v2535, %v2537
  %v2540 = vmul.u32 %v2535, %v2538
  %v2541 = vmul.u32 %v2536, %v2537
  %v2542 = vmul.u32 %v2536, %v2538
  %v2543 = vshll.u32 %v2540, 16
  %v2544 = vshrl.u32 %v2540, 16
  %v2545 = vshll.u32 %v2541, 16
  %v2546 = vshrl.u32 %v2541, 16
  %vm2547 = vc.u32 %v2539, %v2543
  %v2548 = vsel %vm2547, 1, 0
  %v2549 = vadd.s32 %v2539, %v2543
  %v2550 = vadd.s32 %v2542, %v2548
  %vm2551 = vc.u32 %v2549, %v2545
  %v2552 = vsel %vm2551, 1, 0
  %v2553 = vadd.s32 %v2549, %v2545
  %v2554 = vadd.s32 %v2550, %v2552
  %v2555 = vadd.s32 %v2554, %v2544
  %v2556 = vadd.s32 %v2555, %v2546
  %v2557 = vand.u32 %v2534, 65535
  %v2558 = vshrl.u32 %v2534, 16
  %v2559 = vand.u32 %v2529, 65535
  %v2560 = vshrl.u32 %v2529, 16
  %v2561 = vmul.u32 %v2557, %v2559
  %v2562 = vmul.u32 %v2557, %v2560
  %v2563 = vmul.u32 %v2558, %v2559
  %v2564 = vmul.u32 %v2558, %v2560
  %v2565 = vshll.u32 %v2562, 16
  %v2566 = vshrl.u32 %v2562, 16
  %v2567 = vshll.u32 %v2563, 16
  %v2568 = vshrl.u32 %v2563, 16
  %vm2569 = vc.u32 %v2561, %v2565
  %v2570 = vsel %vm2569, 1, 0
  %v2571 = vadd.s32 %v2561, %v2565
  %v2572 = vadd.s32 %v2564, %v2570
  %vm2573 = vc.u32 %v2571, %v2567
  %v2574 = vsel %vm2573, 1, 0
  %v2575 = vadd.s32 %v2571, %v2567
  %v2576 = vadd.s32 %v2572, %v2574
  %v2577 = vadd.s32 %v2576, %v2566
  %v2578 = vadd.s32 %v2577, %v2568
  %v2579 = vmul.u32 %v2534, %v2525
  %v2580 = vadd.s32 %v2556, %v2575
  %vm2581 = vc.u32 %v2556, %v2575
  %v2582 = vadd.s32 %v2578, 1
  %v2583 = vsel %vm2581, %v2582, %v2578
  %v2584 = vadd.s32 %v2579, %v2583
  %v2585 = vadd.s32 %v2584, 536870912
  %v2586 = vshrl.u32 %v2585, 30
  %v2587 = vshll.u32 %v2586, 30
  %v2588 = vsub.s32 %v2584, %v2587
  %vm2589 = vcmp.lt.s32.totalorder %v2588, 0
  %v2590 = vsub.s32 0, %v2588
  %v2591 = vsel %vm2589, %v2590, %v2588
  %v2592 = vclz %v2591
  %v2593 = vsub.s32 %v2592, 2
  %vm2594 = vcmp.gt.s32.totalorder 0, %v2593
  %v2595 = vsel %vm2594, 0, %v2593
  %v2596 = vsub.s32 32, %v2595
  %v2597 = vshll.u32 %v2588, %v2595
  %v2598 = vshrl.u32 %v2580, %v2596
  %v2599 = vor.u32 %v2597, %v2598
  %v2600 = vsub.s32 4294967266, %v2595
  %v2601 = vadd.s32 %v2600, 127
  %v2602 = vshll.u32 %v2601, 23
  %v2603 = vor.u32 4788187, %v2602
  %v2604 = vand.u32 2147483647, %v2603
  %v2606 = vcvt.s32.f32 %v2599
  %v2607 = vmul.f32 %v2606, %v2604
  %v2608 = vxor.u32 %v2607, 2147483648
  %v2609 = vsel %vm2488, %v2608, %v2607
  %v2610 = vsub.s32 4, %v2586
  %v2611 = vsel %vm2488, %v2610, %v2586
  %v2612 = vsel %vm2487, %v606, %v2609
  %v2613 = vsel %vm2487, 0, %v2611
  %v2614 = vmul.f32 %v2612, %v2612
  %v2615 = vmul.f32 %v2614, -0.001358992
  %v2616 = vadd.f32 %v2615, 0.041655596
  %v2617 = vmul.f32 %v2614, %v2616
  %v2618 = vadd.f32 %v2617, -0.4999988
  %v2619 = vmul.f32 %v2614, %v2618
  %v2620 = vadd.f32 1.0, %v2619
  %v2621 = vmul.f32 %v2612, %v2612
  %v2622 = vmul.f32 %v2621, -0.00019511016
  %v2623 = vadd.f32 %v2622, 0.008332121
  %v2624 = vmul.f32 %v2621, %v2623
  %v2625 = vadd.f32 %v2624, -0.16666654
  %v2626 = vmul.f32 %v2621, %v2625
  %v2627 = vadd.f32 %v2626, 1.0
  %v2628 = vmul.f32 %v2627, %v2612
  %vm2629 = vweird.f32 %v606
  %v2630 = vadd.s32 %v2613, 3
  %v2631 = vand.u32 %v2630, 3
  %vm2632 = vcmp.lt.s32.totalorder %v2631, 2
  %vm2633 = vcmp.eq.s32.totalorder %v2631, 0
  %v2634 = vxor.u32 %v2628, 2147483648
  %v2635 = vsel %vm2633, %v2620, %v2634
  %vm2636 = vcmp.eq.s32.totalorder %v2631, 2
  %v2637 = vxor.u32 %v2620, 2147483648
  %v2638 = vsel %vm2636, %v2637, %v2628
  %v2639 = vsel %vm2632, %v2635, %v2638
  %v2640 = vsel %vm2629, nan, %v2639
  %v2641 = vand.u32 2147483647, %v607
  %vm2642 = vcmp.le.f32.partialorder %v2641, 0.7853982
  %vm2643 = vcmp.lt.s32.totalorder %v607, 0
  %v2644 = vand.u32 %v607, 2139095040
  %v2645 = vshrl.u32 %v2644, 23
  %v2646 = vsub.s32 %v2645, 127
  %v2647 = vand.u32 2147483647, %v607
  %v2648 = vand.u32 %v2647, 8388607
  %v2649 = vor.u32 %v2648, 8388608
  %v2650 = vsub.s32 0, %v2649
  %v2651 = vadd.s32 %v2646, 1
  %vm2652 = vcmp.gt.s32.totalorder %v2651, 0
  %v2653 = vsel %vm2652, %v2651, 0
  %v2654 = vshrl.u32 %v2653, 5
  %v2655 = vand.u32 %v2653, 31
  %v2656 = vsub.s32 32, %v2655
  %v2657 = vshrl.u32 683565275, %v2656
  %v2658 = vshll.u32 683565275, %v2655
  %v2659 = vshrl.u32 2475754826, %v2656
  %v2660 = vor.u32 %v2658, %v2659
  %v2661 = vshll.u32 2475754826, %v2655
  %v2662 = vshrl.u32 2131351028, %v2656
  %v2663 = vor.u32 %v2661, %v2662
  %v2664 = vshll.u32 2131351028, %v2655
  %v2665 = vshrl.u32 2102212464, %v2656
  %v2666 = vor.u32 %v2664, %v2665
  %v2667 = vshll.u32 2102212464, %v2655
  %v2668 = vshrl.u32 920167782, %v2656
  %v2669 = vor.u32 %v2667, %v2668
  %v2670 = vshll.u32 920167782, %v2655
  %v2671 = vshrl.u32 1326507024, %v2656
  %v2672 = vor.u32 %v2670, %v2671
  %vm2673 = vcmp.lt.s32.totalorder %v2654, 1
  %vm2674 = vcmp.lt.s32.totalorder %v2654, 2
  %vm2675 = vcmp.lt.s32.totalorder %v2654, 3
  %vm2676 = vcmp.lt.s32.totalorder %v2654, 4
  %v2677 = vsel %vm2673, %v2657, %v2660
  %v2678 = vsel %vm2676, %v2666, 2102212464
  %v2679 = vsel %vm2675, %v2663, %v2678
  %v2680 = vsel %vm2674, %v2677, %v2679
  %v2681 = vsel %vm2673, %v2660, %v2663
  %v2682 = vsel %vm2676, %v2669, 920167782
  %v2683 = vsel %vm2675, %v2666, %v2682
  %v2684 = vsel %vm2674, %v2681, %v2683
  %v2685 = vsel %vm2673, %v2663, %v2666
  %v2686 = vsel %vm2676, %v2672, 1326507024
  %v2687 = vsel %vm2675, %v2669, %v2686
  %v2688 = vsel %vm2674, %v2685, %v2687
  %v2689 = vshll.u32 %v2649, 8
  %v2690 = vand.u32 %v2689, 65535
  %v2691 = vshrl.u32 %v2689, 16
  %v2692 = vand.u32 %v2688, 65535
  %v2693 = vshrl.u32 %v2688, 16
  %v2694 = vmul.u32 %v2690, %v2692
  %v2695 = vmul.u32 %v2690, %v2693
  %v2696 = vmul.u32 %v2691, %v2692
  %v2697 = vmul.u32 %v2691, %v2693
  %v2698 = vshll.u32 %v2695, 16
  %v2699 = vshrl.u32 %v2695, 16
  %v2700 = vshll.u32 %v2696, 16
  %v2701 = vshrl.u32 %v2696, 16
  %vm2702 = vc.u32 %v2694, %v2698
  %v2703 = vsel %vm2702, 1, 0
  %v2704 = vadd.s32 %v2694, %v2698
  %v2705 = vadd.s32 %v2697, %v2703
  %vm2706 = vc.u32 %v2704, %v2700
  %v2707 = vsel %vm2706, 1, 0
  %v2708 = vadd.s32 %v2704, %v2700
  %v2709 = vadd.s32 %v2705, %v2707
  %v2710 = vadd.s32 %v2709, %v2699
  %v2711 = vadd.s32 %v2710, %v2701
  %v2712 = vand.u32 %v2689, 65535
  %v2713 = vshrl.u32 %v2689, 16
  %v2714 = vand.u32 %v2684, 65535
  %v2715 = vshrl.u32 %v2684, 16
  %v2716 = vmul.u32 %v2712, %v2714
  %v2717 = vmul.u32 %v2712, %v2715
  %v2718 = vmul.u32 %v2713, %v2714
  %v2719 = vmul.u32 %v2713, %v2715
  %v2720 = vshll.u32 %v2717, 16
  %v2721 = vshrl.u32 %v2717, 16
  %v2722 = vshll.u32 %v2718, 16
  %v2723 = vshrl.u32 %v2718, 16
  %vm2724 = vc.u32 %v2716, %v2720
  %v2725 = vsel %vm2724, 1, 0
  %v2726 = vadd.s32 %v2716, %v2720
  %v2727 = vadd.s32 %v2719, %v2725
  %vm2728 = vc.u32 %v2726, %v2722
  %v2729 = vsel %vm2728, 1, 0
  %v2730 = vadd.s32 %v2726, %v2722
  %v2731 = vadd.s32 %v2727, %v2729
  %v2732 = vadd.s32 %v2731, %v2721
  %v2733 = vadd.s32 %v2732, %v2723
  %v2734 = vmul.u32 %v2689, %v2680
  %v2735 = vadd.s32 %v2711, %v2730
  %vm2736 = vc.u32 %v2711, %v2730
  %v2737 = vadd.s32 %v2733, 1
  %v2738 = vsel %vm2736, %v2737, %v2733
  %v2739 = vadd.s32 %v2734, %v2738
  %v2740 = vadd.s32 %v2739, 536870912
  %v2741 = vshrl.u32 %v2740, 30
  %v2742 = vshll.u32 %v2741, 30
  %v2743 = vsub.s32 %v2739, %v2742
  %vm2744 = vcmp.lt.s32.totalorder %v2743, 0
  %v2745 = vsub.s32 0, %v2743
  %v2746 = vsel %vm2744, %v2745, %v2743
  %v2747 = vclz %v2746
  %v2748 = vsub.s32 %v2747, 2
  %vm2749 = vcmp.gt.s32.totalorder 0, %v2748
  %v2750 = vsel %vm2749, 0, %v2748
  %v2751 = vsub.s32 32, %v2750
  %v2752 = vshll.u32 %v2743, %v2750
  %v2753 = vshrl.u32 %v2735, %v2751
  %v2754 = vor.u32 %v2752, %v2753
  %v2755 = vsub.s32 4294967266, %v2750
  %v2756 = vadd.s32 %v2755, 127
  %v2757 = vshll.u32 %v2756, 23
  %v2758 = vor.u32 4788187, %v2757
  %v2759 = vand.u32 2147483647, %v2758
  %v2761 = vcvt.s32.f32 %v2754
  %v2762 = vmul.f32 %v2761, %v2759
  %v2763 = vxor.u32 %v2762, 2147483648
  %v2764 = vsel %vm2643, %v2763, %v2762
  %v2765 = vsub.s32 4, %v2741
  %v2766 = vsel %vm2643, %v2765, %v2741
  %v2767 = vsel %vm2642, %v607, %v2764
  %v2768 = vsel %vm2642, 0, %v2766
  %v2769 = vmul.f32 %v2767, %v2767
  %v2770 = vmul.f32 %v2769, -0.001358992
  %v2771 = vadd.f32 %v2770, 0.041655596
  %v2772 = vmul.f32 %v2769, %v2771
  %v2773 = vadd.f32 %v2772, -0.4999988
  %v2774 = vmul.f32 %v2769, %v2773
  %v2775 = vadd.f32 1.0, %v2774
  %v2776 = vmul.f32 %v2767, %v2767
  %v2777 = vmul.f32 %v2776, -0.00019511016
  %v2778 = vadd.f32 %v2777, 0.008332121
  %v2779 = vmul.f32 %v2776, %v2778
  %v2780 = vadd.f32 %v2779, -0.16666654
  %v2781 = vmul.f32 %v2776, %v2780
  %v2782 = vadd.f32 %v2781, 1.0
  %v2783 = vmul.f32 %v2782, %v2767
  %vm2784 = vweird.f32 %v607
  %v2785 = vadd.s32 %v2768, 3
  %v2786 = vand.u32 %v2785, 3
  %vm2787 = vcmp.lt.s32.totalorder %v2786, 2
  %vm2788 = vcmp.eq.s32.totalorder %v2786, 0
  %v2789 = vxor.u32 %v2783, 2147483648
  %v2790 = vsel %vm2788, %v2775, %v2789
  %vm2791 = vcmp.eq.s32.totalorder %v2786, 2
  %v2792 = vxor.u32 %v2775, 2147483648
  %v2793 = vsel %vm2791, %v2792, %v2783
  %v2794 = vsel %vm2787, %v2790, %v2793
  %v2795 = vsel %vm2784, nan, %v2794
  %v2796 = vand.u32 2147483647, %v608
  %vm2797 = vcmp.le.f32.partialorder %v2796, 0.7853982
  %vm2798 = vcmp.lt.s32.totalorder %v608, 0
  %v2799 = vand.u32 %v608, 2139095040
  %v2800 = vshrl.u32 %v2799, 23
  %v2801 = vsub.s32 %v2800, 127
  %v2802 = vand.u32 2147483647, %v608
  %v2803 = vand.u32 %v2802, 8388607
  %v2804 = vor.u32 %v2803, 8388608
  %v2805 = vsub.s32 0, %v2804
  %v2806 = vadd.s32 %v2801, 1
  %vm2807 = vcmp.gt.s32.totalorder %v2806, 0
  %v2808 = vsel %vm2807, %v2806, 0
  %v2809 = vshrl.u32 %v2808, 5
  %v2810 = vand.u32 %v2808, 31
  %v2811 = vsub.s32 32, %v2810
  %v2812 = vshrl.u32 683565275, %v2811
  %v2813 = vshll.u32 683565275, %v2810
  %v2814 = vshrl.u32 2475754826, %v2811
  %v2815 = vor.u32 %v2813, %v2814
  %v2816 = vshll.u32 2475754826, %v2810
  %v2817 = vshrl.u32 2131351028, %v2811
  %v2818 = vor.u32 %v2816, %v2817
  %v2819 = vshll.u32 2131351028, %v2810
  %v2820 = vshrl.u32 2102212464, %v2811
  %v2821 = vor.u32 %v2819, %v2820
  %v2822 = vshll.u32 2102212464, %v2810
  %v2823 = vshrl.u32 920167782, %v2811
  %v2824 = vor.u32 %v2822, %v2823
  %v2825 = vshll.u32 920167782, %v2810
  %v2826 = vshrl.u32 1326507024, %v2811
  %v2827 = vor.u32 %v2825, %v2826
  %vm2828 = vcmp.lt.s32.totalorder %v2809, 1
  %vm2829 = vcmp.lt.s32.totalorder %v2809, 2
  %vm2830 = vcmp.lt.s32.totalorder %v2809, 3
  %vm2831 = vcmp.lt.s32.totalorder %v2809, 4
  %v2832 = vsel %vm2828, %v2812, %v2815
  %v2833 = vsel %vm2831, %v2821, 2102212464
  %v2834 = vsel %vm2830, %v2818, %v2833
  %v2835 = vsel %vm2829, %v2832, %v2834
  %v2836 = vsel %vm2828, %v2815, %v2818
  %v2837 = vsel %vm2831, %v2824, 920167782
  %v2838 = vsel %vm2830, %v2821, %v2837
  %v2839 = vsel %vm2829, %v2836, %v2838
  %v2840 = vsel %vm2828, %v2818, %v2821
  %v2841 = vsel %vm2831, %v2827, 1326507024
  %v2842 = vsel %vm2830, %v2824, %v2841
  %v2843 = vsel %vm2829, %v2840, %v2842
  %v2844 = vshll.u32 %v2804, 8
  %v2845 = vand.u32 %v2844, 65535
  %v2846 = vshrl.u32 %v2844, 16
  %v2847 = vand.u32 %v2843, 65535
  %v2848 = vshrl.u32 %v2843, 16
  %v2849 = vmul.u32 %v2845, %v2847
  %v2850 = vmul.u32 %v2845, %v2848
  %v2851 = vmul.u32 %v2846, %v2847
  %v2852 = vmul.u32 %v2846, %v2848
  %v2853 = vshll.u32 %v2850, 16
  %v2854 = vshrl.u32 %v2850, 16
  %v2855 = vshll.u32 %v2851, 16
  %v2856 = vshrl.u32 %v2851, 16
  %vm2857 = vc.u32 %v2849, %v2853
  %v2858 = vsel %vm2857, 1, 0
  %v2859 = vadd.s32 %v2849, %v2853
  %v2860 = vadd.s32 %v2852, %v2858
  %vm2861 = vc.u32 %v2859, %v2855
  %v2862 = vsel %vm2861, 1, 0
  %v2863 = vadd.s32 %v2859, %v2855
  %v2864 = vadd.s32 %v2860, %v2862
  %v2865 = vadd.s32 %v2864, %v2854
  %v2866 = vadd.s32 %v2865, %v2856
  %v2867 = vand.u32 %v2844, 65535
  %v2868 = vshrl.u32 %v2844, 16
  %v2869 = vand.u32 %v2839, 65535
  %v2870 = vshrl.u32 %v2839, 16
  %v2871 = vmul.u32 %v2867, %v2869
  %v2872 = vmul.u32 %v2867, %v2870
  %v2873 = vmul.u32 %v2868, %v2869
  %v2874 = vmul.u32 %v2868, %v2870
  %v2875 = vshll.u32 %v2872, 16
  %v2876 = vshrl.u32 %v2872, 16
  %v2877 = vshll.u32 %v2873, 16
  %v2878 = vshrl.u32 %v2873, 16
  %vm2879 = vc.u32 %v2871, %v2875
  %v2880 = vsel %vm2879, 1, 0
  %v2881 = vadd.s32 %v2871, %v2875
  %v2882 = vadd.s32 %v2874, %v2880
  %vm2883 = vc.u32 %v2881, %v2877
  %v2884 = vsel %vm2883, 1, 0
  %v2885 = vadd.s32 %v2881, %v2877
  %v2886 = vadd.s32 %v2882, %v2884
  %v2887 = vadd.s32 %v2886, %v2876
  %v2888 = vadd.s32 %v2887, %v2878
  %v2889 = vmul.u32 %v2844, %v2835
  %v2890 = vadd.s32 %v2866, %v2885
  %vm2891 = vc.u32 %v2866, %v2885
  %v2892 = vadd.s32 %v2888, 1
  %v2893 = vsel %vm2891, %v2892, %v2888
  %v2894 = vadd.s32 %v2889, %v2893
  %v2895 = vadd.s32 %v2894, 536870912
  %v2896 = vshrl.u32 %v2895, 30
  %v2897 = vshll.u32 %v2896, 30
  %v2898 = vsub.s32 %v2894, %v2897
  %vm2899 = vcmp.lt.s32.totalorder %v2898, 0
  %v2900 = vsub.s32 0, %v2898
  %v2901 = vsel %vm2899, %v2900, %v2898
  %v2902 = vclz %v2901
  %v2903 = vsub.s32 %v2902, 2
  %vm2904 = vcmp.gt.s32.totalorder 0, %v2903
  %v2905 = vsel %vm2904, 0, %v2903
  %v2906 = vsub.s32 32, %v2905
  %v2907 = vshll.u32 %v2898, %v2905
  %v2908 = vshrl.u32 %v2890, %v2906
  %v2909 = vor.u32 %v2907, %v2908
  %v2910 = vsub.s32 4294967266, %v2905
  %v2911 = vadd.s32 %v2910, 127
  %v2912 = vshll.u32 %v2911, 23
  %v2913 = vor.u32 4788187, %v2912
  %v2914 = vand.u32 2147483647, %v2913
  %v2916 = vcvt.s32.f32 %v2909
  %v2917 = vmul.f32 %v2916, %v2914
  %v2918 = vxor.u32 %v2917, 2147483648
  %v2919 = vsel %vm2798, %v2918, %v2917
  %v2920 = vsub.s32 4, %v2896
  %v2921 = vsel %vm2798, %v2920, %v2896
  %v2922 = vsel %vm2797, %v608, %v2919
  %v2923 = vsel %vm2797, 0, %v2921
  %v2924 = vmul.f32 %v2922, %v2922
  %v2925 = vmul.f32 %v2924, -0.001358992
  %v2926 = vadd.f32 %v2925, 0.041655596
  %v2927 = vmul.f32 %v2924, %v2926
  %v2928 = vadd.f32 %v2927, -0.4999988
  %v2929 = vmul.f32 %v2924, %v2928
  %v2930 = vadd.f32 1.0, %v2929
  %v2931 = vmul.f32 %v2922, %v2922
  %v2932 = vmul.f32 %v2931, -0.00019511016
  %v2933 = vadd.f32 %v2932, 0.008332121
  %v2934 = vmul.f32 %v2931, %v2933
  %v2935 = vadd.f32 %v2934, -0.16666654
  %v2936 = vmul.f32 %v2931, %v2935
  %v2937 = vadd.f32 %v2936, 1.0
  %v2938 = vmul.f32 %v2937, %v2922
  %vm2939 = vweird.f32 %v608
  %v2940 = vadd.s32 %v2923, 3
  %v2941 = vand.u32 %v2940, 3
  %vm2942 = vcmp.lt.s32.totalorder %v2941, 2
  %vm2943 = vcmp.eq.s32.totalorder %v2941, 0
  %v2944 = vxor.u32 %v2938, 2147483648
  %v2945 = vsel %vm2943, %v2930, %v2944
  %vm2946 = vcmp.eq.s32.totalorder %v2941, 2
  %v2947 = vxor.u32 %v2930, 2147483648
  %v2948 = vsel %vm2946, %v2947, %v2938
  %v2949 = vsel %vm2942, %v2945, %v2948
  %v2950 = vsel %vm2939, nan, %v2949
  %v2951 = vand.u32 2147483647, %v609
  %vm2952 = vcmp.le.f32.partialorder %v2951, 0.7853982
  %vm2953 = vcmp.lt.s32.totalorder %v609, 0
  %v2954 = vand.u32 %v609, 2139095040
  %v2955 = vshrl.u32 %v2954, 23
  %v2956 = vsub.s32 %v2955, 127
  %v2957 = vand.u32 2147483647, %v609
  %v2958 = vand.u32 %v2957, 8388607
  %v2959 = vor.u32 %v2958, 8388608
  %v2960 = vsub.s32 0, %v2959
  %v2961 = vadd.s32 %v2956, 1
  %vm2962 = vcmp.gt.s32.totalorder %v2961, 0
  %v2963 = vsel %vm2962, %v2961, 0
  %v2964 = vshrl.u32 %v2963, 5
  %v2965 = vand.u32 %v2963, 31
  %v2966 = vsub.s32 32, %v2965
  %v2967 = vshrl.u32 683565275, %v2966
  %v2968 = vshll.u32 683565275, %v2965
  %v2969 = vshrl.u32 2475754826, %v2966
  %v2970 = vor.u32 %v2968, %v2969
  %v2971 = vshll.u32 2475754826, %v2965
  %v2972 = vshrl.u32 2131351028, %v2966
  %v2973 = vor.u32 %v2971, %v2972
  %v2974 = vshll.u32 2131351028, %v2965
  %v2975 = vshrl.u32 2102212464, %v2966
  %v2976 = vor.u32 %v2974, %v2975
  %v2977 = vshll.u32 2102212464, %v2965
  %v2978 = vshrl.u32 920167782, %v2966
  %v2979 = vor.u32 %v2977, %v2978
  %v2980 = vshll.u32 920167782, %v2965
  %v2981 = vshrl.u32 1326507024, %v2966
  %v2982 = vor.u32 %v2980, %v2981
  %vm2983 = vcmp.lt.s32.totalorder %v2964, 1
  %vm2984 = vcmp.lt.s32.totalorder %v2964, 2
  %vm2985 = vcmp.lt.s32.totalorder %v2964, 3
  %vm2986 = vcmp.lt.s32.totalorder %v2964, 4
  %v2987 = vsel %vm2983, %v2967, %v2970
  %v2988 = vsel %vm2986, %v2976, 2102212464
  %v2989 = vsel %vm2985, %v2973, %v2988
  %v2990 = vsel %vm2984, %v2987, %v2989
  %v2991 = vsel %vm2983, %v2970, %v2973
  %v2992 = vsel %vm2986, %v2979, 920167782
  %v2993 = vsel %vm2985, %v2976, %v2992
  %v2994 = vsel %vm2984, %v2991, %v2993
  %v2995 = vsel %vm2983, %v2973, %v2976
  %v2996 = vsel %vm2986, %v2982, 1326507024
  %v2997 = vsel %vm2985, %v2979, %v2996
  %v2998 = vsel %vm2984, %v2995, %v2997
  %v2999 = vshll.u32 %v2959, 8
  %v3000 = vand.u32 %v2999, 65535
  %v3001 = vshrl.u32 %v2999, 16
  %v3002 = vand.u32 %v2998, 65535
  %v3003 = vshrl.u32 %v2998, 16
  %v3004 = vmul.u32 %v3000, %v3002
  %v3005 = vmul.u32 %v3000, %v3003
  %v3006 = vmul.u32 %v3001, %v3002
  %v3007 = vmul.u32 %v3001, %v3003
  %v3008 = vshll.u32 %v3005, 16
  %v3009 = vshrl.u32 %v3005, 16
  %v3010 = vshll.u32 %v3006, 16
  %v3011 = vshrl.u32 %v3006, 16
  %vm3012 = vc.u32 %v3004, %v3008
  %v3013 = vsel %vm3012, 1, 0
  %v3014 = vadd.s32 %v3004, %v3008
  %v3015 = vadd.s32 %v3007, %v3013
  %vm3016 = vc.u32 %v3014, %v3010
  %v3017 = vsel %vm3016, 1, 0
  %v3018 = vadd.s32 %v3014, %v3010
  %v3019 = vadd.s32 %v3015, %v3017
  %v3020 = vadd.s32 %v3019, %v3009
  %v3021 = vadd.s32 %v3020, %v3011
  %v3022 = vand.u32 %v2999, 65535
  %v3023 = vshrl.u32 %v2999, 16
  %v3024 = vand.u32 %v2994, 65535
  %v3025 = vshrl.u32 %v2994, 16
  %v3026 = vmul.u32 %v3022, %v3024
  %v3027 = vmul.u32 %v3022, %v3025
  %v3028 = vmul.u32 %v3023, %v3024
  %v3029 = vmul.u32 %v3023, %v3025
  %v3030 = vshll.u32 %v3027, 16
  %v3031 = vshrl.u32 %v3027, 16
  %v3032 = vshll.u32 %v3028, 16
  %v3033 = vshrl.u32 %v3028, 16
  %vm3034 = vc.u32 %v3026, %v3030
  %v3035 = vsel %vm3034, 1, 0
  %v3036 = vadd.s32 %v3026, %v3030
  %v3037 = vadd.s32 %v3029, %v3035
  %vm3038 = vc.u32 %v3036, %v3032
  %v3039 = vsel %vm3038, 1, 0
  %v3040 = vadd.s32 %v3036, %v3032
  %v3041 = vadd.s32 %v3037, %v3039
  %v3042 = vadd.s32 %v3041, %v3031
  %v3043 = vadd.s32 %v3042, %v3033
  %v3044 = vmul.u32 %v2999, %v2990
  %v3045 = vadd.s32 %v3021, %v3040
  %vm3046 = vc.u32 %v3021, %v3040
  %v3047 = vadd.s32 %v3043, 1
  %v3048 = vsel %vm3046, %v3047, %v3043
  %v3049 = vadd.s32 %v3044, %v3048
  %v3050 = vadd.s32 %v3049, 536870912
  %v3051 = vshrl.u32 %v3050, 30
  %v3052 = vshll.u32 %v3051, 30
  %v3053 = vsub.s32 %v3049, %v3052
  %vm3054 = vcmp.lt.s32.totalorder %v3053, 0
  %v3055 = vsub.s32 0, %v3053
  %v3056 = vsel %vm3054, %v3055, %v3053
  %v3057 = vclz %v3056
  %v3058 = vsub.s32 %v3057, 2
  %vm3059 = vcmp.gt.s32.totalorder 0, %v3058
  %v3060 = vsel %vm3059, 0, %v3058
  %v3061 = vsub.s32 32, %v3060
  %v3062 = vshll.u32 %v3053, %v3060
  %v3063 = vshrl.u32 %v3045, %v3061
  %v3064 = vor.u32 %v3062, %v3063
  %v3065 = vsub.s32 4294967266, %v3060
  %v3066 = vadd.s32 %v3065, 127
  %v3067 = vshll.u32 %v3066, 23
  %v3068 = vor.u32 4788187, %v3067
  %v3069 = vand.u32 2147483647, %v3068
  %v3071 = vcvt.s32.f32 %v3064
  %v3072 = vmul.f32 %v3071, %v3069
  %v3073 = vxor.u32 %v3072, 2147483648
  %v3074 = vsel %vm2953, %v3073, %v3072
  %v3075 = vsub.s32 4, %v3051
  %v3076 = vsel %vm2953, %v3075, %v3051
  %v3077 = vsel %vm2952, %v609, %v3074
  %v3078 = vsel %vm2952, 0, %v3076
  %v3079 = vmul.f32 %v3077, %v3077
  %v3080 = vmul.f32 %v3079, -0.001358992
  %v3081 = vadd.f32 %v3080, 0.041655596
  %v3082 = vmul.f32 %v3079, %v3081
  %v3083 = vadd.f32 %v3082, -0.4999988
  %v3084 = vmul.f32 %v3079, %v3083
  %v3085 = vadd.f32 1.0, %v3084
  %v3086 = vmul.f32 %v3077, %v3077
  %v3087 = vmul.f32 %v3086, -0.00019511016
  %v3088 = vadd.f32 %v3087, 0.008332121
  %v3089 = vmul.f32 %v3086, %v3088
  %v3090 = vadd.f32 %v3089, -0.16666654
  %v3091 = vmul.f32 %v3086, %v3090
  %v3092 = vadd.f32 %v3091, 1.0
  %v3093 = vmul.f32 %v3092, %v3077
  %vm3094 = vweird.f32 %v609
  %v3095 = vadd.s32 %v3078, 3
  %v3096 = vand.u32 %v3095, 3
  %vm3097 = vcmp.lt.s32.totalorder %v3096, 2
  %vm3098 = vcmp.eq.s32.totalorder %v3096, 0
  %v3099 = vxor.u32 %v3093, 2147483648
  %v3100 = vsel %vm3098, %v3085, %v3099
  %vm3101 = vcmp.eq.s32.totalorder %v3096, 2
  %v3102 = vxor.u32 %v3085, 2147483648
  %v3103 = vsel %vm3101, %v3102, %v3093
  %v3104 = vsel %vm3097, %v3100, %v3103
  %v3105 = vsel %vm3094, nan, %v3104
  %v3106 = vand.u32 2147483647, %v610
  %vm3107 = vcmp.le.f32.partialorder %v3106, 0.7853982
  %vm3108 = vcmp.lt.s32.totalorder %v610, 0
  %v3109 = vand.u32 %v610, 2139095040
  %v3110 = vshrl.u32 %v3109, 23
  %v3111 = vsub.s32 %v3110, 127
  %v3112 = vand.u32 2147483647, %v610
  %v3113 = vand.u32 %v3112, 8388607
  %v3114 = vor.u32 %v3113, 8388608
  %v3115 = vsub.s32 0, %v3114
  %v3116 = vadd.s32 %v3111, 1
  %vm3117 = vcmp.gt.s32.totalorder %v3116, 0
  %v3118 = vsel %vm3117, %v3116, 0
  %v3119 = vshrl.u32 %v3118, 5
  %v3120 = vand.u32 %v3118, 31
  %v3121 = vsub.s32 32, %v3120
  %v3122 = vshrl.u32 683565275, %v3121
  %v3123 = vshll.u32 683565275, %v3120
  %v3124 = vshrl.u32 2475754826, %v3121
  %v3125 = vor.u32 %v3123, %v3124
  %v3126 = vshll.u32 2475754826, %v3120
  %v3127 = vshrl.u32 2131351028, %v3121
  %v3128 = vor.u32 %v3126, %v3127
  %v3129 = vshll.u32 2131351028, %v3120
  %v3130 = vshrl.u32 2102212464, %v3121
  %v3131 = vor.u32 %v3129, %v3130
  %v3132 = vshll.u32 2102212464, %v3120
  %v3133 = vshrl.u32 920167782, %v3121
  %v3134 = vor.u32 %v3132, %v3133
  %v3135 = vshll.u32 920167782, %v3120
  %v3136 = vshrl.u32 1326507024, %v3121
  %v3137 = vor.u32 %v3135, %v3136
  %vm3138 = vcmp.lt.s32.totalorder %v3119, 1
  %vm3139 = vcmp.lt.s32.totalorder %v3119, 2
  %vm3140 = vcmp.lt.s32.totalorder %v3119, 3
  %vm3141 = vcmp.lt.s32.totalorder %v3119, 4
  %v3142 = vsel %vm3138, %v3122, %v3125
  %v3143 = vsel %vm3141, %v3131, 2102212464
  %v3144 = vsel %vm3140, %v3128, %v3143
  %v3145 = vsel %vm3139, %v3142, %v3144
  %v3146 = vsel %vm3138, %v3125, %v3128
  %v3147 = vsel %vm3141, %v3134, 920167782
  %v3148 = vsel %vm3140, %v3131, %v3147
  %v3149 = vsel %vm3139, %v3146, %v3148
  %v3150 = vsel %vm3138, %v3128, %v3131
  %v3151 = vsel %vm3141, %v3137, 1326507024
  %v3152 = vsel %vm3140, %v3134, %v3151
  %v3153 = vsel %vm3139, %v3150, %v3152
  %v3154 = vshll.u32 %v3114, 8
  %v3155 = vand.u32 %v3154, 65535
  %v3156 = vshrl.u32 %v3154, 16
  %v3157 = vand.u32 %v3153, 65535
  %v3158 = vshrl.u32 %v3153, 16
  %v3159 = vmul.u32 %v3155, %v3157
  %v3160 = vmul.u32 %v3155, %v3158
  %v3161 = vmul.u32 %v3156, %v3157
  %v3162 = vmul.u32 %v3156, %v3158
  %v3163 = vshll.u32 %v3160, 16
  %v3164 = vshrl.u32 %v3160, 16
  %v3165 = vshll.u32 %v3161, 16
  %v3166 = vshrl.u32 %v3161, 16
  %vm3167 = vc.u32 %v3159, %v3163
  %v3168 = vsel %vm3167, 1, 0
  %v3169 = vadd.s32 %v3159, %v3163
  %v3170 = vadd.s32 %v3162, %v3168
  %vm3171 = vc.u32 %v3169, %v3165
  %v3172 = vsel %vm3171, 1, 0
  %v3173 = vadd.s32 %v3169, %v3165
  %v3174 = vadd.s32 %v3170, %v3172
  %v3175 = vadd.s32 %v3174, %v3164
  %v3176 = vadd.s32 %v3175, %v3166
  %v3177 = vand.u32 %v3154, 65535
  %v3178 = vshrl.u32 %v3154, 16
  %v3179 = vand.u32 %v3149, 65535
  %v3180 = vshrl.u32 %v3149, 16
  %v3181 = vmul.u32 %v3177, %v3179
  %v3182 = vmul.u32 %v3177, %v3180
  %v3183 = vmul.u32 %v3178, %v3179
  %v3184 = vmul.u32 %v3178, %v3180
  %v3185 = vshll.u32 %v3182, 16
  %v3186 = vshrl.u32 %v3182, 16
  %v3187 = vshll.u32 %v3183, 16
  %v3188 = vshrl.u32 %v3183, 16
  %vm3189 = vc.u32 %v3181, %v3185
  %v3190 = vsel %vm3189, 1, 0
  %v3191 = vadd.s32 %v3181, %v3185
  %v3192 = vadd.s32 %v3184, %v3190
  %vm3193 = vc.u32 %v3191, %v3187
  %v3194 = vsel %vm3193, 1, 0
  %v3195 = vadd.s32 %v3191, %v3187
  %v3196 = vadd.s32 %v3192, %v3194
  %v3197 = vadd.s32 %v3196, %v3186
  %v3198 = vadd.s32 %v3197, %v3188
  %v3199 = vmul.u32 %v3154, %v3145
  %v3200 = vadd.s32 %v3176, %v3195
  %vm3201 = vc.u32 %v3176, %v3195
  %v3202 = vadd.s32 %v3198, 1
  %v3203 = vsel %vm3201, %v3202, %v3198
  %v3204 = vadd.s32 %v3199, %v3203
  %v3205 = vadd.s32 %v3204, 536870912
  %v3206 = vshrl.u32 %v3205, 30
  %v3207 = vshll.u32 %v3206, 30
  %v3208 = vsub.s32 %v3204, %v3207
  %vm3209 = vcmp.lt.s32.totalorder %v3208, 0
  %v3210 = vsub.s32 0, %v3208
  %v3211 = vsel %vm3209, %v3210, %v3208
  %v3212 = vclz %v3211
  %v3213 = vsub.s32 %v3212, 2
  %vm3214 = vcmp.gt.s32.totalorder 0, %v3213
  %v3215 = vsel %vm3214, 0, %v3213
  %v3216 = vsub.s32 32, %v3215
  %v3217 = vshll.u32 %v3208, %v3215
  %v3218 = vshrl.u32 %v3200, %v3216
  %v3219 = vor.u32 %v3217, %v3218
  %v3220 = vsub.s32 4294967266, %v3215
  %v3221 = vadd.s32 %v3220, 127
  %v3222 = vshll.u32 %v3221, 23
  %v3223 = vor.u32 4788187, %v3222
  %v3224 = vand.u32 2147483647, %v3223
  %v3226 = vcvt.s32.f32 %v3219
  %v3227 = vmul.f32 %v3226, %v3224
  %v3228 = vxor.u32 %v3227, 2147483648
  %v3229 = vsel %vm3108, %v3228, %v3227
  %v3230 = vsub.s32 4, %v3206
  %v3231 = vsel %vm3108, %v3230, %v3206
  %v3232 = vsel %vm3107, %v610, %v3229
  %v3233 = vsel %vm3107, 0, %v3231
  %v3234 = vmul.f32 %v3232, %v3232
  %v3235 = vmul.f32 %v3234, -0.001358992
  %v3236 = vadd.f32 %v3235, 0.041655596
  %v3237 = vmul.f32 %v3234, %v3236
  %v3238 = vadd.f32 %v3237, -0.4999988
  %v3239 = vmul.f32 %v3234, %v3238
  %v3240 = vadd.f32 1.0, %v3239
  %v3241 = vmul.f32 %v3232, %v3232
  %v3242 = vmul.f32 %v3241, -0.00019511016
  %v3243 = vadd.f32 %v3242, 0.008332121
  %v3244 = vmul.f32 %v3241, %v3243
  %v3245 = vadd.f32 %v3244, -0.16666654
  %v3246 = vmul.f32 %v3241, %v3245
  %v3247 = vadd.f32 %v3246, 1.0
  %v3248 = vmul.f32 %v3247, %v3232
  %vm3249 = vweird.f32 %v610
  %v3250 = vadd.s32 %v3233, 3
  %v3251 = vand.u32 %v3250, 3
  %vm3252 = vcmp.lt.s32.totalorder %v3251, 2
  %vm3253 = vcmp.eq.s32.totalorder %v3251, 0
  %v3254 = vxor.u32 %v3248, 2147483648
  %v3255 = vsel %vm3253, %v3240, %v3254
  %vm3256 = vcmp.eq.s32.totalorder %v3251, 2
  %v3257 = vxor.u32 %v3240, 2147483648
  %v3258 = vsel %vm3256, %v3257, %v3248
  %v3259 = vsel %vm3252, %v3255, %v3258
  %v3260 = vsel %vm3249, nan, %v3259
  %v3261 = vand.u32 2147483647, %v611
  %vm3262 = vcmp.le.f32.partialorder %v3261, 0.7853982
  %vm3263 = vcmp.lt.s32.totalorder %v611, 0
  %v3264 = vand.u32 %v611, 2139095040
  %v3265 = vshrl.u32 %v3264, 23
  %v3266 = vsub.s32 %v3265, 127
  %v3267 = vand.u32 2147483647, %v611
  %v3268 = vand.u32 %v3267, 8388607
  %v3269 = vor.u32 %v3268, 8388608
  %v3270 = vsub.s32 0, %v3269
  %v3271 = vadd.s32 %v3266, 1
  %vm3272 = vcmp.gt.s32.totalorder %v3271, 0
  %v3273 = vsel %vm3272, %v3271, 0
  %v3274 = vshrl.u32 %v3273, 5
  %v3275 = vand.u32 %v3273, 31
  %v3276 = vsub.s32 32, %v3275
  %v3277 = vshrl.u32 683565275, %v3276
  %v3278 = vshll.u32 683565275, %v3275
  %v3279 = vshrl.u32 2475754826, %v3276
  %v3280 = vor.u32 %v3278, %v3279
  %v3281 = vshll.u32 2475754826, %v3275
  %v3282 = vshrl.u32 2131351028, %v3276
  %v3283 = vor.u32 %v3281, %v3282
  %v3284 = vshll.u32 2131351028, %v3275
  %v3285 = vshrl.u32 2102212464, %v3276
  %v3286 = vor.u32 %v3284, %v3285
  %v3287 = vshll.u32 2102212464, %v3275
  %v3288 = vshrl.u32 920167782, %v3276
  %v3289 = vor.u32 %v3287, %v3288
  %v3290 = vshll.u32 920167782, %v3275
  %v3291 = vshrl.u32 1326507024, %v3276
  %v3292 = vor.u32 %v3290, %v3291
  %vm3293 = vcmp.lt.s32.totalorder %v3274, 1
  %vm3294 = vcmp.lt.s32.totalorder %v3274, 2
  %vm3295 = vcmp.lt.s32.totalorder %v3274, 3
  %vm3296 = vcmp.lt.s32.totalorder %v3274, 4
  %v3297 = vsel %vm3293, %v3277, %v3280
  %v3298 = vsel %vm3296, %v3286, 2102212464
  %v3299 = vsel %vm3295, %v3283, %v3298
  %v3300 = vsel %vm3294, %v3297, %v3299
  %v3301 = vsel %vm3293, %v3280, %v3283
  %v3302 = vsel %vm3296, %v3289, 920167782
  %v3303 = vsel %vm3295, %v3286, %v3302
  %v3304 = vsel %vm3294, %v3301, %v3303
  %v3305 = vsel %vm3293, %v3283, %v3286
  %v3306 = vsel %vm3296, %v3292, 1326507024
  %v3307 = vsel %vm3295, %v3289, %v3306
  %v3308 = vsel %vm3294, %v3305, %v3307
  %v3309 = vshll.u32 %v3269, 8
  %v3310 = vand.u32 %v3309, 65535
  %v3311 = vshrl.u32 %v3309, 16
  %v3312 = vand.u32 %v3308, 65535
  %v3313 = vshrl.u32 %v3308, 16
  %v3314 = vmul.u32 %v3310, %v3312
  %v3315 = vmul.u32 %v3310, %v3313
  %v3316 = vmul.u32 %v3311, %v3312
  %v3317 = vmul.u32 %v3311, %v3313
  %v3318 = vshll.u32 %v3315, 16
  %v3319 = vshrl.u32 %v3315, 16
  %v3320 = vshll.u32 %v3316, 16
  %v3321 = vshrl.u32 %v3316, 16
  %vm3322 = vc.u32 %v3314, %v3318
  %v3323 = vsel %vm3322, 1, 0
  %v3324 = vadd.s32 %v3314, %v3318
  %v3325 = vadd.s32 %v3317, %v3323
  %vm3326 = vc.u32 %v3324, %v3320
  %v3327 = vsel %vm3326, 1, 0
  %v3328 = vadd.s32 %v3324, %v3320
  %v3329 = vadd.s32 %v3325, %v3327
  %v3330 = vadd.s32 %v3329, %v3319
  %v3331 = vadd.s32 %v3330, %v3321
  %v3332 = vand.u32 %v3309, 65535
  %v3333 = vshrl.u32 %v3309, 16
  %v3334 = vand.u32 %v3304, 65535
  %v3335 = vshrl.u32 %v3304, 16
  %v3336 = vmul.u32 %v3332, %v3334
  %v3337 = vmul.u32 %v3332, %v3335
  %v3338 = vmul.u32 %v3333, %v3334
  %v3339 = vmul.u32 %v3333, %v3335
  %v3340 = vshll.u32 %v3337, 16
  %v3341 = vshrl.u32 %v3337, 16
  %v3342 = vshll.u32 %v3338, 16
  %v3343 = vshrl.u32 %v3338, 16
  %vm3344 = vc.u32 %v3336, %v3340
  %v3345 = vsel %vm3344, 1, 0
  %v3346 = vadd.s32 %v3336, %v3340
  %v3347 = vadd.s32 %v3339, %v3345
  %vm3348 = vc.u32 %v3346, %v3342
  %v3349 = vsel %vm3348, 1, 0
  %v3350 = vadd.s32 %v3346, %v3342
  %v3351 = vadd.s32 %v3347, %v3349
  %v3352 = vadd.s32 %v3351, %v3341
  %v3353 = vadd.s32 %v3352, %v3343
  %v3354 = vmul.u32 %v3309, %v3300
  %v3355 = vadd.s32 %v3331, %v3350
  %vm3356 = vc.u32 %v3331, %v3350
  %v3357 = vadd.s32 %v3353, 1
  %v3358 = vsel %vm3356, %v3357, %v3353
  %v3359 = vadd.s32 %v3354, %v3358
  %v3360 = vadd.s32 %v3359, 536870912
  %v3361 = vshrl.u32 %v3360, 30
  %v3362 = vshll.u32 %v3361, 30
  %v3363 = vsub.s32 %v3359, %v3362
  %vm3364 = vcmp.lt.s32.totalorder %v3363, 0
  %v3365 = vsub.s32 0, %v3363
  %v3366 = vsel %vm3364, %v3365, %v3363
  %v3367 = vclz %v3366
  %v3368 = vsub.s32 %v3367, 2
  %vm3369 = vcmp.gt.s32.totalorder 0, %v3368
  %v3370 = vsel %vm3369, 0, %v3368
  %v3371 = vsub.s32 32, %v3370
  %v3372 = vshll.u32 %v3363, %v3370
  %v3373 = vshrl.u32 %v3355, %v3371
  %v3374 = vor.u32 %v3372, %v3373
  %v3375 = vsub.s32 4294967266, %v3370
  %v3376 = vadd.s32 %v3375, 127
  %v3377 = vshll.u32 %v3376, 23
  %v3378 = vor.u32 4788187, %v3377
  %v3379 = vand.u32 2147483647, %v3378
  %v3381 = vcvt.s32.f32 %v3374
  %v3382 = vmul.f32 %v3381, %v3379
  %v3383 = vxor.u32 %v3382, 2147483648
  %v3384 = vsel %vm3263, %v3383, %v3382
  %v3385 = vsub.s32 4, %v3361
  %v3386 = vsel %vm3263, %v3385, %v3361
  %v3387 = vsel %vm3262, %v611, %v3384
  %v3388 = vsel %vm3262, 0, %v3386
  %v3389 = vmul.f32 %v3387, %v3387
  %v3390 = vmul.f32 %v3389, -0.001358992
  %v3391 = vadd.f32 %v3390, 0.041655596
  %v3392 = vmul.f32 %v3389, %v3391
  %v3393 = vadd.f32 %v3392, -0.4999988
  %v3394 = vmul.f32 %v3389, %v3393
  %v3395 = vadd.f32 1.0, %v3394
  %v3396 = vmul.f32 %v3387, %v3387
  %v3397 = vmul.f32 %v3396, -0.00019511016
  %v3398 = vadd.f32 %v3397, 0.008332121
  %v3399 = vmul.f32 %v3396, %v3398
  %v3400 = vadd.f32 %v3399, -0.16666654
  %v3401 = vmul.f32 %v3396, %v3400
  %v3402 = vadd.f32 %v3401, 1.0
  %v3403 = vmul.f32 %v3402, %v3387
  %vm3404 = vweird.f32 %v611
  %v3405 = vadd.s32 %v3388, 3
  %v3406 = vand.u32 %v3405, 3
  %vm3407 = vcmp.lt.s32.totalorder %v3406, 2
  %vm3408 = vcmp.eq.s32.totalorder %v3406, 0
  %v3409 = vxor.u32 %v3403, 2147483648
  %v3410 = vsel %vm3408, %v3395, %v3409
  %vm3411 = vcmp.eq.s32.totalorder %v3406, 2
  %v3412 = vxor.u32 %v3395, 2147483648
  %v3413 = vsel %vm3411, %v3412, %v3403
  %v3414 = vsel %vm3407, %v3410, %v3413
  %v3415 = vsel %vm3404, nan, %v3414
  %v3416 = vand.u32 2147483647, %v612
  %vm3417 = vcmp.le.f32.partialorder %v3416, 0.7853982
  %vm3418 = vcmp.lt.s32.totalorder %v612, 0
  %v3419 = vand.u32 %v612, 2139095040
  %v3420 = vshrl.u32 %v3419, 23
  %v3421 = vsub.s32 %v3420, 127
  %v3422 = vand.u32 2147483647, %v612
  %v3423 = vand.u32 %v3422, 8388607
  %v3424 = vor.u32 %v3423, 8388608
  %v3425 = vsub.s32 0, %v3424
  %v3426 = vadd.s32 %v3421, 1
  %vm3427 = vcmp.gt.s32.totalorder %v3426, 0
  %v3428 = vsel %vm3427, %v3426, 0
  %v3429 = vshrl.u32 %v3428, 5
  %v3430 = vand.u32 %v3428, 31
  %v3431 = vsub.s32 32, %v3430
  %v3432 = vshrl.u32 683565275, %v3431
  %v3433 = vshll.u32 683565275, %v3430
  %v3434 = vshrl.u32 2475754826, %v3431
  %v3435 = vor.u32 %v3433, %v3434
  %v3436 = vshll.u32 2475754826, %v3430
  %v3437 = vshrl.u32 2131351028, %v3431
  %v3438 = vor.u32 %v3436, %v3437
  %v3439 = vshll.u32 2131351028, %v3430
  %v3440 = vshrl.u32 2102212464, %v3431
  %v3441 = vor.u32 %v3439, %v3440
  %v3442 = vshll.u32 2102212464, %v3430
  %v3443 = vshrl.u32 920167782, %v3431
  %v3444 = vor.u32 %v3442, %v3443
  %v3445 = vshll.u32 920167782, %v3430
  %v3446 = vshrl.u32 1326507024, %v3431
  %v3447 = vor.u32 %v3445, %v3446
  %vm3448 = vcmp.lt.s32.totalorder %v3429, 1
  %vm3449 = vcmp.lt.s32.totalorder %v3429, 2
  %vm3450 = vcmp.lt.s32.totalorder %v3429, 3
  %vm3451 = vcmp.lt.s32.totalorder %v3429, 4
  %v3452 = vsel %vm3448, %v3432, %v3435
  %v3453 = vsel %vm3451, %v3441, 2102212464
  %v3454 = vsel %vm3450, %v3438, %v3453
  %v3455 = vsel %vm3449, %v3452, %v3454
  %v3456 = vsel %vm3448, %v3435, %v3438
  %v3457 = vsel %vm3451, %v3444, 920167782
  %v3458 = vsel %vm3450, %v3441, %v3457
  %v3459 = vsel %vm3449, %v3456, %v3458
  %v3460 = vsel %vm3448, %v3438, %v3441
  %v3461 = vsel %vm3451, %v3447, 1326507024
  %v3462 = vsel %vm3450, %v3444, %v3461
  %v3463 = vsel %vm3449, %v3460, %v3462
  %v3464 = vshll.u32 %v3424, 8
  %v3465 = vand.u32 %v3464, 65535
  %v3466 = vshrl.u32 %v3464, 16
  %v3467 = vand.u32 %v3463, 65535
  %v3468 = vshrl.u32 %v3463, 16
  %v3469 = vmul.u32 %v3465, %v3467
  %v3470 = vmul.u32 %v3465, %v3468
  %v3471 = vmul.u32 %v3466, %v3467
  %v3472 = vmul.u32 %v3466, %v3468
  %v3473 = vshll.u32 %v3470, 16
  %v3474 = vshrl.u32 %v3470, 16
  %v3475 = vshll.u32 %v3471, 16
  %v3476 = vshrl.u32 %v3471, 16
  %vm3477 = vc.u32 %v3469, %v3473
  %v3478 = vsel %vm3477, 1, 0
  %v3479 = vadd.s32 %v3469, %v3473
  %v3480 = vadd.s32 %v3472, %v3478
  %vm3481 = vc.u32 %v3479, %v3475
  %v3482 = vsel %vm3481, 1, 0
  %v3483 = vadd.s32 %v3479, %v3475
  %v3484 = vadd.s32 %v3480, %v3482
  %v3485 = vadd.s32 %v3484, %v3474
  %v3486 = vadd.s32 %v3485, %v3476
  %v3487 = vand.u32 %v3464, 65535
  %v3488 = vshrl.u32 %v3464, 16
  %v3489 = vand.u32 %v3459, 65535
  %v3490 = vshrl.u32 %v3459, 16
  %v3491 = vmul.u32 %v3487, %v3489
  %v3492 = vmul.u32 %v3487, %v3490
  %v3493 = vmul.u32 %v3488, %v3489
  %v3494 = vmul.u32 %v3488, %v3490
  %v3495 = vshll.u32 %v3492, 16
  %v3496 = vshrl.u32 %v3492, 16
  %v3497 = vshll.u32 %v3493, 16
  %v3498 = vshrl.u32 %v3493, 16
  %vm3499 = vc.u32 %v3491, %v3495
  %v3500 = vsel %vm3499, 1, 0
  %v3501 = vadd.s32 %v3491, %v3495
  %v3502 = vadd.s32 %v3494, %v3500
  %vm3503 = vc.u32 %v3501, %v3497
  %v3504 = vsel %vm3503, 1, 0
  %v3505 = vadd.s32 %v3501, %v3497
  %v3506 = vadd.s32 %v3502, %v3504
  %v3507 = vadd.s32 %v3506, %v3496
  %v3508 = vadd.s32 %v3507, %v3498
  %v3509 = vmul.u32 %v3464, %v3455
  %v3510 = vadd.s32 %v3486, %v3505
  %vm3511 = vc.u32 %v3486, %v3505
  %v3512 = vadd.s32 %v3508, 1
  %v3513 = vsel %vm3511, %v3512, %v3508
  %v3514 = vadd.s32 %v3509, %v3513
  %v3515 = vadd.s32 %v3514, 536870912
  %v3516 = vshrl.u32 %v3515, 30
  %v3517 = vshll.u32 %v3516, 30
  %v3518 = vsub.s32 %v3514, %v3517
  %vm3519 = vcmp.lt.s32.totalorder %v3518, 0
  %v3520 = vsub.s32 0, %v3518
  %v3521 = vsel %vm3519, %v3520, %v3518
  %v3522 = vclz %v3521
  %v3523 = vsub.s32 %v3522, 2
  %vm3524 = vcmp.gt.s32.totalorder 0, %v3523
  %v3525 = vsel %vm3524, 0, %v3523
  %v3526 = vsub.s32 32, %v3525
  %v3527 = vshll.u32 %v3518, %v3525
  %v3528 = vshrl.u32 %v3510, %v3526
  %v3529 = vor.u32 %v3527, %v3528
  %v3530 = vsub.s32 4294967266, %v3525
  %v3531 = vadd.s32 %v3530, 127
  %v3532 = vshll.u32 %v3531, 23
  %v3533 = vor.u32 4788187, %v3532
  %v3534 = vand.u32 2147483647, %v3533
  %v3536 = vcvt.s32.f32 %v3529
  %v3537 = vmul.f32 %v3536, %v3534
  %v3538 = vxor.u32 %v3537, 2147483648
  %v3539 = vsel %vm3418, %v3538, %v3537
  %v3540 = vsub.s32 4, %v3516
  %v3541 = vsel %vm3418, %v3540, %v3516
  %v3542 = vsel %vm3417, %v612, %v3539
  %v3543 = vsel %vm3417, 0, %v3541
  %v3544 = vmul.f32 %v3542, %v3542
  %v3545 = vmul.f32 %v3544, -0.001358992
  %v3546 = vadd.f32 %v3545, 0.041655596
  %v3547 = vmul.f32 %v3544, %v3546
  %v3548 = vadd.f32 %v3547, -0.4999988
  %v3549 = vmul.f32 %v3544, %v3548
  %v3550 = vadd.f32 1.0, %v3549
  %v3551 = vmul.f32 %v3542, %v3542
  %v3552 = vmul.f32 %v3551, -0.00019511016
  %v3553 = vadd.f32 %v3552, 0.008332121
  %v3554 = vmul.f32 %v3551, %v3553
  %v3555 = vadd.f32 %v3554, -0.16666654
  %v3556 = vmul.f32 %v3551, %v3555
  %v3557 = vadd.f32 %v3556, 1.0
  %v3558 = vmul.f32 %v3557, %v3542
  %vm3559 = vweird.f32 %v612
  %v3560 = vadd.s32 %v3543, 3
  %v3561 = vand.u32 %v3560, 3
  %vm3562 = vcmp.lt.s32.totalorder %v3561, 2
  %vm3563 = vcmp.eq.s32.totalorder %v3561, 0
  %v3564 = vxor.u32 %v3558, 2147483648
  %v3565 = vsel %vm3563, %v3550, %v3564
  %vm3566 = vcmp.eq.s32.totalorder %v3561, 2
  %v3567 = vxor.u32 %v3550, 2147483648
  %v3568 = vsel %vm3566, %v3567, %v3558
  %v3569 = vsel %vm3562, %v3565, %v3568
  %v3570 = vsel %vm3559, nan, %v3569
  %v3571 = vand.u32 2147483647, %v613
  %vm3572 = vcmp.le.f32.partialorder %v3571, 0.7853982
  %vm3573 = vcmp.lt.s32.totalorder %v613, 0
  %v3574 = vand.u32 %v613, 2139095040
  %v3575 = vshrl.u32 %v3574, 23
  %v3576 = vsub.s32 %v3575, 127
  %v3577 = vand.u32 2147483647, %v613
  %v3578 = vand.u32 %v3577, 8388607
  %v3579 = vor.u32 %v3578, 8388608
  %v3580 = vsub.s32 0, %v3579
  %v3581 = vadd.s32 %v3576, 1
  %vm3582 = vcmp.gt.s32.totalorder %v3581, 0
  %v3583 = vsel %vm3582, %v3581, 0
  %v3584 = vshrl.u32 %v3583, 5
  %v3585 = vand.u32 %v3583, 31
  %v3586 = vsub.s32 32, %v3585
  %v3587 = vshrl.u32 683565275, %v3586
  %v3588 = vshll.u32 683565275, %v3585
  %v3589 = vshrl.u32 2475754826, %v3586
  %v3590 = vor.u32 %v3588, %v3589
  %v3591 = vshll.u32 2475754826, %v3585
  %v3592 = vshrl.u32 2131351028, %v3586
  %v3593 = vor.u32 %v3591, %v3592
  %v3594 = vshll.u32 2131351028, %v3585
  %v3595 = vshrl.u32 2102212464, %v3586
  %v3596 = vor.u32 %v3594, %v3595
  %v3597 = vshll.u32 2102212464, %v3585
  %v3598 = vshrl.u32 920167782, %v3586
  %v3599 = vor.u32 %v3597, %v3598
  %v3600 = vshll.u32 920167782, %v3585
  %v3601 = vshrl.u32 1326507024, %v3586
  %v3602 = vor.u32 %v3600, %v3601
  %vm3603 = vcmp.lt.s32.totalorder %v3584, 1
  %vm3604 = vcmp.lt.s32.totalorder %v3584, 2
  %vm3605 = vcmp.lt.s32.totalorder %v3584, 3
  %vm3606 = vcmp.lt.s32.totalorder %v3584, 4
  %v3607 = vsel %vm3603, %v3587, %v3590
  %v3608 = vsel %vm3606, %v3596, 2102212464
  %v3609 = vsel %vm3605, %v3593, %v3608
  %v3610 = vsel %vm3604, %v3607, %v3609
  %v3611 = vsel %vm3603, %v3590, %v3593
  %v3612 = vsel %vm3606, %v3599, 920167782
  %v3613 = vsel %vm3605, %v3596, %v3612
  %v3614 = vsel %vm3604, %v3611, %v3613
  %v3615 = vsel %vm3603, %v3593, %v3596
  %v3616 = vsel %vm3606, %v3602, 1326507024
  %v3617 = vsel %vm3605, %v3599, %v3616
  %v3618 = vsel %vm3604, %v3615, %v3617
  %v3619 = vshll.u32 %v3579, 8
  %v3620 = vand.u32 %v3619, 65535
  %v3621 = vshrl.u32 %v3619, 16
  %v3622 = vand.u32 %v3618, 65535
  %v3623 = vshrl.u32 %v3618, 16
  %v3624 = vmul.u32 %v3620, %v3622
  %v3625 = vmul.u32 %v3620, %v3623
  %v3626 = vmul.u32 %v3621, %v3622
  %v3627 = vmul.u32 %v3621, %v3623
  %v3628 = vshll.u32 %v3625, 16
  %v3629 = vshrl.u32 %v3625, 16
  %v3630 = vshll.u32 %v3626, 16
  %v3631 = vshrl.u32 %v3626, 16
  %vm3632 = vc.u32 %v3624, %v3628
  %v3633 = vsel %vm3632, 1, 0
  %v3634 = vadd.s32 %v3624, %v3628
  %v3635 = vadd.s32 %v3627, %v3633
  %vm3636 = vc.u32 %v3634, %v3630
  %v3637 = vsel %vm3636, 1, 0
  %v3638 = vadd.s32 %v3634, %v3630
  %v3639 = vadd.s32 %v3635, %v3637
  %v3640 = vadd.s32 %v3639, %v3629
  %v3641 = vadd.s32 %v3640, %v3631
  %v3642 = vand.u32 %v3619, 65535
  %v3643 = vshrl.u32 %v3619, 16
  %v3644 = vand.u32 %v3614, 65535
  %v3645 = vshrl.u32 %v3614, 16
  %v3646 = vmul.u32 %v3642, %v3644
  %v3647 = vmul.u32 %v3642, %v3645
  %v3648 = vmul.u32 %v3643, %v3644
  %v3649 = vmul.u32 %v3643, %v3645
  %v3650 = vshll.u32 %v3647, 16
  %v3651 = vshrl.u32 %v3647, 16
  %v3652 = vshll.u32 %v3648, 16
  %v3653 = vshrl.u32 %v3648, 16
  %vm3654 = vc.u32 %v3646, %v3650
  %v3655 = vsel %vm3654, 1, 0
  %v3656 = vadd.s32 %v3646, %v3650
  %v3657 = vadd.s32 %v3649, %v3655
  %vm3658 = vc.u32 %v3656, %v3652
  %v3659 = vsel %vm3658, 1, 0
  %v3660 = vadd.s32 %v3656, %v3652
  %v3661 = vadd.s32 %v3657, %v3659
  %v3662 = vadd.s32 %v3661, %v3651
  %v3663 = vadd.s32 %v3662, %v3653
  %v3664 = vmul.u32 %v3619, %v3610
  %v3665 = vadd.s32 %v3641, %v3660
  %vm3666 = vc.u32 %v3641, %v3660
  %v3667 = vadd.s32 %v3663, 1
  %v3668 = vsel %vm3666, %v3667, %v3663
  %v3669 = vadd.s32 %v3664, %v3668
  %v3670 = vadd.s32 %v3669, 536870912
  %v3671 = vshrl.u32 %v3670, 30
  %v3672 = vshll.u32 %v3671, 30
  %v3673 = vsub.s32 %v3669, %v3672
  %vm3674 = vcmp.lt.s32.totalorder %v3673, 0
  %v3675 = vsub.s32 0, %v3673
  %v3676 = vsel %vm3674, %v3675, %v3673
  %v3677 = vclz %v3676
  %v3678 = vsub.s32 %v3677, 2
  %vm3679 = vcmp.gt.s32.totalorder 0, %v3678
  %v3680 = vsel %vm3679, 0, %v3678
  %v3681 = vsub.s32 32, %v3680
  %v3682 = vshll.u32 %v3673, %v3680
  %v3683 = vshrl.u32 %v3665, %v3681
  %v3684 = vor.u32 %v3682, %v3683
  %v3685 = vsub.s32 4294967266, %v3680
  %v3686 = vadd.s32 %v3685, 127
  %v3687 = vshll.u32 %v3686, 23
  %v3688 = vor.u32 4788187, %v3687
  %v3689 = vand.u32 2147483647, %v3688
  %v3691 = vcvt.s32.f32 %v3684
  %v3692 = vmul.f32 %v3691, %v3689
  %v3693 = vxor.u32 %v3692, 2147483648
  %v3694 = vsel %vm3573, %v3693, %v3692
  %v3695 = vsub.s32 4, %v3671
  %v3696 = vsel %vm3573, %v3695, %v3671
  %v3697 = vsel %vm3572, %v613, %v3694
  %v3698 = vsel %vm3572, 0, %v3696
  %v3699 = vmul.f32 %v3697, %v3697
  %v3700 = vmul.f32 %v3699, -0.001358992
  %v3701 = vadd.f32 %v3700, 0.041655596
  %v3702 = vmul.f32 %v3699, %v3701
  %v3703 = vadd.f32 %v3702, -0.4999988
  %v3704 = vmul.f32 %v3699, %v3703
  %v3705 = vadd.f32 1.0, %v3704
  %v3706 = vmul.f32 %v3697, %v3697
  %v3707 = vmul.f32 %v3706, -0.00019511016
  %v3708 = vadd.f32 %v3707, 0.008332121
  %v3709 = vmul.f32 %v3706, %v3708
  %v3710 = vadd.f32 %v3709, -0.16666654
  %v3711 = vmul.f32 %v3706, %v3710
  %v3712 = vadd.f32 %v3711, 1.0
  %v3713 = vmul.f32 %v3712, %v3697
  %vm3714 = vweird.f32 %v613
  %v3715 = vadd.s32 %v3698, 3
  %v3716 = vand.u32 %v3715, 3
  %vm3717 = vcmp.lt.s32.totalorder %v3716, 2
  %vm3718 = vcmp.eq.s32.totalorder %v3716, 0
  %v3719 = vxor.u32 %v3713, 2147483648
  %v3720 = vsel %vm3718, %v3705, %v3719
  %vm3721 = vcmp.eq.s32.totalorder %v3716, 2
  %v3722 = vxor.u32 %v3705, 2147483648
  %v3723 = vsel %vm3721, %v3722, %v3713
  %v3724 = vsel %vm3717, %v3720, %v3723
  %v3725 = vsel %vm3714, nan, %v3724
  %v3726 = vand.u32 2147483647, %v614
  %vm3727 = vcmp.le.f32.partialorder %v3726, 0.7853982
  %vm3728 = vcmp.lt.s32.totalorder %v614, 0
  %v3729 = vand.u32 %v614, 2139095040
  %v3730 = vshrl.u32 %v3729, 23
  %v3731 = vsub.s32 %v3730, 127
  %v3732 = vand.u32 2147483647, %v614
  %v3733 = vand.u32 %v3732, 8388607
  %v3734 = vor.u32 %v3733, 8388608
  %v3735 = vsub.s32 0, %v3734
  %v3736 = vadd.s32 %v3731, 1
  %vm3737 = vcmp.gt.s32.totalorder %v3736, 0
  %v3738 = vsel %vm3737, %v3736, 0
  %v3739 = vshrl.u32 %v3738, 5
  %v3740 = vand.u32 %v3738, 31
  %v3741 = vsub.s32 32, %v3740
  %v3742 = vshrl.u32 683565275, %v3741
  %v3743 = vshll.u32 683565275, %v3740
  %v3744 = vshrl.u32 2475754826, %v3741
  %v3745 = vor.u32 %v3743, %v3744
  %v3746 = vshll.u32 2475754826, %v3740
  %v3747 = vshrl.u32 2131351028, %v3741
  %v3748 = vor.u32 %v3746, %v3747
  %v3749 = vshll.u32 2131351028, %v3740
  %v3750 = vshrl.u32 2102212464, %v3741
  %v3751 = vor.u32 %v3749, %v3750
  %v3752 = vshll.u32 2102212464, %v3740
  %v3753 = vshrl.u32 920167782, %v3741
  %v3754 = vor.u32 %v3752, %v3753
  %v3755 = vshll.u32 920167782, %v3740
  %v3756 = vshrl.u32 1326507024, %v3741
  %v3757 = vor.u32 %v3755, %v3756
  %vm3758 = vcmp.lt.s32.totalorder %v3739, 1
  %vm3759 = vcmp.lt.s32.totalorder %v3739, 2
  %vm3760 = vcmp.lt.s32.totalorder %v3739, 3
  %vm3761 = vcmp.lt.s32.totalorder %v3739, 4
  %v3762 = vsel %vm3758, %v3742, %v3745
  %v3763 = vsel %vm3761, %v3751, 2102212464
  %v3764 = vsel %vm3760, %v3748, %v3763
  %v3765 = vsel %vm3759, %v3762, %v3764
  %v3766 = vsel %vm3758, %v3745, %v3748
  %v3767 = vsel %vm3761, %v3754, 920167782
  %v3768 = vsel %vm3760, %v3751, %v3767
  %v3769 = vsel %vm3759, %v3766, %v3768
  %v3770 = vsel %vm3758, %v3748, %v3751
  %v3771 = vsel %vm3761, %v3757, 1326507024
  %v3772 = vsel %vm3760, %v3754, %v3771
  %v3773 = vsel %vm3759, %v3770, %v3772
  %v3774 = vshll.u32 %v3734, 8
  %v3775 = vand.u32 %v3774, 65535
  %v3776 = vshrl.u32 %v3774, 16
  %v3777 = vand.u32 %v3773, 65535
  %v3778 = vshrl.u32 %v3773, 16
  %v3779 = vmul.u32 %v3775, %v3777
  %v3780 = vmul.u32 %v3775, %v3778
  %v3781 = vmul.u32 %v3776, %v3777
  %v3782 = vmul.u32 %v3776, %v3778
  %v3783 = vshll.u32 %v3780, 16
  %v3784 = vshrl.u32 %v3780, 16
  %v3785 = vshll.u32 %v3781, 16
  %v3786 = vshrl.u32 %v3781, 16
  %vm3787 = vc.u32 %v3779, %v3783
  %v3788 = vsel %vm3787, 1, 0
  %v3789 = vadd.s32 %v3779, %v3783
  %v3790 = vadd.s32 %v3782, %v3788
  %vm3791 = vc.u32 %v3789, %v3785
  %v3792 = vsel %vm3791, 1, 0
  %v3793 = vadd.s32 %v3789, %v3785
  %v3794 = vadd.s32 %v3790, %v3792
  %v3795 = vadd.s32 %v3794, %v3784
  %v3796 = vadd.s32 %v3795, %v3786
  %v3797 = vand.u32 %v3774, 65535
  %v3798 = vshrl.u32 %v3774, 16
  %v3799 = vand.u32 %v3769, 65535
  %v3800 = vshrl.u32 %v3769, 16
  %v3801 = vmul.u32 %v3797, %v3799
  %v3802 = vmul.u32 %v3797, %v3800
  %v3803 = vmul.u32 %v3798, %v3799
  %v3804 = vmul.u32 %v3798, %v3800
  %v3805 = vshll.u32 %v3802, 16
  %v3806 = vshrl.u32 %v3802, 16
  %v3807 = vshll.u32 %v3803, 16
  %v3808 = vshrl.u32 %v3803, 16
  %vm3809 = vc.u32 %v3801, %v3805
  %v3810 = vsel %vm3809, 1, 0
  %v3811 = vadd.s32 %v3801, %v3805
  %v3812 = vadd.s32 %v3804, %v3810
  %vm3813 = vc.u32 %v3811, %v3807
  %v3814 = vsel %vm3813, 1, 0
  %v3815 = vadd.s32 %v3811, %v3807
  %v3816 = vadd.s32 %v3812, %v3814
  %v3817 = vadd.s32 %v3816, %v3806
  %v3818 = vadd.s32 %v3817, %v3808
  %v3819 = vmul.u32 %v3774, %v3765
  %v3820 = vadd.s32 %v3796, %v3815
  %vm3821 = vc.u32 %v3796, %v3815
  %v3822 = vadd.s32 %v3818, 1
  %v3823 = vsel %vm3821, %v3822, %v3818
  %v3824 = vadd.s32 %v3819, %v3823
  %v3825 = vadd.s32 %v3824, 536870912
  %v3826 = vshrl.u32 %v3825, 30
  %v3827 = vshll.u32 %v3826, 30
  %v3828 = vsub.s32 %v3824, %v3827
  %vm3829 = vcmp.lt.s32.totalorder %v3828, 0
  %v3830 = vsub.s32 0, %v3828
  %v3831 = vsel %vm3829, %v3830, %v3828
  %v3832 = vclz %v3831
  %v3833 = vsub.s32 %v3832, 2
  %vm3834 = vcmp.gt.s32.totalorder 0, %v3833
  %v3835 = vsel %vm3834, 0, %v3833
  %v3836 = vsub.s32 32, %v3835
  %v3837 = vshll.u32 %v3828, %v3835
  %v3838 = vshrl.u32 %v3820, %v3836
  %v3839 = vor.u32 %v3837, %v3838
  %v3840 = vsub.s32 4294967266, %v3835
  %v3841 = vadd.s32 %v3840, 127
  %v3842 = vshll.u32 %v3841, 23
  %v3843 = vor.u32 4788187, %v3842
  %v3844 = vand.u32 2147483647, %v3843
  %v3846 = vcvt.s32.f32 %v3839
  %v3847 = vmul.f32 %v3846, %v3844
  %v3848 = vxor.u32 %v3847, 2147483648
  %v3849 = vsel %vm3728, %v3848, %v3847
  %v3850 = vsub.s32 4, %v3826
  %v3851 = vsel %vm3728, %v3850, %v3826
  %v3852 = vsel %vm3727, %v614, %v3849
  %v3853 = vsel %vm3727, 0, %v3851
  %v3854 = vmul.f32 %v3852, %v3852
  %v3855 = vmul.f32 %v3854, -0.001358992
  %v3856 = vadd.f32 %v3855, 0.041655596
  %v3857 = vmul.f32 %v3854, %v3856
  %v3858 = vadd.f32 %v3857, -0.4999988
  %v3859 = vmul.f32 %v3854, %v3858
  %v3860 = vadd.f32 1.0, %v3859
  %v3861 = vmul.f32 %v3852, %v3852
  %v3862 = vmul.f32 %v3861, -0.00019511016
  %v3863 = vadd.f32 %v3862, 0.008332121
  %v3864 = vmul.f32 %v3861, %v3863
  %v3865 = vadd.f32 %v3864, -0.16666654
  %v3866 = vmul.f32 %v3861, %v3865
  %v3867 = vadd.f32 %v3866, 1.0
  %v3868 = vmul.f32 %v3867, %v3852
  %vm3869 = vweird.f32 %v614
  %v3870 = vadd.s32 %v3853, 3
  %v3871 = vand.u32 %v3870, 3
  %vm3872 = vcmp.lt.s32.totalorder %v3871, 2
  %vm3873 = vcmp.eq.s32.totalorder %v3871, 0
  %v3874 = vxor.u32 %v3868, 2147483648
  %v3875 = vsel %vm3873, %v3860, %v3874
  %vm3876 = vcmp.eq.s32.totalorder %v3871, 2
  %v3877 = vxor.u32 %v3860, 2147483648
  %v3878 = vsel %vm3876, %v3877, %v3868
  %v3879 = vsel %vm3872, %v3875, %v3878
  %v3880 = vsel %vm3869, nan, %v3879
  %v3881 = vand.u32 2147483647, %v615
  %vm3882 = vcmp.le.f32.partialorder %v3881, 0.7853982
  %vm3883 = vcmp.lt.s32.totalorder %v615, 0
  %v3884 = vand.u32 %v615, 2139095040
  %v3885 = vshrl.u32 %v3884, 23
  %v3886 = vsub.s32 %v3885, 127
  %v3887 = vand.u32 2147483647, %v615
  %v3888 = vand.u32 %v3887, 8388607
  %v3889 = vor.u32 %v3888, 8388608
  %v3890 = vsub.s32 0, %v3889
  %v3891 = vadd.s32 %v3886, 1
  %vm3892 = vcmp.gt.s32.totalorder %v3891, 0
  %v3893 = vsel %vm3892, %v3891, 0
  %v3894 = vshrl.u32 %v3893, 5
  %v3895 = vand.u32 %v3893, 31
  %v3896 = vsub.s32 32, %v3895
  %v3897 = vshrl.u32 683565275, %v3896
  %v3898 = vshll.u32 683565275, %v3895
  %v3899 = vshrl.u32 2475754826, %v3896
  %v3900 = vor.u32 %v3898, %v3899
  %v3901 = vshll.u32 2475754826, %v3895
  %v3902 = vshrl.u32 2131351028, %v3896
  %v3903 = vor.u32 %v3901, %v3902
  %v3904 = vshll.u32 2131351028, %v3895
  %v3905 = vshrl.u32 2102212464, %v3896
  %v3906 = vor.u32 %v3904, %v3905
  %v3907 = vshll.u32 2102212464, %v3895
  %v3908 = vshrl.u32 920167782, %v3896
  %v3909 = vor.u32 %v3907, %v3908
  %v3910 = vshll.u32 920167782, %v3895
  %v3911 = vshrl.u32 1326507024, %v3896
  %v3912 = vor.u32 %v3910, %v3911
  %vm3913 = vcmp.lt.s32.totalorder %v3894, 1
  %vm3914 = vcmp.lt.s32.totalorder %v3894, 2
  %vm3915 = vcmp.lt.s32.totalorder %v3894, 3
  %vm3916 = vcmp.lt.s32.totalorder %v3894, 4
  %v3917 = vsel %vm3913, %v3897, %v3900
  %v3918 = vsel %vm3916, %v3906, 2102212464
  %v3919 = vsel %vm3915, %v3903, %v3918
  %v3920 = vsel %vm3914, %v3917, %v3919
  %v3921 = vsel %vm3913, %v3900, %v3903
  %v3922 = vsel %vm3916, %v3909, 920167782
  %v3923 = vsel %vm3915, %v3906, %v3922
  %v3924 = vsel %vm3914, %v3921, %v3923
  %v3925 = vsel %vm3913, %v3903, %v3906
  %v3926 = vsel %vm3916, %v3912, 1326507024
  %v3927 = vsel %vm3915, %v3909, %v3926
  %v3928 = vsel %vm3914, %v3925, %v3927
  %v3929 = vshll.u32 %v3889, 8
  %v3930 = vand.u32 %v3929, 65535
  %v3931 = vshrl.u32 %v3929, 16
  %v3932 = vand.u32 %v3928, 65535
  %v3933 = vshrl.u32 %v3928, 16
  %v3934 = vmul.u32 %v3930, %v3932
  %v3935 = vmul.u32 %v3930, %v3933
  %v3936 = vmul.u32 %v3931, %v3932
  %v3937 = vmul.u32 %v3931, %v3933
  %v3938 = vshll.u32 %v3935, 16
  %v3939 = vshrl.u32 %v3935, 16
  %v3940 = vshll.u32 %v3936, 16
  %v3941 = vshrl.u32 %v3936, 16
  %vm3942 = vc.u32 %v3934, %v3938
  %v3943 = vsel %vm3942, 1, 0
  %v3944 = vadd.s32 %v3934, %v3938
  %v3945 = vadd.s32 %v3937, %v3943
  %vm3946 = vc.u32 %v3944, %v3940
  %v3947 = vsel %vm3946, 1, 0
  %v3948 = vadd.s32 %v3944, %v3940
  %v3949 = vadd.s32 %v3945, %v3947
  %v3950 = vadd.s32 %v3949, %v3939
  %v3951 = vadd.s32 %v3950, %v3941
  %v3952 = vand.u32 %v3929, 65535
  %v3953 = vshrl.u32 %v3929, 16
  %v3954 = vand.u32 %v3924, 65535
  %v3955 = vshrl.u32 %v3924, 16
  %v3956 = vmul.u32 %v3952, %v3954
  %v3957 = vmul.u32 %v3952, %v3955
  %v3958 = vmul.u32 %v3953, %v3954
  %v3959 = vmul.u32 %v3953, %v3955
  %v3960 = vshll.u32 %v3957, 16
  %v3961 = vshrl.u32 %v3957, 16
  %v3962 = vshll.u32 %v3958, 16
  %v3963 = vshrl.u32 %v3958, 16
  %vm3964 = vc.u32 %v3956, %v3960
  %v3965 = vsel %vm3964, 1, 0
  %v3966 = vadd.s32 %v3956, %v3960
  %v3967 = vadd.s32 %v3959, %v3965
  %vm3968 = vc.u32 %v3966, %v3962
  %v3969 = vsel %vm3968, 1, 0
  %v3970 = vadd.s32 %v3966, %v3962
  %v3971 = vadd.s32 %v3967, %v3969
  %v3972 = vadd.s32 %v3971, %v3961
  %v3973 = vadd.s32 %v3972, %v3963
  %v3974 = vmul.u32 %v3929, %v3920
  %v3975 = vadd.s32 %v3951, %v3970
  %vm3976 = vc.u32 %v3951, %v3970
  %v3977 = vadd.s32 %v3973, 1
  %v3978 = vsel %vm3976, %v3977, %v3973
  %v3979 = vadd.s32 %v3974, %v3978
  %v3980 = vadd.s32 %v3979, 536870912
  %v3981 = vshrl.u32 %v3980, 30
  %v3982 = vshll.u32 %v3981, 30
  %v3983 = vsub.s32 %v3979, %v3982
  %vm3984 = vcmp.lt.s32.totalorder %v3983, 0
  %v3985 = vsub.s32 0, %v3983
  %v3986 = vsel %vm3984, %v3985, %v3983
  %v3987 = vclz %v3986
  %v3988 = vsub.s32 %v3987, 2
  %vm3989 = vcmp.gt.s32.totalorder 0, %v3988
  %v3990 = vsel %vm3989, 0, %v3988
  %v3991 = vsub.s32 32, %v3990
  %v3992 = vshll.u32 %v3983, %v3990
  %v3993 = vshrl.u32 %v3975, %v3991
  %v3994 = vor.u32 %v3992, %v3993
  %v3995 = vsub.s32 4294967266, %v3990
  %v3996 = vadd.s32 %v3995, 127
  %v3997 = vshll.u32 %v3996, 23
  %v3998 = vor.u32 4788187, %v3997
  %v3999 = vand.u32 2147483647, %v3998
  %v4001 = vcvt.s32.f32 %v3994
  %v4002 = vmul.f32 %v4001, %v3999
  %v4003 = vxor.u32 %v4002, 2147483648
  %v4004 = vsel %vm3883, %v4003, %v4002
  %v4005 = vsub.s32 4, %v3981
  %v4006 = vsel %vm3883, %v4005, %v3981
  %v4007 = vsel %vm3882, %v615, %v4004
  %v4008 = vsel %vm3882, 0, %v4006
  %v4009 = vmul.f32 %v4007, %v4007
  %v4010 = vmul.f32 %v4009, -0.001358992
  %v4011 = vadd.f32 %v4010, 0.041655596
  %v4012 = vmul.f32 %v4009, %v4011
  %v4013 = vadd.f32 %v4012, -0.4999988
  %v4014 = vmul.f32 %v4009, %v4013
  %v4015 = vadd.f32 1.0, %v4014
  %v4016 = vmul.f32 %v4007, %v4007
  %v4017 = vmul.f32 %v4016, -0.00019511016
  %v4018 = vadd.f32 %v4017, 0.008332121
  %v4019 = vmul.f32 %v4016, %v4018
  %v4020 = vadd.f32 %v4019, -0.16666654
  %v4021 = vmul.f32 %v4016, %v4020
  %v4022 = vadd.f32 %v4021, 1.0
  %v4023 = vmul.f32 %v4022, %v4007
  %vm4024 = vweird.f32 %v615
  %v4025 = vadd.s32 %v4008, 3
  %v4026 = vand.u32 %v4025, 3
  %vm4027 = vcmp.lt.s32.totalorder %v4026, 2
  %vm4028 = vcmp.eq.s32.totalorder %v4026, 0
  %v4029 = vxor.u32 %v4023, 2147483648
  %v4030 = vsel %vm4028, %v4015, %v4029
  %vm4031 = vcmp.eq.s32.totalorder %v4026, 2
  %v4032 = vxor.u32 %v4015, 2147483648
  %v4033 = vsel %vm4031, %v4032, %v4023
  %v4034 = vsel %vm4027, %v4030, %v4033
  %v4035 = vsel %vm4024, nan, %v4034
  %v4036 = vand.u32 2147483647, %v616
  %vm4037 = vcmp.le.f32.partialorder %v4036, 0.7853982
  %vm4038 = vcmp.lt.s32.totalorder %v616, 0
  %v4039 = vand.u32 %v616, 2139095040
  %v4040 = vshrl.u32 %v4039, 23
  %v4041 = vsub.s32 %v4040, 127
  %v4042 = vand.u32 2147483647, %v616
  %v4043 = vand.u32 %v4042, 8388607
  %v4044 = vor.u32 %v4043, 8388608
  %v4045 = vsub.s32 0, %v4044
  %v4046 = vadd.s32 %v4041, 1
  %vm4047 = vcmp.gt.s32.totalorder %v4046, 0
  %v4048 = vsel %vm4047, %v4046, 0
  %v4049 = vshrl.u32 %v4048, 5
  %v4050 = vand.u32 %v4048, 31
  %v4051 = vsub.s32 32, %v4050
  %v4052 = vshrl.u32 683565275, %v4051
  %v4053 = vshll.u32 683565275, %v4050
  %v4054 = vshrl.u32 2475754826, %v4051
  %v4055 = vor.u32 %v4053, %v4054
  %v4056 = vshll.u32 2475754826, %v4050
  %v4057 = vshrl.u32 2131351028, %v4051
  %v4058 = vor.u32 %v4056, %v4057
  %v4059 = vshll.u32 2131351028, %v4050
  %v4060 = vshrl.u32 2102212464, %v4051
  %v4061 = vor.u32 %v4059, %v4060
  %v4062 = vshll.u32 2102212464, %v4050
  %v4063 = vshrl.u32 920167782, %v4051
  %v4064 = vor.u32 %v4062, %v4063
  %v4065 = vshll.u32 920167782, %v4050
  %v4066 = vshrl.u32 1326507024, %v4051
  %v4067 = vor.u32 %v4065, %v4066
  %vm4068 = vcmp.lt.s32.totalorder %v4049, 1
  %vm4069 = vcmp.lt.s32.totalorder %v4049, 2
  %vm4070 = vcmp.lt.s32.totalorder %v4049, 3
  %vm4071 = vcmp.lt.s32.totalorder %v4049, 4
  %v4072 = vsel %vm4068, %v4052, %v4055
  %v4073 = vsel %vm4071, %v4061, 2102212464
  %v4074 = vsel %vm4070, %v4058, %v4073
  %v4075 = vsel %vm4069, %v4072, %v4074
  %v4076 = vsel %vm4068, %v4055, %v4058
  %v4077 = vsel %vm4071, %v4064, 920167782
  %v4078 = vsel %vm4070, %v4061, %v4077
  %v4079 = vsel %vm4069, %v4076, %v4078
  %v4080 = vsel %vm4068, %v4058, %v4061
  %v4081 = vsel %vm4071, %v4067, 1326507024
  %v4082 = vsel %vm4070, %v4064, %v4081
  %v4083 = vsel %vm4069, %v4080, %v4082
  %v4084 = vshll.u32 %v4044, 8
  %v4085 = vand.u32 %v4084, 65535
  %v4086 = vshrl.u32 %v4084, 16
  %v4087 = vand.u32 %v4083, 65535
  %v4088 = vshrl.u32 %v4083, 16
  %v4089 = vmul.u32 %v4085, %v4087
  %v4090 = vmul.u32 %v4085, %v4088
  %v4091 = vmul.u32 %v4086, %v4087
  %v4092 = vmul.u32 %v4086, %v4088
  %v4093 = vshll.u32 %v4090, 16
  %v4094 = vshrl.u32 %v4090, 16
  %v4095 = vshll.u32 %v4091, 16
  %v4096 = vshrl.u32 %v4091, 16
  %vm4097 = vc.u32 %v4089, %v4093
  %v4098 = vsel %vm4097, 1, 0
  %v4099 = vadd.s32 %v4089, %v4093
  %v4100 = vadd.s32 %v4092, %v4098
  %vm4101 = vc.u32 %v4099, %v4095
  %v4102 = vsel %vm4101, 1, 0
  %v4103 = vadd.s32 %v4099, %v4095
  %v4104 = vadd.s32 %v4100, %v4102
  %v4105 = vadd.s32 %v4104, %v4094
  %v4106 = vadd.s32 %v4105, %v4096
  %v4107 = vand.u32 %v4084, 65535
  %v4108 = vshrl.u32 %v4084, 16
  %v4109 = vand.u32 %v4079, 65535
  %v4110 = vshrl.u32 %v4079, 16
  %v4111 = vmul.u32 %v4107, %v4109
  %v4112 = vmul.u32 %v4107, %v4110
  %v4113 = vmul.u32 %v4108, %v4109
  %v4114 = vmul.u32 %v4108, %v4110
  %v4115 = vshll.u32 %v4112, 16
  %v4116 = vshrl.u32 %v4112, 16
  %v4117 = vshll.u32 %v4113, 16
  %v4118 = vshrl.u32 %v4113, 16
  %vm4119 = vc.u32 %v4111, %v4115
  %v4120 = vsel %vm4119, 1, 0
  %v4121 = vadd.s32 %v4111, %v4115
  %v4122 = vadd.s32 %v4114, %v4120
  %vm4123 = vc.u32 %v4121, %v4117
  %v4124 = vsel %vm4123, 1, 0
  %v4125 = vadd.s32 %v4121, %v4117
  %v4126 = vadd.s32 %v4122, %v4124
  %v4127 = vadd.s32 %v4126, %v4116
  %v4128 = vadd.s32 %v4127, %v4118
  %v4129 = vmul.u32 %v4084, %v4075
  %v4130 = vadd.s32 %v4106, %v4125
  %vm4131 = vc.u32 %v4106, %v4125
  %v4132 = vadd.s32 %v4128, 1
  %v4133 = vsel %vm4131, %v4132, %v4128
  %v4134 = vadd.s32 %v4129, %v4133
  %v4135 = vadd.s32 %v4134, 536870912
  %v4136 = vshrl.u32 %v4135, 30
  %v4137 = vshll.u32 %v4136, 30
  %v4138 = vsub.s32 %v4134, %v4137
  %vm4139 = vcmp.lt.s32.totalorder %v4138, 0
  %v4140 = vsub.s32 0, %v4138
  %v4141 = vsel %vm4139, %v4140, %v4138
  %v4142 = vclz %v4141
  %v4143 = vsub.s32 %v4142, 2
  %vm4144 = vcmp.gt.s32.totalorder 0, %v4143
  %v4145 = vsel %vm4144, 0, %v4143
  %v4146 = vsub.s32 32, %v4145
  %v4147 = vshll.u32 %v4138, %v4145
  %v4148 = vshrl.u32 %v4130, %v4146
  %v4149 = vor.u32 %v4147, %v4148
  %v4150 = vsub.s32 4294967266, %v4145
  %v4151 = vadd.s32 %v4150, 127
  %v4152 = vshll.u32 %v4151, 23
  %v4153 = vor.u32 4788187, %v4152
  %v4154 = vand.u32 2147483647, %v4153
  %v4156 = vcvt.s32.f32 %v4149
  %v4157 = vmul.f32 %v4156, %v4154
  %v4158 = vxor.u32 %v4157, 2147483648
  %v4159 = vsel %vm4038, %v4158, %v4157
  %v4160 = vsub.s32 4, %v4136
  %v4161 = vsel %vm4038, %v4160, %v4136
  %v4162 = vsel %vm4037, %v616, %v4159
  %v4163 = vsel %vm4037, 0, %v4161
  %v4164 = vmul.f32 %v4162, %v4162
  %v4165 = vmul.f32 %v4164, -0.001358992
  %v4166 = vadd.f32 %v4165, 0.041655596
  %v4167 = vmul.f32 %v4164, %v4166
  %v4168 = vadd.f32 %v4167, -0.4999988
  %v4169 = vmul.f32 %v4164, %v4168
  %v4170 = vadd.f32 1.0, %v4169
  %v4171 = vmul.f32 %v4162, %v4162
  %v4172 = vmul.f32 %v4171, -0.00019511016
  %v4173 = vadd.f32 %v4172, 0.008332121
  %v4174 = vmul.f32 %v4171, %v4173
  %v4175 = vadd.f32 %v4174, -0.16666654
  %v4176 = vmul.f32 %v4171, %v4175
  %v4177 = vadd.f32 %v4176, 1.0
  %v4178 = vmul.f32 %v4177, %v4162
  %vm4179 = vweird.f32 %v616
  %v4180 = vadd.s32 %v4163, 3
  %v4181 = vand.u32 %v4180, 3
  %vm4182 = vcmp.lt.s32.totalorder %v4181, 2
  %vm4183 = vcmp.eq.s32.totalorder %v4181, 0
  %v4184 = vxor.u32 %v4178, 2147483648
  %v4185 = vsel %vm4183, %v4170, %v4184
  %vm4186 = vcmp.eq.s32.totalorder %v4181, 2
  %v4187 = vxor.u32 %v4170, 2147483648
  %v4188 = vsel %vm4186, %v4187, %v4178
  %v4189 = vsel %vm4182, %v4185, %v4188
  %v4190 = vsel %vm4179, nan, %v4189
  %v4191 = vand.u32 2147483647, %v617
  %vm4192 = vcmp.le.f32.partialorder %v4191, 0.7853982
  %vm4193 = vcmp.lt.s32.totalorder %v617, 0
  %v4194 = vand.u32 %v617, 2139095040
  %v4195 = vshrl.u32 %v4194, 23
  %v4196 = vsub.s32 %v4195, 127
  %v4197 = vand.u32 2147483647, %v617
  %v4198 = vand.u32 %v4197, 8388607
  %v4199 = vor.u32 %v4198, 8388608
  %v4200 = vsub.s32 0, %v4199
  %v4201 = vadd.s32 %v4196, 1
  %vm4202 = vcmp.gt.s32.totalorder %v4201, 0
  %v4203 = vsel %vm4202, %v4201, 0
  %v4204 = vshrl.u32 %v4203, 5
  %v4205 = vand.u32 %v4203, 31
  %v4206 = vsub.s32 32, %v4205
  %v4207 = vshrl.u32 683565275, %v4206
  %v4208 = vshll.u32 683565275, %v4205
  %v4209 = vshrl.u32 2475754826, %v4206
  %v4210 = vor.u32 %v4208, %v4209
  %v4211 = vshll.u32 2475754826, %v4205
  %v4212 = vshrl.u32 2131351028, %v4206
  %v4213 = vor.u32 %v4211, %v4212
  %v4214 = vshll.u32 2131351028, %v4205
  %v4215 = vshrl.u32 2102212464, %v4206
  %v4216 = vor.u32 %v4214, %v4215
  %v4217 = vshll.u32 2102212464, %v4205
  %v4218 = vshrl.u32 920167782, %v4206
  %v4219 = vor.u32 %v4217, %v4218
  %v4220 = vshll.u32 920167782, %v4205
  %v4221 = vshrl.u32 1326507024, %v4206
  %v4222 = vor.u32 %v4220, %v4221
  %vm4223 = vcmp.lt.s32.totalorder %v4204, 1
  %vm4224 = vcmp.lt.s32.totalorder %v4204, 2
  %vm4225 = vcmp.lt.s32.totalorder %v4204, 3
  %vm4226 = vcmp.lt.s32.totalorder %v4204, 4
  %v4227 = vsel %vm4223, %v4207, %v4210
  %v4228 = vsel %vm4226, %v4216, 2102212464
  %v4229 = vsel %vm4225, %v4213, %v4228
  %v4230 = vsel %vm4224, %v4227, %v4229
  %v4231 = vsel %vm4223, %v4210, %v4213
  %v4232 = vsel %vm4226, %v4219, 920167782
  %v4233 = vsel %vm4225, %v4216, %v4232
  %v4234 = vsel %vm4224, %v4231, %v4233
  %v4235 = vsel %vm4223, %v4213, %v4216
  %v4236 = vsel %vm4226, %v4222, 1326507024
  %v4237 = vsel %vm4225, %v4219, %v4236
  %v4238 = vsel %vm4224, %v4235, %v4237
  %v4239 = vshll.u32 %v4199, 8
  %v4240 = vand.u32 %v4239, 65535
  %v4241 = vshrl.u32 %v4239, 16
  %v4242 = vand.u32 %v4238, 65535
  %v4243 = vshrl.u32 %v4238, 16
  %v4244 = vmul.u32 %v4240, %v4242
  %v4245 = vmul.u32 %v4240, %v4243
  %v4246 = vmul.u32 %v4241, %v4242
  %v4247 = vmul.u32 %v4241, %v4243
  %v4248 = vshll.u32 %v4245, 16
  %v4249 = vshrl.u32 %v4245, 16
  %v4250 = vshll.u32 %v4246, 16
  %v4251 = vshrl.u32 %v4246, 16
  %vm4252 = vc.u32 %v4244, %v4248
  %v4253 = vsel %vm4252, 1, 0
  %v4254 = vadd.s32 %v4244, %v4248
  %v4255 = vadd.s32 %v4247, %v4253
  %vm4256 = vc.u32 %v4254, %v4250
  %v4257 = vsel %vm4256, 1, 0
  %v4258 = vadd.s32 %v4254, %v4250
  %v4259 = vadd.s32 %v4255, %v4257
  %v4260 = vadd.s32 %v4259, %v4249
  %v4261 = vadd.s32 %v4260, %v4251
  %v4262 = vand.u32 %v4239, 65535
  %v4263 = vshrl.u32 %v4239, 16
  %v4264 = vand.u32 %v4234, 65535
  %v4265 = vshrl.u32 %v4234, 16
  %v4266 = vmul.u32 %v4262, %v4264
  %v4267 = vmul.u32 %v4262, %v4265
  %v4268 = vmul.u32 %v4263, %v4264
  %v4269 = vmul.u32 %v4263, %v4265
  %v4270 = vshll.u32 %v4267, 16
  %v4271 = vshrl.u32 %v4267, 16
  %v4272 = vshll.u32 %v4268, 16
  %v4273 = vshrl.u32 %v4268, 16
  %vm4274 = vc.u32 %v4266, %v4270
  %v4275 = vsel %vm4274, 1, 0
  %v4276 = vadd.s32 %v4266, %v4270
  %v4277 = vadd.s32 %v4269, %v4275
  %vm4278 = vc.u32 %v4276, %v4272
  %v4279 = vsel %vm4278, 1, 0
  %v4280 = vadd.s32 %v4276, %v4272
  %v4281 = vadd.s32 %v4277, %v4279
  %v4282 = vadd.s32 %v4281, %v4271
  %v4283 = vadd.s32 %v4282, %v4273
  %v4284 = vmul.u32 %v4239, %v4230
  %v4285 = vadd.s32 %v4261, %v4280
  %vm4286 = vc.u32 %v4261, %v4280
  %v4287 = vadd.s32 %v4283, 1
  %v4288 = vsel %vm4286, %v4287, %v4283
  %v4289 = vadd.s32 %v4284, %v4288
  %v4290 = vadd.s32 %v4289, 536870912
  %v4291 = vshrl.u32 %v4290, 30
  %v4292 = vshll.u32 %v4291, 30
  %v4293 = vsub.s32 %v4289, %v4292
  %vm4294 = vcmp.lt.s32.totalorder %v4293, 0
  %v4295 = vsub.s32 0, %v4293
  %v4296 = vsel %vm4294, %v4295, %v4293
  %v4297 = vclz %v4296
  %v4298 = vsub.s32 %v4297, 2
  %vm4299 = vcmp.gt.s32.totalorder 0, %v4298
  %v4300 = vsel %vm4299, 0, %v4298
  %v4301 = vsub.s32 32, %v4300
  %v4302 = vshll.u32 %v4293, %v4300
  %v4303 = vshrl.u32 %v4285, %v4301
  %v4304 = vor.u32 %v4302, %v4303
  %v4305 = vsub.s32 4294967266, %v4300
  %v4306 = vadd.s32 %v4305, 127
  %v4307 = vshll.u32 %v4306, 23
  %v4308 = vor.u32 4788187, %v4307
  %v4309 = vand.u32 2147483647, %v4308
  %v4311 = vcvt.s32.f32 %v4304
  %v4312 = vmul.f32 %v4311, %v4309
  %v4313 = vxor.u32 %v4312, 2147483648
  %v4314 = vsel %vm4193, %v4313, %v4312
  %v4315 = vsub.s32 4, %v4291
  %v4316 = vsel %vm4193, %v4315, %v4291
  %v4317 = vsel %vm4192, %v617, %v4314
  %v4318 = vsel %vm4192, 0, %v4316
  %v4319 = vmul.f32 %v4317, %v4317
  %v4320 = vmul.f32 %v4319, -0.001358992
  %v4321 = vadd.f32 %v4320, 0.041655596
  %v4322 = vmul.f32 %v4319, %v4321
  %v4323 = vadd.f32 %v4322, -0.4999988
  %v4324 = vmul.f32 %v4319, %v4323
  %v4325 = vadd.f32 1.0, %v4324
  %v4326 = vmul.f32 %v4317, %v4317
  %v4327 = vmul.f32 %v4326, -0.00019511016
  %v4328 = vadd.f32 %v4327, 0.008332121
  %v4329 = vmul.f32 %v4326, %v4328
  %v4330 = vadd.f32 %v4329, -0.16666654
  %v4331 = vmul.f32 %v4326, %v4330
  %v4332 = vadd.f32 %v4331, 1.0
  %v4333 = vmul.f32 %v4332, %v4317
  %vm4334 = vweird.f32 %v617
  %v4335 = vadd.s32 %v4318, 3
  %v4336 = vand.u32 %v4335, 3
  %vm4337 = vcmp.lt.s32.totalorder %v4336, 2
  %vm4338 = vcmp.eq.s32.totalorder %v4336, 0
  %v4339 = vxor.u32 %v4333, 2147483648
  %v4340 = vsel %vm4338, %v4325, %v4339
  %vm4341 = vcmp.eq.s32.totalorder %v4336, 2
  %v4342 = vxor.u32 %v4325, 2147483648
  %v4343 = vsel %vm4341, %v4342, %v4333
  %v4344 = vsel %vm4337, %v4340, %v4343
  %v4345 = vsel %vm4334, nan, %v4344
  %v4346 = vand.u32 2147483647, %v618
  %vm4347 = vcmp.le.f32.partialorder %v4346, 0.7853982
  %vm4348 = vcmp.lt.s32.totalorder %v618, 0
  %v4349 = vand.u32 %v618, 2139095040
  %v4350 = vshrl.u32 %v4349, 23
  %v4351 = vsub.s32 %v4350, 127
  %v4352 = vand.u32 2147483647, %v618
  %v4353 = vand.u32 %v4352, 8388607
  %v4354 = vor.u32 %v4353, 8388608
  %v4355 = vsub.s32 0, %v4354
  %v4356 = vadd.s32 %v4351, 1
  %vm4357 = vcmp.gt.s32.totalorder %v4356, 0
  %v4358 = vsel %vm4357, %v4356, 0
  %v4359 = vshrl.u32 %v4358, 5
  %v4360 = vand.u32 %v4358, 31
  %v4361 = vsub.s32 32, %v4360
  %v4362 = vshrl.u32 683565275, %v4361
  %v4363 = vshll.u32 683565275, %v4360
  %v4364 = vshrl.u32 2475754826, %v4361
  %v4365 = vor.u32 %v4363, %v4364
  %v4366 = vshll.u32 2475754826, %v4360
  %v4367 = vshrl.u32 2131351028, %v4361
  %v4368 = vor.u32 %v4366, %v4367
  %v4369 = vshll.u32 2131351028, %v4360
  %v4370 = vshrl.u32 2102212464, %v4361
  %v4371 = vor.u32 %v4369, %v4370
  %v4372 = vshll.u32 2102212464, %v4360
  %v4373 = vshrl.u32 920167782, %v4361
  %v4374 = vor.u32 %v4372, %v4373
  %v4375 = vshll.u32 920167782, %v4360
  %v4376 = vshrl.u32 1326507024, %v4361
  %v4377 = vor.u32 %v4375, %v4376
  %vm4378 = vcmp.lt.s32.totalorder %v4359, 1
  %vm4379 = vcmp.lt.s32.totalorder %v4359, 2
  %vm4380 = vcmp.lt.s32.totalorder %v4359, 3
  %vm4381 = vcmp.lt.s32.totalorder %v4359, 4
  %v4382 = vsel %vm4378, %v4362, %v4365
  %v4383 = vsel %vm4381, %v4371, 2102212464
  %v4384 = vsel %vm4380, %v4368, %v4383
  %v4385 = vsel %vm4379, %v4382, %v4384
  %v4386 = vsel %vm4378, %v4365, %v4368
  %v4387 = vsel %vm4381, %v4374, 920167782
  %v4388 = vsel %vm4380, %v4371, %v4387
  %v4389 = vsel %vm4379, %v4386, %v4388
  %v4390 = vsel %vm4378, %v4368, %v4371
  %v4391 = vsel %vm4381, %v4377, 1326507024
  %v4392 = vsel %vm4380, %v4374, %v4391
  %v4393 = vsel %vm4379, %v4390, %v4392
  %v4394 = vshll.u32 %v4354, 8
  %v4395 = vand.u32 %v4394, 65535
  %v4396 = vshrl.u32 %v4394, 16
  %v4397 = vand.u32 %v4393, 65535
  %v4398 = vshrl.u32 %v4393, 16
  %v4399 = vmul.u32 %v4395, %v4397
  %v4400 = vmul.u32 %v4395, %v4398
  %v4401 = vmul.u32 %v4396, %v4397
  %v4402 = vmul.u32 %v4396, %v4398
  %v4403 = vshll.u32 %v4400, 16
  %v4404 = vshrl.u32 %v4400, 16
  %v4405 = vshll.u32 %v4401, 16
  %v4406 = vshrl.u32 %v4401, 16
  %vm4407 = vc.u32 %v4399, %v4403
  %v4408 = vsel %vm4407, 1, 0
  %v4409 = vadd.s32 %v4399, %v4403
  %v4410 = vadd.s32 %v4402, %v4408
  %vm4411 = vc.u32 %v4409, %v4405
  %v4412 = vsel %vm4411, 1, 0
  %v4413 = vadd.s32 %v4409, %v4405
  %v4414 = vadd.s32 %v4410, %v4412
  %v4415 = vadd.s32 %v4414, %v4404
  %v4416 = vadd.s32 %v4415, %v4406
  %v4417 = vand.u32 %v4394, 65535
  %v4418 = vshrl.u32 %v4394, 16
  %v4419 = vand.u32 %v4389, 65535
  %v4420 = vshrl.u32 %v4389, 16
  %v4421 = vmul.u32 %v4417, %v4419
  %v4422 = vmul.u32 %v4417, %v4420
  %v4423 = vmul.u32 %v4418, %v4419
  %v4424 = vmul.u32 %v4418, %v4420
  %v4425 = vshll.u32 %v4422, 16
  %v4426 = vshrl.u32 %v4422, 16
  %v4427 = vshll.u32 %v4423, 16
  %v4428 = vshrl.u32 %v4423, 16
  %vm4429 = vc.u32 %v4421, %v4425
  %v4430 = vsel %vm4429, 1, 0
  %v4431 = vadd.s32 %v4421, %v4425
  %v4432 = vadd.s32 %v4424, %v4430
  %vm4433 = vc.u32 %v4431, %v4427
  %v4434 = vsel %vm4433, 1, 0
  %v4435 = vadd.s32 %v4431, %v4427
  %v4436 = vadd.s32 %v4432, %v4434
  %v4437 = vadd.s32 %v4436, %v4426
  %v4438 = vadd.s32 %v4437, %v4428
  %v4439 = vmul.u32 %v4394, %v4385
  %v4440 = vadd.s32 %v4416, %v4435
  %vm4441 = vc.u32 %v4416, %v4435
  %v4442 = vadd.s32 %v4438, 1
  %v4443 = vsel %vm4441, %v4442, %v4438
  %v4444 = vadd.s32 %v4439, %v4443
  %v4445 = vadd.s32 %v4444, 536870912
  %v4446 = vshrl.u32 %v4445, 30
  %v4447 = vshll.u32 %v4446, 30
  %v4448 = vsub.s32 %v4444, %v4447
  %vm4449 = vcmp.lt.s32.totalorder %v4448, 0
  %v4450 = vsub.s32 0, %v4448
  %v4451 = vsel %vm4449, %v4450, %v4448
  %v4452 = vclz %v4451
  %v4453 = vsub.s32 %v4452, 2
  %vm4454 = vcmp.gt.s32.totalorder 0, %v4453
  %v4455 = vsel %vm4454, 0, %v4453
  %v4456 = vsub.s32 32, %v4455
  %v4457 = vshll.u32 %v4448, %v4455
  %v4458 = vshrl.u32 %v4440, %v4456
  %v4459 = vor.u32 %v4457, %v4458
  %v4460 = vsub.s32 4294967266, %v4455
  %v4461 = vadd.s32 %v4460, 127
  %v4462 = vshll.u32 %v4461, 23
  %v4463 = vor.u32 4788187, %v4462
  %v4464 = vand.u32 2147483647, %v4463
  %v4466 = vcvt.s32.f32 %v4459
  %v4467 = vmul.f32 %v4466, %v4464
  %v4468 = vxor.u32 %v4467, 2147483648
  %v4469 = vsel %vm4348, %v4468, %v4467
  %v4470 = vsub.s32 4, %v4446
  %v4471 = vsel %vm4348, %v4470, %v4446
  %v4472 = vsel %vm4347, %v618, %v4469
  %v4473 = vsel %vm4347, 0, %v4471
  %v4474 = vmul.f32 %v4472, %v4472
  %v4475 = vmul.f32 %v4474, -0.001358992
  %v4476 = vadd.f32 %v4475, 0.041655596
  %v4477 = vmul.f32 %v4474, %v4476
  %v4478 = vadd.f32 %v4477, -0.4999988
  %v4479 = vmul.f32 %v4474, %v4478
  %v4480 = vadd.f32 1.0, %v4479
  %v4481 = vmul.f32 %v4472, %v4472
  %v4482 = vmul.f32 %v4481, -0.00019511016
  %v4483 = vadd.f32 %v4482, 0.008332121
  %v4484 = vmul.f32 %v4481, %v4483
  %v4485 = vadd.f32 %v4484, -0.16666654
  %v4486 = vmul.f32 %v4481, %v4485
  %v4487 = vadd.f32 %v4486, 1.0
  %v4488 = vmul.f32 %v4487, %v4472
  %vm4489 = vweird.f32 %v618
  %v4490 = vadd.s32 %v4473, 3
  %v4491 = vand.u32 %v4490, 3
  %vm4492 = vcmp.lt.s32.totalorder %v4491, 2
  %vm4493 = vcmp.eq.s32.totalorder %v4491, 0
  %v4494 = vxor.u32 %v4488, 2147483648
  %v4495 = vsel %vm4493, %v4480, %v4494
  %vm4496 = vcmp.eq.s32.totalorder %v4491, 2
  %v4497 = vxor.u32 %v4480, 2147483648
  %v4498 = vsel %vm4496, %v4497, %v4488
  %v4499 = vsel %vm4492, %v4495, %v4498
  %v4500 = vsel %vm4489, nan, %v4499
  %v4501 = vand.u32 2147483647, %v619
  %vm4502 = vcmp.le.f32.partialorder %v4501, 0.7853982
  %vm4503 = vcmp.lt.s32.totalorder %v619, 0
  %v4504 = vand.u32 %v619, 2139095040
  %v4505 = vshrl.u32 %v4504, 23
  %v4506 = vsub.s32 %v4505, 127
  %v4507 = vand.u32 2147483647, %v619
  %v4508 = vand.u32 %v4507, 8388607
  %v4509 = vor.u32 %v4508, 8388608
  %v4510 = vsub.s32 0, %v4509
  %v4511 = vadd.s32 %v4506, 1
  %vm4512 = vcmp.gt.s32.totalorder %v4511, 0
  %v4513 = vsel %vm4512, %v4511, 0
  %v4514 = vshrl.u32 %v4513, 5
  %v4515 = vand.u32 %v4513, 31
  %v4516 = vsub.s32 32, %v4515
  %v4517 = vshrl.u32 683565275, %v4516
  %v4518 = vshll.u32 683565275, %v4515
  %v4519 = vshrl.u32 2475754826, %v4516
  %v4520 = vor.u32 %v4518, %v4519
  %v4521 = vshll.u32 2475754826, %v4515
  %v4522 = vshrl.u32 2131351028, %v4516
  %v4523 = vor.u32 %v4521, %v4522
  %v4524 = vshll.u32 2131351028, %v4515
  %v4525 = vshrl.u32 2102212464, %v4516
  %v4526 = vor.u32 %v4524, %v4525
  %v4527 = vshll.u32 2102212464, %v4515
  %v4528 = vshrl.u32 920167782, %v4516
  %v4529 = vor.u32 %v4527, %v4528
  %v4530 = vshll.u32 920167782, %v4515
  %v4531 = vshrl.u32 1326507024, %v4516
  %v4532 = vor.u32 %v4530, %v4531
  %vm4533 = vcmp.lt.s32.totalorder %v4514, 1
  %vm4534 = vcmp.lt.s32.totalorder %v4514, 2
  %vm4535 = vcmp.lt.s32.totalorder %v4514, 3
  %vm4536 = vcmp.lt.s32.totalorder %v4514, 4
  %v4537 = vsel %vm4533, %v4517, %v4520
  %v4538 = vsel %vm4536, %v4526, 2102212464
  %v4539 = vsel %vm4535, %v4523, %v4538
  %v4540 = vsel %vm4534, %v4537, %v4539
  %v4541 = vsel %vm4533, %v4520, %v4523
  %v4542 = vsel %vm4536, %v4529, 920167782
  %v4543 = vsel %vm4535, %v4526, %v4542
  %v4544 = vsel %vm4534, %v4541, %v4543
  %v4545 = vsel %vm4533, %v4523, %v4526
  %v4546 = vsel %vm4536, %v4532, 1326507024
  %v4547 = vsel %vm4535, %v4529, %v4546
  %v4548 = vsel %vm4534, %v4545, %v4547
  %v4549 = vshll.u32 %v4509, 8
  %v4550 = vand.u32 %v4549, 65535
  %v4551 = vshrl.u32 %v4549, 16
  %v4552 = vand.u32 %v4548, 65535
  %v4553 = vshrl.u32 %v4548, 16
  %v4554 = vmul.u32 %v4550, %v4552
  %v4555 = vmul.u32 %v4550, %v4553
  %v4556 = vmul.u32 %v4551, %v4552
  %v4557 = vmul.u32 %v4551, %v4553
  %v4558 = vshll.u32 %v4555, 16
  %v4559 = vshrl.u32 %v4555, 16
  %v4560 = vshll.u32 %v4556, 16
  %v4561 = vshrl.u32 %v4556, 16
  %vm4562 = vc.u32 %v4554, %v4558
  %v4563 = vsel %vm4562, 1, 0
  %v4564 = vadd.s32 %v4554, %v4558
  %v4565 = vadd.s32 %v4557, %v4563
  %vm4566 = vc.u32 %v4564, %v4560
  %v4567 = vsel %vm4566, 1, 0
  %v4568 = vadd.s32 %v4564, %v4560
  %v4569 = vadd.s32 %v4565, %v4567
  %v4570 = vadd.s32 %v4569, %v4559
  %v4571 = vadd.s32 %v4570, %v4561
  %v4572 = vand.u32 %v4549, 65535
  %v4573 = vshrl.u32 %v4549, 16
  %v4574 = vand.u32 %v4544, 65535
  %v4575 = vshrl.u32 %v4544, 16
  %v4576 = vmul.u32 %v4572, %v4574
  %v4577 = vmul.u32 %v4572, %v4575
  %v4578 = vmul.u32 %v4573, %v4574
  %v4579 = vmul.u32 %v4573, %v4575
  %v4580 = vshll.u32 %v4577, 16
  %v4581 = vshrl.u32 %v4577, 16
  %v4582 = vshll.u32 %v4578, 16
  %v4583 = vshrl.u32 %v4578, 16
  %vm4584 = vc.u32 %v4576, %v4580
  %v4585 = vsel %vm4584, 1, 0
  %v4586 = vadd.s32 %v4576, %v4580
  %v4587 = vadd.s32 %v4579, %v4585
  %vm4588 = vc.u32 %v4586, %v4582
  %v4589 = vsel %vm4588, 1, 0
  %v4590 = vadd.s32 %v4586, %v4582
  %v4591 = vadd.s32 %v4587, %v4589
  %v4592 = vadd.s32 %v4591, %v4581
  %v4593 = vadd.s32 %v4592, %v4583
  %v4594 = vmul.u32 %v4549, %v4540
  %v4595 = vadd.s32 %v4571, %v4590
  %vm4596 = vc.u32 %v4571, %v4590
  %v4597 = vadd.s32 %v4593, 1
  %v4598 = vsel %vm4596, %v4597, %v4593
  %v4599 = vadd.s32 %v4594, %v4598
  %v4600 = vadd.s32 %v4599, 536870912
  %v4601 = vshrl.u32 %v4600, 30
  %v4602 = vshll.u32 %v4601, 30
  %v4603 = vsub.s32 %v4599, %v4602
  %vm4604 = vcmp.lt.s32.totalorder %v4603, 0
  %v4605 = vsub.s32 0, %v4603
  %v4606 = vsel %vm4604, %v4605, %v4603
  %v4607 = vclz %v4606
  %v4608 = vsub.s32 %v4607, 2
  %vm4609 = vcmp.gt.s32.totalorder 0, %v4608
  %v4610 = vsel %vm4609, 0, %v4608
  %v4611 = vsub.s32 32, %v4610
  %v4612 = vshll.u32 %v4603, %v4610
  %v4613 = vshrl.u32 %v4595, %v4611
  %v4614 = vor.u32 %v4612, %v4613
  %v4615 = vsub.s32 4294967266, %v4610
  %v4616 = vadd.s32 %v4615, 127
  %v4617 = vshll.u32 %v4616, 23
  %v4618 = vor.u32 4788187, %v4617
  %v4619 = vand.u32 2147483647, %v4618
  %v4621 = vcvt.s32.f32 %v4614
  %v4622 = vmul.f32 %v4621, %v4619
  %v4623 = vxor.u32 %v4622, 2147483648
  %v4624 = vsel %vm4503, %v4623, %v4622
  %v4625 = vsub.s32 4, %v4601
  %v4626 = vsel %vm4503, %v4625, %v4601
  %v4627 = vsel %vm4502, %v619, %v4624
  %v4628 = vsel %vm4502, 0, %v4626
  %v4629 = vmul.f32 %v4627, %v4627
  %v4630 = vmul.f32 %v4629, -0.001358992
  %v4631 = vadd.f32 %v4630, 0.041655596
  %v4632 = vmul.f32 %v4629, %v4631
  %v4633 = vadd.f32 %v4632, -0.4999988
  %v4634 = vmul.f32 %v4629, %v4633
  %v4635 = vadd.f32 1.0, %v4634
  %v4636 = vmul.f32 %v4627, %v4627
  %v4637 = vmul.f32 %v4636, -0.00019511016
  %v4638 = vadd.f32 %v4637, 0.008332121
  %v4639 = vmul.f32 %v4636, %v4638
  %v4640 = vadd.f32 %v4639, -0.16666654
  %v4641 = vmul.f32 %v4636, %v4640
  %v4642 = vadd.f32 %v4641, 1.0
  %v4643 = vmul.f32 %v4642, %v4627
  %vm4644 = vweird.f32 %v619
  %v4645 = vadd.s32 %v4628, 3
  %v4646 = vand.u32 %v4645, 3
  %vm4647 = vcmp.lt.s32.totalorder %v4646, 2
  %vm4648 = vcmp.eq.s32.totalorder %v4646, 0
  %v4649 = vxor.u32 %v4643, 2147483648
  %v4650 = vsel %vm4648, %v4635, %v4649
  %vm4651 = vcmp.eq.s32.totalorder %v4646, 2
  %v4652 = vxor.u32 %v4635, 2147483648
  %v4653 = vsel %vm4651, %v4652, %v4643
  %v4654 = vsel %vm4647, %v4650, %v4653
  %v4655 = vsel %vm4644, nan, %v4654
  %v4656 = vand.u32 2147483647, %v620
  %vm4657 = vcmp.le.f32.partialorder %v4656, 0.7853982
  %vm4658 = vcmp.lt.s32.totalorder %v620, 0
  %v4659 = vand.u32 %v620, 2139095040
  %v4660 = vshrl.u32 %v4659, 23
  %v4661 = vsub.s32 %v4660, 127
  %v4662 = vand.u32 2147483647, %v620
  %v4663 = vand.u32 %v4662, 8388607
  %v4664 = vor.u32 %v4663, 8388608
  %v4665 = vsub.s32 0, %v4664
  %v4666 = vadd.s32 %v4661, 1
  %vm4667 = vcmp.gt.s32.totalorder %v4666, 0
  %v4668 = vsel %vm4667, %v4666, 0
  %v4669 = vshrl.u32 %v4668, 5
  %v4670 = vand.u32 %v4668, 31
  %v4671 = vsub.s32 32, %v4670
  %v4672 = vshrl.u32 683565275, %v4671
  %v4673 = vshll.u32 683565275, %v4670
  %v4674 = vshrl.u32 2475754826, %v4671
  %v4675 = vor.u32 %v4673, %v4674
  %v4676 = vshll.u32 2475754826, %v4670
  %v4677 = vshrl.u32 2131351028, %v4671
  %v4678 = vor.u32 %v4676, %v4677
  %v4679 = vshll.u32 2131351028, %v4670
  %v4680 = vshrl.u32 2102212464, %v4671
  %v4681 = vor.u32 %v4679, %v4680
  %v4682 = vshll.u32 2102212464, %v4670
  %v4683 = vshrl.u32 920167782, %v4671
  %v4684 = vor.u32 %v4682, %v4683
  %v4685 = vshll.u32 920167782, %v4670
  %v4686 = vshrl.u32 1326507024, %v4671
  %v4687 = vor.u32 %v4685, %v4686
  %vm4688 = vcmp.lt.s32.totalorder %v4669, 1
  %vm4689 = vcmp.lt.s32.totalorder %v4669, 2
  %vm4690 = vcmp.lt.s32.totalorder %v4669, 3
  %vm4691 = vcmp.lt.s32.totalorder %v4669, 4
  %v4692 = vsel %vm4688, %v4672, %v4675
  %v4693 = vsel %vm4691, %v4681, 2102212464
  %v4694 = vsel %vm4690, %v4678, %v4693
  %v4695 = vsel %vm4689, %v4692, %v4694
  %v4696 = vsel %vm4688, %v4675, %v4678
  %v4697 = vsel %vm4691, %v4684, 920167782
  %v4698 = vsel %vm4690, %v4681, %v4697
  %v4699 = vsel %vm4689, %v4696, %v4698
  %v4700 = vsel %vm4688, %v4678, %v4681
  %v4701 = vsel %vm4691, %v4687, 1326507024
  %v4702 = vsel %vm4690, %v4684, %v4701
  %v4703 = vsel %vm4689, %v4700, %v4702
  %v4704 = vshll.u32 %v4664, 8
  %v4705 = vand.u32 %v4704, 65535
  %v4706 = vshrl.u32 %v4704, 16
  %v4707 = vand.u32 %v4703, 65535
  %v4708 = vshrl.u32 %v4703, 16
  %v4709 = vmul.u32 %v4705, %v4707
  %v4710 = vmul.u32 %v4705, %v4708
  %v4711 = vmul.u32 %v4706, %v4707
  %v4712 = vmul.u32 %v4706, %v4708
  %v4713 = vshll.u32 %v4710, 16
  %v4714 = vshrl.u32 %v4710, 16
  %v4715 = vshll.u32 %v4711, 16
  %v4716 = vshrl.u32 %v4711, 16
  %vm4717 = vc.u32 %v4709, %v4713
  %v4718 = vsel %vm4717, 1, 0
  %v4719 = vadd.s32 %v4709, %v4713
  %v4720 = vadd.s32 %v4712, %v4718
  %vm4721 = vc.u32 %v4719, %v4715
  %v4722 = vsel %vm4721, 1, 0
  %v4723 = vadd.s32 %v4719, %v4715
  %v4724 = vadd.s32 %v4720, %v4722
  %v4725 = vadd.s32 %v4724, %v4714
  %v4726 = vadd.s32 %v4725, %v4716
  %v4727 = vand.u32 %v4704, 65535
  %v4728 = vshrl.u32 %v4704, 16
  %v4729 = vand.u32 %v4699, 65535
  %v4730 = vshrl.u32 %v4699, 16
  %v4731 = vmul.u32 %v4727, %v4729
  %v4732 = vmul.u32 %v4727, %v4730
  %v4733 = vmul.u32 %v4728, %v4729
  %v4734 = vmul.u32 %v4728, %v4730
  %v4735 = vshll.u32 %v4732, 16
  %v4736 = vshrl.u32 %v4732, 16
  %v4737 = vshll.u32 %v4733, 16
  %v4738 = vshrl.u32 %v4733, 16
  %vm4739 = vc.u32 %v4731, %v4735
  %v4740 = vsel %vm4739, 1, 0
  %v4741 = vadd.s32 %v4731, %v4735
  %v4742 = vadd.s32 %v4734, %v4740
  %vm4743 = vc.u32 %v4741, %v4737
  %v4744 = vsel %vm4743, 1, 0
  %v4745 = vadd.s32 %v4741, %v4737
  %v4746 = vadd.s32 %v4742, %v4744
  %v4747 = vadd.s32 %v4746, %v4736
  %v4748 = vadd.s32 %v4747, %v4738
  %v4749 = vmul.u32 %v4704, %v4695
  %v4750 = vadd.s32 %v4726, %v4745
  %vm4751 = vc.u32 %v4726, %v4745
  %v4752 = vadd.s32 %v4748, 1
  %v4753 = vsel %vm4751, %v4752, %v4748
  %v4754 = vadd.s32 %v4749, %v4753
  %v4755 = vadd.s32 %v4754, 536870912
  %v4756 = vshrl.u32 %v4755, 30
  %v4757 = vshll.u32 %v4756, 30
  %v4758 = vsub.s32 %v4754, %v4757
  %vm4759 = vcmp.lt.s32.totalorder %v4758, 0
  %v4760 = vsub.s32 0, %v4758
  %v4761 = vsel %vm4759, %v4760, %v4758
  %v4762 = vclz %v4761
  %v4763 = vsub.s32 %v4762, 2
  %vm4764 = vcmp.gt.s32.totalorder 0, %v4763
  %v4765 = vsel %vm4764, 0, %v4763
  %v4766 = vsub.s32 32, %v4765
  %v4767 = vshll.u32 %v4758, %v4765
  %v4768 = vshrl.u32 %v4750, %v4766
  %v4769 = vor.u32 %v4767, %v4768
  %v4770 = vsub.s32 4294967266, %v4765
  %v4771 = vadd.s32 %v4770, 127
  %v4772 = vshll.u32 %v4771, 23
  %v4773 = vor.u32 4788187, %v4772
  %v4774 = vand.u32 2147483647, %v4773
  %v4776 = vcvt.s32.f32 %v4769
  %v4777 = vmul.f32 %v4776, %v4774
  %v4778 = vxor.u32 %v4777, 2147483648
  %v4779 = vsel %vm4658, %v4778, %v4777
  %v4780 = vsub.s32 4, %v4756
  %v4781 = vsel %vm4658, %v4780, %v4756
  %v4782 = vsel %vm4657, %v620, %v4779
  %v4783 = vsel %vm4657, 0, %v4781
  %v4784 = vmul.f32 %v4782, %v4782
  %v4785 = vmul.f32 %v4784, -0.001358992
  %v4786 = vadd.f32 %v4785, 0.041655596
  %v4787 = vmul.f32 %v4784, %v4786
  %v4788 = vadd.f32 %v4787, -0.4999988
  %v4789 = vmul.f32 %v4784, %v4788
  %v4790 = vadd.f32 1.0, %v4789
  %v4791 = vmul.f32 %v4782, %v4782
  %v4792 = vmul.f32 %v4791, -0.00019511016
  %v4793 = vadd.f32 %v4792, 0.008332121
  %v4794 = vmul.f32 %v4791, %v4793
  %v4795 = vadd.f32 %v4794, -0.16666654
  %v4796 = vmul.f32 %v4791, %v4795
  %v4797 = vadd.f32 %v4796, 1.0
  %v4798 = vmul.f32 %v4797, %v4782
  %vm4799 = vweird.f32 %v620
  %v4800 = vadd.s32 %v4783, 3
  %v4801 = vand.u32 %v4800, 3
  %vm4802 = vcmp.lt.s32.totalorder %v4801, 2
  %vm4803 = vcmp.eq.s32.totalorder %v4801, 0
  %v4804 = vxor.u32 %v4798, 2147483648
  %v4805 = vsel %vm4803, %v4790, %v4804
  %vm4806 = vcmp.eq.s32.totalorder %v4801, 2
  %v4807 = vxor.u32 %v4790, 2147483648
  %v4808 = vsel %vm4806, %v4807, %v4798
  %v4809 = vsel %vm4802, %v4805, %v4808
  %v4810 = vsel %vm4799, nan, %v4809
  %v4811 = vand.u32 2147483647, %v621
  %vm4812 = vcmp.le.f32.partialorder %v4811, 0.7853982
  %vm4813 = vcmp.lt.s32.totalorder %v621, 0
  %v4814 = vand.u32 %v621, 2139095040
  %v4815 = vshrl.u32 %v4814, 23
  %v4816 = vsub.s32 %v4815, 127
  %v4817 = vand.u32 2147483647, %v621
  %v4818 = vand.u32 %v4817, 8388607
  %v4819 = vor.u32 %v4818, 8388608
  %v4820 = vsub.s32 0, %v4819
  %v4821 = vadd.s32 %v4816, 1
  %vm4822 = vcmp.gt.s32.totalorder %v4821, 0
  %v4823 = vsel %vm4822, %v4821, 0
  %v4824 = vshrl.u32 %v4823, 5
  %v4825 = vand.u32 %v4823, 31
  %v4826 = vsub.s32 32, %v4825
  %v4827 = vshrl.u32 683565275, %v4826
  %v4828 = vshll.u32 683565275, %v4825
  %v4829 = vshrl.u32 2475754826, %v4826
  %v4830 = vor.u32 %v4828, %v4829
  %v4831 = vshll.u32 2475754826, %v4825
  %v4832 = vshrl.u32 2131351028, %v4826
  %v4833 = vor.u32 %v4831, %v4832
  %v4834 = vshll.u32 2131351028, %v4825
  %v4835 = vshrl.u32 2102212464, %v4826
  %v4836 = vor.u32 %v4834, %v4835
  %v4837 = vshll.u32 2102212464, %v4825
  %v4838 = vshrl.u32 920167782, %v4826
  %v4839 = vor.u32 %v4837, %v4838
  %v4840 = vshll.u32 920167782, %v4825
  %v4841 = vshrl.u32 1326507024, %v4826
  %v4842 = vor.u32 %v4840, %v4841
  %vm4843 = vcmp.lt.s32.totalorder %v4824, 1
  %vm4844 = vcmp.lt.s32.totalorder %v4824, 2
  %vm4845 = vcmp.lt.s32.totalorder %v4824, 3
  %vm4846 = vcmp.lt.s32.totalorder %v4824, 4
  %v4847 = vsel %vm4843, %v4827, %v4830
  %v4848 = vsel %vm4846, %v4836, 2102212464
  %v4849 = vsel %vm4845, %v4833, %v4848
  %v4850 = vsel %vm4844, %v4847, %v4849
  %v4851 = vsel %vm4843, %v4830, %v4833
  %v4852 = vsel %vm4846, %v4839, 920167782
  %v4853 = vsel %vm4845, %v4836, %v4852
  %v4854 = vsel %vm4844, %v4851, %v4853
  %v4855 = vsel %vm4843, %v4833, %v4836
  %v4856 = vsel %vm4846, %v4842, 1326507024
  %v4857 = vsel %vm4845, %v4839, %v4856
  %v4858 = vsel %vm4844, %v4855, %v4857
  %v4859 = vshll.u32 %v4819, 8
  %v4860 = vand.u32 %v4859, 65535
  %v4861 = vshrl.u32 %v4859, 16
  %v4862 = vand.u32 %v4858, 65535
  %v4863 = vshrl.u32 %v4858, 16
  %v4864 = vmul.u32 %v4860, %v4862
  %v4865 = vmul.u32 %v4860, %v4863
  %v4866 = vmul.u32 %v4861, %v4862
  %v4867 = vmul.u32 %v4861, %v4863
  %v4868 = vshll.u32 %v4865, 16
  %v4869 = vshrl.u32 %v4865, 16
  %v4870 = vshll.u32 %v4866, 16
  %v4871 = vshrl.u32 %v4866, 16
  %vm4872 = vc.u32 %v4864, %v4868
  %v4873 = vsel %vm4872, 1, 0
  %v4874 = vadd.s32 %v4864, %v4868
  %v4875 = vadd.s32 %v4867, %v4873
  %vm4876 = vc.u32 %v4874, %v4870
  %v4877 = vsel %vm4876, 1, 0
  %v4878 = vadd.s32 %v4874, %v4870
  %v4879 = vadd.s32 %v4875, %v4877
  %v4880 = vadd.s32 %v4879, %v4869
  %v4881 = vadd.s32 %v4880, %v4871
  %v4882 = vand.u32 %v4859, 65535
  %v4883 = vshrl.u32 %v4859, 16
  %v4884 = vand.u32 %v4854, 65535
  %v4885 = vshrl.u32 %v4854, 16
  %v4886 = vmul.u32 %v4882, %v4884
  %v4887 = vmul.u32 %v4882, %v4885
  %v4888 = vmul.u32 %v4883, %v4884
  %v4889 = vmul.u32 %v4883, %v4885
  %v4890 = vshll.u32 %v4887, 16
  %v4891 = vshrl.u32 %v4887, 16
  %v4892 = vshll.u32 %v4888, 16
  %v4893 = vshrl.u32 %v4888, 16
  %vm4894 = vc.u32 %v4886, %v4890
  %v4895 = vsel %vm4894, 1, 0
  %v4896 = vadd.s32 %v4886, %v4890
  %v4897 = vadd.s32 %v4889, %v4895
  %vm4898 = vc.u32 %v4896, %v4892
  %v4899 = vsel %vm4898, 1, 0
  %v4900 = vadd.s32 %v4896, %v4892
  %v4901 = vadd.s32 %v4897, %v4899
  %v4902 = vadd.s32 %v4901, %v4891
  %v4903 = vadd.s32 %v4902, %v4893
  %v4904 = vmul.u32 %v4859, %v4850
  %v4905 = vadd.s32 %v4881, %v4900
  %vm4906 = vc.u32 %v4881, %v4900
  %v4907 = vadd.s32 %v4903, 1
  %v4908 = vsel %vm4906, %v4907, %v4903
  %v4909 = vadd.s32 %v4904, %v4908
  %v4910 = vadd.s32 %v4909, 536870912
  %v4911 = vshrl.u32 %v4910, 30
  %v4912 = vshll.u32 %v4911, 30
  %v4913 = vsub.s32 %v4909, %v4912
  %vm4914 = vcmp.lt.s32.totalorder %v4913, 0
  %v4915 = vsub.s32 0, %v4913
  %v4916 = vsel %vm4914, %v4915, %v4913
  %v4917 = vclz %v4916
  %v4918 = vsub.s32 %v4917, 2
  %vm4919 = vcmp.gt.s32.totalorder 0, %v4918
  %v4920 = vsel %vm4919, 0, %v4918
  %v4921 = vsub.s32 32, %v4920
  %v4922 = vshll.u32 %v4913, %v4920
  %v4923 = vshrl.u32 %v4905, %v4921
  %v4924 = vor.u32 %v4922, %v4923
  %v4925 = vsub.s32 4294967266, %v4920
  %v4926 = vadd.s32 %v4925, 127
  %v4927 = vshll.u32 %v4926, 23
  %v4928 = vor.u32 4788187, %v4927
  %v4929 = vand.u32 2147483647, %v4928
  %v4931 = vcvt.s32.f32 %v4924
  %v4932 = vmul.f32 %v4931, %v4929
  %v4933 = vxor.u32 %v4932, 2147483648
  %v4934 = vsel %vm4813, %v4933, %v4932
  %v4935 = vsub.s32 4, %v4911
  %v4936 = vsel %vm4813, %v4935, %v4911
  %v4937 = vsel %vm4812, %v621, %v4934
  %v4938 = vsel %vm4812, 0, %v4936
  %v4939 = vmul.f32 %v4937, %v4937
  %v4940 = vmul.f32 %v4939, -0.001358992
  %v4941 = vadd.f32 %v4940, 0.041655596
  %v4942 = vmul.f32 %v4939, %v4941
  %v4943 = vadd.f32 %v4942, -0.4999988
  %v4944 = vmul.f32 %v4939, %v4943
  %v4945 = vadd.f32 1.0, %v4944
  %v4946 = vmul.f32 %v4937, %v4937
  %v4947 = vmul.f32 %v4946, -0.00019511016
  %v4948 = vadd.f32 %v4947, 0.008332121
  %v4949 = vmul.f32 %v4946, %v4948
  %v4950 = vadd.f32 %v4949, -0.16666654
  %v4951 = vmul.f32 %v4946, %v4950
  %v4952 = vadd.f32 %v4951, 1.0
  %v4953 = vmul.f32 %v4952, %v4937
  %vm4954 = vweird.f32 %v621
  %v4955 = vadd.s32 %v4938, 3
  %v4956 = vand.u32 %v4955, 3
  %vm4957 = vcmp.lt.s32.totalorder %v4956, 2
  %vm4958 = vcmp.eq.s32.totalorder %v4956, 0
  %v4959 = vxor.u32 %v4953, 2147483648
  %v4960 = vsel %vm4958, %v4945, %v4959
  %vm4961 = vcmp.eq.s32.totalorder %v4956, 2
  %v4962 = vxor.u32 %v4945, 2147483648
  %v4963 = vsel %vm4961, %v4962, %v4953
  %v4964 = vsel %vm4957, %v4960, %v4963
  %v4965 = vsel %vm4954, nan, %v4964
  %v4966 = vand.u32 2147483647, %v622
  %vm4967 = vcmp.le.f32.partialorder %v4966, 0.7853982
  %vm4968 = vcmp.lt.s32.totalorder %v622, 0
  %v4969 = vand.u32 %v622, 2139095040
  %v4970 = vshrl.u32 %v4969, 23
  %v4971 = vsub.s32 %v4970, 127
  %v4972 = vand.u32 2147483647, %v622
  %v4973 = vand.u32 %v4972, 8388607
  %v4974 = vor.u32 %v4973, 8388608
  %v4975 = vsub.s32 0, %v4974
  %v4976 = vadd.s32 %v4971, 1
  %vm4977 = vcmp.gt.s32.totalorder %v4976, 0
  %v4978 = vsel %vm4977, %v4976, 0
  %v4979 = vshrl.u32 %v4978, 5
  %v4980 = vand.u32 %v4978, 31
  %v4981 = vsub.s32 32, %v4980
  %v4982 = vshrl.u32 683565275, %v4981
  %v4983 = vshll.u32 683565275, %v4980
  %v4984 = vshrl.u32 2475754826, %v4981
  %v4985 = vor.u32 %v4983, %v4984
  %v4986 = vshll.u32 2475754826, %v4980
  %v4987 = vshrl.u32 2131351028, %v4981
  %v4988 = vor.u32 %v4986, %v4987
  %v4989 = vshll.u32 2131351028, %v4980
  %v4990 = vshrl.u32 2102212464, %v4981
  %v4991 = vor.u32 %v4989, %v4990
  %v4992 = vshll.u32 2102212464, %v4980
  %v4993 = vshrl.u32 920167782, %v4981
  %v4994 = vor.u32 %v4992, %v4993
  %v4995 = vshll.u32 920167782, %v4980
  %v4996 = vshrl.u32 1326507024, %v4981
  %v4997 = vor.u32 %v4995, %v4996
  %vm4998 = vcmp.lt.s32.totalorder %v4979, 1
  %vm4999 = vcmp.lt.s32.totalorder %v4979, 2
  %vm5000 = vcmp.lt.s32.totalorder %v4979, 3
  %vm5001 = vcmp.lt.s32.totalorder %v4979, 4
  %v5002 = vsel %vm4998, %v4982, %v4985
  %v5003 = vsel %vm5001, %v4991, 2102212464
  %v5004 = vsel %vm5000, %v4988, %v5003
  %v5005 = vsel %vm4999, %v5002, %v5004
  %v5006 = vsel %vm4998, %v4985, %v4988
  %v5007 = vsel %vm5001, %v4994, 920167782
  %v5008 = vsel %vm5000, %v4991, %v5007
  %v5009 = vsel %vm4999, %v5006, %v5008
  %v5010 = vsel %vm4998, %v4988, %v4991
  %v5011 = vsel %vm5001, %v4997, 1326507024
  %v5012 = vsel %vm5000, %v4994, %v5011
  %v5013 = vsel %vm4999, %v5010, %v5012
  %v5014 = vshll.u32 %v4974, 8
  %v5015 = vand.u32 %v5014, 65535
  %v5016 = vshrl.u32 %v5014, 16
  %v5017 = vand.u32 %v5013, 65535
  %v5018 = vshrl.u32 %v5013, 16
  %v5019 = vmul.u32 %v5015, %v5017
  %v5020 = vmul.u32 %v5015, %v5018
  %v5021 = vmul.u32 %v5016, %v5017
  %v5022 = vmul.u32 %v5016, %v5018
  %v5023 = vshll.u32 %v5020, 16
  %v5024 = vshrl.u32 %v5020, 16
  %v5025 = vshll.u32 %v5021, 16
  %v5026 = vshrl.u32 %v5021, 16
  %vm5027 = vc.u32 %v5019, %v5023
  %v5028 = vsel %vm5027, 1, 0
  %v5029 = vadd.s32 %v5019, %v5023
  %v5030 = vadd.s32 %v5022, %v5028
  %vm5031 = vc.u32 %v5029, %v5025
  %v5032 = vsel %vm5031, 1, 0
  %v5033 = vadd.s32 %v5029, %v5025
  %v5034 = vadd.s32 %v5030, %v5032
  %v5035 = vadd.s32 %v5034, %v5024
  %v5036 = vadd.s32 %v5035, %v5026
  %v5037 = vand.u32 %v5014, 65535
  %v5038 = vshrl.u32 %v5014, 16
  %v5039 = vand.u32 %v5009, 65535
  %v5040 = vshrl.u32 %v5009, 16
  %v5041 = vmul.u32 %v5037, %v5039
  %v5042 = vmul.u32 %v5037, %v5040
  %v5043 = vmul.u32 %v5038, %v5039
  %v5044 = vmul.u32 %v5038, %v5040
  %v5045 = vshll.u32 %v5042, 16
  %v5046 = vshrl.u32 %v5042, 16
  %v5047 = vshll.u32 %v5043, 16
  %v5048 = vshrl.u32 %v5043, 16
  %vm5049 = vc.u32 %v5041, %v5045
  %v5050 = vsel %vm5049, 1, 0
  %v5051 = vadd.s32 %v5041, %v5045
  %v5052 = vadd.s32 %v5044, %v5050
  %vm5053 = vc.u32 %v5051, %v5047
  %v5054 = vsel %vm5053, 1, 0
  %v5055 = vadd.s32 %v5051, %v5047
  %v5056 = vadd.s32 %v5052, %v5054
  %v5057 = vadd.s32 %v5056, %v5046
  %v5058 = vadd.s32 %v5057, %v5048
  %v5059 = vmul.u32 %v5014, %v5005
  %v5060 = vadd.s32 %v5036, %v5055
  %vm5061 = vc.u32 %v5036, %v5055
  %v5062 = vadd.s32 %v5058, 1
  %v5063 = vsel %vm5061, %v5062, %v5058
  %v5064 = vadd.s32 %v5059, %v5063
  %v5065 = vadd.s32 %v5064, 536870912
  %v5066 = vshrl.u32 %v5065, 30
  %v5067 = vshll.u32 %v5066, 30
  %v5068 = vsub.s32 %v5064, %v5067
  %vm5069 = vcmp.lt.s32.totalorder %v5068, 0
  %v5070 = vsub.s32 0, %v5068
  %v5071 = vsel %vm5069, %v5070, %v5068
  %v5072 = vclz %v5071
  %v5073 = vsub.s32 %v5072, 2
  %vm5074 = vcmp.gt.s32.totalorder 0, %v5073
  %v5075 = vsel %vm5074, 0, %v5073
  %v5076 = vsub.s32 32, %v5075
  %v5077 = vshll.u32 %v5068, %v5075
  %v5078 = vshrl.u32 %v5060, %v5076
  %v5079 = vor.u32 %v5077, %v5078
  %v5080 = vsub.s32 4294967266, %v5075
  %v5081 = vadd.s32 %v5080, 127
  %v5082 = vshll.u32 %v5081, 23
  %v5083 = vor.u32 4788187, %v5082
  %v5084 = vand.u32 2147483647, %v5083
  %v5086 = vcvt.s32.f32 %v5079
  %v5087 = vmul.f32 %v5086, %v5084
  %v5088 = vxor.u32 %v5087, 2147483648
  %v5089 = vsel %vm4968, %v5088, %v5087
  %v5090 = vsub.s32 4, %v5066
  %v5091 = vsel %vm4968, %v5090, %v5066
  %v5092 = vsel %vm4967, %v622, %v5089
  %v5093 = vsel %vm4967, 0, %v5091
  %v5094 = vmul.f32 %v5092, %v5092
  %v5095 = vmul.f32 %v5094, -0.001358992
  %v5096 = vadd.f32 %v5095, 0.041655596
  %v5097 = vmul.f32 %v5094, %v5096
  %v5098 = vadd.f32 %v5097, -0.4999988
  %v5099 = vmul.f32 %v5094, %v5098
  %v5100 = vadd.f32 1.0, %v5099
  %v5101 = vmul.f32 %v5092, %v5092
  %v5102 = vmul.f32 %v5101, -0.00019511016
  %v5103 = vadd.f32 %v5102, 0.008332121
  %v5104 = vmul.f32 %v5101, %v5103
  %v5105 = vadd.f32 %v5104, -0.16666654
  %v5106 = vmul.f32 %v5101, %v5105
  %v5107 = vadd.f32 %v5106, 1.0
  %v5108 = vmul.f32 %v5107, %v5092
  %vm5109 = vweird.f32 %v622
  %v5110 = vadd.s32 %v5093, 3
  %v5111 = vand.u32 %v5110, 3
  %vm5112 = vcmp.lt.s32.totalorder %v5111, 2
  %vm5113 = vcmp.eq.s32.totalorder %v5111, 0
  %v5114 = vxor.u32 %v5108, 2147483648
  %v5115 = vsel %vm5113, %v5100, %v5114
  %vm5116 = vcmp.eq.s32.totalorder %v5111, 2
  %v5117 = vxor.u32 %v5100, 2147483648
  %v5118 = vsel %vm5116, %v5117, %v5108
  %v5119 = vsel %vm5112, %v5115, %v5118
  %v5120 = vsel %vm5109, nan, %v5119
  %v5121 = vand.u32 2147483647, %v623
  %vm5122 = vcmp.le.f32.partialorder %v5121, 0.7853982
  %vm5123 = vcmp.lt.s32.totalorder %v623, 0
  %v5124 = vand.u32 %v623, 2139095040
  %v5125 = vshrl.u32 %v5124, 23
  %v5126 = vsub.s32 %v5125, 127
  %v5127 = vand.u32 2147483647, %v623
  %v5128 = vand.u32 %v5127, 8388607
  %v5129 = vor.u32 %v5128, 8388608
  %v5130 = vsub.s32 0, %v5129
  %v5131 = vadd.s32 %v5126, 1
  %vm5132 = vcmp.gt.s32.totalorder %v5131, 0
  %v5133 = vsel %vm5132, %v5131, 0
  %v5134 = vshrl.u32 %v5133, 5
  %v5135 = vand.u32 %v5133, 31
  %v5136 = vsub.s32 32, %v5135
  %v5137 = vshrl.u32 683565275, %v5136
  %v5138 = vshll.u32 683565275, %v5135
  %v5139 = vshrl.u32 2475754826, %v5136
  %v5140 = vor.u32 %v5138, %v5139
  %v5141 = vshll.u32 2475754826, %v5135
  %v5142 = vshrl.u32 2131351028, %v5136
  %v5143 = vor.u32 %v5141, %v5142
  %v5144 = vshll.u32 2131351028, %v5135
  %v5145 = vshrl.u32 2102212464, %v5136
  %v5146 = vor.u32 %v5144, %v5145
  %v5147 = vshll.u32 2102212464, %v5135
  %v5148 = vshrl.u32 920167782, %v5136
  %v5149 = vor.u32 %v5147, %v5148
  %v5150 = vshll.u32 920167782, %v5135
  %v5151 = vshrl.u32 1326507024, %v5136
  %v5152 = vor.u32 %v5150, %v5151
  %vm5153 = vcmp.lt.s32.totalorder %v5134, 1
  %vm5154 = vcmp.lt.s32.totalorder %v5134, 2
  %vm5155 = vcmp.lt.s32.totalorder %v5134, 3
  %vm5156 = vcmp.lt.s32.totalorder %v5134, 4
  %v5157 = vsel %vm5153, %v5137, %v5140
  %v5158 = vsel %vm5156, %v5146, 2102212464
  %v5159 = vsel %vm5155, %v5143, %v5158
  %v5160 = vsel %vm5154, %v5157, %v5159
  %v5161 = vsel %vm5153, %v5140, %v5143
  %v5162 = vsel %vm5156, %v5149, 920167782
  %v5163 = vsel %vm5155, %v5146, %v5162
  %v5164 = vsel %vm5154, %v5161, %v5163
  %v5165 = vsel %vm5153, %v5143, %v5146
  %v5166 = vsel %vm5156, %v5152, 1326507024
  %v5167 = vsel %vm5155, %v5149, %v5166
  %v5168 = vsel %vm5154, %v5165, %v5167
  %v5169 = vshll.u32 %v5129, 8
  %v5170 = vand.u32 %v5169, 65535
  %v5171 = vshrl.u32 %v5169, 16
  %v5172 = vand.u32 %v5168, 65535
  %v5173 = vshrl.u32 %v5168, 16
  %v5174 = vmul.u32 %v5170, %v5172
  %v5175 = vmul.u32 %v5170, %v5173
  %v5176 = vmul.u32 %v5171, %v5172
  %v5177 = vmul.u32 %v5171, %v5173
  %v5178 = vshll.u32 %v5175, 16
  %v5179 = vshrl.u32 %v5175, 16
  %v5180 = vshll.u32 %v5176, 16
  %v5181 = vshrl.u32 %v5176, 16
  %vm5182 = vc.u32 %v5174, %v5178
  %v5183 = vsel %vm5182, 1, 0
  %v5184 = vadd.s32 %v5174, %v5178
  %v5185 = vadd.s32 %v5177, %v5183
  %vm5186 = vc.u32 %v5184, %v5180
  %v5187 = vsel %vm5186, 1, 0
  %v5188 = vadd.s32 %v5184, %v5180
  %v5189 = vadd.s32 %v5185, %v5187
  %v5190 = vadd.s32 %v5189, %v5179
  %v5191 = vadd.s32 %v5190, %v5181
  %v5192 = vand.u32 %v5169, 65535
  %v5193 = vshrl.u32 %v5169, 16
  %v5194 = vand.u32 %v5164, 65535
  %v5195 = vshrl.u32 %v5164, 16
  %v5196 = vmul.u32 %v5192, %v5194
  %v5197 = vmul.u32 %v5192, %v5195
  %v5198 = vmul.u32 %v5193, %v5194
  %v5199 = vmul.u32 %v5193, %v5195
  %v5200 = vshll.u32 %v5197, 16
  %v5201 = vshrl.u32 %v5197, 16
  %v5202 = vshll.u32 %v5198, 16
  %v5203 = vshrl.u32 %v5198, 16
  %vm5204 = vc.u32 %v5196, %v5200
  %v5205 = vsel %vm5204, 1, 0
  %v5206 = vadd.s32 %v5196, %v5200
  %v5207 = vadd.s32 %v5199, %v5205
  %vm5208 = vc.u32 %v5206, %v5202
  %v5209 = vsel %vm5208, 1, 0
  %v5210 = vadd.s32 %v5206, %v5202
  %v5211 = vadd.s32 %v5207, %v5209
  %v5212 = vadd.s32 %v5211, %v5201
  %v5213 = vadd.s32 %v5212, %v5203
  %v5214 = vmul.u32 %v5169, %v5160
  %v5215 = vadd.s32 %v5191, %v5210
  %vm5216 = vc.u32 %v5191, %v5210
  %v5217 = vadd.s32 %v5213, 1
  %v5218 = vsel %vm5216, %v5217, %v5213
  %v5219 = vadd.s32 %v5214, %v5218
  %v5220 = vadd.s32 %v5219, 536870912
  %v5221 = vshrl.u32 %v5220, 30
  %v5222 = vshll.u32 %v5221, 30
  %v5223 = vsub.s32 %v5219, %v5222
  %vm5224 = vcmp.lt.s32.totalorder %v5223, 0
  %v5225 = vsub.s32 0, %v5223
  %v5226 = vsel %vm5224, %v5225, %v5223
  %v5227 = vclz %v5226
  %v5228 = vsub.s32 %v5227, 2
  %vm5229 = vcmp.gt.s32.totalorder 0, %v5228
  %v5230 = vsel %vm5229, 0, %v5228
  %v5231 = vsub.s32 32, %v5230
  %v5232 = vshll.u32 %v5223, %v5230
  %v5233 = vshrl.u32 %v5215, %v5231
  %v5234 = vor.u32 %v5232, %v5233
  %v5235 = vsub.s32 4294967266, %v5230
  %v5236 = vadd.s32 %v5235, 127
  %v5237 = vshll.u32 %v5236, 23
  %v5238 = vor.u32 4788187, %v5237
  %v5239 = vand.u32 2147483647, %v5238
  %v5241 = vcvt.s32.f32 %v5234
  %v5242 = vmul.f32 %v5241, %v5239
  %v5243 = vxor.u32 %v5242, 2147483648
  %v5244 = vsel %vm5123, %v5243, %v5242
  %v5245 = vsub.s32 4, %v5221
  %v5246 = vsel %vm5123, %v5245, %v5221
  %v5247 = vsel %vm5122, %v623, %v5244
  %v5248 = vsel %vm5122, 0, %v5246
  %v5249 = vmul.f32 %v5247, %v5247
  %v5250 = vmul.f32 %v5249, -0.001358992
  %v5251 = vadd.f32 %v5250, 0.041655596
  %v5252 = vmul.f32 %v5249, %v5251
  %v5253 = vadd.f32 %v5252, -0.4999988
  %v5254 = vmul.f32 %v5249, %v5253
  %v5255 = vadd.f32 1.0, %v5254
  %v5256 = vmul.f32 %v5247, %v5247
  %v5257 = vmul.f32 %v5256, -0.00019511016
  %v5258 = vadd.f32 %v5257, 0.008332121
  %v5259 = vmul.f32 %v5256, %v5258
  %v5260 = vadd.f32 %v5259, -0.16666654
  %v5261 = vmul.f32 %v5256, %v5260
  %v5262 = vadd.f32 %v5261, 1.0
  %v5263 = vmul.f32 %v5262, %v5247
  %vm5264 = vweird.f32 %v623
  %v5265 = vadd.s32 %v5248, 3
  %v5266 = vand.u32 %v5265, 3
  %vm5267 = vcmp.lt.s32.totalorder %v5266, 2
  %vm5268 = vcmp.eq.s32.totalorder %v5266, 0
  %v5269 = vxor.u32 %v5263, 2147483648
  %v5270 = vsel %vm5268, %v5255, %v5269
  %vm5271 = vcmp.eq.s32.totalorder %v5266, 2
  %v5272 = vxor.u32 %v5255, 2147483648
  %v5273 = vsel %vm5271, %v5272, %v5263
  %v5274 = vsel %vm5267, %v5270, %v5273
  %v5275 = vsel %vm5264, nan, %v5274
  %v5276 = vand.u32 2147483647, %v624
  %vm5277 = vcmp.le.f32.partialorder %v5276, 0.7853982
  %vm5278 = vcmp.lt.s32.totalorder %v624, 0
  %v5279 = vand.u32 %v624, 2139095040
  %v5280 = vshrl.u32 %v5279, 23
  %v5281 = vsub.s32 %v5280, 127
  %v5282 = vand.u32 2147483647, %v624
  %v5283 = vand.u32 %v5282, 8388607
  %v5284 = vor.u32 %v5283, 8388608
  %v5285 = vsub.s32 0, %v5284
  %v5286 = vadd.s32 %v5281, 1
  %vm5287 = vcmp.gt.s32.totalorder %v5286, 0
  %v5288 = vsel %vm5287, %v5286, 0
  %v5289 = vshrl.u32 %v5288, 5
  %v5290 = vand.u32 %v5288, 31
  %v5291 = vsub.s32 32, %v5290
  %v5292 = vshrl.u32 683565275, %v5291
  %v5293 = vshll.u32 683565275, %v5290
  %v5294 = vshrl.u32 2475754826, %v5291
  %v5295 = vor.u32 %v5293, %v5294
  %v5296 = vshll.u32 2475754826, %v5290
  %v5297 = vshrl.u32 2131351028, %v5291
  %v5298 = vor.u32 %v5296, %v5297
  %v5299 = vshll.u32 2131351028, %v5290
  %v5300 = vshrl.u32 2102212464, %v5291
  %v5301 = vor.u32 %v5299, %v5300
  %v5302 = vshll.u32 2102212464, %v5290
  %v5303 = vshrl.u32 920167782, %v5291
  %v5304 = vor.u32 %v5302, %v5303
  %v5305 = vshll.u32 920167782, %v5290
  %v5306 = vshrl.u32 1326507024, %v5291
  %v5307 = vor.u32 %v5305, %v5306
  %vm5308 = vcmp.lt.s32.totalorder %v5289, 1
  %vm5309 = vcmp.lt.s32.totalorder %v5289, 2
  %vm5310 = vcmp.lt.s32.totalorder %v5289, 3
  %vm5311 = vcmp.lt.s32.totalorder %v5289, 4
  %v5312 = vsel %vm5308, %v5292, %v5295
  %v5313 = vsel %vm5311, %v5301, 2102212464
  %v5314 = vsel %vm5310, %v5298, %v5313
  %v5315 = vsel %vm5309, %v5312, %v5314
  %v5316 = vsel %vm5308, %v5295, %v5298
  %v5317 = vsel %vm5311, %v5304, 920167782
  %v5318 = vsel %vm5310, %v5301, %v5317
  %v5319 = vsel %vm5309, %v5316, %v5318
  %v5320 = vsel %vm5308, %v5298, %v5301
  %v5321 = vsel %vm5311, %v5307, 1326507024
  %v5322 = vsel %vm5310, %v5304, %v5321
  %v5323 = vsel %vm5309, %v5320, %v5322
  %v5324 = vshll.u32 %v5284, 8
  %v5325 = vand.u32 %v5324, 65535
  %v5326 = vshrl.u32 %v5324, 16
  %v5327 = vand.u32 %v5323, 65535
  %v5328 = vshrl.u32 %v5323, 16
  %v5329 = vmul.u32 %v5325, %v5327
  %v5330 = vmul.u32 %v5325, %v5328
  %v5331 = vmul.u32 %v5326, %v5327
  %v5332 = vmul.u32 %v5326, %v5328
  %v5333 = vshll.u32 %v5330, 16
  %v5334 = vshrl.u32 %v5330, 16
  %v5335 = vshll.u32 %v5331, 16
  %v5336 = vshrl.u32 %v5331, 16
  %vm5337 = vc.u32 %v5329, %v5333
  %v5338 = vsel %vm5337, 1, 0
  %v5339 = vadd.s32 %v5329, %v5333
  %v5340 = vadd.s32 %v5332, %v5338
  %vm5341 = vc.u32 %v5339, %v5335
  %v5342 = vsel %vm5341, 1, 0
  %v5343 = vadd.s32 %v5339, %v5335
  %v5344 = vadd.s32 %v5340, %v5342
  %v5345 = vadd.s32 %v5344, %v5334
  %v5346 = vadd.s32 %v5345, %v5336
  %v5347 = vand.u32 %v5324, 65535
  %v5348 = vshrl.u32 %v5324, 16
  %v5349 = vand.u32 %v5319, 65535
  %v5350 = vshrl.u32 %v5319, 16
  %v5351 = vmul.u32 %v5347, %v5349
  %v5352 = vmul.u32 %v5347, %v5350
  %v5353 = vmul.u32 %v5348, %v5349
  %v5354 = vmul.u32 %v5348, %v5350
  %v5355 = vshll.u32 %v5352, 16
  %v5356 = vshrl.u32 %v5352, 16
  %v5357 = vshll.u32 %v5353, 16
  %v5358 = vshrl.u32 %v5353, 16
  %vm5359 = vc.u32 %v5351, %v5355
  %v5360 = vsel %vm5359, 1, 0
  %v5361 = vadd.s32 %v5351, %v5355
  %v5362 = vadd.s32 %v5354, %v5360
  %vm5363 = vc.u32 %v5361, %v5357
  %v5364 = vsel %vm5363, 1, 0
  %v5365 = vadd.s32 %v5361, %v5357
  %v5366 = vadd.s32 %v5362, %v5364
  %v5367 = vadd.s32 %v5366, %v5356
  %v5368 = vadd.s32 %v5367, %v5358
  %v5369 = vmul.u32 %v5324, %v5315
  %v5370 = vadd.s32 %v5346, %v5365
  %vm5371 = vc.u32 %v5346, %v5365
  %v5372 = vadd.s32 %v5368, 1
  %v5373 = vsel %vm5371, %v5372, %v5368
  %v5374 = vadd.s32 %v5369, %v5373
  %v5375 = vadd.s32 %v5374, 536870912
  %v5376 = vshrl.u32 %v5375, 30
  %v5377 = vshll.u32 %v5376, 30
  %v5378 = vsub.s32 %v5374, %v5377
  %vm5379 = vcmp.lt.s32.totalorder %v5378, 0
  %v5380 = vsub.s32 0, %v5378
  %v5381 = vsel %vm5379, %v5380, %v5378
  %v5382 = vclz %v5381
  %v5383 = vsub.s32 %v5382, 2
  %vm5384 = vcmp.gt.s32.totalorder 0, %v5383
  %v5385 = vsel %vm5384, 0, %v5383
  %v5386 = vsub.s32 32, %v5385
  %v5387 = vshll.u32 %v5378, %v5385
  %v5388 = vshrl.u32 %v5370, %v5386
  %v5389 = vor.u32 %v5387, %v5388
  %v5390 = vsub.s32 4294967266, %v5385
  %v5391 = vadd.s32 %v5390, 127
  %v5392 = vshll.u32 %v5391, 23
  %v5393 = vor.u32 4788187, %v5392
  %v5394 = vand.u32 2147483647, %v5393
  %v5396 = vcvt.s32.f32 %v5389
  %v5397 = vmul.f32 %v5396, %v5394
  %v5398 = vxor.u32 %v5397, 2147483648
  %v5399 = vsel %vm5278, %v5398, %v5397
  %v5400 = vsub.s32 4, %v5376
  %v5401 = vsel %vm5278, %v5400, %v5376
  %v5402 = vsel %vm5277, %v624, %v5399
  %v5403 = vsel %vm5277, 0, %v5401
  %v5404 = vmul.f32 %v5402, %v5402
  %v5405 = vmul.f32 %v5404, -0.001358992
  %v5406 = vadd.f32 %v5405, 0.041655596
  %v5407 = vmul.f32 %v5404, %v5406
  %v5408 = vadd.f32 %v5407, -0.4999988
  %v5409 = vmul.f32 %v5404, %v5408
  %v5410 = vadd.f32 1.0, %v5409
  %v5411 = vmul.f32 %v5402, %v5402
  %v5412 = vmul.f32 %v5411, -0.00019511016
  %v5413 = vadd.f32 %v5412, 0.008332121
  %v5414 = vmul.f32 %v5411, %v5413
  %v5415 = vadd.f32 %v5414, -0.16666654
  %v5416 = vmul.f32 %v5411, %v5415
  %v5417 = vadd.f32 %v5416, 1.0
  %v5418 = vmul.f32 %v5417, %v5402
  %vm5419 = vweird.f32 %v624
  %v5420 = vadd.s32 %v5403, 3
  %v5421 = vand.u32 %v5420, 3
  %vm5422 = vcmp.lt.s32.totalorder %v5421, 2
  %vm5423 = vcmp.eq.s32.totalorder %v5421, 0
  %v5424 = vxor.u32 %v5418, 2147483648
  %v5425 = vsel %vm5423, %v5410, %v5424
  %vm5426 = vcmp.eq.s32.totalorder %v5421, 2
  %v5427 = vxor.u32 %v5410, 2147483648
  %v5428 = vsel %vm5426, %v5427, %v5418
  %v5429 = vsel %vm5422, %v5425, %v5428
  %v5430 = vsel %vm5419, nan, %v5429
  %v5431 = vand.u32 2147483647, %v625
  %vm5432 = vcmp.le.f32.partialorder %v5431, 0.7853982
  %vm5433 = vcmp.lt.s32.totalorder %v625, 0
  %v5434 = vand.u32 %v625, 2139095040
  %v5435 = vshrl.u32 %v5434, 23
  %v5436 = vsub.s32 %v5435, 127
  %v5437 = vand.u32 2147483647, %v625
  %v5438 = vand.u32 %v5437, 8388607
  %v5439 = vor.u32 %v5438, 8388608
  %v5440 = vsub.s32 0, %v5439
  %v5441 = vadd.s32 %v5436, 1
  %vm5442 = vcmp.gt.s32.totalorder %v5441, 0
  %v5443 = vsel %vm5442, %v5441, 0
  %v5444 = vshrl.u32 %v5443, 5
  %v5445 = vand.u32 %v5443, 31
  %v5446 = vsub.s32 32, %v5445
  %v5447 = vshrl.u32 683565275, %v5446
  %v5448 = vshll.u32 683565275, %v5445
  %v5449 = vshrl.u32 2475754826, %v5446
  %v5450 = vor.u32 %v5448, %v5449
  %v5451 = vshll.u32 2475754826, %v5445
  %v5452 = vshrl.u32 2131351028, %v5446
  %v5453 = vor.u32 %v5451, %v5452
  %v5454 = vshll.u32 2131351028, %v5445
  %v5455 = vshrl.u32 2102212464, %v5446
  %v5456 = vor.u32 %v5454, %v5455
  %v5457 = vshll.u32 2102212464, %v5445
  %v5458 = vshrl.u32 920167782, %v5446
  %v5459 = vor.u32 %v5457, %v5458
  %v5460 = vshll.u32 920167782, %v5445
  %v5461 = vshrl.u32 1326507024, %v5446
  %v5462 = vor.u32 %v5460, %v5461
  %vm5463 = vcmp.lt.s32.totalorder %v5444, 1
  %vm5464 = vcmp.lt.s32.totalorder %v5444, 2
  %vm5465 = vcmp.lt.s32.totalorder %v5444, 3
  %vm5466 = vcmp.lt.s32.totalorder %v5444, 4
  %v5467 = vsel %vm5463, %v5447, %v5450
  %v5468 = vsel %vm5466, %v5456, 2102212464
  %v5469 = vsel %vm5465, %v5453, %v5468
  %v5470 = vsel %vm5464, %v5467, %v5469
  %v5471 = vsel %vm5463, %v5450, %v5453
  %v5472 = vsel %vm5466, %v5459, 920167782
  %v5473 = vsel %vm5465, %v5456, %v5472
  %v5474 = vsel %vm5464, %v5471, %v5473
  %v5475 = vsel %vm5463, %v5453, %v5456
  %v5476 = vsel %vm5466, %v5462, 1326507024
  %v5477 = vsel %vm5465, %v5459, %v5476
  %v5478 = vsel %vm5464, %v5475, %v5477
  %v5479 = vshll.u32 %v5439, 8
  %v5480 = vand.u32 %v5479, 65535
  %v5481 = vshrl.u32 %v5479, 16
  %v5482 = vand.u32 %v5478, 65535
  %v5483 = vshrl.u32 %v5478, 16
  %v5484 = vmul.u32 %v5480, %v5482
  %v5485 = vmul.u32 %v5480, %v5483
  %v5486 = vmul.u32 %v5481, %v5482
  %v5487 = vmul.u32 %v5481, %v5483
  %v5488 = vshll.u32 %v5485, 16
  %v5489 = vshrl.u32 %v5485, 16
  %v5490 = vshll.u32 %v5486, 16
  %v5491 = vshrl.u32 %v5486, 16
  %vm5492 = vc.u32 %v5484, %v5488
  %v5493 = vsel %vm5492, 1, 0
  %v5494 = vadd.s32 %v5484, %v5488
  %v5495 = vadd.s32 %v5487, %v5493
  %vm5496 = vc.u32 %v5494, %v5490
  %v5497 = vsel %vm5496, 1, 0
  %v5498 = vadd.s32 %v5494, %v5490
  %v5499 = vadd.s32 %v5495, %v5497
  %v5500 = vadd.s32 %v5499, %v5489
  %v5501 = vadd.s32 %v5500, %v5491
  %v5502 = vand.u32 %v5479, 65535
  %v5503 = vshrl.u32 %v5479, 16
  %v5504 = vand.u32 %v5474, 65535
  %v5505 = vshrl.u32 %v5474, 16
  %v5506 = vmul.u32 %v5502, %v5504
  %v5507 = vmul.u32 %v5502, %v5505
  %v5508 = vmul.u32 %v5503, %v5504
  %v5509 = vmul.u32 %v5503, %v5505
  %v5510 = vshll.u32 %v5507, 16
  %v5511 = vshrl.u32 %v5507, 16
  %v5512 = vshll.u32 %v5508, 16
  %v5513 = vshrl.u32 %v5508, 16
  %vm5514 = vc.u32 %v5506, %v5510
  %v5515 = vsel %vm5514, 1, 0
  %v5516 = vadd.s32 %v5506, %v5510
  %v5517 = vadd.s32 %v5509, %v5515
  %vm5518 = vc.u32 %v5516, %v5512
  %v5519 = vsel %vm5518, 1, 0
  %v5520 = vadd.s32 %v5516, %v5512
  %v5521 = vadd.s32 %v5517, %v5519
  %v5522 = vadd.s32 %v5521, %v5511
  %v5523 = vadd.s32 %v5522, %v5513
  %v5524 = vmul.u32 %v5479, %v5470
  %v5525 = vadd.s32 %v5501, %v5520
  %vm5526 = vc.u32 %v5501, %v5520
  %v5527 = vadd.s32 %v5523, 1
  %v5528 = vsel %vm5526, %v5527, %v5523
  %v5529 = vadd.s32 %v5524, %v5528
  %v5530 = vadd.s32 %v5529, 536870912
  %v5531 = vshrl.u32 %v5530, 30
  %v5532 = vshll.u32 %v5531, 30
  %v5533 = vsub.s32 %v5529, %v5532
  %vm5534 = vcmp.lt.s32.totalorder %v5533, 0
  %v5535 = vsub.s32 0, %v5533
  %v5536 = vsel %vm5534, %v5535, %v5533
  %v5537 = vclz %v5536
  %v5538 = vsub.s32 %v5537, 2
  %vm5539 = vcmp.gt.s32.totalorder 0, %v5538
  %v5540 = vsel %vm5539, 0, %v5538
  %v5541 = vsub.s32 32, %v5540
  %v5542 = vshll.u32 %v5533, %v5540
  %v5543 = vshrl.u32 %v5525, %v5541
  %v5544 = vor.u32 %v5542, %v5543
  %v5545 = vsub.s32 4294967266, %v5540
  %v5546 = vadd.s32 %v5545, 127
  %v5547 = vshll.u32 %v5546, 23
  %v5548 = vor.u32 4788187, %v5547
  %v5549 = vand.u32 2147483647, %v5548
  %v5551 = vcvt.s32.f32 %v5544
  %v5552 = vmul.f32 %v5551, %v5549
  %v5553 = vxor.u32 %v5552, 2147483648
  %v5554 = vsel %vm5433, %v5553, %v5552
  %v5555 = vsub.s32 4, %v5531
  %v5556 = vsel %vm5433, %v5555, %v5531
  %v5557 = vsel %vm5432, %v625, %v5554
  %v5558 = vsel %vm5432, 0, %v5556
  %v5559 = vmul.f32 %v5557, %v5557
  %v5560 = vmul.f32 %v5559, -0.001358992
  %v5561 = vadd.f32 %v5560, 0.041655596
  %v5562 = vmul.f32 %v5559, %v5561
  %v5563 = vadd.f32 %v5562, -0.4999988
  %v5564 = vmul.f32 %v5559, %v5563
  %v5565 = vadd.f32 1.0, %v5564
  %v5566 = vmul.f32 %v5557, %v5557
  %v5567 = vmul.f32 %v5566, -0.00019511016
  %v5568 = vadd.f32 %v5567, 0.008332121
  %v5569 = vmul.f32 %v5566, %v5568
  %v5570 = vadd.f32 %v5569, -0.16666654
  %v5571 = vmul.f32 %v5566, %v5570
  %v5572 = vadd.f32 %v5571, 1.0
  %v5573 = vmul.f32 %v5572, %v5557
  %vm5574 = vweird.f32 %v625
  %v5575 = vadd.s32 %v5558, 3
  %v5576 = vand.u32 %v5575, 3
  %vm5577 = vcmp.lt.s32.totalorder %v5576, 2
  %vm5578 = vcmp.eq.s32.totalorder %v5576, 0
  %v5579 = vxor.u32 %v5573, 2147483648
  %v5580 = vsel %vm5578, %v5565, %v5579
  %vm5581 = vcmp.eq.s32.totalorder %v5576, 2
  %v5582 = vxor.u32 %v5565, 2147483648
  %v5583 = vsel %vm5581, %v5582, %v5573
  %v5584 = vsel %vm5577, %v5580, %v5583
  %v5585 = vsel %vm5574, nan, %v5584
  %v5586 = vand.u32 2147483647, %v594
  %vm5587 = vcmp.le.f32.partialorder %v5586, 0.7853982
  %vm5588 = vcmp.lt.s32.totalorder %v594, 0
  %v5589 = vand.u32 %v594, 2139095040
  %v5590 = vshrl.u32 %v5589, 23
  %v5591 = vsub.s32 %v5590, 127
  %v5592 = vand.u32 2147483647, %v594
  %v5593 = vand.u32 %v5592, 8388607
  %v5594 = vor.u32 %v5593, 8388608
  %v5595 = vsub.s32 0, %v5594
  %v5596 = vadd.s32 %v5591, 1
  %vm5597 = vcmp.gt.s32.totalorder %v5596, 0
  %v5598 = vsel %vm5597, %v5596, 0
  %v5599 = vshrl.u32 %v5598, 5
  %v5600 = vand.u32 %v5598, 31
  %v5601 = vsub.s32 32, %v5600
  %v5602 = vshrl.u32 683565275, %v5601
  %v5603 = vshll.u32 683565275, %v5600
  %v5604 = vshrl.u32 2475754826, %v5601
  %v5605 = vor.u32 %v5603, %v5604
  %v5606 = vshll.u32 2475754826, %v5600
  %v5607 = vshrl.u32 2131351028, %v5601
  %v5608 = vor.u32 %v5606, %v5607
  %v5609 = vshll.u32 2131351028, %v5600
  %v5610 = vshrl.u32 2102212464, %v5601
  %v5611 = vor.u32 %v5609, %v5610
  %v5612 = vshll.u32 2102212464, %v5600
  %v5613 = vshrl.u32 920167782, %v5601
  %v5614 = vor.u32 %v5612, %v5613
  %v5615 = vshll.u32 920167782, %v5600
  %v5616 = vshrl.u32 1326507024, %v5601
  %v5617 = vor.u32 %v5615, %v5616
  %vm5618 = vcmp.lt.s32.totalorder %v5599, 1
  %vm5619 = vcmp.lt.s32.totalorder %v5599, 2
  %vm5620 = vcmp.lt.s32.totalorder %v5599, 3
  %vm5621 = vcmp.lt.s32.totalorder %v5599, 4
  %v5622 = vsel %vm5618, %v5602, %v5605
  %v5623 = vsel %vm5621, %v5611, 2102212464
  %v5624 = vsel %vm5620, %v5608, %v5623
  %v5625 = vsel %vm5619, %v5622, %v5624
  %v5626 = vsel %vm5618, %v5605, %v5608
  %v5627 = vsel %vm5621, %v5614, 920167782
  %v5628 = vsel %vm5620, %v5611, %v5627
  %v5629 = vsel %vm5619, %v5626, %v5628
  %v5630 = vsel %vm5618, %v5608, %v5611
  %v5631 = vsel %vm5621, %v5617, 1326507024
  %v5632 = vsel %vm5620, %v5614, %v5631
  %v5633 = vsel %vm5619, %v5630, %v5632
  %v5634 = vshll.u32 %v5594, 8
  %v5635 = vand.u32 %v5634, 65535
  %v5636 = vshrl.u32 %v5634, 16
  %v5637 = vand.u32 %v5633, 65535
  %v5638 = vshrl.u32 %v5633, 16
  %v5639 = vmul.u32 %v5635, %v5637
  %v5640 = vmul.u32 %v5635, %v5638
  %v5641 = vmul.u32 %v5636, %v5637
  %v5642 = vmul.u32 %v5636, %v5638
  %v5643 = vshll.u32 %v5640, 16
  %v5644 = vshrl.u32 %v5640, 16
  %v5645 = vshll.u32 %v5641, 16
  %v5646 = vshrl.u32 %v5641, 16
  %vm5647 = vc.u32 %v5639, %v5643
  %v5648 = vsel %vm5647, 1, 0
  %v5649 = vadd.s32 %v5639, %v5643
  %v5650 = vadd.s32 %v5642, %v5648
  %vm5651 = vc.u32 %v5649, %v5645
  %v5652 = vsel %vm5651, 1, 0
  %v5653 = vadd.s32 %v5649, %v5645
  %v5654 = vadd.s32 %v5650, %v5652
  %v5655 = vadd.s32 %v5654, %v5644
  %v5656 = vadd.s32 %v5655, %v5646
  %v5657 = vand.u32 %v5634, 65535
  %v5658 = vshrl.u32 %v5634, 16
  %v5659 = vand.u32 %v5629, 65535
  %v5660 = vshrl.u32 %v5629, 16
  %v5661 = vmul.u32 %v5657, %v5659
  %v5662 = vmul.u32 %v5657, %v5660
  %v5663 = vmul.u32 %v5658, %v5659
  %v5664 = vmul.u32 %v5658, %v5660
  %v5665 = vshll.u32 %v5662, 16
  %v5666 = vshrl.u32 %v5662, 16
  %v5667 = vshll.u32 %v5663, 16
  %v5668 = vshrl.u32 %v5663, 16
  %vm5669 = vc.u32 %v5661, %v5665
  %v5670 = vsel %vm5669, 1, 0
  %v5671 = vadd.s32 %v5661, %v5665
  %v5672 = vadd.s32 %v5664, %v5670
  %vm5673 = vc.u32 %v5671, %v5667
  %v5674 = vsel %vm5673, 1, 0
  %v5675 = vadd.s32 %v5671, %v5667
  %v5676 = vadd.s32 %v5672, %v5674
  %v5677 = vadd.s32 %v5676, %v5666
  %v5678 = vadd.s32 %v5677, %v5668
  %v5679 = vmul.u32 %v5634, %v5625
  %v5680 = vadd.s32 %v5656, %v5675
  %vm5681 = vc.u32 %v5656, %v5675
  %v5682 = vadd.s32 %v5678, 1
  %v5683 = vsel %vm5681, %v5682, %v5678
  %v5684 = vadd.s32 %v5679, %v5683
  %v5685 = vadd.s32 %v5684, 536870912
  %v5686 = vshrl.u32 %v5685, 30
  %v5687 = vshll.u32 %v5686, 30
  %v5688 = vsub.s32 %v5684, %v5687
  %vm5689 = vcmp.lt.s32.totalorder %v5688, 0
  %v5690 = vsub.s32 0, %v5688
  %v5691 = vsel %vm5689, %v5690, %v5688
  %v5692 = vclz %v5691
  %v5693 = vsub.s32 %v5692, 2
  %vm5694 = vcmp.gt.s32.totalorder 0, %v5693
  %v5695 = vsel %vm5694, 0, %v5693
  %v5696 = vsub.s32 32, %v5695
  %v5697 = vshll.u32 %v5688, %v5695
  %v5698 = vshrl.u32 %v5680, %v5696
  %v5699 = vor.u32 %v5697, %v5698
  %v5700 = vsub.s32 4294967266, %v5695
  %v5701 = vadd.s32 %v5700, 127
  %v5702 = vshll.u32 %v5701, 23
  %v5703 = vor.u32 4788187, %v5702
  %v5704 = vand.u32 2147483647, %v5703
  %v5706 = vcvt.s32.f32 %v5699
  %v5707 = vmul.f32 %v5706, %v5704
  %v5708 = vxor.u32 %v5707, 2147483648
  %v5709 = vsel %vm5588, %v5708, %v5707
  %v5710 = vsub.s32 4, %v5686
  %v5711 = vsel %vm5588, %v5710, %v5686
  %v5712 = vsel %vm5587, %v594, %v5709
  %v5713 = vsel %vm5587, 0, %v5711
  %v5714 = vmul.f32 %v5712, %v5712
  %v5715 = vmul.f32 %v5714, -0.001358992
  %v5716 = vadd.f32 %v5715, 0.041655596
  %v5717 = vmul.f32 %v5714, %v5716
  %v5718 = vadd.f32 %v5717, -0.4999988
  %v5719 = vmul.f32 %v5714, %v5718
  %v5720 = vadd.f32 1.0, %v5719
  %v5721 = vmul.f32 %v5712, %v5712
  %v5722 = vmul.f32 %v5721, -0.00019511016
  %v5723 = vadd.f32 %v5722, 0.008332121
  %v5724 = vmul.f32 %v5721, %v5723
  %v5725 = vadd.f32 %v5724, -0.16666654
  %v5726 = vmul.f32 %v5721, %v5725
  %v5727 = vadd.f32 %v5726, 1.0
  %v5728 = vmul.f32 %v5727, %v5712
  %vm5729 = vweird.f32 %v594
  %v5730 = vand.u32 %v5713, 3
  %vm5731 = vcmp.lt.s32.totalorder %v5730, 2
  %vm5732 = vcmp.eq.s32.totalorder %v5730, 0
  %v5733 = vxor.u32 %v5728, 2147483648
  %v5734 = vsel %vm5732, %v5720, %v5733
  %vm5735 = vcmp.eq.s32.totalorder %v5730, 2
  %v5736 = vxor.u32 %v5720, 2147483648
  %v5737 = vsel %vm5735, %v5736, %v5728
  %v5738 = vsel %vm5731, %v5734, %v5737
  %v5739 = vsel %vm5729, nan, %v5738
  %v5740 = vand.u32 2147483647, %v595
  %vm5741 = vcmp.le.f32.partialorder %v5740, 0.7853982
  %vm5742 = vcmp.lt.s32.totalorder %v595, 0
  %v5743 = vand.u32 %v595, 2139095040
  %v5744 = vshrl.u32 %v5743, 23
  %v5745 = vsub.s32 %v5744, 127
  %v5746 = vand.u32 2147483647, %v595
  %v5747 = vand.u32 %v5746, 8388607
  %v5748 = vor.u32 %v5747, 8388608
  %v5749 = vsub.s32 0, %v5748
  %v5750 = vadd.s32 %v5745, 1
  %vm5751 = vcmp.gt.s32.totalorder %v5750, 0
  %v5752 = vsel %vm5751, %v5750, 0
  %v5753 = vshrl.u32 %v5752, 5
  %v5754 = vand.u32 %v5752, 31
  %v5755 = vsub.s32 32, %v5754
  %v5756 = vshrl.u32 683565275, %v5755
  %v5757 = vshll.u32 683565275, %v5754
  %v5758 = vshrl.u32 2475754826, %v5755
  %v5759 = vor.u32 %v5757, %v5758
  %v5760 = vshll.u32 2475754826, %v5754
  %v5761 = vshrl.u32 2131351028, %v5755
  %v5762 = vor.u32 %v5760, %v5761
  %v5763 = vshll.u32 2131351028, %v5754
  %v5764 = vshrl.u32 2102212464, %v5755
  %v5765 = vor.u32 %v5763, %v5764
  %v5766 = vshll.u32 2102212464, %v5754
  %v5767 = vshrl.u32 920167782, %v5755
  %v5768 = vor.u32 %v5766, %v5767
  %v5769 = vshll.u32 920167782, %v5754
  %v5770 = vshrl.u32 1326507024, %v5755
  %v5771 = vor.u32 %v5769, %v5770
  %vm5772 = vcmp.lt.s32.totalorder %v5753, 1
  %vm5773 = vcmp.lt.s32.totalorder %v5753, 2
  %vm5774 = vcmp.lt.s32.totalorder %v5753, 3
  %vm5775 = vcmp.lt.s32.totalorder %v5753, 4
  %v5776 = vsel %vm5772, %v5756, %v5759
  %v5777 = vsel %vm5775, %v5765, 2102212464
  %v5778 = vsel %vm5774, %v5762, %v5777
  %v5779 = vsel %vm5773, %v5776, %v5778
  %v5780 = vsel %vm5772, %v5759, %v5762
  %v5781 = vsel %vm5775, %v5768, 920167782
  %v5782 = vsel %vm5774, %v5765, %v5781
  %v5783 = vsel %vm5773, %v5780, %v5782
  %v5784 = vsel %vm5772, %v5762, %v5765
  %v5785 = vsel %vm5775, %v5771, 1326507024
  %v5786 = vsel %vm5774, %v5768, %v5785
  %v5787 = vsel %vm5773, %v5784, %v5786
  %v5788 = vshll.u32 %v5748, 8
  %v5789 = vand.u32 %v5788, 65535
  %v5790 = vshrl.u32 %v5788, 16
  %v5791 = vand.u32 %v5787, 65535
  %v5792 = vshrl.u32 %v5787, 16
  %v5793 = vmul.u32 %v5789, %v5791
  %v5794 = vmul.u32 %v5789, %v5792
  %v5795 = vmul.u32 %v5790, %v5791
  %v5796 = vmul.u32 %v5790, %v5792
  %v5797 = vshll.u32 %v5794, 16
  %v5798 = vshrl.u32 %v5794, 16
  %v5799 = vshll.u32 %v5795, 16
  %v5800 = vshrl.u32 %v5795, 16
  %vm5801 = vc.u32 %v5793, %v5797
  %v5802 = vsel %vm5801, 1, 0
  %v5803 = vadd.s32 %v5793, %v5797
  %v5804 = vadd.s32 %v5796, %v5802
  %vm5805 = vc.u32 %v5803, %v5799
  %v5806 = vsel %vm5805, 1, 0
  %v5807 = vadd.s32 %v5803, %v5799
  %v5808 = vadd.s32 %v5804, %v5806
  %v5809 = vadd.s32 %v5808, %v5798
  %v5810 = vadd.s32 %v5809, %v5800
  %v5811 = vand.u32 %v5788, 65535
  %v5812 = vshrl.u32 %v5788, 16
  %v5813 = vand.u32 %v5783, 65535
  %v5814 = vshrl.u32 %v5783, 16
  %v5815 = vmul.u32 %v5811, %v5813
  %v5816 = vmul.u32 %v5811, %v5814
  %v5817 = vmul.u32 %v5812, %v5813
  %v5818 = vmul.u32 %v5812, %v5814
  %v5819 = vshll.u32 %v5816, 16
  %v5820 = vshrl.u32 %v5816, 16
  %v5821 = vshll.u32 %v5817, 16
  %v5822 = vshrl.u32 %v5817, 16
  %vm5823 = vc.u32 %v5815, %v5819
  %v5824 = vsel %vm5823, 1, 0
  %v5825 = vadd.s32 %v5815, %v5819
  %v5826 = vadd.s32 %v5818, %v5824
  %vm5827 = vc.u32 %v5825, %v5821
  %v5828 = vsel %vm5827, 1, 0
  %v5829 = vadd.s32 %v5825, %v5821
  %v5830 = vadd.s32 %v5826, %v5828
  %v5831 = vadd.s32 %v5830, %v5820
  %v5832 = vadd.s32 %v5831, %v5822
  %v5833 = vmul.u32 %v5788, %v5779
  %v5834 = vadd.s32 %v5810, %v5829
  %vm5835 = vc.u32 %v5810, %v5829
  %v5836 = vadd.s32 %v5832, 1
  %v5837 = vsel %vm5835, %v5836, %v5832
  %v5838 = vadd.s32 %v5833, %v5837
  %v5839 = vadd.s32 %v5838, 536870912
  %v5840 = vshrl.u32 %v5839, 30
  %v5841 = vshll.u32 %v5840, 30
  %v5842 = vsub.s32 %v5838, %v5841
  %vm5843 = vcmp.lt.s32.totalorder %v5842, 0
  %v5844 = vsub.s32 0, %v5842
  %v5845 = vsel %vm5843, %v5844, %v5842
  %v5846 = vclz %v5845
  %v5847 = vsub.s32 %v5846, 2
  %vm5848 = vcmp.gt.s32.totalorder 0, %v5847
  %v5849 = vsel %vm5848, 0, %v5847
  %v5850 = vsub.s32 32, %v5849
  %v5851 = vshll.u32 %v5842, %v5849
  %v5852 = vshrl.u32 %v5834, %v5850
  %v5853 = vor.u32 %v5851, %v5852
  %v5854 = vsub.s32 4294967266, %v5849
  %v5855 = vadd.s32 %v5854, 127
  %v5856 = vshll.u32 %v5855, 23
  %v5857 = vor.u32 4788187, %v5856
  %v5858 = vand.u32 2147483647, %v5857
  %v5860 = vcvt.s32.f32 %v5853
  %v5861 = vmul.f32 %v5860, %v5858
  %v5862 = vxor.u32 %v5861, 2147483648
  %v5863 = vsel %vm5742, %v5862, %v5861
  %v5864 = vsub.s32 4, %v5840
  %v5865 = vsel %vm5742, %v5864, %v5840
  %v5866 = vsel %vm5741, %v595, %v5863
  %v5867 = vsel %vm5741, 0, %v5865
  %v5868 = vmul.f32 %v5866, %v5866
  %v5869 = vmul.f32 %v5868, -0.001358992
  %v5870 = vadd.f32 %v5869, 0.041655596
  %v5871 = vmul.f32 %v5868, %v5870
  %v5872 = vadd.f32 %v5871, -0.4999988
  %v5873 = vmul.f32 %v5868, %v5872
  %v5874 = vadd.f32 1.0, %v5873
  %v5875 = vmul.f32 %v5866, %v5866
  %v5876 = vmul.f32 %v5875, -0.00019511016
  %v5877 = vadd.f32 %v5876, 0.008332121
  %v5878 = vmul.f32 %v5875, %v5877
  %v5879 = vadd.f32 %v5878, -0.16666654
  %v5880 = vmul.f32 %v5875, %v5879
  %v5881 = vadd.f32 %v5880, 1.0
  %v5882 = vmul.f32 %v5881, %v5866
  %vm5883 = vweird.f32 %v595
  %v5884 = vand.u32 %v5867, 3
  %vm5885 = vcmp.lt.s32.totalorder %v5884, 2
  %vm5886 = vcmp.eq.s32.totalorder %v5884, 0
  %v5887 = vxor.u32 %v5882, 2147483648
  %v5888 = vsel %vm5886, %v5874, %v5887
  %vm5889 = vcmp.eq.s32.totalorder %v5884, 2
  %v5890 = vxor.u32 %v5874, 2147483648
  %v5891 = vsel %vm5889, %v5890, %v5882
  %v5892 = vsel %vm5885, %v5888, %v5891
  %v5893 = vsel %vm5883, nan, %v5892
  %v5894 = vand.u32 2147483647, %v596
  %vm5895 = vcmp.le.f32.partialorder %v5894, 0.7853982
  %vm5896 = vcmp.lt.s32.totalorder %v596, 0
  %v5897 = vand.u32 %v596, 2139095040
  %v5898 = vshrl.u32 %v5897, 23
  %v5899 = vsub.s32 %v5898, 127
  %v5900 = vand.u32 2147483647, %v596
  %v5901 = vand.u32 %v5900, 8388607
  %v5902 = vor.u32 %v5901, 8388608
  %v5903 = vsub.s32 0, %v5902
  %v5904 = vadd.s32 %v5899, 1
  %vm5905 = vcmp.gt.s32.totalorder %v5904, 0
  %v5906 = vsel %vm5905, %v5904, 0
  %v5907 = vshrl.u32 %v5906, 5
  %v5908 = vand.u32 %v5906, 31
  %v5909 = vsub.s32 32, %v5908
  %v5910 = vshrl.u32 683565275, %v5909
  %v5911 = vshll.u32 683565275, %v5908
  %v5912 = vshrl.u32 2475754826, %v5909
  %v5913 = vor.u32 %v5911, %v5912
  %v5914 = vshll.u32 2475754826, %v5908
  %v5915 = vshrl.u32 2131351028, %v5909
  %v5916 = vor.u32 %v5914, %v5915
  %v5917 = vshll.u32 2131351028, %v5908
  %v5918 = vshrl.u32 2102212464, %v5909
  %v5919 = vor.u32 %v5917, %v5918
  %v5920 = vshll.u32 2102212464, %v5908
  %v5921 = vshrl.u32 920167782, %v5909
  %v5922 = vor.u32 %v5920, %v5921
  %v5923 = vshll.u32 920167782, %v5908
  %v5924 = vshrl.u32 1326507024, %v5909
  %v5925 = vor.u32 %v5923, %v5924
  %vm5926 = vcmp.lt.s32.totalorder %v5907, 1
  %vm5927 = vcmp.lt.s32.totalorder %v5907, 2
  %vm5928 = vcmp.lt.s32.totalorder %v5907, 3
  %vm5929 = vcmp.lt.s32.totalorder %v5907, 4
  %v5930 = vsel %vm5926, %v5910, %v5913
  %v5931 = vsel %vm5929, %v5919, 2102212464
  %v5932 = vsel %vm5928, %v5916, %v5931
  %v5933 = vsel %vm5927, %v5930, %v5932
  %v5934 = vsel %vm5926, %v5913, %v5916
  %v5935 = vsel %vm5929, %v5922, 920167782
  %v5936 = vsel %vm5928, %v5919, %v5935
  %v5937 = vsel %vm5927, %v5934, %v5936
  %v5938 = vsel %vm5926, %v5916, %v5919
  %v5939 = vsel %vm5929, %v5925, 1326507024
  %v5940 = vsel %vm5928, %v5922, %v5939
  %v5941 = vsel %vm5927, %v5938, %v5940
  %v5942 = vshll.u32 %v5902, 8
  %v5943 = vand.u32 %v5942, 65535
  %v5944 = vshrl.u32 %v5942, 16
  %v5945 = vand.u32 %v5941, 65535
  %v5946 = vshrl.u32 %v5941, 16
  %v5947 = vmul.u32 %v5943, %v5945
  %v5948 = vmul.u32 %v5943, %v5946
  %v5949 = vmul.u32 %v5944, %v5945
  %v5950 = vmul.u32 %v5944, %v5946
  %v5951 = vshll.u32 %v5948, 16
  %v5952 = vshrl.u32 %v5948, 16
  %v5953 = vshll.u32 %v5949, 16
  %v5954 = vshrl.u32 %v5949, 16
  %vm5955 = vc.u32 %v5947, %v5951
  %v5956 = vsel %vm5955, 1, 0
  %v5957 = vadd.s32 %v5947, %v5951
  %v5958 = vadd.s32 %v5950, %v5956
  %vm5959 = vc.u32 %v5957, %v5953
  %v5960 = vsel %vm5959, 1, 0
  %v5961 = vadd.s32 %v5957, %v5953
  %v5962 = vadd.s32 %v5958, %v5960
  %v5963 = vadd.s32 %v5962, %v5952
  %v5964 = vadd.s32 %v5963, %v5954
  %v5965 = vand.u32 %v5942, 65535
  %v5966 = vshrl.u32 %v5942, 16
  %v5967 = vand.u32 %v5937, 65535
  %v5968 = vshrl.u32 %v5937, 16
  %v5969 = vmul.u32 %v5965, %v5967
  %v5970 = vmul.u32 %v5965, %v5968
  %v5971 = vmul.u32 %v5966, %v5967
  %v5972 = vmul.u32 %v5966, %v5968
  %v5973 = vshll.u32 %v5970, 16
  %v5974 = vshrl.u32 %v5970, 16
  %v5975 = vshll.u32 %v5971, 16
  %v5976 = vshrl.u32 %v5971, 16
  %vm5977 = vc.u32 %v5969, %v5973
  %v5978 = vsel %vm5977, 1, 0
  %v5979 = vadd.s32 %v5969, %v5973
  %v5980 = vadd.s32 %v5972, %v5978
  %vm5981 = vc.u32 %v5979, %v5975
  %v5982 = vsel %vm5981, 1, 0
  %v5983 = vadd.s32 %v5979, %v5975
  %v5984 = vadd.s32 %v5980, %v5982
  %v5985 = vadd.s32 %v5984, %v5974
  %v5986 = vadd.s32 %v5985, %v5976
  %v5987 = vmul.u32 %v5942, %v5933
  %v5988 = vadd.s32 %v5964, %v5983
  %vm5989 = vc.u32 %v5964, %v5983
  %v5990 = vadd.s32 %v5986, 1
  %v5991 = vsel %vm5989, %v5990, %v5986
  %v5992 = vadd.s32 %v5987, %v5991
  %v5993 = vadd.s32 %v5992, 536870912
  %v5994 = vshrl.u32 %v5993, 30
  %v5995 = vshll.u32 %v5994, 30
  %v5996 = vsub.s32 %v5992, %v5995
  %vm5997 = vcmp.lt.s32.totalorder %v5996, 0
  %v5998 = vsub.s32 0, %v5996
  %v5999 = vsel %vm5997, %v5998, %v5996
  %v6000 = vclz %v5999
  %v6001 = vsub.s32 %v6000, 2
  %vm6002 = vcmp.gt.s32.totalorder 0, %v6001
  %v6003 = vsel %vm6002, 0, %v6001
  %v6004 = vsub.s32 32, %v6003
  %v6005 = vshll.u32 %v5996, %v6003
  %v6006 = vshrl.u32 %v5988, %v6004
  %v6007 = vor.u32 %v6005, %v6006
  %v6008 = vsub.s32 4294967266, %v6003
  %v6009 = vadd.s32 %v6008, 127
  %v6010 = vshll.u32 %v6009, 23
  %v6011 = vor.u32 4788187, %v6010
  %v6012 = vand.u32 2147483647, %v6011
  %v6014 = vcvt.s32.f32 %v6007
  %v6015 = vmul.f32 %v6014, %v6012
  %v6016 = vxor.u32 %v6015, 2147483648
  %v6017 = vsel %vm5896, %v6016, %v6015
  %v6018 = vsub.s32 4, %v5994
  %v6019 = vsel %vm5896, %v6018, %v5994
  %v6020 = vsel %vm5895, %v596, %v6017
  %v6021 = vsel %vm5895, 0, %v6019
  %v6022 = vmul.f32 %v6020, %v6020
  %v6023 = vmul.f32 %v6022, -0.001358992
  %v6024 = vadd.f32 %v6023, 0.041655596
  %v6025 = vmul.f32 %v6022, %v6024
  %v6026 = vadd.f32 %v6025, -0.4999988
  %v6027 = vmul.f32 %v6022, %v6026
  %v6028 = vadd.f32 1.0, %v6027
  %v6029 = vmul.f32 %v6020, %v6020
  %v6030 = vmul.f32 %v6029, -0.00019511016
  %v6031 = vadd.f32 %v6030, 0.008332121
  %v6032 = vmul.f32 %v6029, %v6031
  %v6033 = vadd.f32 %v6032, -0.16666654
  %v6034 = vmul.f32 %v6029, %v6033
  %v6035 = vadd.f32 %v6034, 1.0
  %v6036 = vmul.f32 %v6035, %v6020
  %vm6037 = vweird.f32 %v596
  %v6038 = vand.u32 %v6021, 3
  %vm6039 = vcmp.lt.s32.totalorder %v6038, 2
  %vm6040 = vcmp.eq.s32.totalorder %v6038, 0
  %v6041 = vxor.u32 %v6036, 2147483648
  %v6042 = vsel %vm6040, %v6028, %v6041
  %vm6043 = vcmp.eq.s32.totalorder %v6038, 2
  %v6044 = vxor.u32 %v6028, 2147483648
  %v6045 = vsel %vm6043, %v6044, %v6036
  %v6046 = vsel %vm6039, %v6042, %v6045
  %v6047 = vsel %vm6037, nan, %v6046
  %v6048 = vand.u32 2147483647, %v597
  %vm6049 = vcmp.le.f32.partialorder %v6048, 0.7853982
  %vm6050 = vcmp.lt.s32.totalorder %v597, 0
  %v6051 = vand.u32 %v597, 2139095040
  %v6052 = vshrl.u32 %v6051, 23
  %v6053 = vsub.s32 %v6052, 127
  %v6054 = vand.u32 2147483647, %v597
  %v6055 = vand.u32 %v6054, 8388607
  %v6056 = vor.u32 %v6055, 8388608
  %v6057 = vsub.s32 0, %v6056
  %v6058 = vadd.s32 %v6053, 1
  %vm6059 = vcmp.gt.s32.totalorder %v6058, 0
  %v6060 = vsel %vm6059, %v6058, 0
  %v6061 = vshrl.u32 %v6060, 5
  %v6062 = vand.u32 %v6060, 31
  %v6063 = vsub.s32 32, %v6062
  %v6064 = vshrl.u32 683565275, %v6063
  %v6065 = vshll.u32 683565275, %v6062
  %v6066 = vshrl.u32 2475754826, %v6063
  %v6067 = vor.u32 %v6065, %v6066
  %v6068 = vshll.u32 2475754826, %v6062
  %v6069 = vshrl.u32 2131351028, %v6063
  %v6070 = vor.u32 %v6068, %v6069
  %v6071 = vshll.u32 2131351028, %v6062
  %v6072 = vshrl.u32 2102212464, %v6063
  %v6073 = vor.u32 %v6071, %v6072
  %v6074 = vshll.u32 2102212464, %v6062
  %v6075 = vshrl.u32 920167782, %v6063
  %v6076 = vor.u32 %v6074, %v6075
  %v6077 = vshll.u32 920167782, %v6062
  %v6078 = vshrl.u32 1326507024, %v6063
  %v6079 = vor.u32 %v6077, %v6078
  %vm6080 = vcmp.lt.s32.totalorder %v6061, 1
  %vm6081 = vcmp.lt.s32.totalorder %v6061, 2
  %vm6082 = vcmp.lt.s32.totalorder %v6061, 3
  %vm6083 = vcmp.lt.s32.totalorder %v6061, 4
  %v6084 = vsel %vm6080, %v6064, %v6067
  %v6085 = vsel %vm6083, %v6073, 2102212464
  %v6086 = vsel %vm6082, %v6070, %v6085
  %v6087 = vsel %vm6081, %v6084, %v6086
  %v6088 = vsel %vm6080, %v6067, %v6070
  %v6089 = vsel %vm6083, %v6076, 920167782
  %v6090 = vsel %vm6082, %v6073, %v6089
  %v6091 = vsel %vm6081, %v6088, %v6090
  %v6092 = vsel %vm6080, %v6070, %v6073
  %v6093 = vsel %vm6083, %v6079, 1326507024
  %v6094 = vsel %vm6082, %v6076, %v6093
  %v6095 = vsel %vm6081, %v6092, %v6094
  %v6096 = vshll.u32 %v6056, 8
  %v6097 = vand.u32 %v6096, 65535
  %v6098 = vshrl.u32 %v6096, 16
  %v6099 = vand.u32 %v6095, 65535
  %v6100 = vshrl.u32 %v6095, 16
  %v6101 = vmul.u32 %v6097, %v6099
  %v6102 = vmul.u32 %v6097, %v6100
  %v6103 = vmul.u32 %v6098, %v6099
  %v6104 = vmul.u32 %v6098, %v6100
  %v6105 = vshll.u32 %v6102, 16
  %v6106 = vshrl.u32 %v6102, 16
  %v6107 = vshll.u32 %v6103, 16
  %v6108 = vshrl.u32 %v6103, 16
  %vm6109 = vc.u32 %v6101, %v6105
  %v6110 = vsel %vm6109, 1, 0
  %v6111 = vadd.s32 %v6101, %v6105
  %v6112 = vadd.s32 %v6104, %v6110
  %vm6113 = vc.u32 %v6111, %v6107
  %v6114 = vsel %vm6113, 1, 0
  %v6115 = vadd.s32 %v6111, %v6107
  %v6116 = vadd.s32 %v6112, %v6114
  %v6117 = vadd.s32 %v6116, %v6106
  %v6118 = vadd.s32 %v6117, %v6108
  %v6119 = vand.u32 %v6096, 65535
  %v6120 = vshrl.u32 %v6096, 16
  %v6121 = vand.u32 %v6091, 65535
  %v6122 = vshrl.u32 %v6091, 16
  %v6123 = vmul.u32 %v6119, %v6121
  %v6124 = vmul.u32 %v6119, %v6122
  %v6125 = vmul.u32 %v6120, %v6121
  %v6126 = vmul.u32 %v6120, %v6122
  %v6127 = vshll.u32 %v6124, 16
  %v6128 = vshrl.u32 %v6124, 16
  %v6129 = vshll.u32 %v6125, 16
  %v6130 = vshrl.u32 %v6125, 16
  %vm6131 = vc.u32 %v6123, %v6127
  %v6132 = vsel %vm6131, 1, 0
  %v6133 = vadd.s32 %v6123, %v6127
  %v6134 = vadd.s32 %v6126, %v6132
  %vm6135 = vc.u32 %v6133, %v6129
  %v6136 = vsel %vm6135, 1, 0
  %v6137 = vadd.s32 %v6133, %v6129
  %v6138 = vadd.s32 %v6134, %v6136
  %v6139 = vadd.s32 %v6138, %v6128
  %v6140 = vadd.s32 %v6139, %v6130
  %v6141 = vmul.u32 %v6096, %v6087
  %v6142 = vadd.s32 %v6118, %v6137
  %vm6143 = vc.u32 %v6118, %v6137
  %v6144 = vadd.s32 %v6140, 1
  %v6145 = vsel %vm6143, %v6144, %v6140
  %v6146 = vadd.s32 %v6141, %v6145
  %v6147 = vadd.s32 %v6146, 536870912
  %v6148 = vshrl.u32 %v6147, 30
  %v6149 = vshll.u32 %v6148, 30
  %v6150 = vsub.s32 %v6146, %v6149
  %vm6151 = vcmp.lt.s32.totalorder %v6150, 0
  %v6152 = vsub.s32 0, %v6150
  %v6153 = vsel %vm6151, %v6152, %v6150
  %v6154 = vclz %v6153
  %v6155 = vsub.s32 %v6154, 2
  %vm6156 = vcmp.gt.s32.totalorder 0, %v6155
  %v6157 = vsel %vm6156, 0, %v6155
  %v6158 = vsub.s32 32, %v6157
  %v6159 = vshll.u32 %v6150, %v6157
  %v6160 = vshrl.u32 %v6142, %v6158
  %v6161 = vor.u32 %v6159, %v6160
  %v6162 = vsub.s32 4294967266, %v6157
  %v6163 = vadd.s32 %v6162, 127
  %v6164 = vshll.u32 %v6163, 23
  %v6165 = vor.u32 4788187, %v6164
  %v6166 = vand.u32 2147483647, %v6165
  %v6168 = vcvt.s32.f32 %v6161
  %v6169 = vmul.f32 %v6168, %v6166
  %v6170 = vxor.u32 %v6169, 2147483648
  %v6171 = vsel %vm6050, %v6170, %v6169
  %v6172 = vsub.s32 4, %v6148
  %v6173 = vsel %vm6050, %v6172, %v6148
  %v6174 = vsel %vm6049, %v597, %v6171
  %v6175 = vsel %vm6049, 0, %v6173
  %v6176 = vmul.f32 %v6174, %v6174
  %v6177 = vmul.f32 %v6176, -0.001358992
  %v6178 = vadd.f32 %v6177, 0.041655596
  %v6179 = vmul.f32 %v6176, %v6178
  %v6180 = vadd.f32 %v6179, -0.4999988
  %v6181 = vmul.f32 %v6176, %v6180
  %v6182 = vadd.f32 1.0, %v6181
  %v6183 = vmul.f32 %v6174, %v6174
  %v6184 = vmul.f32 %v6183, -0.00019511016
  %v6185 = vadd.f32 %v6184, 0.008332121
  %v6186 = vmul.f32 %v6183, %v6185
  %v6187 = vadd.f32 %v6186, -0.16666654
  %v6188 = vmul.f32 %v6183, %v6187
  %v6189 = vadd.f32 %v6188, 1.0
  %v6190 = vmul.f32 %v6189, %v6174
  %vm6191 = vweird.f32 %v597
  %v6192 = vand.u32 %v6175, 3
  %vm6193 = vcmp.lt.s32.totalorder %v6192, 2
  %vm6194 = vcmp.eq.s32.totalorder %v6192, 0
  %v6195 = vxor.u32 %v6190, 2147483648
  %v6196 = vsel %vm6194, %v6182, %v6195
  %vm6197 = vcmp.eq.s32.totalorder %v6192, 2
  %v6198 = vxor.u32 %v6182, 2147483648
  %v6199 = vsel %vm6197, %v6198, %v6190
  %v6200 = vsel %vm6193, %v6196, %v6199
  %v6201 = vsel %vm6191, nan, %v6200
  %v6202 = vand.u32 2147483647, %v598
  %vm6203 = vcmp.le.f32.partialorder %v6202, 0.7853982
  %vm6204 = vcmp.lt.s32.totalorder %v598, 0
  %v6205 = vand.u32 %v598, 2139095040
  %v6206 = vshrl.u32 %v6205, 23
  %v6207 = vsub.s32 %v6206, 127
  %v6208 = vand.u32 2147483647, %v598
  %v6209 = vand.u32 %v6208, 8388607
  %v6210 = vor.u32 %v6209, 8388608
  %v6211 = vsub.s32 0, %v6210
  %v6212 = vadd.s32 %v6207, 1
  %vm6213 = vcmp.gt.s32.totalorder %v6212, 0
  %v6214 = vsel %vm6213, %v6212, 0
  %v6215 = vshrl.u32 %v6214, 5
  %v6216 = vand.u32 %v6214, 31
  %v6217 = vsub.s32 32, %v6216
  %v6218 = vshrl.u32 683565275, %v6217
  %v6219 = vshll.u32 683565275, %v6216
  %v6220 = vshrl.u32 2475754826, %v6217
  %v6221 = vor.u32 %v6219, %v6220
  %v6222 = vshll.u32 2475754826, %v6216
  %v6223 = vshrl.u32 2131351028, %v6217
  %v6224 = vor.u32 %v6222, %v6223
  %v6225 = vshll.u32 2131351028, %v6216
  %v6226 = vshrl.u32 2102212464, %v6217
  %v6227 = vor.u32 %v6225, %v6226
  %v6228 = vshll.u32 2102212464, %v6216
  %v6229 = vshrl.u32 920167782, %v6217
  %v6230 = vor.u32 %v6228, %v6229
  %v6231 = vshll.u32 920167782, %v6216
  %v6232 = vshrl.u32 1326507024, %v6217
  %v6233 = vor.u32 %v6231, %v6232
  %vm6234 = vcmp.lt.s32.totalorder %v6215, 1
  %vm6235 = vcmp.lt.s32.totalorder %v6215, 2
  %vm6236 = vcmp.lt.s32.totalorder %v6215, 3
  %vm6237 = vcmp.lt.s32.totalorder %v6215, 4
  %v6238 = vsel %vm6234, %v6218, %v6221
  %v6239 = vsel %vm6237, %v6227, 2102212464
  %v6240 = vsel %vm6236, %v6224, %v6239
  %v6241 = vsel %vm6235, %v6238, %v6240
  %v6242 = vsel %vm6234, %v6221, %v6224
  %v6243 = vsel %vm6237, %v6230, 920167782
  %v6244 = vsel %vm6236, %v6227, %v6243
  %v6245 = vsel %vm6235, %v6242, %v6244
  %v6246 = vsel %vm6234, %v6224, %v6227
  %v6247 = vsel %vm6237, %v6233, 1326507024
  %v6248 = vsel %vm6236, %v6230, %v6247
  %v6249 = vsel %vm6235, %v6246, %v6248
  %v6250 = vshll.u32 %v6210, 8
  %v6251 = vand.u32 %v6250, 65535
  %v6252 = vshrl.u32 %v6250, 16
  %v6253 = vand.u32 %v6249, 65535
  %v6254 = vshrl.u32 %v6249, 16
  %v6255 = vmul.u32 %v6251, %v6253
  %v6256 = vmul.u32 %v6251, %v6254
  %v6257 = vmul.u32 %v6252, %v6253
  %v6258 = vmul.u32 %v6252, %v6254
  %v6259 = vshll.u32 %v6256, 16
  %v6260 = vshrl.u32 %v6256, 16
  %v6261 = vshll.u32 %v6257, 16
  %v6262 = vshrl.u32 %v6257, 16
  %vm6263 = vc.u32 %v6255, %v6259
  %v6264 = vsel %vm6263, 1, 0
  %v6265 = vadd.s32 %v6255, %v6259
  %v6266 = vadd.s32 %v6258, %v6264
  %vm6267 = vc.u32 %v6265, %v6261
  %v6268 = vsel %vm6267, 1, 0
  %v6269 = vadd.s32 %v6265, %v6261
  %v6270 = vadd.s32 %v6266, %v6268
  %v6271 = vadd.s32 %v6270, %v6260
  %v6272 = vadd.s32 %v6271, %v6262
  %v6273 = vand.u32 %v6250, 65535
  %v6274 = vshrl.u32 %v6250, 16
  %v6275 = vand.u32 %v6245, 65535
  %v6276 = vshrl.u32 %v6245, 16
  %v6277 = vmul.u32 %v6273, %v6275
  %v6278 = vmul.u32 %v6273, %v6276
  %v6279 = vmul.u32 %v6274, %v6275
  %v6280 = vmul.u32 %v6274, %v6276
  %v6281 = vshll.u32 %v6278, 16
  %v6282 = vshrl.u32 %v6278, 16
  %v6283 = vshll.u32 %v6279, 16
  %v6284 = vshrl.u32 %v6279, 16
  %vm6285 = vc.u32 %v6277, %v6281
  %v6286 = vsel %vm6285, 1, 0
  %v6287 = vadd.s32 %v6277, %v6281
  %v6288 = vadd.s32 %v6280, %v6286
  %vm6289 = vc.u32 %v6287, %v6283
  %v6290 = vsel %vm6289, 1, 0
  %v6291 = vadd.s32 %v6287, %v6283
  %v6292 = vadd.s32 %v6288, %v6290
  %v6293 = vadd.s32 %v6292, %v6282
  %v6294 = vadd.s32 %v6293, %v6284
  %v6295 = vmul.u32 %v6250, %v6241
  %v6296 = vadd.s32 %v6272, %v6291
  %vm6297 = vc.u32 %v6272, %v6291
  %v6298 = vadd.s32 %v6294, 1
  %v6299 = vsel %vm6297, %v6298, %v6294
  %v6300 = vadd.s32 %v6295, %v6299
  %v6301 = vadd.s32 %v6300, 536870912
  %v6302 = vshrl.u32 %v6301, 30
  %v6303 = vshll.u32 %v6302, 30
  %v6304 = vsub.s32 %v6300, %v6303
  %vm6305 = vcmp.lt.s32.totalorder %v6304, 0
  %v6306 = vsub.s32 0, %v6304
  %v6307 = vsel %vm6305, %v6306, %v6304
  %v6308 = vclz %v6307
  %v6309 = vsub.s32 %v6308, 2
  %vm6310 = vcmp.gt.s32.totalorder 0, %v6309
  %v6311 = vsel %vm6310, 0, %v6309
  %v6312 = vsub.s32 32, %v6311
  %v6313 = vshll.u32 %v6304, %v6311
  %v6314 = vshrl.u32 %v6296, %v6312
  %v6315 = vor.u32 %v6313, %v6314
  %v6316 = vsub.s32 4294967266, %v6311
  %v6317 = vadd.s32 %v6316, 127
  %v6318 = vshll.u32 %v6317, 23
  %v6319 = vor.u32 4788187, %v6318
  %v6320 = vand.u32 2147483647, %v6319
  %v6322 = vcvt.s32.f32 %v6315
  %v6323 = vmul.f32 %v6322, %v6320
  %v6324 = vxor.u32 %v6323, 2147483648
  %v6325 = vsel %vm6204, %v6324, %v6323
  %v6326 = vsub.s32 4, %v6302
  %v6327 = vsel %vm6204, %v6326, %v6302
  %v6328 = vsel %vm6203, %v598, %v6325
  %v6329 = vsel %vm6203, 0, %v6327
  %v6330 = vmul.f32 %v6328, %v6328
  %v6331 = vmul.f32 %v6330, -0.001358992
  %v6332 = vadd.f32 %v6331, 0.041655596
  %v6333 = vmul.f32 %v6330, %v6332
  %v6334 = vadd.f32 %v6333, -0.4999988
  %v6335 = vmul.f32 %v6330, %v6334
  %v6336 = vadd.f32 1.0, %v6335
  %v6337 = vmul.f32 %v6328, %v6328
  %v6338 = vmul.f32 %v6337, -0.00019511016
  %v6339 = vadd.f32 %v6338, 0.008332121
  %v6340 = vmul.f32 %v6337, %v6339
  %v6341 = vadd.f32 %v6340, -0.16666654
  %v6342 = vmul.f32 %v6337, %v6341
  %v6343 = vadd.f32 %v6342, 1.0
  %v6344 = vmul.f32 %v6343, %v6328
  %vm6345 = vweird.f32 %v598
  %v6346 = vand.u32 %v6329, 3
  %vm6347 = vcmp.lt.s32.totalorder %v6346, 2
  %vm6348 = vcmp.eq.s32.totalorder %v6346, 0
  %v6349 = vxor.u32 %v6344, 2147483648
  %v6350 = vsel %vm6348, %v6336, %v6349
  %vm6351 = vcmp.eq.s32.totalorder %v6346, 2
  %v6352 = vxor.u32 %v6336, 2147483648
  %v6353 = vsel %vm6351, %v6352, %v6344
  %v6354 = vsel %vm6347, %v6350, %v6353
  %v6355 = vsel %vm6345, nan, %v6354
  %v6356 = vand.u32 2147483647, %v599
  %vm6357 = vcmp.le.f32.partialorder %v6356, 0.7853982
  %vm6358 = vcmp.lt.s32.totalorder %v599, 0
  %v6359 = vand.u32 %v599, 2139095040
  %v6360 = vshrl.u32 %v6359, 23
  %v6361 = vsub.s32 %v6360, 127
  %v6362 = vand.u32 2147483647, %v599
  %v6363 = vand.u32 %v6362, 8388607
  %v6364 = vor.u32 %v6363, 8388608
  %v6365 = vsub.s32 0, %v6364
  %v6366 = vadd.s32 %v6361, 1
  %vm6367 = vcmp.gt.s32.totalorder %v6366, 0
  %v6368 = vsel %vm6367, %v6366, 0
  %v6369 = vshrl.u32 %v6368, 5
  %v6370 = vand.u32 %v6368, 31
  %v6371 = vsub.s32 32, %v6370
  %v6372 = vshrl.u32 683565275, %v6371
  %v6373 = vshll.u32 683565275, %v6370
  %v6374 = vshrl.u32 2475754826, %v6371
  %v6375 = vor.u32 %v6373, %v6374
  %v6376 = vshll.u32 2475754826, %v6370
  %v6377 = vshrl.u32 2131351028, %v6371
  %v6378 = vor.u32 %v6376, %v6377
  %v6379 = vshll.u32 2131351028, %v6370
  %v6380 = vshrl.u32 2102212464, %v6371
  %v6381 = vor.u32 %v6379, %v6380
  %v6382 = vshll.u32 2102212464, %v6370
  %v6383 = vshrl.u32 920167782, %v6371
  %v6384 = vor.u32 %v6382, %v6383
  %v6385 = vshll.u32 920167782, %v6370
  %v6386 = vshrl.u32 1326507024, %v6371
  %v6387 = vor.u32 %v6385, %v6386
  %vm6388 = vcmp.lt.s32.totalorder %v6369, 1
  %vm6389 = vcmp.lt.s32.totalorder %v6369, 2
  %vm6390 = vcmp.lt.s32.totalorder %v6369, 3
  %vm6391 = vcmp.lt.s32.totalorder %v6369, 4
  %v6392 = vsel %vm6388, %v6372, %v6375
  %v6393 = vsel %vm6391, %v6381, 2102212464
  %v6394 = vsel %vm6390, %v6378, %v6393
  %v6395 = vsel %vm6389, %v6392, %v6394
  %v6396 = vsel %vm6388, %v6375, %v6378
  %v6397 = vsel %vm6391, %v6384, 920167782
  %v6398 = vsel %vm6390, %v6381, %v6397
  %v6399 = vsel %vm6389, %v6396, %v6398
  %v6400 = vsel %vm6388, %v6378, %v6381
  %v6401 = vsel %vm6391, %v6387, 1326507024
  %v6402 = vsel %vm6390, %v6384, %v6401
  %v6403 = vsel %vm6389, %v6400, %v6402
  %v6404 = vshll.u32 %v6364, 8
  %v6405 = vand.u32 %v6404, 65535
  %v6406 = vshrl.u32 %v6404, 16
  %v6407 = vand.u32 %v6403, 65535
  %v6408 = vshrl.u32 %v6403, 16
  %v6409 = vmul.u32 %v6405, %v6407
  %v6410 = vmul.u32 %v6405, %v6408
  %v6411 = vmul.u32 %v6406, %v6407
  %v6412 = vmul.u32 %v6406, %v6408
  %v6413 = vshll.u32 %v6410, 16
  %v6414 = vshrl.u32 %v6410, 16
  %v6415 = vshll.u32 %v6411, 16
  %v6416 = vshrl.u32 %v6411, 16
  %vm6417 = vc.u32 %v6409, %v6413
  %v6418 = vsel %vm6417, 1, 0
  %v6419 = vadd.s32 %v6409, %v6413
  %v6420 = vadd.s32 %v6412, %v6418
  %vm6421 = vc.u32 %v6419, %v6415
  %v6422 = vsel %vm6421, 1, 0
  %v6423 = vadd.s32 %v6419, %v6415
  %v6424 = vadd.s32 %v6420, %v6422
  %v6425 = vadd.s32 %v6424, %v6414
  %v6426 = vadd.s32 %v6425, %v6416
  %v6427 = vand.u32 %v6404, 65535
  %v6428 = vshrl.u32 %v6404, 16
  %v6429 = vand.u32 %v6399, 65535
  %v6430 = vshrl.u32 %v6399, 16
  %v6431 = vmul.u32 %v6427, %v6429
  %v6432 = vmul.u32 %v6427, %v6430
  %v6433 = vmul.u32 %v6428, %v6429
  %v6434 = vmul.u32 %v6428, %v6430
  %v6435 = vshll.u32 %v6432, 16
  %v6436 = vshrl.u32 %v6432, 16
  %v6437 = vshll.u32 %v6433, 16
  %v6438 = vshrl.u32 %v6433, 16
  %vm6439 = vc.u32 %v6431, %v6435
  %v6440 = vsel %vm6439, 1, 0
  %v6441 = vadd.s32 %v6431, %v6435
  %v6442 = vadd.s32 %v6434, %v6440
  %vm6443 = vc.u32 %v6441, %v6437
  %v6444 = vsel %vm6443, 1, 0
  %v6445 = vadd.s32 %v6441, %v6437
  %v6446 = vadd.s32 %v6442, %v6444
  %v6447 = vadd.s32 %v6446, %v6436
  %v6448 = vadd.s32 %v6447, %v6438
  %v6449 = vmul.u32 %v6404, %v6395
  %v6450 = vadd.s32 %v6426, %v6445
  %vm6451 = vc.u32 %v6426, %v6445
  %v6452 = vadd.s32 %v6448, 1
  %v6453 = vsel %vm6451, %v6452, %v6448
  %v6454 = vadd.s32 %v6449, %v6453
  %v6455 = vadd.s32 %v6454, 536870912
  %v6456 = vshrl.u32 %v6455, 30
  %v6457 = vshll.u32 %v6456, 30
  %v6458 = vsub.s32 %v6454, %v6457
  %vm6459 = vcmp.lt.s32.totalorder %v6458, 0
  %v6460 = vsub.s32 0, %v6458
  %v6461 = vsel %vm6459, %v6460, %v6458
  %v6462 = vclz %v6461
  %v6463 = vsub.s32 %v6462, 2
  %vm6464 = vcmp.gt.s32.totalorder 0, %v6463
  %v6465 = vsel %vm6464, 0, %v6463
  %v6466 = vsub.s32 32, %v6465
  %v6467 = vshll.u32 %v6458, %v6465
  %v6468 = vshrl.u32 %v6450, %v6466
  %v6469 = vor.u32 %v6467, %v6468
  %v6470 = vsub.s32 4294967266, %v6465
  %v6471 = vadd.s32 %v6470, 127
  %v6472 = vshll.u32 %v6471, 23
  %v6473 = vor.u32 4788187, %v6472
  %v6474 = vand.u32 2147483647, %v6473
  %v6476 = vcvt.s32.f32 %v6469
  %v6477 = vmul.f32 %v6476, %v6474
  %v6478 = vxor.u32 %v6477, 2147483648
  %v6479 = vsel %vm6358, %v6478, %v6477
  %v6480 = vsub.s32 4, %v6456
  %v6481 = vsel %vm6358, %v6480, %v6456
  %v6482 = vsel %vm6357, %v599, %v6479
  %v6483 = vsel %vm6357, 0, %v6481
  %v6484 = vmul.f32 %v6482, %v6482
  %v6485 = vmul.f32 %v6484, -0.001358992
  %v6486 = vadd.f32 %v6485, 0.041655596
  %v6487 = vmul.f32 %v6484, %v6486
  %v6488 = vadd.f32 %v6487, -0.4999988
  %v6489 = vmul.f32 %v6484, %v6488
  %v6490 = vadd.f32 1.0, %v6489
  %v6491 = vmul.f32 %v6482, %v6482
  %v6492 = vmul.f32 %v6491, -0.00019511016
  %v6493 = vadd.f32 %v6492, 0.008332121
  %v6494 = vmul.f32 %v6491, %v6493
  %v6495 = vadd.f32 %v6494, -0.16666654
  %v6496 = vmul.f32 %v6491, %v6495
  %v6497 = vadd.f32 %v6496, 1.0
  %v6498 = vmul.f32 %v6497, %v6482
  %vm6499 = vweird.f32 %v599
  %v6500 = vand.u32 %v6483, 3
  %vm6501 = vcmp.lt.s32.totalorder %v6500, 2
  %vm6502 = vcmp.eq.s32.totalorder %v6500, 0
  %v6503 = vxor.u32 %v6498, 2147483648
  %v6504 = vsel %vm6502, %v6490, %v6503
  %vm6505 = vcmp.eq.s32.totalorder %v6500, 2
  %v6506 = vxor.u32 %v6490, 2147483648
  %v6507 = vsel %vm6505, %v6506, %v6498
  %v6508 = vsel %vm6501, %v6504, %v6507
  %v6509 = vsel %vm6499, nan, %v6508
  %v6510 = vand.u32 2147483647, %v600
  %vm6511 = vcmp.le.f32.partialorder %v6510, 0.7853982
  %vm6512 = vcmp.lt.s32.totalorder %v600, 0
  %v6513 = vand.u32 %v600, 2139095040
  %v6514 = vshrl.u32 %v6513, 23
  %v6515 = vsub.s32 %v6514, 127
  %v6516 = vand.u32 2147483647, %v600
  %v6517 = vand.u32 %v6516, 8388607
  %v6518 = vor.u32 %v6517, 8388608
  %v6519 = vsub.s32 0, %v6518
  %v6520 = vadd.s32 %v6515, 1
  %vm6521 = vcmp.gt.s32.totalorder %v6520, 0
  %v6522 = vsel %vm6521, %v6520, 0
  %v6523 = vshrl.u32 %v6522, 5
  %v6524 = vand.u32 %v6522, 31
  %v6525 = vsub.s32 32, %v6524
  %v6526 = vshrl.u32 683565275, %v6525
  %v6527 = vshll.u32 683565275, %v6524
  %v6528 = vshrl.u32 2475754826, %v6525
  %v6529 = vor.u32 %v6527, %v6528
  %v6530 = vshll.u32 2475754826, %v6524
  %v6531 = vshrl.u32 2131351028, %v6525
  %v6532 = vor.u32 %v6530, %v6531
  %v6533 = vshll.u32 2131351028, %v6524
  %v6534 = vshrl.u32 2102212464, %v6525
  %v6535 = vor.u32 %v6533, %v6534
  %v6536 = vshll.u32 2102212464, %v6524
  %v6537 = vshrl.u32 920167782, %v6525
  %v6538 = vor.u32 %v6536, %v6537
  %v6539 = vshll.u32 920167782, %v6524
  %v6540 = vshrl.u32 1326507024, %v6525
  %v6541 = vor.u32 %v6539, %v6540
  %vm6542 = vcmp.lt.s32.totalorder %v6523, 1
  %vm6543 = vcmp.lt.s32.totalorder %v6523, 2
  %vm6544 = vcmp.lt.s32.totalorder %v6523, 3
  %vm6545 = vcmp.lt.s32.totalorder %v6523, 4
  %v6546 = vsel %vm6542, %v6526, %v6529
  %v6547 = vsel %vm6545, %v6535, 2102212464
  %v6548 = vsel %vm6544, %v6532, %v6547
  %v6549 = vsel %vm6543, %v6546, %v6548
  %v6550 = vsel %vm6542, %v6529, %v6532
  %v6551 = vsel %vm6545, %v6538, 920167782
  %v6552 = vsel %vm6544, %v6535, %v6551
  %v6553 = vsel %vm6543, %v6550, %v6552
  %v6554 = vsel %vm6542, %v6532, %v6535
  %v6555 = vsel %vm6545, %v6541, 1326507024
  %v6556 = vsel %vm6544, %v6538, %v6555
  %v6557 = vsel %vm6543, %v6554, %v6556
  %v6558 = vshll.u32 %v6518, 8
  %v6559 = vand.u32 %v6558, 65535
  %v6560 = vshrl.u32 %v6558, 16
  %v6561 = vand.u32 %v6557, 65535
  %v6562 = vshrl.u32 %v6557, 16
  %v6563 = vmul.u32 %v6559, %v6561
  %v6564 = vmul.u32 %v6559, %v6562
  %v6565 = vmul.u32 %v6560, %v6561
  %v6566 = vmul.u32 %v6560, %v6562
  %v6567 = vshll.u32 %v6564, 16
  %v6568 = vshrl.u32 %v6564, 16
  %v6569 = vshll.u32 %v6565, 16
  %v6570 = vshrl.u32 %v6565, 16
  %vm6571 = vc.u32 %v6563, %v6567
  %v6572 = vsel %vm6571, 1, 0
  %v6573 = vadd.s32 %v6563, %v6567
  %v6574 = vadd.s32 %v6566, %v6572
  %vm6575 = vc.u32 %v6573, %v6569
  %v6576 = vsel %vm6575, 1, 0
  %v6577 = vadd.s32 %v6573, %v6569
  %v6578 = vadd.s32 %v6574, %v6576
  %v6579 = vadd.s32 %v6578, %v6568
  %v6580 = vadd.s32 %v6579, %v6570
  %v6581 = vand.u32 %v6558, 65535
  %v6582 = vshrl.u32 %v6558, 16
  %v6583 = vand.u32 %v6553, 65535
  %v6584 = vshrl.u32 %v6553, 16
  %v6585 = vmul.u32 %v6581, %v6583
  %v6586 = vmul.u32 %v6581, %v6584
  %v6587 = vmul.u32 %v6582, %v6583
  %v6588 = vmul.u32 %v6582, %v6584
  %v6589 = vshll.u32 %v6586, 16
  %v6590 = vshrl.u32 %v6586, 16
  %v6591 = vshll.u32 %v6587, 16
  %v6592 = vshrl.u32 %v6587, 16
  %vm6593 = vc.u32 %v6585, %v6589
  %v6594 = vsel %vm6593, 1, 0
  %v6595 = vadd.s32 %v6585, %v6589
  %v6596 = vadd.s32 %v6588, %v6594
  %vm6597 = vc.u32 %v6595, %v6591
  %v6598 = vsel %vm6597, 1, 0
  %v6599 = vadd.s32 %v6595, %v6591
  %v6600 = vadd.s32 %v6596, %v6598
  %v6601 = vadd.s32 %v6600, %v6590
  %v6602 = vadd.s32 %v6601, %v6592
  %v6603 = vmul.u32 %v6558, %v6549
  %v6604 = vadd.s32 %v6580, %v6599
  %vm6605 = vc.u32 %v6580, %v6599
  %v6606 = vadd.s32 %v6602, 1
  %v6607 = vsel %vm6605, %v6606, %v6602
  %v6608 = vadd.s32 %v6603, %v6607
  %v6609 = vadd.s32 %v6608, 536870912
  %v6610 = vshrl.u32 %v6609, 30
  %v6611 = vshll.u32 %v6610, 30
  %v6612 = vsub.s32 %v6608, %v6611
  %vm6613 = vcmp.lt.s32.totalorder %v6612, 0
  %v6614 = vsub.s32 0, %v6612
  %v6615 = vsel %vm6613, %v6614, %v6612
  %v6616 = vclz %v6615
  %v6617 = vsub.s32 %v6616, 2
  %vm6618 = vcmp.gt.s32.totalorder 0, %v6617
  %v6619 = vsel %vm6618, 0, %v6617
  %v6620 = vsub.s32 32, %v6619
  %v6621 = vshll.u32 %v6612, %v6619
  %v6622 = vshrl.u32 %v6604, %v6620
  %v6623 = vor.u32 %v6621, %v6622
  %v6624 = vsub.s32 4294967266, %v6619
  %v6625 = vadd.s32 %v6624, 127
  %v6626 = vshll.u32 %v6625, 23
  %v6627 = vor.u32 4788187, %v6626
  %v6628 = vand.u32 2147483647, %v6627
  %v6630 = vcvt.s32.f32 %v6623
  %v6631 = vmul.f32 %v6630, %v6628
  %v6632 = vxor.u32 %v6631, 2147483648
  %v6633 = vsel %vm6512, %v6632, %v6631
  %v6634 = vsub.s32 4, %v6610
  %v6635 = vsel %vm6512, %v6634, %v6610
  %v6636 = vsel %vm6511, %v600, %v6633
  %v6637 = vsel %vm6511, 0, %v6635
  %v6638 = vmul.f32 %v6636, %v6636
  %v6639 = vmul.f32 %v6638, -0.001358992
  %v6640 = vadd.f32 %v6639, 0.041655596
  %v6641 = vmul.f32 %v6638, %v6640
  %v6642 = vadd.f32 %v6641, -0.4999988
  %v6643 = vmul.f32 %v6638, %v6642
  %v6644 = vadd.f32 1.0, %v6643
  %v6645 = vmul.f32 %v6636, %v6636
  %v6646 = vmul.f32 %v6645, -0.00019511016
  %v6647 = vadd.f32 %v6646, 0.008332121
  %v6648 = vmul.f32 %v6645, %v6647
  %v6649 = vadd.f32 %v6648, -0.16666654
  %v6650 = vmul.f32 %v6645, %v6649
  %v6651 = vadd.f32 %v6650, 1.0
  %v6652 = vmul.f32 %v6651, %v6636
  %vm6653 = vweird.f32 %v600
  %v6654 = vand.u32 %v6637, 3
  %vm6655 = vcmp.lt.s32.totalorder %v6654, 2
  %vm6656 = vcmp.eq.s32.totalorder %v6654, 0
  %v6657 = vxor.u32 %v6652, 2147483648
  %v6658 = vsel %vm6656, %v6644, %v6657
  %vm6659 = vcmp.eq.s32.totalorder %v6654, 2
  %v6660 = vxor.u32 %v6644, 2147483648
  %v6661 = vsel %vm6659, %v6660, %v6652
  %v6662 = vsel %vm6655, %v6658, %v6661
  %v6663 = vsel %vm6653, nan, %v6662
  %v6664 = vand.u32 2147483647, %v601
  %vm6665 = vcmp.le.f32.partialorder %v6664, 0.7853982
  %vm6666 = vcmp.lt.s32.totalorder %v601, 0
  %v6667 = vand.u32 %v601, 2139095040
  %v6668 = vshrl.u32 %v6667, 23
  %v6669 = vsub.s32 %v6668, 127
  %v6670 = vand.u32 2147483647, %v601
  %v6671 = vand.u32 %v6670, 8388607
  %v6672 = vor.u32 %v6671, 8388608
  %v6673 = vsub.s32 0, %v6672
  %v6674 = vadd.s32 %v6669, 1
  %vm6675 = vcmp.gt.s32.totalorder %v6674, 0
  %v6676 = vsel %vm6675, %v6674, 0
  %v6677 = vshrl.u32 %v6676, 5
  %v6678 = vand.u32 %v6676, 31
  %v6679 = vsub.s32 32, %v6678
  %v6680 = vshrl.u32 683565275, %v6679
  %v6681 = vshll.u32 683565275, %v6678
  %v6682 = vshrl.u32 2475754826, %v6679
  %v6683 = vor.u32 %v6681, %v6682
  %v6684 = vshll.u32 2475754826, %v6678
  %v6685 = vshrl.u32 2131351028, %v6679
  %v6686 = vor.u32 %v6684, %v6685
  %v6687 = vshll.u32 2131351028, %v6678
  %v6688 = vshrl.u32 2102212464, %v6679
  %v6689 = vor.u32 %v6687, %v6688
  %v6690 = vshll.u32 2102212464, %v6678
  %v6691 = vshrl.u32 920167782, %v6679
  %v6692 = vor.u32 %v6690, %v6691
  %v6693 = vshll.u32 920167782, %v6678
  %v6694 = vshrl.u32 1326507024, %v6679
  %v6695 = vor.u32 %v6693, %v6694
  %vm6696 = vcmp.lt.s32.totalorder %v6677, 1
  %vm6697 = vcmp.lt.s32.totalorder %v6677, 2
  %vm6698 = vcmp.lt.s32.totalorder %v6677, 3
  %vm6699 = vcmp.lt.s32.totalorder %v6677, 4
  %v6700 = vsel %vm6696, %v6680, %v6683
  %v6701 = vsel %vm6699, %v6689, 2102212464
  %v6702 = vsel %vm6698, %v6686, %v6701
  %v6703 = vsel %vm6697, %v6700, %v6702
  %v6704 = vsel %vm6696, %v6683, %v6686
  %v6705 = vsel %vm6699, %v6692, 920167782
  %v6706 = vsel %vm6698, %v6689, %v6705
  %v6707 = vsel %vm6697, %v6704, %v6706
  %v6708 = vsel %vm6696, %v6686, %v6689
  %v6709 = vsel %vm6699, %v6695, 1326507024
  %v6710 = vsel %vm6698, %v6692, %v6709
  %v6711 = vsel %vm6697, %v6708, %v6710
  %v6712 = vshll.u32 %v6672, 8
  %v6713 = vand.u32 %v6712, 65535
  %v6714 = vshrl.u32 %v6712, 16
  %v6715 = vand.u32 %v6711, 65535
  %v6716 = vshrl.u32 %v6711, 16
  %v6717 = vmul.u32 %v6713, %v6715
  %v6718 = vmul.u32 %v6713, %v6716
  %v6719 = vmul.u32 %v6714, %v6715
  %v6720 = vmul.u32 %v6714, %v6716
  %v6721 = vshll.u32 %v6718, 16
  %v6722 = vshrl.u32 %v6718, 16
  %v6723 = vshll.u32 %v6719, 16
  %v6724 = vshrl.u32 %v6719, 16
  %vm6725 = vc.u32 %v6717, %v6721
  %v6726 = vsel %vm6725, 1, 0
  %v6727 = vadd.s32 %v6717, %v6721
  %v6728 = vadd.s32 %v6720, %v6726
  %vm6729 = vc.u32 %v6727, %v6723
  %v6730 = vsel %vm6729, 1, 0
  %v6731 = vadd.s32 %v6727, %v6723
  %v6732 = vadd.s32 %v6728, %v6730
  %v6733 = vadd.s32 %v6732, %v6722
  %v6734 = vadd.s32 %v6733, %v6724
  %v6735 = vand.u32 %v6712, 65535
  %v6736 = vshrl.u32 %v6712, 16
  %v6737 = vand.u32 %v6707, 65535
  %v6738 = vshrl.u32 %v6707, 16
  %v6739 = vmul.u32 %v6735, %v6737
  %v6740 = vmul.u32 %v6735, %v6738
  %v6741 = vmul.u32 %v6736, %v6737
  %v6742 = vmul.u32 %v6736, %v6738
  %v6743 = vshll.u32 %v6740, 16
  %v6744 = vshrl.u32 %v6740, 16
  %v6745 = vshll.u32 %v6741, 16
  %v6746 = vshrl.u32 %v6741, 16
  %vm6747 = vc.u32 %v6739, %v6743
  %v6748 = vsel %vm6747, 1, 0
  %v6749 = vadd.s32 %v6739, %v6743
  %v6750 = vadd.s32 %v6742, %v6748
  %vm6751 = vc.u32 %v6749, %v6745
  %v6752 = vsel %vm6751, 1, 0
  %v6753 = vadd.s32 %v6749, %v6745
  %v6754 = vadd.s32 %v6750, %v6752
  %v6755 = vadd.s32 %v6754, %v6744
  %v6756 = vadd.s32 %v6755, %v6746
  %v6757 = vmul.u32 %v6712, %v6703
  %v6758 = vadd.s32 %v6734, %v6753
  %vm6759 = vc.u32 %v6734, %v6753
  %v6760 = vadd.s32 %v6756, 1
  %v6761 = vsel %vm6759, %v6760, %v6756
  %v6762 = vadd.s32 %v6757, %v6761
  %v6763 = vadd.s32 %v6762, 536870912
  %v6764 = vshrl.u32 %v6763, 30
  %v6765 = vshll.u32 %v6764, 30
  %v6766 = vsub.s32 %v6762, %v6765
  %vm6767 = vcmp.lt.s32.totalorder %v6766, 0
  %v6768 = vsub.s32 0, %v6766
  %v6769 = vsel %vm6767, %v6768, %v6766
  %v6770 = vclz %v6769
  %v6771 = vsub.s32 %v6770, 2
  %vm6772 = vcmp.gt.s32.totalorder 0, %v6771
  %v6773 = vsel %vm6772, 0, %v6771
  %v6774 = vsub.s32 32, %v6773
  %v6775 = vshll.u32 %v6766, %v6773
  %v6776 = vshrl.u32 %v6758, %v6774
  %v6777 = vor.u32 %v6775, %v6776
  %v6778 = vsub.s32 4294967266, %v6773
  %v6779 = vadd.s32 %v6778, 127
  %v6780 = vshll.u32 %v6779, 23
  %v6781 = vor.u32 4788187, %v6780
  %v6782 = vand.u32 2147483647, %v6781
  %v6784 = vcvt.s32.f32 %v6777
  %v6785 = vmul.f32 %v6784, %v6782
  %v6786 = vxor.u32 %v6785, 2147483648
  %v6787 = vsel %vm6666, %v6786, %v6785
  %v6788 = vsub.s32 4, %v6764
  %v6789 = vsel %vm6666, %v6788, %v6764
  %v6790 = vsel %vm6665, %v601, %v6787
  %v6791 = vsel %vm6665, 0, %v6789
  %v6792 = vmul.f32 %v6790, %v6790
  %v6793 = vmul.f32 %v6792, -0.001358992
  %v6794 = vadd.f32 %v6793, 0.041655596
  %v6795 = vmul.f32 %v6792, %v6794
  %v6796 = vadd.f32 %v6795, -0.4999988
  %v6797 = vmul.f32 %v6792, %v6796
  %v6798 = vadd.f32 1.0, %v6797
  %v6799 = vmul.f32 %v6790, %v6790
  %v6800 = vmul.f32 %v6799, -0.00019511016
  %v6801 = vadd.f32 %v6800, 0.008332121
  %v6802 = vmul.f32 %v6799, %v6801
  %v6803 = vadd.f32 %v6802, -0.16666654
  %v6804 = vmul.f32 %v6799, %v6803
  %v6805 = vadd.f32 %v6804, 1.0
  %v6806 = vmul.f32 %v6805, %v6790
  %vm6807 = vweird.f32 %v601
  %v6808 = vand.u32 %v6791, 3
  %vm6809 = vcmp.lt.s32.totalorder %v6808, 2
  %vm6810 = vcmp.eq.s32.totalorder %v6808, 0
  %v6811 = vxor.u32 %v6806, 2147483648
  %v6812 = vsel %vm6810, %v6798, %v6811
  %vm6813 = vcmp.eq.s32.totalorder %v6808, 2
  %v6814 = vxor.u32 %v6798, 2147483648
  %v6815 = vsel %vm6813, %v6814, %v6806
  %v6816 = vsel %vm6809, %v6812, %v6815
  %v6817 = vsel %vm6807, nan, %v6816
  %v6818 = vand.u32 2147483647, %v602
  %vm6819 = vcmp.le.f32.partialorder %v6818, 0.7853982
  %vm6820 = vcmp.lt.s32.totalorder %v602, 0
  %v6821 = vand.u32 %v602, 2139095040
  %v6822 = vshrl.u32 %v6821, 23
  %v6823 = vsub.s32 %v6822, 127
  %v6824 = vand.u32 2147483647, %v602
  %v6825 = vand.u32 %v6824, 8388607
  %v6826 = vor.u32 %v6825, 8388608
  %v6827 = vsub.s32 0, %v6826
  %v6828 = vadd.s32 %v6823, 1
  %vm6829 = vcmp.gt.s32.totalorder %v6828, 0
  %v6830 = vsel %vm6829, %v6828, 0
  %v6831 = vshrl.u32 %v6830, 5
  %v6832 = vand.u32 %v6830, 31
  %v6833 = vsub.s32 32, %v6832
  %v6834 = vshrl.u32 683565275, %v6833
  %v6835 = vshll.u32 683565275, %v6832
  %v6836 = vshrl.u32 2475754826, %v6833
  %v6837 = vor.u32 %v6835, %v6836
  %v6838 = vshll.u32 2475754826, %v6832
  %v6839 = vshrl.u32 2131351028, %v6833
  %v6840 = vor.u32 %v6838, %v6839
  %v6841 = vshll.u32 2131351028, %v6832
  %v6842 = vshrl.u32 2102212464, %v6833
  %v6843 = vor.u32 %v6841, %v6842
  %v6844 = vshll.u32 2102212464, %v6832
  %v6845 = vshrl.u32 920167782, %v6833
  %v6846 = vor.u32 %v6844, %v6845
  %v6847 = vshll.u32 920167782, %v6832
  %v6848 = vshrl.u32 1326507024, %v6833
  %v6849 = vor.u32 %v6847, %v6848
  %vm6850 = vcmp.lt.s32.totalorder %v6831, 1
  %vm6851 = vcmp.lt.s32.totalorder %v6831, 2
  %vm6852 = vcmp.lt.s32.totalorder %v6831, 3
  %vm6853 = vcmp.lt.s32.totalorder %v6831, 4
  %v6854 = vsel %vm6850, %v6834, %v6837
  %v6855 = vsel %vm6853, %v6843, 2102212464
  %v6856 = vsel %vm6852, %v6840, %v6855
  %v6857 = vsel %vm6851, %v6854, %v6856
  %v6858 = vsel %vm6850, %v6837, %v6840
  %v6859 = vsel %vm6853, %v6846, 920167782
  %v6860 = vsel %vm6852, %v6843, %v6859
  %v6861 = vsel %vm6851, %v6858, %v6860
  %v6862 = vsel %vm6850, %v6840, %v6843
  %v6863 = vsel %vm6853, %v6849, 1326507024
  %v6864 = vsel %vm6852, %v6846, %v6863
  %v6865 = vsel %vm6851, %v6862, %v6864
  %v6866 = vshll.u32 %v6826, 8
  %v6867 = vand.u32 %v6866, 65535
  %v6868 = vshrl.u32 %v6866, 16
  %v6869 = vand.u32 %v6865, 65535
  %v6870 = vshrl.u32 %v6865, 16
  %v6871 = vmul.u32 %v6867, %v6869
  %v6872 = vmul.u32 %v6867, %v6870
  %v6873 = vmul.u32 %v6868, %v6869
  %v6874 = vmul.u32 %v6868, %v6870
  %v6875 = vshll.u32 %v6872, 16
  %v6876 = vshrl.u32 %v6872, 16
  %v6877 = vshll.u32 %v6873, 16
  %v6878 = vshrl.u32 %v6873, 16
  %vm6879 = vc.u32 %v6871, %v6875
  %v6880 = vsel %vm6879, 1, 0
  %v6881 = vadd.s32 %v6871, %v6875
  %v6882 = vadd.s32 %v6874, %v6880
  %vm6883 = vc.u32 %v6881, %v6877
  %v6884 = vsel %vm6883, 1, 0
  %v6885 = vadd.s32 %v6881, %v6877
  %v6886 = vadd.s32 %v6882, %v6884
  %v6887 = vadd.s32 %v6886, %v6876
  %v6888 = vadd.s32 %v6887, %v6878
  %v6889 = vand.u32 %v6866, 65535
  %v6890 = vshrl.u32 %v6866, 16
  %v6891 = vand.u32 %v6861, 65535
  %v6892 = vshrl.u32 %v6861, 16
  %v6893 = vmul.u32 %v6889, %v6891
  %v6894 = vmul.u32 %v6889, %v6892
  %v6895 = vmul.u32 %v6890, %v6891
  %v6896 = vmul.u32 %v6890, %v6892
  %v6897 = vshll.u32 %v6894, 16
  %v6898 = vshrl.u32 %v6894, 16
  %v6899 = vshll.u32 %v6895, 16
  %v6900 = vshrl.u32 %v6895, 16
  %vm6901 = vc.u32 %v6893, %v6897
  %v6902 = vsel %vm6901, 1, 0
  %v6903 = vadd.s32 %v6893, %v6897
  %v6904 = vadd.s32 %v6896, %v6902
  %vm6905 = vc.u32 %v6903, %v6899
  %v6906 = vsel %vm6905, 1, 0
  %v6907 = vadd.s32 %v6903, %v6899
  %v6908 = vadd.s32 %v6904, %v6906
  %v6909 = vadd.s32 %v6908, %v6898
  %v6910 = vadd.s32 %v6909, %v6900
  %v6911 = vmul.u32 %v6866, %v6857
  %v6912 = vadd.s32 %v6888, %v6907
  %vm6913 = vc.u32 %v6888, %v6907
  %v6914 = vadd.s32 %v6910, 1
  %v6915 = vsel %vm6913, %v6914, %v6910
  %v6916 = vadd.s32 %v6911, %v6915
  %v6917 = vadd.s32 %v6916, 536870912
  %v6918 = vshrl.u32 %v6917, 30
  %v6919 = vshll.u32 %v6918, 30
  %v6920 = vsub.s32 %v6916, %v6919
  %vm6921 = vcmp.lt.s32.totalorder %v6920, 0
  %v6922 = vsub.s32 0, %v6920
  %v6923 = vsel %vm6921, %v6922, %v6920
  %v6924 = vclz %v6923
  %v6925 = vsub.s32 %v6924, 2
  %vm6926 = vcmp.gt.s32.totalorder 0, %v6925
  %v6927 = vsel %vm6926, 0, %v6925
  %v6928 = vsub.s32 32, %v6927
  %v6929 = vshll.u32 %v6920, %v6927
  %v6930 = vshrl.u32 %v6912, %v6928
  %v6931 = vor.u32 %v6929, %v6930
  %v6932 = vsub.s32 4294967266, %v6927
  %v6933 = vadd.s32 %v6932, 127
  %v6934 = vshll.u32 %v6933, 23
  %v6935 = vor.u32 4788187, %v6934
  %v6936 = vand.u32 2147483647, %v6935
  %v6938 = vcvt.s32.f32 %v6931
  %v6939 = vmul.f32 %v6938, %v6936
  %v6940 = vxor.u32 %v6939, 2147483648
  %v6941 = vsel %vm6820, %v6940, %v6939
  %v6942 = vsub.s32 4, %v6918
  %v6943 = vsel %vm6820, %v6942, %v6918
  %v6944 = vsel %vm6819, %v602, %v6941
  %v6945 = vsel %vm6819, 0, %v6943
  %v6946 = vmul.f32 %v6944, %v6944
  %v6947 = vmul.f32 %v6946, -0.001358992
  %v6948 = vadd.f32 %v6947, 0.041655596
  %v6949 = vmul.f32 %v6946, %v6948
  %v6950 = vadd.f32 %v6949, -0.4999988
  %v6951 = vmul.f32 %v6946, %v6950
  %v6952 = vadd.f32 1.0, %v6951
  %v6953 = vmul.f32 %v6944, %v6944
  %v6954 = vmul.f32 %v6953, -0.00019511016
  %v6955 = vadd.f32 %v6954, 0.008332121
  %v6956 = vmul.f32 %v6953, %v6955
  %v6957 = vadd.f32 %v6956, -0.16666654
  %v6958 = vmul.f32 %v6953, %v6957
  %v6959 = vadd.f32 %v6958, 1.0
  %v6960 = vmul.f32 %v6959, %v6944
  %vm6961 = vweird.f32 %v602
  %v6962 = vand.u32 %v6945, 3
  %vm6963 = vcmp.lt.s32.totalorder %v6962, 2
  %vm6964 = vcmp.eq.s32.totalorder %v6962, 0
  %v6965 = vxor.u32 %v6960, 2147483648
  %v6966 = vsel %vm6964, %v6952, %v6965
  %vm6967 = vcmp.eq.s32.totalorder %v6962, 2
  %v6968 = vxor.u32 %v6952, 2147483648
  %v6969 = vsel %vm6967, %v6968, %v6960
  %v6970 = vsel %vm6963, %v6966, %v6969
  %v6971 = vsel %vm6961, nan, %v6970
  %v6972 = vand.u32 2147483647, %v603
  %vm6973 = vcmp.le.f32.partialorder %v6972, 0.7853982
  %vm6974 = vcmp.lt.s32.totalorder %v603, 0
  %v6975 = vand.u32 %v603, 2139095040
  %v6976 = vshrl.u32 %v6975, 23
  %v6977 = vsub.s32 %v6976, 127
  %v6978 = vand.u32 2147483647, %v603
  %v6979 = vand.u32 %v6978, 8388607
  %v6980 = vor.u32 %v6979, 8388608
  %v6981 = vsub.s32 0, %v6980
  %v6982 = vadd.s32 %v6977, 1
  %vm6983 = vcmp.gt.s32.totalorder %v6982, 0
  %v6984 = vsel %vm6983, %v6982, 0
  %v6985 = vshrl.u32 %v6984, 5
  %v6986 = vand.u32 %v6984, 31
  %v6987 = vsub.s32 32, %v6986
  %v6988 = vshrl.u32 683565275, %v6987
  %v6989 = vshll.u32 683565275, %v6986
  %v6990 = vshrl.u32 2475754826, %v6987
  %v6991 = vor.u32 %v6989, %v6990
  %v6992 = vshll.u32 2475754826, %v6986
  %v6993 = vshrl.u32 2131351028, %v6987
  %v6994 = vor.u32 %v6992, %v6993
  %v6995 = vshll.u32 2131351028, %v6986
  %v6996 = vshrl.u32 2102212464, %v6987
  %v6997 = vor.u32 %v6995, %v6996
  %v6998 = vshll.u32 2102212464, %v6986
  %v6999 = vshrl.u32 920167782, %v6987
  %v7000 = vor.u32 %v6998, %v6999
  %v7001 = vshll.u32 920167782, %v6986
  %v7002 = vshrl.u32 1326507024, %v6987
  %v7003 = vor.u32 %v7001, %v7002
  %vm7004 = vcmp.lt.s32.totalorder %v6985, 1
  %vm7005 = vcmp.lt.s32.totalorder %v6985, 2
  %vm7006 = vcmp.lt.s32.totalorder %v6985, 3
  %vm7007 = vcmp.lt.s32.totalorder %v6985, 4
  %v7008 = vsel %vm7004, %v6988, %v6991
  %v7009 = vsel %vm7007, %v6997, 2102212464
  %v7010 = vsel %vm7006, %v6994, %v7009
  %v7011 = vsel %vm7005, %v7008, %v7010
  %v7012 = vsel %vm7004, %v6991, %v6994
  %v7013 = vsel %vm7007, %v7000, 920167782
  %v7014 = vsel %vm7006, %v6997, %v7013
  %v7015 = vsel %vm7005, %v7012, %v7014
  %v7016 = vsel %vm7004, %v6994, %v6997
  %v7017 = vsel %vm7007, %v7003, 1326507024
  %v7018 = vsel %vm7006, %v7000, %v7017
  %v7019 = vsel %vm7005, %v7016, %v7018
  %v7020 = vshll.u32 %v6980, 8
  %v7021 = vand.u32 %v7020, 65535
  %v7022 = vshrl.u32 %v7020, 16
  %v7023 = vand.u32 %v7019, 65535
  %v7024 = vshrl.u32 %v7019, 16
  %v7025 = vmul.u32 %v7021, %v7023
  %v7026 = vmul.u32 %v7021, %v7024
  %v7027 = vmul.u32 %v7022, %v7023
  %v7028 = vmul.u32 %v7022, %v7024
  %v7029 = vshll.u32 %v7026, 16
  %v7030 = vshrl.u32 %v7026, 16
  %v7031 = vshll.u32 %v7027, 16
  %v7032 = vshrl.u32 %v7027, 16
  %vm7033 = vc.u32 %v7025, %v7029
  %v7034 = vsel %vm7033, 1, 0
  %v7035 = vadd.s32 %v7025, %v7029
  %v7036 = vadd.s32 %v7028, %v7034
  %vm7037 = vc.u32 %v7035, %v7031
  %v7038 = vsel %vm7037, 1, 0
  %v7039 = vadd.s32 %v7035, %v7031
  %v7040 = vadd.s32 %v7036, %v7038
  %v7041 = vadd.s32 %v7040, %v7030
  %v7042 = vadd.s32 %v7041, %v7032
  %v7043 = vand.u32 %v7020, 65535
  %v7044 = vshrl.u32 %v7020, 16
  %v7045 = vand.u32 %v7015, 65535
  %v7046 = vshrl.u32 %v7015, 16
  %v7047 = vmul.u32 %v7043, %v7045
  %v7048 = vmul.u32 %v7043, %v7046
  %v7049 = vmul.u32 %v7044, %v7045
  %v7050 = vmul.u32 %v7044, %v7046
  %v7051 = vshll.u32 %v7048, 16
  %v7052 = vshrl.u32 %v7048, 16
  %v7053 = vshll.u32 %v7049, 16
  %v7054 = vshrl.u32 %v7049, 16
  %vm7055 = vc.u32 %v7047, %v7051
  %v7056 = vsel %vm7055, 1, 0
  %v7057 = vadd.s32 %v7047, %v7051
  %v7058 = vadd.s32 %v7050, %v7056
  %vm7059 = vc.u32 %v7057, %v7053
  %v7060 = vsel %vm7059, 1, 0
  %v7061 = vadd.s32 %v7057, %v7053
  %v7062 = vadd.s32 %v7058, %v7060
  %v7063 = vadd.s32 %v7062, %v7052
  %v7064 = vadd.s32 %v7063, %v7054
  %v7065 = vmul.u32 %v7020, %v7011
  %v7066 = vadd.s32 %v7042, %v7061
  %vm7067 = vc.u32 %v7042, %v7061
  %v7068 = vadd.s32 %v7064, 1
  %v7069 = vsel %vm7067, %v7068, %v7064
  %v7070 = vadd.s32 %v7065, %v7069
  %v7071 = vadd.s32 %v7070, 536870912
  %v7072 = vshrl.u32 %v7071, 30
  %v7073 = vshll.u32 %v7072, 30
  %v7074 = vsub.s32 %v7070, %v7073
  %vm7075 = vcmp.lt.s32.totalorder %v7074, 0
  %v7076 = vsub.s32 0, %v7074
  %v7077 = vsel %vm7075, %v7076, %v7074
  %v7078 = vclz %v7077
  %v7079 = vsub.s32 %v7078, 2
  %vm7080 = vcmp.gt.s32.totalorder 0, %v7079
  %v7081 = vsel %vm7080, 0, %v7079
  %v7082 = vsub.s32 32, %v7081
  %v7083 = vshll.u32 %v7074, %v7081
  %v7084 = vshrl.u32 %v7066, %v7082
  %v7085 = vor.u32 %v7083, %v7084
  %v7086 = vsub.s32 4294967266, %v7081
  %v7087 = vadd.s32 %v7086, 127
  %v7088 = vshll.u32 %v7087, 23
  %v7089 = vor.u32 4788187, %v7088
  %v7090 = vand.u32 2147483647, %v7089
  %v7092 = vcvt.s32.f32 %v7085
  %v7093 = vmul.f32 %v7092, %v7090
  %v7094 = vxor.u32 %v7093, 2147483648
  %v7095 = vsel %vm6974, %v7094, %v7093
  %v7096 = vsub.s32 4, %v7072
  %v7097 = vsel %vm6974, %v7096, %v7072
  %v7098 = vsel %vm6973, %v603, %v7095
  %v7099 = vsel %vm6973, 0, %v7097
  %v7100 = vmul.f32 %v7098, %v7098
  %v7101 = vmul.f32 %v7100, -0.001358992
  %v7102 = vadd.f32 %v7101, 0.041655596
  %v7103 = vmul.f32 %v7100, %v7102
  %v7104 = vadd.f32 %v7103, -0.4999988
  %v7105 = vmul.f32 %v7100, %v7104
  %v7106 = vadd.f32 1.0, %v7105
  %v7107 = vmul.f32 %v7098, %v7098
  %v7108 = vmul.f32 %v7107, -0.00019511016
  %v7109 = vadd.f32 %v7108, 0.008332121
  %v7110 = vmul.f32 %v7107, %v7109
  %v7111 = vadd.f32 %v7110, -0.16666654
  %v7112 = vmul.f32 %v7107, %v7111
  %v7113 = vadd.f32 %v7112, 1.0
  %v7114 = vmul.f32 %v7113, %v7098
  %vm7115 = vweird.f32 %v603
  %v7116 = vand.u32 %v7099, 3
  %vm7117 = vcmp.lt.s32.totalorder %v7116, 2
  %vm7118 = vcmp.eq.s32.totalorder %v7116, 0
  %v7119 = vxor.u32 %v7114, 2147483648
  %v7120 = vsel %vm7118, %v7106, %v7119
  %vm7121 = vcmp.eq.s32.totalorder %v7116, 2
  %v7122 = vxor.u32 %v7106, 2147483648
  %v7123 = vsel %vm7121, %v7122, %v7114
  %v7124 = vsel %vm7117, %v7120, %v7123
  %v7125 = vsel %vm7115, nan, %v7124
  %v7126 = vand.u32 2147483647, %v604
  %vm7127 = vcmp.le.f32.partialorder %v7126, 0.7853982
  %vm7128 = vcmp.lt.s32.totalorder %v604, 0
  %v7129 = vand.u32 %v604, 2139095040
  %v7130 = vshrl.u32 %v7129, 23
  %v7131 = vsub.s32 %v7130, 127
  %v7132 = vand.u32 2147483647, %v604
  %v7133 = vand.u32 %v7132, 8388607
  %v7134 = vor.u32 %v7133, 8388608
  %v7135 = vsub.s32 0, %v7134
  %v7136 = vadd.s32 %v7131, 1
  %vm7137 = vcmp.gt.s32.totalorder %v7136, 0
  %v7138 = vsel %vm7137, %v7136, 0
  %v7139 = vshrl.u32 %v7138, 5
  %v7140 = vand.u32 %v7138, 31
  %v7141 = vsub.s32 32, %v7140
  %v7142 = vshrl.u32 683565275, %v7141
  %v7143 = vshll.u32 683565275, %v7140
  %v7144 = vshrl.u32 2475754826, %v7141
  %v7145 = vor.u32 %v7143, %v7144
  %v7146 = vshll.u32 2475754826, %v7140
  %v7147 = vshrl.u32 2131351028, %v7141
  %v7148 = vor.u32 %v7146, %v7147
  %v7149 = vshll.u32 2131351028, %v7140
  %v7150 = vshrl.u32 2102212464, %v7141
  %v7151 = vor.u32 %v7149, %v7150
  %v7152 = vshll.u32 2102212464, %v7140
  %v7153 = vshrl.u32 920167782, %v7141
  %v7154 = vor.u32 %v7152, %v7153
  %v7155 = vshll.u32 920167782, %v7140
  %v7156 = vshrl.u32 1326507024, %v7141
  %v7157 = vor.u32 %v7155, %v7156
  %vm7158 = vcmp.lt.s32.totalorder %v7139, 1
  %vm7159 = vcmp.lt.s32.totalorder %v7139, 2
  %vm7160 = vcmp.lt.s32.totalorder %v7139, 3
  %vm7161 = vcmp.lt.s32.totalorder %v7139, 4
  %v7162 = vsel %vm7158, %v7142, %v7145
  %v7163 = vsel %vm7161, %v7151, 2102212464
  %v7164 = vsel %vm7160, %v7148, %v7163
  %v7165 = vsel %vm7159, %v7162, %v7164
  %v7166 = vsel %vm7158, %v7145, %v7148
  %v7167 = vsel %vm7161, %v7154, 920167782
  %v7168 = vsel %vm7160, %v7151, %v7167
  %v7169 = vsel %vm7159, %v7166, %v7168
  %v7170 = vsel %vm7158, %v7148, %v7151
  %v7171 = vsel %vm7161, %v7157, 1326507024
  %v7172 = vsel %vm7160, %v7154, %v7171
  %v7173 = vsel %vm7159, %v7170, %v7172
  %v7174 = vshll.u32 %v7134, 8
  %v7175 = vand.u32 %v7174, 65535
  %v7176 = vshrl.u32 %v7174, 16
  %v7177 = vand.u32 %v7173, 65535
  %v7178 = vshrl.u32 %v7173, 16
  %v7179 = vmul.u32 %v7175, %v7177
  %v7180 = vmul.u32 %v7175, %v7178
  %v7181 = vmul.u32 %v7176, %v7177
  %v7182 = vmul.u32 %v7176, %v7178
  %v7183 = vshll.u32 %v7180, 16
  %v7184 = vshrl.u32 %v7180, 16
  %v7185 = vshll.u32 %v7181, 16
  %v7186 = vshrl.u32 %v7181, 16
  %vm7187 = vc.u32 %v7179, %v7183
  %v7188 = vsel %vm7187, 1, 0
  %v7189 = vadd.s32 %v7179, %v7183
  %v7190 = vadd.s32 %v7182, %v7188
  %vm7191 = vc.u32 %v7189, %v7185
  %v7192 = vsel %vm7191, 1, 0
  %v7193 = vadd.s32 %v7189, %v7185
  %v7194 = vadd.s32 %v7190, %v7192
  %v7195 = vadd.s32 %v7194, %v7184
  %v7196 = vadd.s32 %v7195, %v7186
  %v7197 = vand.u32 %v7174, 65535
  %v7198 = vshrl.u32 %v7174, 16
  %v7199 = vand.u32 %v7169, 65535
  %v7200 = vshrl.u32 %v7169, 16
  %v7201 = vmul.u32 %v7197, %v7199
  %v7202 = vmul.u32 %v7197, %v7200
  %v7203 = vmul.u32 %v7198, %v7199
  %v7204 = vmul.u32 %v7198, %v7200
  %v7205 = vshll.u32 %v7202, 16
  %v7206 = vshrl.u32 %v7202, 16
  %v7207 = vshll.u32 %v7203, 16
  %v7208 = vshrl.u32 %v7203, 16
  %vm7209 = vc.u32 %v7201, %v7205
  %v7210 = vsel %vm7209, 1, 0
  %v7211 = vadd.s32 %v7201, %v7205
  %v7212 = vadd.s32 %v7204, %v7210
  %vm7213 = vc.u32 %v7211, %v7207
  %v7214 = vsel %vm7213, 1, 0
  %v7215 = vadd.s32 %v7211, %v7207
  %v7216 = vadd.s32 %v7212, %v7214
  %v7217 = vadd.s32 %v7216, %v7206
  %v7218 = vadd.s32 %v7217, %v7208
  %v7219 = vmul.u32 %v7174, %v7165
  %v7220 = vadd.s32 %v7196, %v7215
  %vm7221 = vc.u32 %v7196, %v7215
  %v7222 = vadd.s32 %v7218, 1
  %v7223 = vsel %vm7221, %v7222, %v7218
  %v7224 = vadd.s32 %v7219, %v7223
  %v7225 = vadd.s32 %v7224, 536870912
  %v7226 = vshrl.u32 %v7225, 30
  %v7227 = vshll.u32 %v7226, 30
  %v7228 = vsub.s32 %v7224, %v7227
  %vm7229 = vcmp.lt.s32.totalorder %v7228, 0
  %v7230 = vsub.s32 0, %v7228
  %v7231 = vsel %vm7229, %v7230, %v7228
  %v7232 = vclz %v7231
  %v7233 = vsub.s32 %v7232, 2
  %vm7234 = vcmp.gt.s32.totalorder 0, %v7233
  %v7235 = vsel %vm7234, 0, %v7233
  %v7236 = vsub.s32 32, %v7235
  %v7237 = vshll.u32 %v7228, %v7235
  %v7238 = vshrl.u32 %v7220, %v7236
  %v7239 = vor.u32 %v7237, %v7238
  %v7240 = vsub.s32 4294967266, %v7235
  %v7241 = vadd.s32 %v7240, 127
  %v7242 = vshll.u32 %v7241, 23
  %v7243 = vor.u32 4788187, %v7242
  %v7244 = vand.u32 2147483647, %v7243
  %v7246 = vcvt.s32.f32 %v7239
  %v7247 = vmul.f32 %v7246, %v7244
  %v7248 = vxor.u32 %v7247, 2147483648
  %v7249 = vsel %vm7128, %v7248, %v7247
  %v7250 = vsub.s32 4, %v7226
  %v7251 = vsel %vm7128, %v7250, %v7226
  %v7252 = vsel %vm7127, %v604, %v7249
  %v7253 = vsel %vm7127, 0, %v7251
  %v7254 = vmul.f32 %v7252, %v7252
  %v7255 = vmul.f32 %v7254, -0.001358992
  %v7256 = vadd.f32 %v7255, 0.041655596
  %v7257 = vmul.f32 %v7254, %v7256
  %v7258 = vadd.f32 %v7257, -0.4999988
  %v7259 = vmul.f32 %v7254, %v7258
  %v7260 = vadd.f32 1.0, %v7259
  %v7261 = vmul.f32 %v7252, %v7252
  %v7262 = vmul.f32 %v7261, -0.00019511016
  %v7263 = vadd.f32 %v7262, 0.008332121
  %v7264 = vmul.f32 %v7261, %v7263
  %v7265 = vadd.f32 %v7264, -0.16666654
  %v7266 = vmul.f32 %v7261, %v7265
  %v7267 = vadd.f32 %v7266, 1.0
  %v7268 = vmul.f32 %v7267, %v7252
  %vm7269 = vweird.f32 %v604
  %v7270 = vand.u32 %v7253, 3
  %vm7271 = vcmp.lt.s32.totalorder %v7270, 2
  %vm7272 = vcmp.eq.s32.totalorder %v7270, 0
  %v7273 = vxor.u32 %v7268, 2147483648
  %v7274 = vsel %vm7272, %v7260, %v7273
  %vm7275 = vcmp.eq.s32.totalorder %v7270, 2
  %v7276 = vxor.u32 %v7260, 2147483648
  %v7277 = vsel %vm7275, %v7276, %v7268
  %v7278 = vsel %vm7271, %v7274, %v7277
  %v7279 = vsel %vm7269, nan, %v7278
  %v7280 = vand.u32 2147483647, %v605
  %vm7281 = vcmp.le.f32.partialorder %v7280, 0.7853982
  %vm7282 = vcmp.lt.s32.totalorder %v605, 0
  %v7283 = vand.u32 %v605, 2139095040
  %v7284 = vshrl.u32 %v7283, 23
  %v7285 = vsub.s32 %v7284, 127
  %v7286 = vand.u32 2147483647, %v605
  %v7287 = vand.u32 %v7286, 8388607
  %v7288 = vor.u32 %v7287, 8388608
  %v7289 = vsub.s32 0, %v7288
  %v7290 = vadd.s32 %v7285, 1
  %vm7291 = vcmp.gt.s32.totalorder %v7290, 0
  %v7292 = vsel %vm7291, %v7290, 0
  %v7293 = vshrl.u32 %v7292, 5
  %v7294 = vand.u32 %v7292, 31
  %v7295 = vsub.s32 32, %v7294
  %v7296 = vshrl.u32 683565275, %v7295
  %v7297 = vshll.u32 683565275, %v7294
  %v7298 = vshrl.u32 2475754826, %v7295
  %v7299 = vor.u32 %v7297, %v7298
  %v7300 = vshll.u32 2475754826, %v7294
  %v7301 = vshrl.u32 2131351028, %v7295
  %v7302 = vor.u32 %v7300, %v7301
  %v7303 = vshll.u32 2131351028, %v7294
  %v7304 = vshrl.u32 2102212464, %v7295
  %v7305 = vor.u32 %v7303, %v7304
  %v7306 = vshll.u32 2102212464, %v7294
  %v7307 = vshrl.u32 920167782, %v7295
  %v7308 = vor.u32 %v7306, %v7307
  %v7309 = vshll.u32 920167782, %v7294
  %v7310 = vshrl.u32 1326507024, %v7295
  %v7311 = vor.u32 %v7309, %v7310
  %vm7312 = vcmp.lt.s32.totalorder %v7293, 1
  %vm7313 = vcmp.lt.s32.totalorder %v7293, 2
  %vm7314 = vcmp.lt.s32.totalorder %v7293, 3
  %vm7315 = vcmp.lt.s32.totalorder %v7293, 4
  %v7316 = vsel %vm7312, %v7296, %v7299
  %v7317 = vsel %vm7315, %v7305, 2102212464
  %v7318 = vsel %vm7314, %v7302, %v7317
  %v7319 = vsel %vm7313, %v7316, %v7318
  %v7320 = vsel %vm7312, %v7299, %v7302
  %v7321 = vsel %vm7315, %v7308, 920167782
  %v7322 = vsel %vm7314, %v7305, %v7321
  %v7323 = vsel %vm7313, %v7320, %v7322
  %v7324 = vsel %vm7312, %v7302, %v7305
  %v7325 = vsel %vm7315, %v7311, 1326507024
  %v7326 = vsel %vm7314, %v7308, %v7325
  %v7327 = vsel %vm7313, %v7324, %v7326
  %v7328 = vshll.u32 %v7288, 8
  %v7329 = vand.u32 %v7328, 65535
  %v7330 = vshrl.u32 %v7328, 16
  %v7331 = vand.u32 %v7327, 65535
  %v7332 = vshrl.u32 %v7327, 16
  %v7333 = vmul.u32 %v7329, %v7331
  %v7334 = vmul.u32 %v7329, %v7332
  %v7335 = vmul.u32 %v7330, %v7331
  %v7336 = vmul.u32 %v7330, %v7332
  %v7337 = vshll.u32 %v7334, 16
  %v7338 = vshrl.u32 %v7334, 16
  %v7339 = vshll.u32 %v7335, 16
  %v7340 = vshrl.u32 %v7335, 16
  %vm7341 = vc.u32 %v7333, %v7337
  %v7342 = vsel %vm7341, 1, 0
  %v7343 = vadd.s32 %v7333, %v7337
  %v7344 = vadd.s32 %v7336, %v7342
  %vm7345 = vc.u32 %v7343, %v7339
  %v7346 = vsel %vm7345, 1, 0
  %v7347 = vadd.s32 %v7343, %v7339
  %v7348 = vadd.s32 %v7344, %v7346
  %v7349 = vadd.s32 %v7348, %v7338
  %v7350 = vadd.s32 %v7349, %v7340
  %v7351 = vand.u32 %v7328, 65535
  %v7352 = vshrl.u32 %v7328, 16
  %v7353 = vand.u32 %v7323, 65535
  %v7354 = vshrl.u32 %v7323, 16
  %v7355 = vmul.u32 %v7351, %v7353
  %v7356 = vmul.u32 %v7351, %v7354
  %v7357 = vmul.u32 %v7352, %v7353
  %v7358 = vmul.u32 %v7352, %v7354
  %v7359 = vshll.u32 %v7356, 16
  %v7360 = vshrl.u32 %v7356, 16
  %v7361 = vshll.u32 %v7357, 16
  %v7362 = vshrl.u32 %v7357, 16
  %vm7363 = vc.u32 %v7355, %v7359
  %v7364 = vsel %vm7363, 1, 0
  %v7365 = vadd.s32 %v7355, %v7359
  %v7366 = vadd.s32 %v7358, %v7364
  %vm7367 = vc.u32 %v7365, %v7361
  %v7368 = vsel %vm7367, 1, 0
  %v7369 = vadd.s32 %v7365, %v7361
  %v7370 = vadd.s32 %v7366, %v7368
  %v7371 = vadd.s32 %v7370, %v7360
  %v7372 = vadd.s32 %v7371, %v7362
  %v7373 = vmul.u32 %v7328, %v7319
  %v7374 = vadd.s32 %v7350, %v7369
  %vm7375 = vc.u32 %v7350, %v7369
  %v7376 = vadd.s32 %v7372, 1
  %v7377 = vsel %vm7375, %v7376, %v7372
  %v7378 = vadd.s32 %v7373, %v7377
  %v7379 = vadd.s32 %v7378, 536870912
  %v7380 = vshrl.u32 %v7379, 30
  %v7381 = vshll.u32 %v7380, 30
  %v7382 = vsub.s32 %v7378, %v7381
  %vm7383 = vcmp.lt.s32.totalorder %v7382, 0
  %v7384 = vsub.s32 0, %v7382
  %v7385 = vsel %vm7383, %v7384, %v7382
  %v7386 = vclz %v7385
  %v7387 = vsub.s32 %v7386, 2
  %vm7388 = vcmp.gt.s32.totalorder 0, %v7387
  %v7389 = vsel %vm7388, 0, %v7387
  %v7390 = vsub.s32 32, %v7389
  %v7391 = vshll.u32 %v7382, %v7389
  %v7392 = vshrl.u32 %v7374, %v7390
  %v7393 = vor.u32 %v7391, %v7392
  %v7394 = vsub.s32 4294967266, %v7389
  %v7395 = vadd.s32 %v7394, 127
  %v7396 = vshll.u32 %v7395, 23
  %v7397 = vor.u32 4788187, %v7396
  %v7398 = vand.u32 2147483647, %v7397
  %v7400 = vcvt.s32.f32 %v7393
  %v7401 = vmul.f32 %v7400, %v7398
  %v7402 = vxor.u32 %v7401, 2147483648
  %v7403 = vsel %vm7282, %v7402, %v7401
  %v7404 = vsub.s32 4, %v7380
  %v7405 = vsel %vm7282, %v7404, %v7380
  %v7406 = vsel %vm7281, %v605, %v7403
  %v7407 = vsel %vm7281, 0, %v7405
  %v7408 = vmul.f32 %v7406, %v7406
  %v7409 = vmul.f32 %v7408, -0.001358992
  %v7410 = vadd.f32 %v7409, 0.041655596
  %v7411 = vmul.f32 %v7408, %v7410
  %v7412 = vadd.f32 %v7411, -0.4999988
  %v7413 = vmul.f32 %v7408, %v7412
  %v7414 = vadd.f32 1.0, %v7413
  %v7415 = vmul.f32 %v7406, %v7406
  %v7416 = vmul.f32 %v7415, -0.00019511016
  %v7417 = vadd.f32 %v7416, 0.008332121
  %v7418 = vmul.f32 %v7415, %v7417
  %v7419 = vadd.f32 %v7418, -0.16666654
  %v7420 = vmul.f32 %v7415, %v7419
  %v7421 = vadd.f32 %v7420, 1.0
  %v7422 = vmul.f32 %v7421, %v7406
  %vm7423 = vweird.f32 %v605
  %v7424 = vand.u32 %v7407, 3
  %vm7425 = vcmp.lt.s32.totalorder %v7424, 2
  %vm7426 = vcmp.eq.s32.totalorder %v7424, 0
  %v7427 = vxor.u32 %v7422, 2147483648
  %v7428 = vsel %vm7426, %v7414, %v7427
  %vm7429 = vcmp.eq.s32.totalorder %v7424, 2
  %v7430 = vxor.u32 %v7414, 2147483648
  %v7431 = vsel %vm7429, %v7430, %v7422
  %v7432 = vsel %vm7425, %v7428, %v7431
  %v7433 = vsel %vm7423, nan, %v7432
  %v7434 = vand.u32 2147483647, %v606
  %vm7435 = vcmp.le.f32.partialorder %v7434, 0.7853982
  %vm7436 = vcmp.lt.s32.totalorder %v606, 0
  %v7437 = vand.u32 %v606, 2139095040
  %v7438 = vshrl.u32 %v7437, 23
  %v7439 = vsub.s32 %v7438, 127
  %v7440 = vand.u32 2147483647, %v606
  %v7441 = vand.u32 %v7440, 8388607
  %v7442 = vor.u32 %v7441, 8388608
  %v7443 = vsub.s32 0, %v7442
  %v7444 = vadd.s32 %v7439, 1
  %vm7445 = vcmp.gt.s32.totalorder %v7444, 0
  %v7446 = vsel %vm7445, %v7444, 0
  %v7447 = vshrl.u32 %v7446, 5
  %v7448 = vand.u32 %v7446, 31
  %v7449 = vsub.s32 32, %v7448
  %v7450 = vshrl.u32 683565275, %v7449
  %v7451 = vshll.u32 683565275, %v7448
  %v7452 = vshrl.u32 2475754826, %v7449
  %v7453 = vor.u32 %v7451, %v7452
  %v7454 = vshll.u32 2475754826, %v7448
  %v7455 = vshrl.u32 2131351028, %v7449
  %v7456 = vor.u32 %v7454, %v7455
  %v7457 = vshll.u32 2131351028, %v7448
  %v7458 = vshrl.u32 2102212464, %v7449
  %v7459 = vor.u32 %v7457, %v7458
  %v7460 = vshll.u32 2102212464, %v7448
  %v7461 = vshrl.u32 920167782, %v7449
  %v7462 = vor.u32 %v7460, %v7461
  %v7463 = vshll.u32 920167782, %v7448
  %v7464 = vshrl.u32 1326507024, %v7449
  %v7465 = vor.u32 %v7463, %v7464
  %vm7466 = vcmp.lt.s32.totalorder %v7447, 1
  %vm7467 = vcmp.lt.s32.totalorder %v7447, 2
  %vm7468 = vcmp.lt.s32.totalorder %v7447, 3
  %vm7469 = vcmp.lt.s32.totalorder %v7447, 4
  %v7470 = vsel %vm7466, %v7450, %v7453
  %v7471 = vsel %vm7469, %v7459, 2102212464
  %v7472 = vsel %vm7468, %v7456, %v7471
  %v7473 = vsel %vm7467, %v7470, %v7472
  %v7474 = vsel %vm7466, %v7453, %v7456
  %v7475 = vsel %vm7469, %v7462, 920167782
  %v7476 = vsel %vm7468, %v7459, %v7475
  %v7477 = vsel %vm7467, %v7474, %v7476
  %v7478 = vsel %vm7466, %v7456, %v7459
  %v7479 = vsel %vm7469, %v7465, 1326507024
  %v7480 = vsel %vm7468, %v7462, %v7479
  %v7481 = vsel %vm7467, %v7478, %v7480
  %v7482 = vshll.u32 %v7442, 8
  %v7483 = vand.u32 %v7482, 65535
  %v7484 = vshrl.u32 %v7482, 16
  %v7485 = vand.u32 %v7481, 65535
  %v7486 = vshrl.u32 %v7481, 16
  %v7487 = vmul.u32 %v7483, %v7485
  %v7488 = vmul.u32 %v7483, %v7486
  %v7489 = vmul.u32 %v7484, %v7485
  %v7490 = vmul.u32 %v7484, %v7486
  %v7491 = vshll.u32 %v7488, 16
  %v7492 = vshrl.u32 %v7488, 16
  %v7493 = vshll.u32 %v7489, 16
  %v7494 = vshrl.u32 %v7489, 16
  %vm7495 = vc.u32 %v7487, %v7491
  %v7496 = vsel %vm7495, 1, 0
  %v7497 = vadd.s32 %v7487, %v7491
  %v7498 = vadd.s32 %v7490, %v7496
  %vm7499 = vc.u32 %v7497, %v7493
  %v7500 = vsel %vm7499, 1, 0
  %v7501 = vadd.s32 %v7497, %v7493
  %v7502 = vadd.s32 %v7498, %v7500
  %v7503 = vadd.s32 %v7502, %v7492
  %v7504 = vadd.s32 %v7503, %v7494
  %v7505 = vand.u32 %v7482, 65535
  %v7506 = vshrl.u32 %v7482, 16
  %v7507 = vand.u32 %v7477, 65535
  %v7508 = vshrl.u32 %v7477, 16
  %v7509 = vmul.u32 %v7505, %v7507
  %v7510 = vmul.u32 %v7505, %v7508
  %v7511 = vmul.u32 %v7506, %v7507
  %v7512 = vmul.u32 %v7506, %v7508
  %v7513 = vshll.u32 %v7510, 16
  %v7514 = vshrl.u32 %v7510, 16
  %v7515 = vshll.u32 %v7511, 16
  %v7516 = vshrl.u32 %v7511, 16
  %vm7517 = vc.u32 %v7509, %v7513
  %v7518 = vsel %vm7517, 1, 0
  %v7519 = vadd.s32 %v7509, %v7513
  %v7520 = vadd.s32 %v7512, %v7518
  %vm7521 = vc.u32 %v7519, %v7515
  %v7522 = vsel %vm7521, 1, 0
  %v7523 = vadd.s32 %v7519, %v7515
  %v7524 = vadd.s32 %v7520, %v7522
  %v7525 = vadd.s32 %v7524, %v7514
  %v7526 = vadd.s32 %v7525, %v7516
  %v7527 = vmul.u32 %v7482, %v7473
  %v7528 = vadd.s32 %v7504, %v7523
  %vm7529 = vc.u32 %v7504, %v7523
  %v7530 = vadd.s32 %v7526, 1
  %v7531 = vsel %vm7529, %v7530, %v7526
  %v7532 = vadd.s32 %v7527, %v7531
  %v7533 = vadd.s32 %v7532, 536870912
  %v7534 = vshrl.u32 %v7533, 30
  %v7535 = vshll.u32 %v7534, 30
  %v7536 = vsub.s32 %v7532, %v7535
  %vm7537 = vcmp.lt.s32.totalorder %v7536, 0
  %v7538 = vsub.s32 0, %v7536
  %v7539 = vsel %vm7537, %v7538, %v7536
  %v7540 = vclz %v7539
  %v7541 = vsub.s32 %v7540, 2
  %vm7542 = vcmp.gt.s32.totalorder 0, %v7541
  %v7543 = vsel %vm7542, 0, %v7541
  %v7544 = vsub.s32 32, %v7543
  %v7545 = vshll.u32 %v7536, %v7543
  %v7546 = vshrl.u32 %v7528, %v7544
  %v7547 = vor.u32 %v7545, %v7546
  %v7548 = vsub.s32 4294967266, %v7543
  %v7549 = vadd.s32 %v7548, 127
  %v7550 = vshll.u32 %v7549, 23
  %v7551 = vor.u32 4788187, %v7550
  %v7552 = vand.u32 2147483647, %v7551
  %v7554 = vcvt.s32.f32 %v7547
  %v7555 = vmul.f32 %v7554, %v7552
  %v7556 = vxor.u32 %v7555, 2147483648
  %v7557 = vsel %vm7436, %v7556, %v7555
  %v7558 = vsub.s32 4, %v7534
  %v7559 = vsel %vm7436, %v7558, %v7534
  %v7560 = vsel %vm7435, %v606, %v7557
  %v7561 = vsel %vm7435, 0, %v7559
  %v7562 = vmul.f32 %v7560, %v7560
  %v7563 = vmul.f32 %v7562, -0.001358992
  %v7564 = vadd.f32 %v7563, 0.041655596
  %v7565 = vmul.f32 %v7562, %v7564
  %v7566 = vadd.f32 %v7565, -0.4999988
  %v7567 = vmul.f32 %v7562, %v7566
  %v7568 = vadd.f32 1.0, %v7567
  %v7569 = vmul.f32 %v7560, %v7560
  %v7570 = vmul.f32 %v7569, -0.00019511016
  %v7571 = vadd.f32 %v7570, 0.008332121
  %v7572 = vmul.f32 %v7569, %v7571
  %v7573 = vadd.f32 %v7572, -0.16666654
  %v7574 = vmul.f32 %v7569, %v7573
  %v7575 = vadd.f32 %v7574, 1.0
  %v7576 = vmul.f32 %v7575, %v7560
  %vm7577 = vweird.f32 %v606
  %v7578 = vand.u32 %v7561, 3
  %vm7579 = vcmp.lt.s32.totalorder %v7578, 2
  %vm7580 = vcmp.eq.s32.totalorder %v7578, 0
  %v7581 = vxor.u32 %v7576, 2147483648
  %v7582 = vsel %vm7580, %v7568, %v7581
  %vm7583 = vcmp.eq.s32.totalorder %v7578, 2
  %v7584 = vxor.u32 %v7568, 2147483648
  %v7585 = vsel %vm7583, %v7584, %v7576
  %v7586 = vsel %vm7579, %v7582, %v7585
  %v7587 = vsel %vm7577, nan, %v7586
  %v7588 = vand.u32 2147483647, %v607
  %vm7589 = vcmp.le.f32.partialorder %v7588, 0.7853982
  %vm7590 = vcmp.lt.s32.totalorder %v607, 0
  %v7591 = vand.u32 %v607, 2139095040
  %v7592 = vshrl.u32 %v7591, 23
  %v7593 = vsub.s32 %v7592, 127
  %v7594 = vand.u32 2147483647, %v607
  %v7595 = vand.u32 %v7594, 8388607
  %v7596 = vor.u32 %v7595, 8388608
  %v7597 = vsub.s32 0, %v7596
  %v7598 = vadd.s32 %v7593, 1
  %vm7599 = vcmp.gt.s32.totalorder %v7598, 0
  %v7600 = vsel %vm7599, %v7598, 0
  %v7601 = vshrl.u32 %v7600, 5
  %v7602 = vand.u32 %v7600, 31
  %v7603 = vsub.s32 32, %v7602
  %v7604 = vshrl.u32 683565275, %v7603
  %v7605 = vshll.u32 683565275, %v7602
  %v7606 = vshrl.u32 2475754826, %v7603
  %v7607 = vor.u32 %v7605, %v7606
  %v7608 = vshll.u32 2475754826, %v7602
  %v7609 = vshrl.u32 2131351028, %v7603
  %v7610 = vor.u32 %v7608, %v7609
  %v7611 = vshll.u32 2131351028, %v7602
  %v7612 = vshrl.u32 2102212464, %v7603
  %v7613 = vor.u32 %v7611, %v7612
  %v7614 = vshll.u32 2102212464, %v7602
  %v7615 = vshrl.u32 920167782, %v7603
  %v7616 = vor.u32 %v7614, %v7615
  %v7617 = vshll.u32 920167782, %v7602
  %v7618 = vshrl.u32 1326507024, %v7603
  %v7619 = vor.u32 %v7617, %v7618
  %vm7620 = vcmp.lt.s32.totalorder %v7601, 1
  %vm7621 = vcmp.lt.s32.totalorder %v7601, 2
  %vm7622 = vcmp.lt.s32.totalorder %v7601, 3
  %vm7623 = vcmp.lt.s32.totalorder %v7601, 4
  %v7624 = vsel %vm7620, %v7604, %v7607
  %v7625 = vsel %vm7623, %v7613, 2102212464
  %v7626 = vsel %vm7622, %v7610, %v7625
  %v7627 = vsel %vm7621, %v7624, %v7626
  %v7628 = vsel %vm7620, %v7607, %v7610
  %v7629 = vsel %vm7623, %v7616, 920167782
  %v7630 = vsel %vm7622, %v7613, %v7629
  %v7631 = vsel %vm7621, %v7628, %v7630
  %v7632 = vsel %vm7620, %v7610, %v7613
  %v7633 = vsel %vm7623, %v7619, 1326507024
  %v7634 = vsel %vm7622, %v7616, %v7633
  %v7635 = vsel %vm7621, %v7632, %v7634
  %v7636 = vshll.u32 %v7596, 8
  %v7637 = vand.u32 %v7636, 65535
  %v7638 = vshrl.u32 %v7636, 16
  %v7639 = vand.u32 %v7635, 65535
  %v7640 = vshrl.u32 %v7635, 16
  %v7641 = vmul.u32 %v7637, %v7639
  %v7642 = vmul.u32 %v7637, %v7640
  %v7643 = vmul.u32 %v7638, %v7639
  %v7644 = vmul.u32 %v7638, %v7640
  %v7645 = vshll.u32 %v7642, 16
  %v7646 = vshrl.u32 %v7642, 16
  %v7647 = vshll.u32 %v7643, 16
  %v7648 = vshrl.u32 %v7643, 16
  %vm7649 = vc.u32 %v7641, %v7645
  %v7650 = vsel %vm7649, 1, 0
  %v7651 = vadd.s32 %v7641, %v7645
  %v7652 = vadd.s32 %v7644, %v7650
  %vm7653 = vc.u32 %v7651, %v7647
  %v7654 = vsel %vm7653, 1, 0
  %v7655 = vadd.s32 %v7651, %v7647
  %v7656 = vadd.s32 %v7652, %v7654
  %v7657 = vadd.s32 %v7656, %v7646
  %v7658 = vadd.s32 %v7657, %v7648
  %v7659 = vand.u32 %v7636, 65535
  %v7660 = vshrl.u32 %v7636, 16
  %v7661 = vand.u32 %v7631, 65535
  %v7662 = vshrl.u32 %v7631, 16
  %v7663 = vmul.u32 %v7659, %v7661
  %v7664 = vmul.u32 %v7659, %v7662
  %v7665 = vmul.u32 %v7660, %v7661
  %v7666 = vmul.u32 %v7660, %v7662
  %v7667 = vshll.u32 %v7664, 16
  %v7668 = vshrl.u32 %v7664, 16
  %v7669 = vshll.u32 %v7665, 16
  %v7670 = vshrl.u32 %v7665, 16
  %vm7671 = vc.u32 %v7663, %v7667
  %v7672 = vsel %vm7671, 1, 0
  %v7673 = vadd.s32 %v7663, %v7667
  %v7674 = vadd.s32 %v7666, %v7672
  %vm7675 = vc.u32 %v7673, %v7669
  %v7676 = vsel %vm7675, 1, 0
  %v7677 = vadd.s32 %v7673, %v7669
  %v7678 = vadd.s32 %v7674, %v7676
  %v7679 = vadd.s32 %v7678, %v7668
  %v7680 = vadd.s32 %v7679, %v7670
  %v7681 = vmul.u32 %v7636, %v7627
  %v7682 = vadd.s32 %v7658, %v7677
  %vm7683 = vc.u32 %v7658, %v7677
  %v7684 = vadd.s32 %v7680, 1
  %v7685 = vsel %vm7683, %v7684, %v7680
  %v7686 = vadd.s32 %v7681, %v7685
  %v7687 = vadd.s32 %v7686, 536870912
  %v7688 = vshrl.u32 %v7687, 30
  %v7689 = vshll.u32 %v7688, 30
  %v7690 = vsub.s32 %v7686, %v7689
  %vm7691 = vcmp.lt.s32.totalorder %v7690, 0
  %v7692 = vsub.s32 0, %v7690
  %v7693 = vsel %vm7691, %v7692, %v7690
  %v7694 = vclz %v7693
  %v7695 = vsub.s32 %v7694, 2
  %vm7696 = vcmp.gt.s32.totalorder 0, %v7695
  %v7697 = vsel %vm7696, 0, %v7695
  %v7698 = vsub.s32 32, %v7697
  %v7699 = vshll.u32 %v7690, %v7697
  %v7700 = vshrl.u32 %v7682, %v7698
  %v7701 = vor.u32 %v7699, %v7700
  %v7702 = vsub.s32 4294967266, %v7697
  %v7703 = vadd.s32 %v7702, 127
  %v7704 = vshll.u32 %v7703, 23
  %v7705 = vor.u32 4788187, %v7704
  %v7706 = vand.u32 2147483647, %v7705
  %v7708 = vcvt.s32.f32 %v7701
  %v7709 = vmul.f32 %v7708, %v7706
  %v7710 = vxor.u32 %v7709, 2147483648
  %v7711 = vsel %vm7590, %v7710, %v7709
  %v7712 = vsub.s32 4, %v7688
  %v7713 = vsel %vm7590, %v7712, %v7688
  %v7714 = vsel %vm7589, %v607, %v7711
  %v7715 = vsel %vm7589, 0, %v7713
  %v7716 = vmul.f32 %v7714, %v7714
  %v7717 = vmul.f32 %v7716, -0.001358992
  %v7718 = vadd.f32 %v7717, 0.041655596
  %v7719 = vmul.f32 %v7716, %v7718
  %v7720 = vadd.f32 %v7719, -0.4999988
  %v7721 = vmul.f32 %v7716, %v7720
  %v7722 = vadd.f32 1.0, %v7721
  %v7723 = vmul.f32 %v7714, %v7714
  %v7724 = vmul.f32 %v7723, -0.00019511016
  %v7725 = vadd.f32 %v7724, 0.008332121
  %v7726 = vmul.f32 %v7723, %v7725
  %v7727 = vadd.f32 %v7726, -0.16666654
  %v7728 = vmul.f32 %v7723, %v7727
  %v7729 = vadd.f32 %v7728, 1.0
  %v7730 = vmul.f32 %v7729, %v7714
  %vm7731 = vweird.f32 %v607
  %v7732 = vand.u32 %v7715, 3
  %vm7733 = vcmp.lt.s32.totalorder %v7732, 2
  %vm7734 = vcmp.eq.s32.totalorder %v7732, 0
  %v7735 = vxor.u32 %v7730, 2147483648
  %v7736 = vsel %vm7734, %v7722, %v7735
  %vm7737 = vcmp.eq.s32.totalorder %v7732, 2
  %v7738 = vxor.u32 %v7722, 2147483648
  %v7739 = vsel %vm7737, %v7738, %v7730
  %v7740 = vsel %vm7733, %v7736, %v7739
  %v7741 = vsel %vm7731, nan, %v7740
  %v7742 = vand.u32 2147483647, %v608
  %vm7743 = vcmp.le.f32.partialorder %v7742, 0.7853982
  %vm7744 = vcmp.lt.s32.totalorder %v608, 0
  %v7745 = vand.u32 %v608, 2139095040
  %v7746 = vshrl.u32 %v7745, 23
  %v7747 = vsub.s32 %v7746, 127
  %v7748 = vand.u32 2147483647, %v608
  %v7749 = vand.u32 %v7748, 8388607
  %v7750 = vor.u32 %v7749, 8388608
  %v7751 = vsub.s32 0, %v7750
  %v7752 = vadd.s32 %v7747, 1
  %vm7753 = vcmp.gt.s32.totalorder %v7752, 0
  %v7754 = vsel %vm7753, %v7752, 0
  %v7755 = vshrl.u32 %v7754, 5
  %v7756 = vand.u32 %v7754, 31
  %v7757 = vsub.s32 32, %v7756
  %v7758 = vshrl.u32 683565275, %v7757
  %v7759 = vshll.u32 683565275, %v7756
  %v7760 = vshrl.u32 2475754826, %v7757
  %v7761 = vor.u32 %v7759, %v7760
  %v7762 = vshll.u32 2475754826, %v7756
  %v7763 = vshrl.u32 2131351028, %v7757
  %v7764 = vor.u32 %v7762, %v7763
  %v7765 = vshll.u32 2131351028, %v7756
  %v7766 = vshrl.u32 2102212464, %v7757
  %v7767 = vor.u32 %v7765, %v7766
  %v7768 = vshll.u32 2102212464, %v7756
  %v7769 = vshrl.u32 920167782, %v7757
  %v7770 = vor.u32 %v7768, %v7769
  %v7771 = vshll.u32 920167782, %v7756
  %v7772 = vshrl.u32 1326507024, %v7757
  %v7773 = vor.u32 %v7771, %v7772
  %vm7774 = vcmp.lt.s32.totalorder %v7755, 1
  %vm7775 = vcmp.lt.s32.totalorder %v7755, 2
  %vm7776 = vcmp.lt.s32.totalorder %v7755, 3
  %vm7777 = vcmp.lt.s32.totalorder %v7755, 4
  %v7778 = vsel %vm7774, %v7758, %v7761
  %v7779 = vsel %vm7777, %v7767, 2102212464
  %v7780 = vsel %vm7776, %v7764, %v7779
  %v7781 = vsel %vm7775, %v7778, %v7780
  %v7782 = vsel %vm7774, %v7761, %v7764
  %v7783 = vsel %vm7777, %v7770, 920167782
  %v7784 = vsel %vm7776, %v7767, %v7783
  %v7785 = vsel %vm7775, %v7782, %v7784
  %v7786 = vsel %vm7774, %v7764, %v7767
  %v7787 = vsel %vm7777, %v7773, 1326507024
  %v7788 = vsel %vm7776, %v7770, %v7787
  %v7789 = vsel %vm7775, %v7786, %v7788
  %v7790 = vshll.u32 %v7750, 8
  %v7791 = vand.u32 %v7790, 65535
  %v7792 = vshrl.u32 %v7790, 16
  %v7793 = vand.u32 %v7789, 65535
  %v7794 = vshrl.u32 %v7789, 16
  %v7795 = vmul.u32 %v7791, %v7793
  %v7796 = vmul.u32 %v7791, %v7794
  %v7797 = vmul.u32 %v7792, %v7793
  %v7798 = vmul.u32 %v7792, %v7794
  %v7799 = vshll.u32 %v7796, 16
  %v7800 = vshrl.u32 %v7796, 16
  %v7801 = vshll.u32 %v7797, 16
  %v7802 = vshrl.u32 %v7797, 16
  %vm7803 = vc.u32 %v7795, %v7799
  %v7804 = vsel %vm7803, 1, 0
  %v7805 = vadd.s32 %v7795, %v7799
  %v7806 = vadd.s32 %v7798, %v7804
  %vm7807 = vc.u32 %v7805, %v7801
  %v7808 = vsel %vm7807, 1, 0
  %v7809 = vadd.s32 %v7805, %v7801
  %v7810 = vadd.s32 %v7806, %v7808
  %v7811 = vadd.s32 %v7810, %v7800
  %v7812 = vadd.s32 %v7811, %v7802
  %v7813 = vand.u32 %v7790, 65535
  %v7814 = vshrl.u32 %v7790, 16
  %v7815 = vand.u32 %v7785, 65535
  %v7816 = vshrl.u32 %v7785, 16
  %v7817 = vmul.u32 %v7813, %v7815
  %v7818 = vmul.u32 %v7813, %v7816
  %v7819 = vmul.u32 %v7814, %v7815
  %v7820 = vmul.u32 %v7814, %v7816
  %v7821 = vshll.u32 %v7818, 16
  %v7822 = vshrl.u32 %v7818, 16
  %v7823 = vshll.u32 %v7819, 16
  %v7824 = vshrl.u32 %v7819, 16
  %vm7825 = vc.u32 %v7817, %v7821
  %v7826 = vsel %vm7825, 1, 0
  %v7827 = vadd.s32 %v7817, %v7821
  %v7828 = vadd.s32 %v7820, %v7826
  %vm7829 = vc.u32 %v7827, %v7823
  %v7830 = vsel %vm7829, 1, 0
  %v7831 = vadd.s32 %v7827, %v7823
  %v7832 = vadd.s32 %v7828, %v7830
  %v7833 = vadd.s32 %v7832, %v7822
  %v7834 = vadd.s32 %v7833, %v7824
  %v7835 = vmul.u32 %v7790, %v7781
  %v7836 = vadd.s32 %v7812, %v7831
  %vm7837 = vc.u32 %v7812, %v7831
  %v7838 = vadd.s32 %v7834, 1
  %v7839 = vsel %vm7837, %v7838, %v7834
  %v7840 = vadd.s32 %v7835, %v7839
  %v7841 = vadd.s32 %v7840, 536870912
  %v7842 = vshrl.u32 %v7841, 30
  %v7843 = vshll.u32 %v7842, 30
  %v7844 = vsub.s32 %v7840, %v7843
  %vm7845 = vcmp.lt.s32.totalorder %v7844, 0
  %v7846 = vsub.s32 0, %v7844
  %v7847 = vsel %vm7845, %v7846, %v7844
  %v7848 = vclz %v7847
  %v7849 = vsub.s32 %v7848, 2
  %vm7850 = vcmp.gt.s32.totalorder 0, %v7849
  %v7851 = vsel %vm7850, 0, %v7849
  %v7852 = vsub.s32 32, %v7851
  %v7853 = vshll.u32 %v7844, %v7851
  %v7854 = vshrl.u32 %v7836, %v7852
  %v7855 = vor.u32 %v7853, %v7854
  %v7856 = vsub.s32 4294967266, %v7851
  %v7857 = vadd.s32 %v7856, 127
  %v7858 = vshll.u32 %v7857, 23
  %v7859 = vor.u32 4788187, %v7858
  %v7860 = vand.u32 2147483647, %v7859
  %v7862 = vcvt.s32.f32 %v7855
  %v7863 = vmul.f32 %v7862, %v7860
  %v7864 = vxor.u32 %v7863, 2147483648
  %v7865 = vsel %vm7744, %v7864, %v7863
  %v7866 = vsub.s32 4, %v7842
  %v7867 = vsel %vm7744, %v7866, %v7842
  %v7868 = vsel %vm7743, %v608, %v7865
  %v7869 = vsel %vm7743, 0, %v7867
  %v7870 = vmul.f32 %v7868, %v7868
  %v7871 = vmul.f32 %v7870, -0.001358992
  %v7872 = vadd.f32 %v7871, 0.041655596
  %v7873 = vmul.f32 %v7870, %v7872
  %v7874 = vadd.f32 %v7873, -0.4999988
  %v7875 = vmul.f32 %v7870, %v7874
  %v7876 = vadd.f32 1.0, %v7875
  %v7877 = vmul.f32 %v7868, %v7868
  %v7878 = vmul.f32 %v7877, -0.00019511016
  %v7879 = vadd.f32 %v7878, 0.008332121
  %v7880 = vmul.f32 %v7877, %v7879
  %v7881 = vadd.f32 %v7880, -0.16666654
  %v7882 = vmul.f32 %v7877, %v7881
  %v7883 = vadd.f32 %v7882, 1.0
  %v7884 = vmul.f32 %v7883, %v7868
  %vm7885 = vweird.f32 %v608
  %v7886 = vand.u32 %v7869, 3
  %vm7887 = vcmp.lt.s32.totalorder %v7886, 2
  %vm7888 = vcmp.eq.s32.totalorder %v7886, 0
  %v7889 = vxor.u32 %v7884, 2147483648
  %v7890 = vsel %vm7888, %v7876, %v7889
  %vm7891 = vcmp.eq.s32.totalorder %v7886, 2
  %v7892 = vxor.u32 %v7876, 2147483648
  %v7893 = vsel %vm7891, %v7892, %v7884
  %v7894 = vsel %vm7887, %v7890, %v7893
  %v7895 = vsel %vm7885, nan, %v7894
  %v7896 = vand.u32 2147483647, %v609
  %vm7897 = vcmp.le.f32.partialorder %v7896, 0.7853982
  %vm7898 = vcmp.lt.s32.totalorder %v609, 0
  %v7899 = vand.u32 %v609, 2139095040
  %v7900 = vshrl.u32 %v7899, 23
  %v7901 = vsub.s32 %v7900, 127
  %v7902 = vand.u32 2147483647, %v609
  %v7903 = vand.u32 %v7902, 8388607
  %v7904 = vor.u32 %v7903, 8388608
  %v7905 = vsub.s32 0, %v7904
  %v7906 = vadd.s32 %v7901, 1
  %vm7907 = vcmp.gt.s32.totalorder %v7906, 0
  %v7908 = vsel %vm7907, %v7906, 0
  %v7909 = vshrl.u32 %v7908, 5
  %v7910 = vand.u32 %v7908, 31
  %v7911 = vsub.s32 32, %v7910
  %v7912 = vshrl.u32 683565275, %v7911
  %v7913 = vshll.u32 683565275, %v7910
  %v7914 = vshrl.u32 2475754826, %v7911
  %v7915 = vor.u32 %v7913, %v7914
  %v7916 = vshll.u32 2475754826, %v7910
  %v7917 = vshrl.u32 2131351028, %v7911
  %v7918 = vor.u32 %v7916, %v7917
  %v7919 = vshll.u32 2131351028, %v7910
  %v7920 = vshrl.u32 2102212464, %v7911
  %v7921 = vor.u32 %v7919, %v7920
  %v7922 = vshll.u32 2102212464, %v7910
  %v7923 = vshrl.u32 920167782, %v7911
  %v7924 = vor.u32 %v7922, %v7923
  %v7925 = vshll.u32 920167782, %v7910
  %v7926 = vshrl.u32 1326507024, %v7911
  %v7927 = vor.u32 %v7925, %v7926
  %vm7928 = vcmp.lt.s32.totalorder %v7909, 1
  %vm7929 = vcmp.lt.s32.totalorder %v7909, 2
  %vm7930 = vcmp.lt.s32.totalorder %v7909, 3
  %vm7931 = vcmp.lt.s32.totalorder %v7909, 4
  %v7932 = vsel %vm7928, %v7912, %v7915
  %v7933 = vsel %vm7931, %v7921, 2102212464
  %v7934 = vsel %vm7930, %v7918, %v7933
  %v7935 = vsel %vm7929, %v7932, %v7934
  %v7936 = vsel %vm7928, %v7915, %v7918
  %v7937 = vsel %vm7931, %v7924, 920167782
  %v7938 = vsel %vm7930, %v7921, %v7937
  %v7939 = vsel %vm7929, %v7936, %v7938
  %v7940 = vsel %vm7928, %v7918, %v7921
  %v7941 = vsel %vm7931, %v7927, 1326507024
  %v7942 = vsel %vm7930, %v7924, %v7941
  %v7943 = vsel %vm7929, %v7940, %v7942
  %v7944 = vshll.u32 %v7904, 8
  %v7945 = vand.u32 %v7944, 65535
  %v7946 = vshrl.u32 %v7944, 16
  %v7947 = vand.u32 %v7943, 65535
  %v7948 = vshrl.u32 %v7943, 16
  %v7949 = vmul.u32 %v7945, %v7947
  %v7950 = vmul.u32 %v7945, %v7948
  %v7951 = vmul.u32 %v7946, %v7947
  %v7952 = vmul.u32 %v7946, %v7948
  %v7953 = vshll.u32 %v7950, 16
  %v7954 = vshrl.u32 %v7950, 16
  %v7955 = vshll.u32 %v7951, 16
  %v7956 = vshrl.u32 %v7951, 16
  %vm7957 = vc.u32 %v7949, %v7953
  %v7958 = vsel %vm7957, 1, 0
  %v7959 = vadd.s32 %v7949, %v7953
  %v7960 = vadd.s32 %v7952, %v7958
  %vm7961 = vc.u32 %v7959, %v7955
  %v7962 = vsel %vm7961, 1, 0
  %v7963 = vadd.s32 %v7959, %v7955
  %v7964 = vadd.s32 %v7960, %v7962
  %v7965 = vadd.s32 %v7964, %v7954
  %v7966 = vadd.s32 %v7965, %v7956
  %v7967 = vand.u32 %v7944, 65535
  %v7968 = vshrl.u32 %v7944, 16
  %v7969 = vand.u32 %v7939, 65535
  %v7970 = vshrl.u32 %v7939, 16
  %v7971 = vmul.u32 %v7967, %v7969
  %v7972 = vmul.u32 %v7967, %v7970
  %v7973 = vmul.u32 %v7968, %v7969
  %v7974 = vmul.u32 %v7968, %v7970
  %v7975 = vshll.u32 %v7972, 16
  %v7976 = vshrl.u32 %v7972, 16
  %v7977 = vshll.u32 %v7973, 16
  %v7978 = vshrl.u32 %v7973, 16
  %vm7979 = vc.u32 %v7971, %v7975
  %v7980 = vsel %vm7979, 1, 0
  %v7981 = vadd.s32 %v7971, %v7975
  %v7982 = vadd.s32 %v7974, %v7980
  %vm7983 = vc.u32 %v7981, %v7977
  %v7984 = vsel %vm7983, 1, 0
  %v7985 = vadd.s32 %v7981, %v7977
  %v7986 = vadd.s32 %v7982, %v7984
  %v7987 = vadd.s32 %v7986, %v7976
  %v7988 = vadd.s32 %v7987, %v7978
  %v7989 = vmul.u32 %v7944, %v7935
  %v7990 = vadd.s32 %v7966, %v7985
  %vm7991 = vc.u32 %v7966, %v7985
  %v7992 = vadd.s32 %v7988, 1
  %v7993 = vsel %vm7991, %v7992, %v7988
  %v7994 = vadd.s32 %v7989, %v7993
  %v7995 = vadd.s32 %v7994, 536870912
  %v7996 = vshrl.u32 %v7995, 30
  %v7997 = vshll.u32 %v7996, 30
  %v7998 = vsub.s32 %v7994, %v7997
  %vm7999 = vcmp.lt.s32.totalorder %v7998, 0
  %v8000 = vsub.s32 0, %v7998
  %v8001 = vsel %vm7999, %v8000, %v7998
  %v8002 = vclz %v8001
  %v8003 = vsub.s32 %v8002, 2
  %vm8004 = vcmp.gt.s32.totalorder 0, %v8003
  %v8005 = vsel %vm8004, 0, %v8003
  %v8006 = vsub.s32 32, %v8005
  %v8007 = vshll.u32 %v7998, %v8005
  %v8008 = vshrl.u32 %v7990, %v8006
  %v8009 = vor.u32 %v8007, %v8008
  %v8010 = vsub.s32 4294967266, %v8005
  %v8011 = vadd.s32 %v8010, 127
  %v8012 = vshll.u32 %v8011, 23
  %v8013 = vor.u32 4788187, %v8012
  %v8014 = vand.u32 2147483647, %v8013
  %v8016 = vcvt.s32.f32 %v8009
  %v8017 = vmul.f32 %v8016, %v8014
  %v8018 = vxor.u32 %v8017, 2147483648
  %v8019 = vsel %vm7898, %v8018, %v8017
  %v8020 = vsub.s32 4, %v7996
  %v8021 = vsel %vm7898, %v8020, %v7996
  %v8022 = vsel %vm7897, %v609, %v8019
  %v8023 = vsel %vm7897, 0, %v8021
  %v8024 = vmul.f32 %v8022, %v8022
  %v8025 = vmul.f32 %v8024, -0.001358992
  %v8026 = vadd.f32 %v8025, 0.041655596
  %v8027 = vmul.f32 %v8024, %v8026
  %v8028 = vadd.f32 %v8027, -0.4999988
  %v8029 = vmul.f32 %v8024, %v8028
  %v8030 = vadd.f32 1.0, %v8029
  %v8031 = vmul.f32 %v8022, %v8022
  %v8032 = vmul.f32 %v8031, -0.00019511016
  %v8033 = vadd.f32 %v8032, 0.008332121
  %v8034 = vmul.f32 %v8031, %v8033
  %v8035 = vadd.f32 %v8034, -0.16666654
  %v8036 = vmul.f32 %v8031, %v8035
  %v8037 = vadd.f32 %v8036, 1.0
  %v8038 = vmul.f32 %v8037, %v8022
  %vm8039 = vweird.f32 %v609
  %v8040 = vand.u32 %v8023, 3
  %vm8041 = vcmp.lt.s32.totalorder %v8040, 2
  %vm8042 = vcmp.eq.s32.totalorder %v8040, 0
  %v8043 = vxor.u32 %v8038, 2147483648
  %v8044 = vsel %vm8042, %v8030, %v8043
  %vm8045 = vcmp.eq.s32.totalorder %v8040, 2
  %v8046 = vxor.u32 %v8030, 2147483648
  %v8047 = vsel %vm8045, %v8046, %v8038
  %v8048 = vsel %vm8041, %v8044, %v8047
  %v8049 = vsel %vm8039, nan, %v8048
  %v8050 = vand.u32 2147483647, %v610
  %vm8051 = vcmp.le.f32.partialorder %v8050, 0.7853982
  %vm8052 = vcmp.lt.s32.totalorder %v610, 0
  %v8053 = vand.u32 %v610, 2139095040
  %v8054 = vshrl.u32 %v8053, 23
  %v8055 = vsub.s32 %v8054, 127
  %v8056 = vand.u32 2147483647, %v610
  %v8057 = vand.u32 %v8056, 8388607
  %v8058 = vor.u32 %v8057, 8388608
  %v8059 = vsub.s32 0, %v8058
  %v8060 = vadd.s32 %v8055, 1
  %vm8061 = vcmp.gt.s32.totalorder %v8060, 0
  %v8062 = vsel %vm8061, %v8060, 0
  %v8063 = vshrl.u32 %v8062, 5
  %v8064 = vand.u32 %v8062, 31
  %v8065 = vsub.s32 32, %v8064
  %v8066 = vshrl.u32 683565275, %v8065
  %v8067 = vshll.u32 683565275, %v8064
  %v8068 = vshrl.u32 2475754826, %v8065
  %v8069 = vor.u32 %v8067, %v8068
  %v8070 = vshll.u32 2475754826, %v8064
  %v8071 = vshrl.u32 2131351028, %v8065
  %v8072 = vor.u32 %v8070, %v8071
  %v8073 = vshll.u32 2131351028, %v8064
  %v8074 = vshrl.u32 2102212464, %v8065
  %v8075 = vor.u32 %v8073, %v8074
  %v8076 = vshll.u32 2102212464, %v8064
  %v8077 = vshrl.u32 920167782, %v8065
  %v8078 = vor.u32 %v8076, %v8077
  %v8079 = vshll.u32 920167782, %v8064
  %v8080 = vshrl.u32 1326507024, %v8065
  %v8081 = vor.u32 %v8079, %v8080
  %vm8082 = vcmp.lt.s32.totalorder %v8063, 1
  %vm8083 = vcmp.lt.s32.totalorder %v8063, 2
  %vm8084 = vcmp.lt.s32.totalorder %v8063, 3
  %vm8085 = vcmp.lt.s32.totalorder %v8063, 4
  %v8086 = vsel %vm8082, %v8066, %v8069
  %v8087 = vsel %vm8085, %v8075, 2102212464
  %v8088 = vsel %vm8084, %v8072, %v8087
  %v8089 = vsel %vm8083, %v8086, %v8088
  %v8090 = vsel %vm8082, %v8069, %v8072
  %v8091 = vsel %vm8085, %v8078, 920167782
  %v8092 = vsel %vm8084, %v8075, %v8091
  %v8093 = vsel %vm8083, %v8090, %v8092
  %v8094 = vsel %vm8082, %v8072, %v8075
  %v8095 = vsel %vm8085, %v8081, 1326507024
  %v8096 = vsel %vm8084, %v8078, %v8095
  %v8097 = vsel %vm8083, %v8094, %v8096
  %v8098 = vshll.u32 %v8058, 8
  %v8099 = vand.u32 %v8098, 65535
  %v8100 = vshrl.u32 %v8098, 16
  %v8101 = vand.u32 %v8097, 65535
  %v8102 = vshrl.u32 %v8097, 16
  %v8103 = vmul.u32 %v8099, %v8101
  %v8104 = vmul.u32 %v8099, %v8102
  %v8105 = vmul.u32 %v8100, %v8101
  %v8106 = vmul.u32 %v8100, %v8102
  %v8107 = vshll.u32 %v8104, 16
  %v8108 = vshrl.u32 %v8104, 16
  %v8109 = vshll.u32 %v8105, 16
  %v8110 = vshrl.u32 %v8105, 16
  %vm8111 = vc.u32 %v8103, %v8107
  %v8112 = vsel %vm8111, 1, 0
  %v8113 = vadd.s32 %v8103, %v8107
  %v8114 = vadd.s32 %v8106, %v8112
  %vm8115 = vc.u32 %v8113, %v8109
  %v8116 = vsel %vm8115, 1, 0
  %v8117 = vadd.s32 %v8113, %v8109
  %v8118 = vadd.s32 %v8114, %v8116
  %v8119 = vadd.s32 %v8118, %v8108
  %v8120 = vadd.s32 %v8119, %v8110
  %v8121 = vand.u32 %v8098, 65535
  %v8122 = vshrl.u32 %v8098, 16
  %v8123 = vand.u32 %v8093, 65535
  %v8124 = vshrl.u32 %v8093, 16
  %v8125 = vmul.u32 %v8121, %v8123
  %v8126 = vmul.u32 %v8121, %v8124
  %v8127 = vmul.u32 %v8122, %v8123
  %v8128 = vmul.u32 %v8122, %v8124
  %v8129 = vshll.u32 %v8126, 16
  %v8130 = vshrl.u32 %v8126, 16
  %v8131 = vshll.u32 %v8127, 16
  %v8132 = vshrl.u32 %v8127, 16
  %vm8133 = vc.u32 %v8125, %v8129
  %v8134 = vsel %vm8133, 1, 0
  %v8135 = vadd.s32 %v8125, %v8129
  %v8136 = vadd.s32 %v8128, %v8134
  %vm8137 = vc.u32 %v8135, %v8131
  %v8138 = vsel %vm8137, 1, 0
  %v8139 = vadd.s32 %v8135, %v8131
  %v8140 = vadd.s32 %v8136, %v8138
  %v8141 = vadd.s32 %v8140, %v8130
  %v8142 = vadd.s32 %v8141, %v8132
  %v8143 = vmul.u32 %v8098, %v8089
  %v8144 = vadd.s32 %v8120, %v8139
  %vm8145 = vc.u32 %v8120, %v8139
  %v8146 = vadd.s32 %v8142, 1
  %v8147 = vsel %vm8145, %v8146, %v8142
  %v8148 = vadd.s32 %v8143, %v8147
  %v8149 = vadd.s32 %v8148, 536870912
  %v8150 = vshrl.u32 %v8149, 30
  %v8151 = vshll.u32 %v8150, 30
  %v8152 = vsub.s32 %v8148, %v8151
  %vm8153 = vcmp.lt.s32.totalorder %v8152, 0
  %v8154 = vsub.s32 0, %v8152
  %v8155 = vsel %vm8153, %v8154, %v8152
  %v8156 = vclz %v8155
  %v8157 = vsub.s32 %v8156, 2
  %vm8158 = vcmp.gt.s32.totalorder 0, %v8157
  %v8159 = vsel %vm8158, 0, %v8157
  %v8160 = vsub.s32 32, %v8159
  %v8161 = vshll.u32 %v8152, %v8159
  %v8162 = vshrl.u32 %v8144, %v8160
  %v8163 = vor.u32 %v8161, %v8162
  %v8164 = vsub.s32 4294967266, %v8159
  %v8165 = vadd.s32 %v8164, 127
  %v8166 = vshll.u32 %v8165, 23
  %v8167 = vor.u32 4788187, %v8166
  %v8168 = vand.u32 2147483647, %v8167
  %v8170 = vcvt.s32.f32 %v8163
  %v8171 = vmul.f32 %v8170, %v8168
  %v8172 = vxor.u32 %v8171, 2147483648
  %v8173 = vsel %vm8052, %v8172, %v8171
  %v8174 = vsub.s32 4, %v8150
  %v8175 = vsel %vm8052, %v8174, %v8150
  %v8176 = vsel %vm8051, %v610, %v8173
  %v8177 = vsel %vm8051, 0, %v8175
  %v8178 = vmul.f32 %v8176, %v8176
  %v8179 = vmul.f32 %v8178, -0.001358992
  %v8180 = vadd.f32 %v8179, 0.041655596
  %v8181 = vmul.f32 %v8178, %v8180
  %v8182 = vadd.f32 %v8181, -0.4999988
  %v8183 = vmul.f32 %v8178, %v8182
  %v8184 = vadd.f32 1.0, %v8183
  %v8185 = vmul.f32 %v8176, %v8176
  %v8186 = vmul.f32 %v8185, -0.00019511016
  %v8187 = vadd.f32 %v8186, 0.008332121
  %v8188 = vmul.f32 %v8185, %v8187
  %v8189 = vadd.f32 %v8188, -0.16666654
  %v8190 = vmul.f32 %v8185, %v8189
  %v8191 = vadd.f32 %v8190, 1.0
  %v8192 = vmul.f32 %v8191, %v8176
  %vm8193 = vweird.f32 %v610
  %v8194 = vand.u32 %v8177, 3
  %vm8195 = vcmp.lt.s32.totalorder %v8194, 2
  %vm8196 = vcmp.eq.s32.totalorder %v8194, 0
  %v8197 = vxor.u32 %v8192, 2147483648
  %v8198 = vsel %vm8196, %v8184, %v8197
  %vm8199 = vcmp.eq.s32.totalorder %v8194, 2
  %v8200 = vxor.u32 %v8184, 2147483648
  %v8201 = vsel %vm8199, %v8200, %v8192
  %v8202 = vsel %vm8195, %v8198, %v8201
  %v8203 = vsel %vm8193, nan, %v8202
  %v8204 = vand.u32 2147483647, %v611
  %vm8205 = vcmp.le.f32.partialorder %v8204, 0.7853982
  %vm8206 = vcmp.lt.s32.totalorder %v611, 0
  %v8207 = vand.u32 %v611, 2139095040
  %v8208 = vshrl.u32 %v8207, 23
  %v8209 = vsub.s32 %v8208, 127
  %v8210 = vand.u32 2147483647, %v611
  %v8211 = vand.u32 %v8210, 8388607
  %v8212 = vor.u32 %v8211, 8388608
  %v8213 = vsub.s32 0, %v8212
  %v8214 = vadd.s32 %v8209, 1
  %vm8215 = vcmp.gt.s32.totalorder %v8214, 0
  %v8216 = vsel %vm8215, %v8214, 0
  %v8217 = vshrl.u32 %v8216, 5
  %v8218 = vand.u32 %v8216, 31
  %v8219 = vsub.s32 32, %v8218
  %v8220 = vshrl.u32 683565275, %v8219
  %v8221 = vshll.u32 683565275, %v8218
  %v8222 = vshrl.u32 2475754826, %v8219
  %v8223 = vor.u32 %v8221, %v8222
  %v8224 = vshll.u32 2475754826, %v8218
  %v8225 = vshrl.u32 2131351028, %v8219
  %v8226 = vor.u32 %v8224, %v8225
  %v8227 = vshll.u32 2131351028, %v8218
  %v8228 = vshrl.u32 2102212464, %v8219
  %v8229 = vor.u32 %v8227, %v8228
  %v8230 = vshll.u32 2102212464, %v8218
  %v8231 = vshrl.u32 920167782, %v8219
  %v8232 = vor.u32 %v8230, %v8231
  %v8233 = vshll.u32 920167782, %v8218
  %v8234 = vshrl.u32 1326507024, %v8219
  %v8235 = vor.u32 %v8233, %v8234
  %vm8236 = vcmp.lt.s32.totalorder %v8217, 1
  %vm8237 = vcmp.lt.s32.totalorder %v8217, 2
  %vm8238 = vcmp.lt.s32.totalorder %v8217, 3
  %vm8239 = vcmp.lt.s32.totalorder %v8217, 4
  %v8240 = vsel %vm8236, %v8220, %v8223
  %v8241 = vsel %vm8239, %v8229, 2102212464
  %v8242 = vsel %vm8238, %v8226, %v8241
  %v8243 = vsel %vm8237, %v8240, %v8242
  %v8244 = vsel %vm8236, %v8223, %v8226
  %v8245 = vsel %vm8239, %v8232, 920167782
  %v8246 = vsel %vm8238, %v8229, %v8245
  %v8247 = vsel %vm8237, %v8244, %v8246
  %v8248 = vsel %vm8236, %v8226, %v8229
  %v8249 = vsel %vm8239, %v8235, 1326507024
  %v8250 = vsel %vm8238, %v8232, %v8249
  %v8251 = vsel %vm8237, %v8248, %v8250
  %v8252 = vshll.u32 %v8212, 8
  %v8253 = vand.u32 %v8252, 65535
  %v8254 = vshrl.u32 %v8252, 16
  %v8255 = vand.u32 %v8251, 65535
  %v8256 = vshrl.u32 %v8251, 16
  %v8257 = vmul.u32 %v8253, %v8255
  %v8258 = vmul.u32 %v8253, %v8256
  %v8259 = vmul.u32 %v8254, %v8255
  %v8260 = vmul.u32 %v8254, %v8256
  %v8261 = vshll.u32 %v8258, 16
  %v8262 = vshrl.u32 %v8258, 16
  %v8263 = vshll.u32 %v8259, 16
  %v8264 = vshrl.u32 %v8259, 16
  %vm8265 = vc.u32 %v8257, %v8261
  %v8266 = vsel %vm8265, 1, 0
  %v8267 = vadd.s32 %v8257, %v8261
  %v8268 = vadd.s32 %v8260, %v8266
  %vm8269 = vc.u32 %v8267, %v8263
  %v8270 = vsel %vm8269, 1, 0
  %v8271 = vadd.s32 %v8267, %v8263
  %v8272 = vadd.s32 %v8268, %v8270
  %v8273 = vadd.s32 %v8272, %v8262
  %v8274 = vadd.s32 %v8273, %v8264
  %v8275 = vand.u32 %v8252, 65535
  %v8276 = vshrl.u32 %v8252, 16
  %v8277 = vand.u32 %v8247, 65535
  %v8278 = vshrl.u32 %v8247, 16
  %v8279 = vmul.u32 %v8275, %v8277
  %v8280 = vmul.u32 %v8275, %v8278
  %v8281 = vmul.u32 %v8276, %v8277
  %v8282 = vmul.u32 %v8276, %v8278
  %v8283 = vshll.u32 %v8280, 16
  %v8284 = vshrl.u32 %v8280, 16
  %v8285 = vshll.u32 %v8281, 16
  %v8286 = vshrl.u32 %v8281, 16
  %vm8287 = vc.u32 %v8279, %v8283
  %v8288 = vsel %vm8287, 1, 0
  %v8289 = vadd.s32 %v8279, %v8283
  %v8290 = vadd.s32 %v8282, %v8288
  %vm8291 = vc.u32 %v8289, %v8285
  %v8292 = vsel %vm8291, 1, 0
  %v8293 = vadd.s32 %v8289, %v8285
  %v8294 = vadd.s32 %v8290, %v8292
  %v8295 = vadd.s32 %v8294, %v8284
  %v8296 = vadd.s32 %v8295, %v8286
  %v8297 = vmul.u32 %v8252, %v8243
  %v8298 = vadd.s32 %v8274, %v8293
  %vm8299 = vc.u32 %v8274, %v8293
  %v8300 = vadd.s32 %v8296, 1
  %v8301 = vsel %vm8299, %v8300, %v8296
  %v8302 = vadd.s32 %v8297, %v8301
  %v8303 = vadd.s32 %v8302, 536870912
  %v8304 = vshrl.u32 %v8303, 30
  %v8305 = vshll.u32 %v8304, 30
  %v8306 = vsub.s32 %v8302, %v8305
  %vm8307 = vcmp.lt.s32.totalorder %v8306, 0
  %v8308 = vsub.s32 0, %v8306
  %v8309 = vsel %vm8307, %v8308, %v8306
  %v8310 = vclz %v8309
  %v8311 = vsub.s32 %v8310, 2
  %vm8312 = vcmp.gt.s32.totalorder 0, %v8311
  %v8313 = vsel %vm8312, 0, %v8311
  %v8314 = vsub.s32 32, %v8313
  %v8315 = vshll.u32 %v8306, %v8313
  %v8316 = vshrl.u32 %v8298, %v8314
  %v8317 = vor.u32 %v8315, %v8316
  %v8318 = vsub.s32 4294967266, %v8313
  %v8319 = vadd.s32 %v8318, 127
  %v8320 = vshll.u32 %v8319, 23
  %v8321 = vor.u32 4788187, %v8320
  %v8322 = vand.u32 2147483647, %v8321
  %v8324 = vcvt.s32.f32 %v8317
  %v8325 = vmul.f32 %v8324, %v8322
  %v8326 = vxor.u32 %v8325, 2147483648
  %v8327 = vsel %vm8206, %v8326, %v8325
  %v8328 = vsub.s32 4, %v8304
  %v8329 = vsel %vm8206, %v8328, %v8304
  %v8330 = vsel %vm8205, %v611, %v8327
  %v8331 = vsel %vm8205, 0, %v8329
  %v8332 = vmul.f32 %v8330, %v8330
  %v8333 = vmul.f32 %v8332, -0.001358992
  %v8334 = vadd.f32 %v8333, 0.041655596
  %v8335 = vmul.f32 %v8332, %v8334
  %v8336 = vadd.f32 %v8335, -0.4999988
  %v8337 = vmul.f32 %v8332, %v8336
  %v8338 = vadd.f32 1.0, %v8337
  %v8339 = vmul.f32 %v8330, %v8330
  %v8340 = vmul.f32 %v8339, -0.00019511016
  %v8341 = vadd.f32 %v8340, 0.008332121
  %v8342 = vmul.f32 %v8339, %v8341
  %v8343 = vadd.f32 %v8342, -0.16666654
  %v8344 = vmul.f32 %v8339, %v8343
  %v8345 = vadd.f32 %v8344, 1.0
  %v8346 = vmul.f32 %v8345, %v8330
  %vm8347 = vweird.f32 %v611
  %v8348 = vand.u32 %v8331, 3
  %vm8349 = vcmp.lt.s32.totalorder %v8348, 2
  %vm8350 = vcmp.eq.s32.totalorder %v8348, 0
  %v8351 = vxor.u32 %v8346, 2147483648
  %v8352 = vsel %vm8350, %v8338, %v8351
  %vm8353 = vcmp.eq.s32.totalorder %v8348, 2
  %v8354 = vxor.u32 %v8338, 2147483648
  %v8355 = vsel %vm8353, %v8354, %v8346
  %v8356 = vsel %vm8349, %v8352, %v8355
  %v8357 = vsel %vm8347, nan, %v8356
  %v8358 = vand.u32 2147483647, %v612
  %vm8359 = vcmp.le.f32.partialorder %v8358, 0.7853982
  %vm8360 = vcmp.lt.s32.totalorder %v612, 0
  %v8361 = vand.u32 %v612, 2139095040
  %v8362 = vshrl.u32 %v8361, 23
  %v8363 = vsub.s32 %v8362, 127
  %v8364 = vand.u32 2147483647, %v612
  %v8365 = vand.u32 %v8364, 8388607
  %v8366 = vor.u32 %v8365, 8388608
  %v8367 = vsub.s32 0, %v8366
  %v8368 = vadd.s32 %v8363, 1
  %vm8369 = vcmp.gt.s32.totalorder %v8368, 0
  %v8370 = vsel %vm8369, %v8368, 0
  %v8371 = vshrl.u32 %v8370, 5
  %v8372 = vand.u32 %v8370, 31
  %v8373 = vsub.s32 32, %v8372
  %v8374 = vshrl.u32 683565275, %v8373
  %v8375 = vshll.u32 683565275, %v8372
  %v8376 = vshrl.u32 2475754826, %v8373
  %v8377 = vor.u32 %v8375, %v8376
  %v8378 = vshll.u32 2475754826, %v8372
  %v8379 = vshrl.u32 2131351028, %v8373
  %v8380 = vor.u32 %v8378, %v8379
  %v8381 = vshll.u32 2131351028, %v8372
  %v8382 = vshrl.u32 2102212464, %v8373
  %v8383 = vor.u32 %v8381, %v8382
  %v8384 = vshll.u32 2102212464, %v8372
  %v8385 = vshrl.u32 920167782, %v8373
  %v8386 = vor.u32 %v8384, %v8385
  %v8387 = vshll.u32 920167782, %v8372
  %v8388 = vshrl.u32 1326507024, %v8373
  %v8389 = vor.u32 %v8387, %v8388
  %vm8390 = vcmp.lt.s32.totalorder %v8371, 1
  %vm8391 = vcmp.lt.s32.totalorder %v8371, 2
  %vm8392 = vcmp.lt.s32.totalorder %v8371, 3
  %vm8393 = vcmp.lt.s32.totalorder %v8371, 4
  %v8394 = vsel %vm8390, %v8374, %v8377
  %v8395 = vsel %vm8393, %v8383, 2102212464
  %v8396 = vsel %vm8392, %v8380, %v8395
  %v8397 = vsel %vm8391, %v8394, %v8396
  %v8398 = vsel %vm8390, %v8377, %v8380
  %v8399 = vsel %vm8393, %v8386, 920167782
  %v8400 = vsel %vm8392, %v8383, %v8399
  %v8401 = vsel %vm8391, %v8398, %v8400
  %v8402 = vsel %vm8390, %v8380, %v8383
  %v8403 = vsel %vm8393, %v8389, 1326507024
  %v8404 = vsel %vm8392, %v8386, %v8403
  %v8405 = vsel %vm8391, %v8402, %v8404
  %v8406 = vshll.u32 %v8366, 8
  %v8407 = vand.u32 %v8406, 65535
  %v8408 = vshrl.u32 %v8406, 16
  %v8409 = vand.u32 %v8405, 65535
  %v8410 = vshrl.u32 %v8405, 16
  %v8411 = vmul.u32 %v8407, %v8409
  %v8412 = vmul.u32 %v8407, %v8410
  %v8413 = vmul.u32 %v8408, %v8409
  %v8414 = vmul.u32 %v8408, %v8410
  %v8415 = vshll.u32 %v8412, 16
  %v8416 = vshrl.u32 %v8412, 16
  %v8417 = vshll.u32 %v8413, 16
  %v8418 = vshrl.u32 %v8413, 16
  %vm8419 = vc.u32 %v8411, %v8415
  %v8420 = vsel %vm8419, 1, 0
  %v8421 = vadd.s32 %v8411, %v8415
  %v8422 = vadd.s32 %v8414, %v8420
  %vm8423 = vc.u32 %v8421, %v8417
  %v8424 = vsel %vm8423, 1, 0
  %v8425 = vadd.s32 %v8421, %v8417
  %v8426 = vadd.s32 %v8422, %v8424
  %v8427 = vadd.s32 %v8426, %v8416
  %v8428 = vadd.s32 %v8427, %v8418
  %v8429 = vand.u32 %v8406, 65535
  %v8430 = vshrl.u32 %v8406, 16
  %v8431 = vand.u32 %v8401, 65535
  %v8432 = vshrl.u32 %v8401, 16
  %v8433 = vmul.u32 %v8429, %v8431
  %v8434 = vmul.u32 %v8429, %v8432
  %v8435 = vmul.u32 %v8430, %v8431
  %v8436 = vmul.u32 %v8430, %v8432
  %v8437 = vshll.u32 %v8434, 16
  %v8438 = vshrl.u32 %v8434, 16
  %v8439 = vshll.u32 %v8435, 16
  %v8440 = vshrl.u32 %v8435, 16
  %vm8441 = vc.u32 %v8433, %v8437
  %v8442 = vsel %vm8441, 1, 0
  %v8443 = vadd.s32 %v8433, %v8437
  %v8444 = vadd.s32 %v8436, %v8442
  %vm8445 = vc.u32 %v8443, %v8439
  %v8446 = vsel %vm8445, 1, 0
  %v8447 = vadd.s32 %v8443, %v8439
  %v8448 = vadd.s32 %v8444, %v8446
  %v8449 = vadd.s32 %v8448, %v8438
  %v8450 = vadd.s32 %v8449, %v8440
  %v8451 = vmul.u32 %v8406, %v8397
  %v8452 = vadd.s32 %v8428, %v8447
  %vm8453 = vc.u32 %v8428, %v8447
  %v8454 = vadd.s32 %v8450, 1
  %v8455 = vsel %vm8453, %v8454, %v8450
  %v8456 = vadd.s32 %v8451, %v8455
  %v8457 = vadd.s32 %v8456, 536870912
  %v8458 = vshrl.u32 %v8457, 30
  %v8459 = vshll.u32 %v8458, 30
  %v8460 = vsub.s32 %v8456, %v8459
  %vm8461 = vcmp.lt.s32.totalorder %v8460, 0
  %v8462 = vsub.s32 0, %v8460
  %v8463 = vsel %vm8461, %v8462, %v8460
  %v8464 = vclz %v8463
  %v8465 = vsub.s32 %v8464, 2
  %vm8466 = vcmp.gt.s32.totalorder 0, %v8465
  %v8467 = vsel %vm8466, 0, %v8465
  %v8468 = vsub.s32 32, %v8467
  %v8469 = vshll.u32 %v8460, %v8467
  %v8470 = vshrl.u32 %v8452, %v8468
  %v8471 = vor.u32 %v8469, %v8470
  %v8472 = vsub.s32 4294967266, %v8467
  %v8473 = vadd.s32 %v8472, 127
  %v8474 = vshll.u32 %v8473, 23
  %v8475 = vor.u32 4788187, %v8474
  %v8476 = vand.u32 2147483647, %v8475
  %v8478 = vcvt.s32.f32 %v8471
  %v8479 = vmul.f32 %v8478, %v8476
  %v8480 = vxor.u32 %v8479, 2147483648
  %v8481 = vsel %vm8360, %v8480, %v8479
  %v8482 = vsub.s32 4, %v8458
  %v8483 = vsel %vm8360, %v8482, %v8458
  %v8484 = vsel %vm8359, %v612, %v8481
  %v8485 = vsel %vm8359, 0, %v8483
  %v8486 = vmul.f32 %v8484, %v8484
  %v8487 = vmul.f32 %v8486, -0.001358992
  %v8488 = vadd.f32 %v8487, 0.041655596
  %v8489 = vmul.f32 %v8486, %v8488
  %v8490 = vadd.f32 %v8489, -0.4999988
  %v8491 = vmul.f32 %v8486, %v8490
  %v8492 = vadd.f32 1.0, %v8491
  %v8493 = vmul.f32 %v8484, %v8484
  %v8494 = vmul.f32 %v8493, -0.00019511016
  %v8495 = vadd.f32 %v8494, 0.008332121
  %v8496 = vmul.f32 %v8493, %v8495
  %v8497 = vadd.f32 %v8496, -0.16666654
  %v8498 = vmul.f32 %v8493, %v8497
  %v8499 = vadd.f32 %v8498, 1.0
  %v8500 = vmul.f32 %v8499, %v8484
  %vm8501 = vweird.f32 %v612
  %v8502 = vand.u32 %v8485, 3
  %vm8503 = vcmp.lt.s32.totalorder %v8502, 2
  %vm8504 = vcmp.eq.s32.totalorder %v8502, 0
  %v8505 = vxor.u32 %v8500, 2147483648
  %v8506 = vsel %vm8504, %v8492, %v8505
  %vm8507 = vcmp.eq.s32.totalorder %v8502, 2
  %v8508 = vxor.u32 %v8492, 2147483648
  %v8509 = vsel %vm8507, %v8508, %v8500
  %v8510 = vsel %vm8503, %v8506, %v8509
  %v8511 = vsel %vm8501, nan, %v8510
  %v8512 = vand.u32 2147483647, %v613
  %vm8513 = vcmp.le.f32.partialorder %v8512, 0.7853982
  %vm8514 = vcmp.lt.s32.totalorder %v613, 0
  %v8515 = vand.u32 %v613, 2139095040
  %v8516 = vshrl.u32 %v8515, 23
  %v8517 = vsub.s32 %v8516, 127
  %v8518 = vand.u32 2147483647, %v613
  %v8519 = vand.u32 %v8518, 8388607
  %v8520 = vor.u32 %v8519, 8388608
  %v8521 = vsub.s32 0, %v8520
  %v8522 = vadd.s32 %v8517, 1
  %vm8523 = vcmp.gt.s32.totalorder %v8522, 0
  %v8524 = vsel %vm8523, %v8522, 0
  %v8525 = vshrl.u32 %v8524, 5
  %v8526 = vand.u32 %v8524, 31
  %v8527 = vsub.s32 32, %v8526
  %v8528 = vshrl.u32 683565275, %v8527
  %v8529 = vshll.u32 683565275, %v8526
  %v8530 = vshrl.u32 2475754826, %v8527
  %v8531 = vor.u32 %v8529, %v8530
  %v8532 = vshll.u32 2475754826, %v8526
  %v8533 = vshrl.u32 2131351028, %v8527
  %v8534 = vor.u32 %v8532, %v8533
  %v8535 = vshll.u32 2131351028, %v8526
  %v8536 = vshrl.u32 2102212464, %v8527
  %v8537 = vor.u32 %v8535, %v8536
  %v8538 = vshll.u32 2102212464, %v8526
  %v8539 = vshrl.u32 920167782, %v8527
  %v8540 = vor.u32 %v8538, %v8539
  %v8541 = vshll.u32 920167782, %v8526
  %v8542 = vshrl.u32 1326507024, %v8527
  %v8543 = vor.u32 %v8541, %v8542
  %vm8544 = vcmp.lt.s32.totalorder %v8525, 1
  %vm8545 = vcmp.lt.s32.totalorder %v8525, 2
  %vm8546 = vcmp.lt.s32.totalorder %v8525, 3
  %vm8547 = vcmp.lt.s32.totalorder %v8525, 4
  %v8548 = vsel %vm8544, %v8528, %v8531
  %v8549 = vsel %vm8547, %v8537, 2102212464
  %v8550 = vsel %vm8546, %v8534, %v8549
  %v8551 = vsel %vm8545, %v8548, %v8550
  %v8552 = vsel %vm8544, %v8531, %v8534
  %v8553 = vsel %vm8547, %v8540, 920167782
  %v8554 = vsel %vm8546, %v8537, %v8553
  %v8555 = vsel %vm8545, %v8552, %v8554
  %v8556 = vsel %vm8544, %v8534, %v8537
  %v8557 = vsel %vm8547, %v8543, 1326507024
  %v8558 = vsel %vm8546, %v8540, %v8557
  %v8559 = vsel %vm8545, %v8556, %v8558
  %v8560 = vshll.u32 %v8520, 8
  %v8561 = vand.u32 %v8560, 65535
  %v8562 = vshrl.u32 %v8560, 16
  %v8563 = vand.u32 %v8559, 65535
  %v8564 = vshrl.u32 %v8559, 16
  %v8565 = vmul.u32 %v8561, %v8563
  %v8566 = vmul.u32 %v8561, %v8564
  %v8567 = vmul.u32 %v8562, %v8563
  %v8568 = vmul.u32 %v8562, %v8564
  %v8569 = vshll.u32 %v8566, 16
  %v8570 = vshrl.u32 %v8566, 16
  %v8571 = vshll.u32 %v8567, 16
  %v8572 = vshrl.u32 %v8567, 16
  %vm8573 = vc.u32 %v8565, %v8569
  %v8574 = vsel %vm8573, 1, 0
  %v8575 = vadd.s32 %v8565, %v8569
  %v8576 = vadd.s32 %v8568, %v8574
  %vm8577 = vc.u32 %v8575, %v8571
  %v8578 = vsel %vm8577, 1, 0
  %v8579 = vadd.s32 %v8575, %v8571
  %v8580 = vadd.s32 %v8576, %v8578
  %v8581 = vadd.s32 %v8580, %v8570
  %v8582 = vadd.s32 %v8581, %v8572
  %v8583 = vand.u32 %v8560, 65535
  %v8584 = vshrl.u32 %v8560, 16
  %v8585 = vand.u32 %v8555, 65535
  %v8586 = vshrl.u32 %v8555, 16
  %v8587 = vmul.u32 %v8583, %v8585
  %v8588 = vmul.u32 %v8583, %v8586
  %v8589 = vmul.u32 %v8584, %v8585
  %v8590 = vmul.u32 %v8584, %v8586
  %v8591 = vshll.u32 %v8588, 16
  %v8592 = vshrl.u32 %v8588, 16
  %v8593 = vshll.u32 %v8589, 16
  %v8594 = vshrl.u32 %v8589, 16
  %vm8595 = vc.u32 %v8587, %v8591
  %v8596 = vsel %vm8595, 1, 0
  %v8597 = vadd.s32 %v8587, %v8591
  %v8598 = vadd.s32 %v8590, %v8596
  %vm8599 = vc.u32 %v8597, %v8593
  %v8600 = vsel %vm8599, 1, 0
  %v8601 = vadd.s32 %v8597, %v8593
  %v8602 = vadd.s32 %v8598, %v8600
  %v8603 = vadd.s32 %v8602, %v8592
  %v8604 = vadd.s32 %v8603, %v8594
  %v8605 = vmul.u32 %v8560, %v8551
  %v8606 = vadd.s32 %v8582, %v8601
  %vm8607 = vc.u32 %v8582, %v8601
  %v8608 = vadd.s32 %v8604, 1
  %v8609 = vsel %vm8607, %v8608, %v8604
  %v8610 = vadd.s32 %v8605, %v8609
  %v8611 = vadd.s32 %v8610, 536870912
  %v8612 = vshrl.u32 %v8611, 30
  %v8613 = vshll.u32 %v8612, 30
  %v8614 = vsub.s32 %v8610, %v8613
  %vm8615 = vcmp.lt.s32.totalorder %v8614, 0
  %v8616 = vsub.s32 0, %v8614
  %v8617 = vsel %vm8615, %v8616, %v8614
  %v8618 = vclz %v8617
  %v8619 = vsub.s32 %v8618, 2
  %vm8620 = vcmp.gt.s32.totalorder 0, %v8619
  %v8621 = vsel %vm8620, 0, %v8619
  %v8622 = vsub.s32 32, %v8621
  %v8623 = vshll.u32 %v8614, %v8621
  %v8624 = vshrl.u32 %v8606, %v8622
  %v8625 = vor.u32 %v8623, %v8624
  %v8626 = vsub.s32 4294967266, %v8621
  %v8627 = vadd.s32 %v8626, 127
  %v8628 = vshll.u32 %v8627, 23
  %v8629 = vor.u32 4788187, %v8628
  %v8630 = vand.u32 2147483647, %v8629
  %v8632 = vcvt.s32.f32 %v8625
  %v8633 = vmul.f32 %v8632, %v8630
  %v8634 = vxor.u32 %v8633, 2147483648
  %v8635 = vsel %vm8514, %v8634, %v8633
  %v8636 = vsub.s32 4, %v8612
  %v8637 = vsel %vm8514, %v8636, %v8612
  %v8638 = vsel %vm8513, %v613, %v8635
  %v8639 = vsel %vm8513, 0, %v8637
  %v8640 = vmul.f32 %v8638, %v8638
  %v8641 = vmul.f32 %v8640, -0.001358992
  %v8642 = vadd.f32 %v8641, 0.041655596
  %v8643 = vmul.f32 %v8640, %v8642
  %v8644 = vadd.f32 %v8643, -0.4999988
  %v8645 = vmul.f32 %v8640, %v8644
  %v8646 = vadd.f32 1.0, %v8645
  %v8647 = vmul.f32 %v8638, %v8638
  %v8648 = vmul.f32 %v8647, -0.00019511016
  %v8649 = vadd.f32 %v8648, 0.008332121
  %v8650 = vmul.f32 %v8647, %v8649
  %v8651 = vadd.f32 %v8650, -0.16666654
  %v8652 = vmul.f32 %v8647, %v8651
  %v8653 = vadd.f32 %v8652, 1.0
  %v8654 = vmul.f32 %v8653, %v8638
  %vm8655 = vweird.f32 %v613
  %v8656 = vand.u32 %v8639, 3
  %vm8657 = vcmp.lt.s32.totalorder %v8656, 2
  %vm8658 = vcmp.eq.s32.totalorder %v8656, 0
  %v8659 = vxor.u32 %v8654, 2147483648
  %v8660 = vsel %vm8658, %v8646, %v8659
  %vm8661 = vcmp.eq.s32.totalorder %v8656, 2
  %v8662 = vxor.u32 %v8646, 2147483648
  %v8663 = vsel %vm8661, %v8662, %v8654
  %v8664 = vsel %vm8657, %v8660, %v8663
  %v8665 = vsel %vm8655, nan, %v8664
  %v8666 = vand.u32 2147483647, %v614
  %vm8667 = vcmp.le.f32.partialorder %v8666, 0.7853982
  %vm8668 = vcmp.lt.s32.totalorder %v614, 0
  %v8669 = vand.u32 %v614, 2139095040
  %v8670 = vshrl.u32 %v8669, 23
  %v8671 = vsub.s32 %v8670, 127
  %v8672 = vand.u32 2147483647, %v614
  %v8673 = vand.u32 %v8672, 8388607
  %v8674 = vor.u32 %v8673, 8388608
  %v8675 = vsub.s32 0, %v8674
  %v8676 = vadd.s32 %v8671, 1
  %vm8677 = vcmp.gt.s32.totalorder %v8676, 0
  %v8678 = vsel %vm8677, %v8676, 0
  %v8679 = vshrl.u32 %v8678, 5
  %v8680 = vand.u32 %v8678, 31
  %v8681 = vsub.s32 32, %v8680
  %v8682 = vshrl.u32 683565275, %v8681
  %v8683 = vshll.u32 683565275, %v8680
  %v8684 = vshrl.u32 2475754826, %v8681
  %v8685 = vor.u32 %v8683, %v8684
  %v8686 = vshll.u32 2475754826, %v8680
  %v8687 = vshrl.u32 2131351028, %v8681
  %v8688 = vor.u32 %v8686, %v8687
  %v8689 = vshll.u32 2131351028, %v8680
  %v8690 = vshrl.u32 2102212464, %v8681
  %v8691 = vor.u32 %v8689, %v8690
  %v8692 = vshll.u32 2102212464, %v8680
  %v8693 = vshrl.u32 920167782, %v8681
  %v8694 = vor.u32 %v8692, %v8693
  %v8695 = vshll.u32 920167782, %v8680
  %v8696 = vshrl.u32 1326507024, %v8681
  %v8697 = vor.u32 %v8695, %v8696
  %vm8698 = vcmp.lt.s32.totalorder %v8679, 1
  %vm8699 = vcmp.lt.s32.totalorder %v8679, 2
  %vm8700 = vcmp.lt.s32.totalorder %v8679, 3
  %vm8701 = vcmp.lt.s32.totalorder %v8679, 4
  %v8702 = vsel %vm8698, %v8682, %v8685
  %v8703 = vsel %vm8701, %v8691, 2102212464
  %v8704 = vsel %vm8700, %v8688, %v8703
  %v8705 = vsel %vm8699, %v8702, %v8704
  %v8706 = vsel %vm8698, %v8685, %v8688
  %v8707 = vsel %vm8701, %v8694, 920167782
  %v8708 = vsel %vm8700, %v8691, %v8707
  %v8709 = vsel %vm8699, %v8706, %v8708
  %v8710 = vsel %vm8698, %v8688, %v8691
  %v8711 = vsel %vm8701, %v8697, 1326507024
  %v8712 = vsel %vm8700, %v8694, %v8711
  %v8713 = vsel %vm8699, %v8710, %v8712
  %v8714 = vshll.u32 %v8674, 8
  %v8715 = vand.u32 %v8714, 65535
  %v8716 = vshrl.u32 %v8714, 16
  %v8717 = vand.u32 %v8713, 65535
  %v8718 = vshrl.u32 %v8713, 16
  %v8719 = vmul.u32 %v8715, %v8717
  %v8720 = vmul.u32 %v8715, %v8718
  %v8721 = vmul.u32 %v8716, %v8717
  %v8722 = vmul.u32 %v8716, %v8718
  %v8723 = vshll.u32 %v8720, 16
  %v8724 = vshrl.u32 %v8720, 16
  %v8725 = vshll.u32 %v8721, 16
  %v8726 = vshrl.u32 %v8721, 16
  %vm8727 = vc.u32 %v8719, %v8723
  %v8728 = vsel %vm8727, 1, 0
  %v8729 = vadd.s32 %v8719, %v8723
  %v8730 = vadd.s32 %v8722, %v8728
  %vm8731 = vc.u32 %v8729, %v8725
  %v8732 = vsel %vm8731, 1, 0
  %v8733 = vadd.s32 %v8729, %v8725
  %v8734 = vadd.s32 %v8730, %v8732
  %v8735 = vadd.s32 %v8734, %v8724
  %v8736 = vadd.s32 %v8735, %v8726
  %v8737 = vand.u32 %v8714, 65535
  %v8738 = vshrl.u32 %v8714, 16
  %v8739 = vand.u32 %v8709, 65535
  %v8740 = vshrl.u32 %v8709, 16
  %v8741 = vmul.u32 %v8737, %v8739
  %v8742 = vmul.u32 %v8737, %v8740
  %v8743 = vmul.u32 %v8738, %v8739
  %v8744 = vmul.u32 %v8738, %v8740
  %v8745 = vshll.u32 %v8742, 16
  %v8746 = vshrl.u32 %v8742, 16
  %v8747 = vshll.u32 %v8743, 16
  %v8748 = vshrl.u32 %v8743, 16
  %vm8749 = vc.u32 %v8741, %v8745
  %v8750 = vsel %vm8749, 1, 0
  %v8751 = vadd.s32 %v8741, %v8745
  %v8752 = vadd.s32 %v8744, %v8750
  %vm8753 = vc.u32 %v8751, %v8747
  %v8754 = vsel %vm8753, 1, 0
  %v8755 = vadd.s32 %v8751, %v8747
  %v8756 = vadd.s32 %v8752, %v8754
  %v8757 = vadd.s32 %v8756, %v8746
  %v8758 = vadd.s32 %v8757, %v8748
  %v8759 = vmul.u32 %v8714, %v8705
  %v8760 = vadd.s32 %v8736, %v8755
  %vm8761 = vc.u32 %v8736, %v8755
  %v8762 = vadd.s32 %v8758, 1
  %v8763 = vsel %vm8761, %v8762, %v8758
  %v8764 = vadd.s32 %v8759, %v8763
  %v8765 = vadd.s32 %v8764, 536870912
  %v8766 = vshrl.u32 %v8765, 30
  %v8767 = vshll.u32 %v8766, 30
  %v8768 = vsub.s32 %v8764, %v8767
  %vm8769 = vcmp.lt.s32.totalorder %v8768, 0
  %v8770 = vsub.s32 0, %v8768
  %v8771 = vsel %vm8769, %v8770, %v8768
  %v8772 = vclz %v8771
  %v8773 = vsub.s32 %v8772, 2
  %vm8774 = vcmp.gt.s32.totalorder 0, %v8773
  %v8775 = vsel %vm8774, 0, %v8773
  %v8776 = vsub.s32 32, %v8775
  %v8777 = vshll.u32 %v8768, %v8775
  %v8778 = vshrl.u32 %v8760, %v8776
  %v8779 = vor.u32 %v8777, %v8778
  %v8780 = vsub.s32 4294967266, %v8775
  %v8781 = vadd.s32 %v8780, 127
  %v8782 = vshll.u32 %v8781, 23
  %v8783 = vor.u32 4788187, %v8782
  %v8784 = vand.u32 2147483647, %v8783
  %v8786 = vcvt.s32.f32 %v8779
  %v8787 = vmul.f32 %v8786, %v8784
  %v8788 = vxor.u32 %v8787, 2147483648
  %v8789 = vsel %vm8668, %v8788, %v8787
  %v8790 = vsub.s32 4, %v8766
  %v8791 = vsel %vm8668, %v8790, %v8766
  %v8792 = vsel %vm8667, %v614, %v8789
  %v8793 = vsel %vm8667, 0, %v8791
  %v8794 = vmul.f32 %v8792, %v8792
  %v8795 = vmul.f32 %v8794, -0.001358992
  %v8796 = vadd.f32 %v8795, 0.041655596
  %v8797 = vmul.f32 %v8794, %v8796
  %v8798 = vadd.f32 %v8797, -0.4999988
  %v8799 = vmul.f32 %v8794, %v8798
  %v8800 = vadd.f32 1.0, %v8799
  %v8801 = vmul.f32 %v8792, %v8792
  %v8802 = vmul.f32 %v8801, -0.00019511016
  %v8803 = vadd.f32 %v8802, 0.008332121
  %v8804 = vmul.f32 %v8801, %v8803
  %v8805 = vadd.f32 %v8804, -0.16666654
  %v8806 = vmul.f32 %v8801, %v8805
  %v8807 = vadd.f32 %v8806, 1.0
  %v8808 = vmul.f32 %v8807, %v8792
  %vm8809 = vweird.f32 %v614
  %v8810 = vand.u32 %v8793, 3
  %vm8811 = vcmp.lt.s32.totalorder %v8810, 2
  %vm8812 = vcmp.eq.s32.totalorder %v8810, 0
  %v8813 = vxor.u32 %v8808, 2147483648
  %v8814 = vsel %vm8812, %v8800, %v8813
  %vm8815 = vcmp.eq.s32.totalorder %v8810, 2
  %v8816 = vxor.u32 %v8800, 2147483648
  %v8817 = vsel %vm8815, %v8816, %v8808
  %v8818 = vsel %vm8811, %v8814, %v8817
  %v8819 = vsel %vm8809, nan, %v8818
  %v8820 = vand.u32 2147483647, %v615
  %vm8821 = vcmp.le.f32.partialorder %v8820, 0.7853982
  %vm8822 = vcmp.lt.s32.totalorder %v615, 0
  %v8823 = vand.u32 %v615, 2139095040
  %v8824 = vshrl.u32 %v8823, 23
  %v8825 = vsub.s32 %v8824, 127
  %v8826 = vand.u32 2147483647, %v615
  %v8827 = vand.u32 %v8826, 8388607
  %v8828 = vor.u32 %v8827, 8388608
  %v8829 = vsub.s32 0, %v8828
  %v8830 = vadd.s32 %v8825, 1
  %vm8831 = vcmp.gt.s32.totalorder %v8830, 0
  %v8832 = vsel %vm8831, %v8830, 0
  %v8833 = vshrl.u32 %v8832, 5
  %v8834 = vand.u32 %v8832, 31
  %v8835 = vsub.s32 32, %v8834
  %v8836 = vshrl.u32 683565275, %v8835
  %v8837 = vshll.u32 683565275, %v8834
  %v8838 = vshrl.u32 2475754826, %v8835
  %v8839 = vor.u32 %v8837, %v8838
  %v8840 = vshll.u32 2475754826, %v8834
  %v8841 = vshrl.u32 2131351028, %v8835
  %v8842 = vor.u32 %v8840, %v8841
  %v8843 = vshll.u32 2131351028, %v8834
  %v8844 = vshrl.u32 2102212464, %v8835
  %v8845 = vor.u32 %v8843, %v8844
  %v8846 = vshll.u32 2102212464, %v8834
  %v8847 = vshrl.u32 920167782, %v8835
  %v8848 = vor.u32 %v8846, %v8847
  %v8849 = vshll.u32 920167782, %v8834
  %v8850 = vshrl.u32 1326507024, %v8835
  %v8851 = vor.u32 %v8849, %v8850
  %vm8852 = vcmp.lt.s32.totalorder %v8833, 1
  %vm8853 = vcmp.lt.s32.totalorder %v8833, 2
  %vm8854 = vcmp.lt.s32.totalorder %v8833, 3
  %vm8855 = vcmp.lt.s32.totalorder %v8833, 4
  %v8856 = vsel %vm8852, %v8836, %v8839
  %v8857 = vsel %vm8855, %v8845, 2102212464
  %v8858 = vsel %vm8854, %v8842, %v8857
  %v8859 = vsel %vm8853, %v8856, %v8858
  %v8860 = vsel %vm8852, %v8839, %v8842
  %v8861 = vsel %vm8855, %v8848, 920167782
  %v8862 = vsel %vm8854, %v8845, %v8861
  %v8863 = vsel %vm8853, %v8860, %v8862
  %v8864 = vsel %vm8852, %v8842, %v8845
  %v8865 = vsel %vm8855, %v8851, 1326507024
  %v8866 = vsel %vm8854, %v8848, %v8865
  %v8867 = vsel %vm8853, %v8864, %v8866
  %v8868 = vshll.u32 %v8828, 8
  %v8869 = vand.u32 %v8868, 65535
  %v8870 = vshrl.u32 %v8868, 16
  %v8871 = vand.u32 %v8867, 65535
  %v8872 = vshrl.u32 %v8867, 16
  %v8873 = vmul.u32 %v8869, %v8871
  %v8874 = vmul.u32 %v8869, %v8872
  %v8875 = vmul.u32 %v8870, %v8871
  %v8876 = vmul.u32 %v8870, %v8872
  %v8877 = vshll.u32 %v8874, 16
  %v8878 = vshrl.u32 %v8874, 16
  %v8879 = vshll.u32 %v8875, 16
  %v8880 = vshrl.u32 %v8875, 16
  %vm8881 = vc.u32 %v8873, %v8877
  %v8882 = vsel %vm8881, 1, 0
  %v8883 = vadd.s32 %v8873, %v8877
  %v8884 = vadd.s32 %v8876, %v8882
  %vm8885 = vc.u32 %v8883, %v8879
  %v8886 = vsel %vm8885, 1, 0
  %v8887 = vadd.s32 %v8883, %v8879
  %v8888 = vadd.s32 %v8884, %v8886
  %v8889 = vadd.s32 %v8888, %v8878
  %v8890 = vadd.s32 %v8889, %v8880
  %v8891 = vand.u32 %v8868, 65535
  %v8892 = vshrl.u32 %v8868, 16
  %v8893 = vand.u32 %v8863, 65535
  %v8894 = vshrl.u32 %v8863, 16
  %v8895 = vmul.u32 %v8891, %v8893
  %v8896 = vmul.u32 %v8891, %v8894
  %v8897 = vmul.u32 %v8892, %v8893
  %v8898 = vmul.u32 %v8892, %v8894
  %v8899 = vshll.u32 %v8896, 16
  %v8900 = vshrl.u32 %v8896, 16
  %v8901 = vshll.u32 %v8897, 16
  %v8902 = vshrl.u32 %v8897, 16
  %vm8903 = vc.u32 %v8895, %v8899
  %v8904 = vsel %vm8903, 1, 0
  %v8905 = vadd.s32 %v8895, %v8899
  %v8906 = vadd.s32 %v8898, %v8904
  %vm8907 = vc.u32 %v8905, %v8901
  %v8908 = vsel %vm8907, 1, 0
  %v8909 = vadd.s32 %v8905, %v8901
  %v8910 = vadd.s32 %v8906, %v8908
  %v8911 = vadd.s32 %v8910, %v8900
  %v8912 = vadd.s32 %v8911, %v8902
  %v8913 = vmul.u32 %v8868, %v8859
  %v8914 = vadd.s32 %v8890, %v8909
  %vm8915 = vc.u32 %v8890, %v8909
  %v8916 = vadd.s32 %v8912, 1
  %v8917 = vsel %vm8915, %v8916, %v8912
  %v8918 = vadd.s32 %v8913, %v8917
  %v8919 = vadd.s32 %v8918, 536870912
  %v8920 = vshrl.u32 %v8919, 30
  %v8921 = vshll.u32 %v8920, 30
  %v8922 = vsub.s32 %v8918, %v8921
  %vm8923 = vcmp.lt.s32.totalorder %v8922, 0
  %v8924 = vsub.s32 0, %v8922
  %v8925 = vsel %vm8923, %v8924, %v8922
  %v8926 = vclz %v8925
  %v8927 = vsub.s32 %v8926, 2
  %vm8928 = vcmp.gt.s32.totalorder 0, %v8927
  %v8929 = vsel %vm8928, 0, %v8927
  %v8930 = vsub.s32 32, %v8929
  %v8931 = vshll.u32 %v8922, %v8929
  %v8932 = vshrl.u32 %v8914, %v8930
  %v8933 = vor.u32 %v8931, %v8932
  %v8934 = vsub.s32 4294967266, %v8929
  %v8935 = vadd.s32 %v8934, 127
  %v8936 = vshll.u32 %v8935, 23
  %v8937 = vor.u32 4788187, %v8936
  %v8938 = vand.u32 2147483647, %v8937
  %v8940 = vcvt.s32.f32 %v8933
  %v8941 = vmul.f32 %v8940, %v8938
  %v8942 = vxor.u32 %v8941, 2147483648
  %v8943 = vsel %vm8822, %v8942, %v8941
  %v8944 = vsub.s32 4, %v8920
  %v8945 = vsel %vm8822, %v8944, %v8920
  %v8946 = vsel %vm8821, %v615, %v8943
  %v8947 = vsel %vm8821, 0, %v8945
  %v8948 = vmul.f32 %v8946, %v8946
  %v8949 = vmul.f32 %v8948, -0.001358992
  %v8950 = vadd.f32 %v8949, 0.041655596
  %v8951 = vmul.f32 %v8948, %v8950
  %v8952 = vadd.f32 %v8951, -0.4999988
  %v8953 = vmul.f32 %v8948, %v8952
  %v8954 = vadd.f32 1.0, %v8953
  %v8955 = vmul.f32 %v8946, %v8946
  %v8956 = vmul.f32 %v8955, -0.00019511016
  %v8957 = vadd.f32 %v8956, 0.008332121
  %v8958 = vmul.f32 %v8955, %v8957
  %v8959 = vadd.f32 %v8958, -0.16666654
  %v8960 = vmul.f32 %v8955, %v8959
  %v8961 = vadd.f32 %v8960, 1.0
  %v8962 = vmul.f32 %v8961, %v8946
  %vm8963 = vweird.f32 %v615
  %v8964 = vand.u32 %v8947, 3
  %vm8965 = vcmp.lt.s32.totalorder %v8964, 2
  %vm8966 = vcmp.eq.s32.totalorder %v8964, 0
  %v8967 = vxor.u32 %v8962, 2147483648
  %v8968 = vsel %vm8966, %v8954, %v8967
  %vm8969 = vcmp.eq.s32.totalorder %v8964, 2
  %v8970 = vxor.u32 %v8954, 2147483648
  %v8971 = vsel %vm8969, %v8970, %v8962
  %v8972 = vsel %vm8965, %v8968, %v8971
  %v8973 = vsel %vm8963, nan, %v8972
  %v8974 = vand.u32 2147483647, %v616
  %vm8975 = vcmp.le.f32.partialorder %v8974, 0.7853982
  %vm8976 = vcmp.lt.s32.totalorder %v616, 0
  %v8977 = vand.u32 %v616, 2139095040
  %v8978 = vshrl.u32 %v8977, 23
  %v8979 = vsub.s32 %v8978, 127
  %v8980 = vand.u32 2147483647, %v616
  %v8981 = vand.u32 %v8980, 8388607
  %v8982 = vor.u32 %v8981, 8388608
  %v8983 = vsub.s32 0, %v8982
  %v8984 = vadd.s32 %v8979, 1
  %vm8985 = vcmp.gt.s32.totalorder %v8984, 0
  %v8986 = vsel %vm8985, %v8984, 0
  %v8987 = vshrl.u32 %v8986, 5
  %v8988 = vand.u32 %v8986, 31
  %v8989 = vsub.s32 32, %v8988
  %v8990 = vshrl.u32 683565275, %v8989
  %v8991 = vshll.u32 683565275, %v8988
  %v8992 = vshrl.u32 2475754826, %v8989
  %v8993 = vor.u32 %v8991, %v8992
  %v8994 = vshll.u32 2475754826, %v8988
  %v8995 = vshrl.u32 2131351028, %v8989
  %v8996 = vor.u32 %v8994, %v8995
  %v8997 = vshll.u32 2131351028, %v8988
  %v8998 = vshrl.u32 2102212464, %v8989
  %v8999 = vor.u32 %v8997, %v8998
  %v9000 = vshll.u32 2102212464, %v8988
  %v9001 = vshrl.u32 920167782, %v8989
  %v9002 = vor.u32 %v9000, %v9001
  %v9003 = vshll.u32 920167782, %v8988
  %v9004 = vshrl.u32 1326507024, %v8989
  %v9005 = vor.u32 %v9003, %v9004
  %vm9006 = vcmp.lt.s32.totalorder %v8987, 1
  %vm9007 = vcmp.lt.s32.totalorder %v8987, 2
  %vm9008 = vcmp.lt.s32.totalorder %v8987, 3
  %vm9009 = vcmp.lt.s32.totalorder %v8987, 4
  %v9010 = vsel %vm9006, %v8990, %v8993
  %v9011 = vsel %vm9009, %v8999, 2102212464
  %v9012 = vsel %vm9008, %v8996, %v9011
  %v9013 = vsel %vm9007, %v9010, %v9012
  %v9014 = vsel %vm9006, %v8993, %v8996
  %v9015 = vsel %vm9009, %v9002, 920167782
  %v9016 = vsel %vm9008, %v8999, %v9015
  %v9017 = vsel %vm9007, %v9014, %v9016
  %v9018 = vsel %vm9006, %v8996, %v8999
  %v9019 = vsel %vm9009, %v9005, 1326507024
  %v9020 = vsel %vm9008, %v9002, %v9019
  %v9021 = vsel %vm9007, %v9018, %v9020
  %v9022 = vshll.u32 %v8982, 8
  %v9023 = vand.u32 %v9022, 65535
  %v9024 = vshrl.u32 %v9022, 16
  %v9025 = vand.u32 %v9021, 65535
  %v9026 = vshrl.u32 %v9021, 16
  %v9027 = vmul.u32 %v9023, %v9025
  %v9028 = vmul.u32 %v9023, %v9026
  %v9029 = vmul.u32 %v9024, %v9025
  %v9030 = vmul.u32 %v9024, %v9026
  %v9031 = vshll.u32 %v9028, 16
  %v9032 = vshrl.u32 %v9028, 16
  %v9033 = vshll.u32 %v9029, 16
  %v9034 = vshrl.u32 %v9029, 16
  %vm9035 = vc.u32 %v9027, %v9031
  %v9036 = vsel %vm9035, 1, 0
  %v9037 = vadd.s32 %v9027, %v9031
  %v9038 = vadd.s32 %v9030, %v9036
  %vm9039 = vc.u32 %v9037, %v9033
  %v9040 = vsel %vm9039, 1, 0
  %v9041 = vadd.s32 %v9037, %v9033
  %v9042 = vadd.s32 %v9038, %v9040
  %v9043 = vadd.s32 %v9042, %v9032
  %v9044 = vadd.s32 %v9043, %v9034
  %v9045 = vand.u32 %v9022, 65535
  %v9046 = vshrl.u32 %v9022, 16
  %v9047 = vand.u32 %v9017, 65535
  %v9048 = vshrl.u32 %v9017, 16
  %v9049 = vmul.u32 %v9045, %v9047
  %v9050 = vmul.u32 %v9045, %v9048
  %v9051 = vmul.u32 %v9046, %v9047
  %v9052 = vmul.u32 %v9046, %v9048
  %v9053 = vshll.u32 %v9050, 16
  %v9054 = vshrl.u32 %v9050, 16
  %v9055 = vshll.u32 %v9051, 16
  %v9056 = vshrl.u32 %v9051, 16
  %vm9057 = vc.u32 %v9049, %v9053
  %v9058 = vsel %vm9057, 1, 0
  %v9059 = vadd.s32 %v9049, %v9053
  %v9060 = vadd.s32 %v9052, %v9058
  %vm9061 = vc.u32 %v9059, %v9055
  %v9062 = vsel %vm9061, 1, 0
  %v9063 = vadd.s32 %v9059, %v9055
  %v9064 = vadd.s32 %v9060, %v9062
  %v9065 = vadd.s32 %v9064, %v9054
  %v9066 = vadd.s32 %v9065, %v9056
  %v9067 = vmul.u32 %v9022, %v9013
  %v9068 = vadd.s32 %v9044, %v9063
  %vm9069 = vc.u32 %v9044, %v9063
  %v9070 = vadd.s32 %v9066, 1
  %v9071 = vsel %vm9069, %v9070, %v9066
  %v9072 = vadd.s32 %v9067, %v9071
  %v9073 = vadd.s32 %v9072, 536870912
  %v9074 = vshrl.u32 %v9073, 30
  %v9075 = vshll.u32 %v9074, 30
  %v9076 = vsub.s32 %v9072, %v9075
  %vm9077 = vcmp.lt.s32.totalorder %v9076, 0
  %v9078 = vsub.s32 0, %v9076
  %v9079 = vsel %vm9077, %v9078, %v9076
  %v9080 = vclz %v9079
  %v9081 = vsub.s32 %v9080, 2
  %vm9082 = vcmp.gt.s32.totalorder 0, %v9081
  %v9083 = vsel %vm9082, 0, %v9081
  %v9084 = vsub.s32 32, %v9083
  %v9085 = vshll.u32 %v9076, %v9083
  %v9086 = vshrl.u32 %v9068, %v9084
  %v9087 = vor.u32 %v9085, %v9086
  %v9088 = vsub.s32 4294967266, %v9083
  %v9089 = vadd.s32 %v9088, 127
  %v9090 = vshll.u32 %v9089, 23
  %v9091 = vor.u32 4788187, %v9090
  %v9092 = vand.u32 2147483647, %v9091
  %v9094 = vcvt.s32.f32 %v9087
  %v9095 = vmul.f32 %v9094, %v9092
  %v9096 = vxor.u32 %v9095, 2147483648
  %v9097 = vsel %vm8976, %v9096, %v9095
  %v9098 = vsub.s32 4, %v9074
  %v9099 = vsel %vm8976, %v9098, %v9074
  %v9100 = vsel %vm8975, %v616, %v9097
  %v9101 = vsel %vm8975, 0, %v9099
  %v9102 = vmul.f32 %v9100, %v9100
  %v9103 = vmul.f32 %v9102, -0.001358992
  %v9104 = vadd.f32 %v9103, 0.041655596
  %v9105 = vmul.f32 %v9102, %v9104
  %v9106 = vadd.f32 %v9105, -0.4999988
  %v9107 = vmul.f32 %v9102, %v9106
  %v9108 = vadd.f32 1.0, %v9107
  %v9109 = vmul.f32 %v9100, %v9100
  %v9110 = vmul.f32 %v9109, -0.00019511016
  %v9111 = vadd.f32 %v9110, 0.008332121
  %v9112 = vmul.f32 %v9109, %v9111
  %v9113 = vadd.f32 %v9112, -0.16666654
  %v9114 = vmul.f32 %v9109, %v9113
  %v9115 = vadd.f32 %v9114, 1.0
  %v9116 = vmul.f32 %v9115, %v9100
  %vm9117 = vweird.f32 %v616
  %v9118 = vand.u32 %v9101, 3
  %vm9119 = vcmp.lt.s32.totalorder %v9118, 2
  %vm9120 = vcmp.eq.s32.totalorder %v9118, 0
  %v9121 = vxor.u32 %v9116, 2147483648
  %v9122 = vsel %vm9120, %v9108, %v9121
  %vm9123 = vcmp.eq.s32.totalorder %v9118, 2
  %v9124 = vxor.u32 %v9108, 2147483648
  %v9125 = vsel %vm9123, %v9124, %v9116
  %v9126 = vsel %vm9119, %v9122, %v9125
  %v9127 = vsel %vm9117, nan, %v9126
  %v9128 = vand.u32 2147483647, %v617
  %vm9129 = vcmp.le.f32.partialorder %v9128, 0.7853982
  %vm9130 = vcmp.lt.s32.totalorder %v617, 0
  %v9131 = vand.u32 %v617, 2139095040
  %v9132 = vshrl.u32 %v9131, 23
  %v9133 = vsub.s32 %v9132, 127
  %v9134 = vand.u32 2147483647, %v617
  %v9135 = vand.u32 %v9134, 8388607
  %v9136 = vor.u32 %v9135, 8388608
  %v9137 = vsub.s32 0, %v9136
  %v9138 = vadd.s32 %v9133, 1
  %vm9139 = vcmp.gt.s32.totalorder %v9138, 0
  %v9140 = vsel %vm9139, %v9138, 0
  %v9141 = vshrl.u32 %v9140, 5
  %v9142 = vand.u32 %v9140, 31
  %v9143 = vsub.s32 32, %v9142
  %v9144 = vshrl.u32 683565275, %v9143
  %v9145 = vshll.u32 683565275, %v9142
  %v9146 = vshrl.u32 2475754826, %v9143
  %v9147 = vor.u32 %v9145, %v9146
  %v9148 = vshll.u32 2475754826, %v9142
  %v9149 = vshrl.u32 2131351028, %v9143
  %v9150 = vor.u32 %v9148, %v9149
  %v9151 = vshll.u32 2131351028, %v9142
  %v9152 = vshrl.u32 2102212464, %v9143
  %v9153 = vor.u32 %v9151, %v9152
  %v9154 = vshll.u32 2102212464, %v9142
  %v9155 = vshrl.u32 920167782, %v9143
  %v9156 = vor.u32 %v9154, %v9155
  %v9157 = vshll.u32 920167782, %v9142
  %v9158 = vshrl.u32 1326507024, %v9143
  %v9159 = vor.u32 %v9157, %v9158
  %vm9160 = vcmp.lt.s32.totalorder %v9141, 1
  %vm9161 = vcmp.lt.s32.totalorder %v9141, 2
  %vm9162 = vcmp.lt.s32.totalorder %v9141, 3
  %vm9163 = vcmp.lt.s32.totalorder %v9141, 4
  %v9164 = vsel %vm9160, %v9144, %v9147
  %v9165 = vsel %vm9163, %v9153, 2102212464
  %v9166 = vsel %vm9162, %v9150, %v9165
  %v9167 = vsel %vm9161, %v9164, %v9166
  %v9168 = vsel %vm9160, %v9147, %v9150
  %v9169 = vsel %vm9163, %v9156, 920167782
  %v9170 = vsel %vm9162, %v9153, %v9169
  %v9171 = vsel %vm9161, %v9168, %v9170
  %v9172 = vsel %vm9160, %v9150, %v9153
  %v9173 = vsel %vm9163, %v9159, 1326507024
  %v9174 = vsel %vm9162, %v9156, %v9173
  %v9175 = vsel %vm9161, %v9172, %v9174
  %v9176 = vshll.u32 %v9136, 8
  %v9177 = vand.u32 %v9176, 65535
  %v9178 = vshrl.u32 %v9176, 16
  %v9179 = vand.u32 %v9175, 65535
  %v9180 = vshrl.u32 %v9175, 16
  %v9181 = vmul.u32 %v9177, %v9179
  %v9182 = vmul.u32 %v9177, %v9180
  %v9183 = vmul.u32 %v9178, %v9179
  %v9184 = vmul.u32 %v9178, %v9180
  %v9185 = vshll.u32 %v9182, 16
  %v9186 = vshrl.u32 %v9182, 16
  %v9187 = vshll.u32 %v9183, 16
  %v9188 = vshrl.u32 %v9183, 16
  %vm9189 = vc.u32 %v9181, %v9185
  %v9190 = vsel %vm9189, 1, 0
  %v9191 = vadd.s32 %v9181, %v9185
  %v9192 = vadd.s32 %v9184, %v9190
  %vm9193 = vc.u32 %v9191, %v9187
  %v9194 = vsel %vm9193, 1, 0
  %v9195 = vadd.s32 %v9191, %v9187
  %v9196 = vadd.s32 %v9192, %v9194
  %v9197 = vadd.s32 %v9196, %v9186
  %v9198 = vadd.s32 %v9197, %v9188
  %v9199 = vand.u32 %v9176, 65535
  %v9200 = vshrl.u32 %v9176, 16
  %v9201 = vand.u32 %v9171, 65535
  %v9202 = vshrl.u32 %v9171, 16
  %v9203 = vmul.u32 %v9199, %v9201
  %v9204 = vmul.u32 %v9199, %v9202
  %v9205 = vmul.u32 %v9200, %v9201
  %v9206 = vmul.u32 %v9200, %v9202
  %v9207 = vshll.u32 %v9204, 16
  %v9208 = vshrl.u32 %v9204, 16
  %v9209 = vshll.u32 %v9205, 16
  %v9210 = vshrl.u32 %v9205, 16
  %vm9211 = vc.u32 %v9203, %v9207
  %v9212 = vsel %vm9211, 1, 0
  %v9213 = vadd.s32 %v9203, %v9207
  %v9214 = vadd.s32 %v9206, %v9212
  %vm9215 = vc.u32 %v9213, %v9209
  %v9216 = vsel %vm9215, 1, 0
  %v9217 = vadd.s32 %v9213, %v9209
  %v9218 = vadd.s32 %v9214, %v9216
  %v9219 = vadd.s32 %v9218, %v9208
  %v9220 = vadd.s32 %v9219, %v9210
  %v9221 = vmul.u32 %v9176, %v9167
  %v9222 = vadd.s32 %v9198, %v9217
  %vm9223 = vc.u32 %v9198, %v9217
  %v9224 = vadd.s32 %v9220, 1
  %v9225 = vsel %vm9223, %v9224, %v9220
  %v9226 = vadd.s32 %v9221, %v9225
  %v9227 = vadd.s32 %v9226, 536870912
  %v9228 = vshrl.u32 %v9227, 30
  %v9229 = vshll.u32 %v9228, 30
  %v9230 = vsub.s32 %v9226, %v9229
  %vm9231 = vcmp.lt.s32.totalorder %v9230, 0
  %v9232 = vsub.s32 0, %v9230
  %v9233 = vsel %vm9231, %v9232, %v9230
  %v9234 = vclz %v9233
  %v9235 = vsub.s32 %v9234, 2
  %vm9236 = vcmp.gt.s32.totalorder 0, %v9235
  %v9237 = vsel %vm9236, 0, %v9235
  %v9238 = vsub.s32 32, %v9237
  %v9239 = vshll.u32 %v9230, %v9237
  %v9240 = vshrl.u32 %v9222, %v9238
  %v9241 = vor.u32 %v9239, %v9240
  %v9242 = vsub.s32 4294967266, %v9237
  %v9243 = vadd.s32 %v9242, 127
  %v9244 = vshll.u32 %v9243, 23
  %v9245 = vor.u32 4788187, %v9244
  %v9246 = vand.u32 2147483647, %v9245
  %v9248 = vcvt.s32.f32 %v9241
  %v9249 = vmul.f32 %v9248, %v9246
  %v9250 = vxor.u32 %v9249, 2147483648
  %v9251 = vsel %vm9130, %v9250, %v9249
  %v9252 = vsub.s32 4, %v9228
  %v9253 = vsel %vm9130, %v9252, %v9228
  %v9254 = vsel %vm9129, %v617, %v9251
  %v9255 = vsel %vm9129, 0, %v9253
  %v9256 = vmul.f32 %v9254, %v9254
  %v9257 = vmul.f32 %v9256, -0.001358992
  %v9258 = vadd.f32 %v9257, 0.041655596
  %v9259 = vmul.f32 %v9256, %v9258
  %v9260 = vadd.f32 %v9259, -0.4999988
  %v9261 = vmul.f32 %v9256, %v9260
  %v9262 = vadd.f32 1.0, %v9261
  %v9263 = vmul.f32 %v9254, %v9254
  %v9264 = vmul.f32 %v9263, -0.00019511016
  %v9265 = vadd.f32 %v9264, 0.008332121
  %v9266 = vmul.f32 %v9263, %v9265
  %v9267 = vadd.f32 %v9266, -0.16666654
  %v9268 = vmul.f32 %v9263, %v9267
  %v9269 = vadd.f32 %v9268, 1.0
  %v9270 = vmul.f32 %v9269, %v9254
  %vm9271 = vweird.f32 %v617
  %v9272 = vand.u32 %v9255, 3
  %vm9273 = vcmp.lt.s32.totalorder %v9272, 2
  %vm9274 = vcmp.eq.s32.totalorder %v9272, 0
  %v9275 = vxor.u32 %v9270, 2147483648
  %v9276 = vsel %vm9274, %v9262, %v9275
  %vm9277 = vcmp.eq.s32.totalorder %v9272, 2
  %v9278 = vxor.u32 %v9262, 2147483648
  %v9279 = vsel %vm9277, %v9278, %v9270
  %v9280 = vsel %vm9273, %v9276, %v9279
  %v9281 = vsel %vm9271, nan, %v9280
  %v9282 = vand.u32 2147483647, %v618
  %vm9283 = vcmp.le.f32.partialorder %v9282, 0.7853982
  %vm9284 = vcmp.lt.s32.totalorder %v618, 0
  %v9285 = vand.u32 %v618, 2139095040
  %v9286 = vshrl.u32 %v9285, 23
  %v9287 = vsub.s32 %v9286, 127
  %v9288 = vand.u32 2147483647, %v618
  %v9289 = vand.u32 %v9288, 8388607
  %v9290 = vor.u32 %v9289, 8388608
  %v9291 = vsub.s32 0, %v9290
  %v9292 = vadd.s32 %v9287, 1
  %vm9293 = vcmp.gt.s32.totalorder %v9292, 0
  %v9294 = vsel %vm9293, %v9292, 0
  %v9295 = vshrl.u32 %v9294, 5
  %v9296 = vand.u32 %v9294, 31
  %v9297 = vsub.s32 32, %v9296
  %v9298 = vshrl.u32 683565275, %v9297
  %v9299 = vshll.u32 683565275, %v9296
  %v9300 = vshrl.u32 2475754826, %v9297
  %v9301 = vor.u32 %v9299, %v9300
  %v9302 = vshll.u32 2475754826, %v9296
  %v9303 = vshrl.u32 2131351028, %v9297
  %v9304 = vor.u32 %v9302, %v9303
  %v9305 = vshll.u32 2131351028, %v9296
  %v9306 = vshrl.u32 2102212464, %v9297
  %v9307 = vor.u32 %v9305, %v9306
  %v9308 = vshll.u32 2102212464, %v9296
  %v9309 = vshrl.u32 920167782, %v9297
  %v9310 = vor.u32 %v9308, %v9309
  %v9311 = vshll.u32 920167782, %v9296
  %v9312 = vshrl.u32 1326507024, %v9297
  %v9313 = vor.u32 %v9311, %v9312
  %vm9314 = vcmp.lt.s32.totalorder %v9295, 1
  %vm9315 = vcmp.lt.s32.totalorder %v9295, 2
  %vm9316 = vcmp.lt.s32.totalorder %v9295, 3
  %vm9317 = vcmp.lt.s32.totalorder %v9295, 4
  %v9318 = vsel %vm9314, %v9298, %v9301
  %v9319 = vsel %vm9317, %v9307, 2102212464
  %v9320 = vsel %vm9316, %v9304, %v9319
  %v9321 = vsel %vm9315, %v9318, %v9320
  %v9322 = vsel %vm9314, %v9301, %v9304
  %v9323 = vsel %vm9317, %v9310, 920167782
  %v9324 = vsel %vm9316, %v9307, %v9323
  %v9325 = vsel %vm9315, %v9322, %v9324
  %v9326 = vsel %vm9314, %v9304, %v9307
  %v9327 = vsel %vm9317, %v9313, 1326507024
  %v9328 = vsel %vm9316, %v9310, %v9327
  %v9329 = vsel %vm9315, %v9326, %v9328
  %v9330 = vshll.u32 %v9290, 8
  %v9331 = vand.u32 %v9330, 65535
  %v9332 = vshrl.u32 %v9330, 16
  %v9333 = vand.u32 %v9329, 65535
  %v9334 = vshrl.u32 %v9329, 16
  %v9335 = vmul.u32 %v9331, %v9333
  %v9336 = vmul.u32 %v9331, %v9334
  %v9337 = vmul.u32 %v9332, %v9333
  %v9338 = vmul.u32 %v9332, %v9334
  %v9339 = vshll.u32 %v9336, 16
  %v9340 = vshrl.u32 %v9336, 16
  %v9341 = vshll.u32 %v9337, 16
  %v9342 = vshrl.u32 %v9337, 16
  %vm9343 = vc.u32 %v9335, %v9339
  %v9344 = vsel %vm9343, 1, 0
  %v9345 = vadd.s32 %v9335, %v9339
  %v9346 = vadd.s32 %v9338, %v9344
  %vm9347 = vc.u32 %v9345, %v9341
  %v9348 = vsel %vm9347, 1, 0
  %v9349 = vadd.s32 %v9345, %v9341
  %v9350 = vadd.s32 %v9346, %v9348
  %v9351 = vadd.s32 %v9350, %v9340
  %v9352 = vadd.s32 %v9351, %v9342
  %v9353 = vand.u32 %v9330, 65535
  %v9354 = vshrl.u32 %v9330, 16
  %v9355 = vand.u32 %v9325, 65535
  %v9356 = vshrl.u32 %v9325, 16
  %v9357 = vmul.u32 %v9353, %v9355
  %v9358 = vmul.u32 %v9353, %v9356
  %v9359 = vmul.u32 %v9354, %v9355
  %v9360 = vmul.u32 %v9354, %v9356
  %v9361 = vshll.u32 %v9358, 16
  %v9362 = vshrl.u32 %v9358, 16
  %v9363 = vshll.u32 %v9359, 16
  %v9364 = vshrl.u32 %v9359, 16
  %vm9365 = vc.u32 %v9357, %v9361
  %v9366 = vsel %vm9365, 1, 0
  %v9367 = vadd.s32 %v9357, %v9361
  %v9368 = vadd.s32 %v9360, %v9366
  %vm9369 = vc.u32 %v9367, %v9363
  %v9370 = vsel %vm9369, 1, 0
  %v9371 = vadd.s32 %v9367, %v9363
  %v9372 = vadd.s32 %v9368, %v9370
  %v9373 = vadd.s32 %v9372, %v9362
  %v9374 = vadd.s32 %v9373, %v9364
  %v9375 = vmul.u32 %v9330, %v9321
  %v9376 = vadd.s32 %v9352, %v9371
  %vm9377 = vc.u32 %v9352, %v9371
  %v9378 = vadd.s32 %v9374, 1
  %v9379 = vsel %vm9377, %v9378, %v9374
  %v9380 = vadd.s32 %v9375, %v9379
  %v9381 = vadd.s32 %v9380, 536870912
  %v9382 = vshrl.u32 %v9381, 30
  %v9383 = vshll.u32 %v9382, 30
  %v9384 = vsub.s32 %v9380, %v9383
  %vm9385 = vcmp.lt.s32.totalorder %v9384, 0
  %v9386 = vsub.s32 0, %v9384
  %v9387 = vsel %vm9385, %v9386, %v9384
  %v9388 = vclz %v9387
  %v9389 = vsub.s32 %v9388, 2
  %vm9390 = vcmp.gt.s32.totalorder 0, %v9389
  %v9391 = vsel %vm9390, 0, %v9389
  %v9392 = vsub.s32 32, %v9391
  %v9393 = vshll.u32 %v9384, %v9391
  %v9394 = vshrl.u32 %v9376, %v9392
  %v9395 = vor.u32 %v9393, %v9394
  %v9396 = vsub.s32 4294967266, %v9391
  %v9397 = vadd.s32 %v9396, 127
  %v9398 = vshll.u32 %v9397, 23
  %v9399 = vor.u32 4788187, %v9398
  %v9400 = vand.u32 2147483647, %v9399
  %v9402 = vcvt.s32.f32 %v9395
  %v9403 = vmul.f32 %v9402, %v9400
  %v9404 = vxor.u32 %v9403, 2147483648
  %v9405 = vsel %vm9284, %v9404, %v9403
  %v9406 = vsub.s32 4, %v9382
  %v9407 = vsel %vm9284, %v9406, %v9382
  %v9408 = vsel %vm9283, %v618, %v9405
  %v9409 = vsel %vm9283, 0, %v9407
  %v9410 = vmul.f32 %v9408, %v9408
  %v9411 = vmul.f32 %v9410, -0.001358992
  %v9412 = vadd.f32 %v9411, 0.041655596
  %v9413 = vmul.f32 %v9410, %v9412
  %v9414 = vadd.f32 %v9413, -0.4999988
  %v9415 = vmul.f32 %v9410, %v9414
  %v9416 = vadd.f32 1.0, %v9415
  %v9417 = vmul.f32 %v9408, %v9408
  %v9418 = vmul.f32 %v9417, -0.00019511016
  %v9419 = vadd.f32 %v9418, 0.008332121
  %v9420 = vmul.f32 %v9417, %v9419
  %v9421 = vadd.f32 %v9420, -0.16666654
  %v9422 = vmul.f32 %v9417, %v9421
  %v9423 = vadd.f32 %v9422, 1.0
  %v9424 = vmul.f32 %v9423, %v9408
  %vm9425 = vweird.f32 %v618
  %v9426 = vand.u32 %v9409, 3
  %vm9427 = vcmp.lt.s32.totalorder %v9426, 2
  %vm9428 = vcmp.eq.s32.totalorder %v9426, 0
  %v9429 = vxor.u32 %v9424, 2147483648
  %v9430 = vsel %vm9428, %v9416, %v9429
  %vm9431 = vcmp.eq.s32.totalorder %v9426, 2
  %v9432 = vxor.u32 %v9416, 2147483648
  %v9433 = vsel %vm9431, %v9432, %v9424
  %v9434 = vsel %vm9427, %v9430, %v9433
  %v9435 = vsel %vm9425, nan, %v9434
  %v9436 = vand.u32 2147483647, %v619
  %vm9437 = vcmp.le.f32.partialorder %v9436, 0.7853982
  %vm9438 = vcmp.lt.s32.totalorder %v619, 0
  %v9439 = vand.u32 %v619, 2139095040
  %v9440 = vshrl.u32 %v9439, 23
  %v9441 = vsub.s32 %v9440, 127
  %v9442 = vand.u32 2147483647, %v619
  %v9443 = vand.u32 %v9442, 8388607
  %v9444 = vor.u32 %v9443, 8388608
  %v9445 = vsub.s32 0, %v9444
  %v9446 = vadd.s32 %v9441, 1
  %vm9447 = vcmp.gt.s32.totalorder %v9446, 0
  %v9448 = vsel %vm9447, %v9446, 0
  %v9449 = vshrl.u32 %v9448, 5
  %v9450 = vand.u32 %v9448, 31
  %v9451 = vsub.s32 32, %v9450
  %v9452 = vshrl.u32 683565275, %v9451
  %v9453 = vshll.u32 683565275, %v9450
  %v9454 = vshrl.u32 2475754826, %v9451
  %v9455 = vor.u32 %v9453, %v9454
  %v9456 = vshll.u32 2475754826, %v9450
  %v9457 = vshrl.u32 2131351028, %v9451
  %v9458 = vor.u32 %v9456, %v9457
  %v9459 = vshll.u32 2131351028, %v9450
  %v9460 = vshrl.u32 2102212464, %v9451
  %v9461 = vor.u32 %v9459, %v9460
  %v9462 = vshll.u32 2102212464, %v9450
  %v9463 = vshrl.u32 920167782, %v9451
  %v9464 = vor.u32 %v9462, %v9463
  %v9465 = vshll.u32 920167782, %v9450
  %v9466 = vshrl.u32 1326507024, %v9451
  %v9467 = vor.u32 %v9465, %v9466
  %vm9468 = vcmp.lt.s32.totalorder %v9449, 1
  %vm9469 = vcmp.lt.s32.totalorder %v9449, 2
  %vm9470 = vcmp.lt.s32.totalorder %v9449, 3
  %vm9471 = vcmp.lt.s32.totalorder %v9449, 4
  %v9472 = vsel %vm9468, %v9452, %v9455
  %v9473 = vsel %vm9471, %v9461, 2102212464
  %v9474 = vsel %vm9470, %v9458, %v9473
  %v9475 = vsel %vm9469, %v9472, %v9474
  %v9476 = vsel %vm9468, %v9455, %v9458
  %v9477 = vsel %vm9471, %v9464, 920167782
  %v9478 = vsel %vm9470, %v9461, %v9477
  %v9479 = vsel %vm9469, %v9476, %v9478
  %v9480 = vsel %vm9468, %v9458, %v9461
  %v9481 = vsel %vm9471, %v9467, 1326507024
  %v9482 = vsel %vm9470, %v9464, %v9481
  %v9483 = vsel %vm9469, %v9480, %v9482
  %v9484 = vshll.u32 %v9444, 8
  %v9485 = vand.u32 %v9484, 65535
  %v9486 = vshrl.u32 %v9484, 16
  %v9487 = vand.u32 %v9483, 65535
  %v9488 = vshrl.u32 %v9483, 16
  %v9489 = vmul.u32 %v9485, %v9487
  %v9490 = vmul.u32 %v9485, %v9488
  %v9491 = vmul.u32 %v9486, %v9487
  %v9492 = vmul.u32 %v9486, %v9488
  %v9493 = vshll.u32 %v9490, 16
  %v9494 = vshrl.u32 %v9490, 16
  %v9495 = vshll.u32 %v9491, 16
  %v9496 = vshrl.u32 %v9491, 16
  %vm9497 = vc.u32 %v9489, %v9493
  %v9498 = vsel %vm9497, 1, 0
  %v9499 = vadd.s32 %v9489, %v9493
  %v9500 = vadd.s32 %v9492, %v9498
  %vm9501 = vc.u32 %v9499, %v9495
  %v9502 = vsel %vm9501, 1, 0
  %v9503 = vadd.s32 %v9499, %v9495
  %v9504 = vadd.s32 %v9500, %v9502
  %v9505 = vadd.s32 %v9504, %v9494
  %v9506 = vadd.s32 %v9505, %v9496
  %v9507 = vand.u32 %v9484, 65535
  %v9508 = vshrl.u32 %v9484, 16
  %v9509 = vand.u32 %v9479, 65535
  %v9510 = vshrl.u32 %v9479, 16
  %v9511 = vmul.u32 %v9507, %v9509
  %v9512 = vmul.u32 %v9507, %v9510
  %v9513 = vmul.u32 %v9508, %v9509
  %v9514 = vmul.u32 %v9508, %v9510
  %v9515 = vshll.u32 %v9512, 16
  %v9516 = vshrl.u32 %v9512, 16
  %v9517 = vshll.u32 %v9513, 16
  %v9518 = vshrl.u32 %v9513, 16
  %vm9519 = vc.u32 %v9511, %v9515
  %v9520 = vsel %vm9519, 1, 0
  %v9521 = vadd.s32 %v9511, %v9515
  %v9522 = vadd.s32 %v9514, %v9520
  %vm9523 = vc.u32 %v9521, %v9517
  %v9524 = vsel %vm9523, 1, 0
  %v9525 = vadd.s32 %v9521, %v9517
  %v9526 = vadd.s32 %v9522, %v9524
  %v9527 = vadd.s32 %v9526, %v9516
  %v9528 = vadd.s32 %v9527, %v9518
  %v9529 = vmul.u32 %v9484, %v9475
  %v9530 = vadd.s32 %v9506, %v9525
  %vm9531 = vc.u32 %v9506, %v9525
  %v9532 = vadd.s32 %v9528, 1
  %v9533 = vsel %vm9531, %v9532, %v9528
  %v9534 = vadd.s32 %v9529, %v9533
  %v9535 = vadd.s32 %v9534, 536870912
  %v9536 = vshrl.u32 %v9535, 30
  %v9537 = vshll.u32 %v9536, 30
  %v9538 = vsub.s32 %v9534, %v9537
  %vm9539 = vcmp.lt.s32.totalorder %v9538, 0
  %v9540 = vsub.s32 0, %v9538
  %v9541 = vsel %vm9539, %v9540, %v9538
  %v9542 = vclz %v9541
  %v9543 = vsub.s32 %v9542, 2
  %vm9544 = vcmp.gt.s32.totalorder 0, %v9543
  %v9545 = vsel %vm9544, 0, %v9543
  %v9546 = vsub.s32 32, %v9545
  %v9547 = vshll.u32 %v9538, %v9545
  %v9548 = vshrl.u32 %v9530, %v9546
  %v9549 = vor.u32 %v9547, %v9548
  %v9550 = vsub.s32 4294967266, %v9545
  %v9551 = vadd.s32 %v9550, 127
  %v9552 = vshll.u32 %v9551, 23
  %v9553 = vor.u32 4788187, %v9552
  %v9554 = vand.u32 2147483647, %v9553
  %v9556 = vcvt.s32.f32 %v9549
  %v9557 = vmul.f32 %v9556, %v9554
  %v9558 = vxor.u32 %v9557, 2147483648
  %v9559 = vsel %vm9438, %v9558, %v9557
  %v9560 = vsub.s32 4, %v9536
  %v9561 = vsel %vm9438, %v9560, %v9536
  %v9562 = vsel %vm9437, %v619, %v9559
  %v9563 = vsel %vm9437, 0, %v9561
  %v9564 = vmul.f32 %v9562, %v9562
  %v9565 = vmul.f32 %v9564, -0.001358992
  %v9566 = vadd.f32 %v9565, 0.041655596
  %v9567 = vmul.f32 %v9564, %v9566
  %v9568 = vadd.f32 %v9567, -0.4999988
  %v9569 = vmul.f32 %v9564, %v9568
  %v9570 = vadd.f32 1.0, %v9569
  %v9571 = vmul.f32 %v9562, %v9562
  %v9572 = vmul.f32 %v9571, -0.00019511016
  %v9573 = vadd.f32 %v9572, 0.008332121
  %v9574 = vmul.f32 %v9571, %v9573
  %v9575 = vadd.f32 %v9574, -0.16666654
  %v9576 = vmul.f32 %v9571, %v9575
  %v9577 = vadd.f32 %v9576, 1.0
  %v9578 = vmul.f32 %v9577, %v9562
  %vm9579 = vweird.f32 %v619
  %v9580 = vand.u32 %v9563, 3
  %vm9581 = vcmp.lt.s32.totalorder %v9580, 2
  %vm9582 = vcmp.eq.s32.totalorder %v9580, 0
  %v9583 = vxor.u32 %v9578, 2147483648
  %v9584 = vsel %vm9582, %v9570, %v9583
  %vm9585 = vcmp.eq.s32.totalorder %v9580, 2
  %v9586 = vxor.u32 %v9570, 2147483648
  %v9587 = vsel %vm9585, %v9586, %v9578
  %v9588 = vsel %vm9581, %v9584, %v9587
  %v9589 = vsel %vm9579, nan, %v9588
  %v9590 = vand.u32 2147483647, %v620
  %vm9591 = vcmp.le.f32.partialorder %v9590, 0.7853982
  %vm9592 = vcmp.lt.s32.totalorder %v620, 0
  %v9593 = vand.u32 %v620, 2139095040
  %v9594 = vshrl.u32 %v9593, 23
  %v9595 = vsub.s32 %v9594, 127
  %v9596 = vand.u32 2147483647, %v620
  %v9597 = vand.u32 %v9596, 8388607
  %v9598 = vor.u32 %v9597, 8388608
  %v9599 = vsub.s32 0, %v9598
  %v9600 = vadd.s32 %v9595, 1
  %vm9601 = vcmp.gt.s32.totalorder %v9600, 0
  %v9602 = vsel %vm9601, %v9600, 0
  %v9603 = vshrl.u32 %v9602, 5
  %v9604 = vand.u32 %v9602, 31
  %v9605 = vsub.s32 32, %v9604
  %v9606 = vshrl.u32 683565275, %v9605
  %v9607 = vshll.u32 683565275, %v9604
  %v9608 = vshrl.u32 2475754826, %v9605
  %v9609 = vor.u32 %v9607, %v9608
  %v9610 = vshll.u32 2475754826, %v9604
  %v9611 = vshrl.u32 2131351028, %v9605
  %v9612 = vor.u32 %v9610, %v9611
  %v9613 = vshll.u32 2131351028, %v9604
  %v9614 = vshrl.u32 2102212464, %v9605
  %v9615 = vor.u32 %v9613, %v9614
  %v9616 = vshll.u32 2102212464, %v9604
  %v9617 = vshrl.u32 920167782, %v9605
  %v9618 = vor.u32 %v9616, %v9617
  %v9619 = vshll.u32 920167782, %v9604
  %v9620 = vshrl.u32 1326507024, %v9605
  %v9621 = vor.u32 %v9619, %v9620
  %vm9622 = vcmp.lt.s32.totalorder %v9603, 1
  %vm9623 = vcmp.lt.s32.totalorder %v9603, 2
  %vm9624 = vcmp.lt.s32.totalorder %v9603, 3
  %vm9625 = vcmp.lt.s32.totalorder %v9603, 4
  %v9626 = vsel %vm9622, %v9606, %v9609
  %v9627 = vsel %vm9625, %v9615, 2102212464
  %v9628 = vsel %vm9624, %v9612, %v9627
  %v9629 = vsel %vm9623, %v9626, %v9628
  %v9630 = vsel %vm9622, %v9609, %v9612
  %v9631 = vsel %vm9625, %v9618, 920167782
  %v9632 = vsel %vm9624, %v9615, %v9631
  %v9633 = vsel %vm9623, %v9630, %v9632
  %v9634 = vsel %vm9622, %v9612, %v9615
  %v9635 = vsel %vm9625, %v9621, 1326507024
  %v9636 = vsel %vm9624, %v9618, %v9635
  %v9637 = vsel %vm9623, %v9634, %v9636
  %v9638 = vshll.u32 %v9598, 8
  %v9639 = vand.u32 %v9638, 65535
  %v9640 = vshrl.u32 %v9638, 16
  %v9641 = vand.u32 %v9637, 65535
  %v9642 = vshrl.u32 %v9637, 16
  %v9643 = vmul.u32 %v9639, %v9641
  %v9644 = vmul.u32 %v9639, %v9642
  %v9645 = vmul.u32 %v9640, %v9641
  %v9646 = vmul.u32 %v9640, %v9642
  %v9647 = vshll.u32 %v9644, 16
  %v9648 = vshrl.u32 %v9644, 16
  %v9649 = vshll.u32 %v9645, 16
  %v9650 = vshrl.u32 %v9645, 16
  %vm9651 = vc.u32 %v9643, %v9647
  %v9652 = vsel %vm9651, 1, 0
  %v9653 = vadd.s32 %v9643, %v9647
  %v9654 = vadd.s32 %v9646, %v9652
  %vm9655 = vc.u32 %v9653, %v9649
  %v9656 = vsel %vm9655, 1, 0
  %v9657 = vadd.s32 %v9653, %v9649
  %v9658 = vadd.s32 %v9654, %v9656
  %v9659 = vadd.s32 %v9658, %v9648
  %v9660 = vadd.s32 %v9659, %v9650
  %v9661 = vand.u32 %v9638, 65535
  %v9662 = vshrl.u32 %v9638, 16
  %v9663 = vand.u32 %v9633, 65535
  %v9664 = vshrl.u32 %v9633, 16
  %v9665 = vmul.u32 %v9661, %v9663
  %v9666 = vmul.u32 %v9661, %v9664
  %v9667 = vmul.u32 %v9662, %v9663
  %v9668 = vmul.u32 %v9662, %v9664
  %v9669 = vshll.u32 %v9666, 16
  %v9670 = vshrl.u32 %v9666, 16
  %v9671 = vshll.u32 %v9667, 16
  %v9672 = vshrl.u32 %v9667, 16
  %vm9673 = vc.u32 %v9665, %v9669
  %v9674 = vsel %vm9673, 1, 0
  %v9675 = vadd.s32 %v9665, %v9669
  %v9676 = vadd.s32 %v9668, %v9674
  %vm9677 = vc.u32 %v9675, %v9671
  %v9678 = vsel %vm9677, 1, 0
  %v9679 = vadd.s32 %v9675, %v9671
  %v9680 = vadd.s32 %v9676, %v9678
  %v9681 = vadd.s32 %v9680, %v9670
  %v9682 = vadd.s32 %v9681, %v9672
  %v9683 = vmul.u32 %v9638, %v9629
  %v9684 = vadd.s32 %v9660, %v9679
  %vm9685 = vc.u32 %v9660, %v9679
  %v9686 = vadd.s32 %v9682, 1
  %v9687 = vsel %vm9685, %v9686, %v9682
  %v9688 = vadd.s32 %v9683, %v9687
  %v9689 = vadd.s32 %v9688, 536870912
  %v9690 = vshrl.u32 %v9689, 30
  %v9691 = vshll.u32 %v9690, 30
  %v9692 = vsub.s32 %v9688, %v9691
  %vm9693 = vcmp.lt.s32.totalorder %v9692, 0
  %v9694 = vsub.s32 0, %v9692
  %v9695 = vsel %vm9693, %v9694, %v9692
  %v9696 = vclz %v9695
  %v9697 = vsub.s32 %v9696, 2
  %vm9698 = vcmp.gt.s32.totalorder 0, %v9697
  %v9699 = vsel %vm9698, 0, %v9697
  %v9700 = vsub.s32 32, %v9699
  %v9701 = vshll.u32 %v9692, %v9699
  %v9702 = vshrl.u32 %v9684, %v9700
  %v9703 = vor.u32 %v9701, %v9702
  %v9704 = vsub.s32 4294967266, %v9699
  %v9705 = vadd.s32 %v9704, 127
  %v9706 = vshll.u32 %v9705, 23
  %v9707 = vor.u32 4788187, %v9706
  %v9708 = vand.u32 2147483647, %v9707
  %v9710 = vcvt.s32.f32 %v9703
  %v9711 = vmul.f32 %v9710, %v9708
  %v9712 = vxor.u32 %v9711, 2147483648
  %v9713 = vsel %vm9592, %v9712, %v9711
  %v9714 = vsub.s32 4, %v9690
  %v9715 = vsel %vm9592, %v9714, %v9690
  %v9716 = vsel %vm9591, %v620, %v9713
  %v9717 = vsel %vm9591, 0, %v9715
  %v9718 = vmul.f32 %v9716, %v9716
  %v9719 = vmul.f32 %v9718, -0.001358992
  %v9720 = vadd.f32 %v9719, 0.041655596
  %v9721 = vmul.f32 %v9718, %v9720
  %v9722 = vadd.f32 %v9721, -0.4999988
  %v9723 = vmul.f32 %v9718, %v9722
  %v9724 = vadd.f32 1.0, %v9723
  %v9725 = vmul.f32 %v9716, %v9716
  %v9726 = vmul.f32 %v9725, -0.00019511016
  %v9727 = vadd.f32 %v9726, 0.008332121
  %v9728 = vmul.f32 %v9725, %v9727
  %v9729 = vadd.f32 %v9728, -0.16666654
  %v9730 = vmul.f32 %v9725, %v9729
  %v9731 = vadd.f32 %v9730, 1.0
  %v9732 = vmul.f32 %v9731, %v9716
  %vm9733 = vweird.f32 %v620
  %v9734 = vand.u32 %v9717, 3
  %vm9735 = vcmp.lt.s32.totalorder %v9734, 2
  %vm9736 = vcmp.eq.s32.totalorder %v9734, 0
  %v9737 = vxor.u32 %v9732, 2147483648
  %v9738 = vsel %vm9736, %v9724, %v9737
  %vm9739 = vcmp.eq.s32.totalorder %v9734, 2
  %v9740 = vxor.u32 %v9724, 2147483648
  %v9741 = vsel %vm9739, %v9740, %v9732
  %v9742 = vsel %vm9735, %v9738, %v9741
  %v9743 = vsel %vm9733, nan, %v9742
  %v9744 = vand.u32 2147483647, %v621
  %vm9745 = vcmp.le.f32.partialorder %v9744, 0.7853982
  %vm9746 = vcmp.lt.s32.totalorder %v621, 0
  %v9747 = vand.u32 %v621, 2139095040
  %v9748 = vshrl.u32 %v9747, 23
  %v9749 = vsub.s32 %v9748, 127
  %v9750 = vand.u32 2147483647, %v621
  %v9751 = vand.u32 %v9750, 8388607
  %v9752 = vor.u32 %v9751, 8388608
  %v9753 = vsub.s32 0, %v9752
  %v9754 = vadd.s32 %v9749, 1
  %vm9755 = vcmp.gt.s32.totalorder %v9754, 0
  %v9756 = vsel %vm9755, %v9754, 0
  %v9757 = vshrl.u32 %v9756, 5
  %v9758 = vand.u32 %v9756, 31
  %v9759 = vsub.s32 32, %v9758
  %v9760 = vshrl.u32 683565275, %v9759
  %v9761 = vshll.u32 683565275, %v9758
  %v9762 = vshrl.u32 2475754826, %v9759
  %v9763 = vor.u32 %v9761, %v9762
  %v9764 = vshll.u32 2475754826, %v9758
  %v9765 = vshrl.u32 2131351028, %v9759
  %v9766 = vor.u32 %v9764, %v9765
  %v9767 = vshll.u32 2131351028, %v9758
  %v9768 = vshrl.u32 2102212464, %v9759
  %v9769 = vor.u32 %v9767, %v9768
  %v9770 = vshll.u32 2102212464, %v9758
  %v9771 = vshrl.u32 920167782, %v9759
  %v9772 = vor.u32 %v9770, %v9771
  %v9773 = vshll.u32 920167782, %v9758
  %v9774 = vshrl.u32 1326507024, %v9759
  %v9775 = vor.u32 %v9773, %v9774
  %vm9776 = vcmp.lt.s32.totalorder %v9757, 1
  %vm9777 = vcmp.lt.s32.totalorder %v9757, 2
  %vm9778 = vcmp.lt.s32.totalorder %v9757, 3
  %vm9779 = vcmp.lt.s32.totalorder %v9757, 4
  %v9780 = vsel %vm9776, %v9760, %v9763
  %v9781 = vsel %vm9779, %v9769, 2102212464
  %v9782 = vsel %vm9778, %v9766, %v9781
  %v9783 = vsel %vm9777, %v9780, %v9782
  %v9784 = vsel %vm9776, %v9763, %v9766
  %v9785 = vsel %vm9779, %v9772, 920167782
  %v9786 = vsel %vm9778, %v9769, %v9785
  %v9787 = vsel %vm9777, %v9784, %v9786
  %v9788 = vsel %vm9776, %v9766, %v9769
  %v9789 = vsel %vm9779, %v9775, 1326507024
  %v9790 = vsel %vm9778, %v9772, %v9789
  %v9791 = vsel %vm9777, %v9788, %v9790
  %v9792 = vshll.u32 %v9752, 8
  %v9793 = vand.u32 %v9792, 65535
  %v9794 = vshrl.u32 %v9792, 16
  %v9795 = vand.u32 %v9791, 65535
  %v9796 = vshrl.u32 %v9791, 16
  %v9797 = vmul.u32 %v9793, %v9795
  %v9798 = vmul.u32 %v9793, %v9796
  %v9799 = vmul.u32 %v9794, %v9795
  %v9800 = vmul.u32 %v9794, %v9796
  %v9801 = vshll.u32 %v9798, 16
  %v9802 = vshrl.u32 %v9798, 16
  %v9803 = vshll.u32 %v9799, 16
  %v9804 = vshrl.u32 %v9799, 16
  %vm9805 = vc.u32 %v9797, %v9801
  %v9806 = vsel %vm9805, 1, 0
  %v9807 = vadd.s32 %v9797, %v9801
  %v9808 = vadd.s32 %v9800, %v9806
  %vm9809 = vc.u32 %v9807, %v9803
  %v9810 = vsel %vm9809, 1, 0
  %v9811 = vadd.s32 %v9807, %v9803
  %v9812 = vadd.s32 %v9808, %v9810
  %v9813 = vadd.s32 %v9812, %v9802
  %v9814 = vadd.s32 %v9813, %v9804
  %v9815 = vand.u32 %v9792, 65535
  %v9816 = vshrl.u32 %v9792, 16
  %v9817 = vand.u32 %v9787, 65535
  %v9818 = vshrl.u32 %v9787, 16
  %v9819 = vmul.u32 %v9815, %v9817
  %v9820 = vmul.u32 %v9815, %v9818
  %v9821 = vmul.u32 %v9816, %v9817
  %v9822 = vmul.u32 %v9816, %v9818
  %v9823 = vshll.u32 %v9820, 16
  %v9824 = vshrl.u32 %v9820, 16
  %v9825 = vshll.u32 %v9821, 16
  %v9826 = vshrl.u32 %v9821, 16
  %vm9827 = vc.u32 %v9819, %v9823
  %v9828 = vsel %vm9827, 1, 0
  %v9829 = vadd.s32 %v9819, %v9823
  %v9830 = vadd.s32 %v9822, %v9828
  %vm9831 = vc.u32 %v9829, %v9825
  %v9832 = vsel %vm9831, 1, 0
  %v9833 = vadd.s32 %v9829, %v9825
  %v9834 = vadd.s32 %v9830, %v9832
  %v9835 = vadd.s32 %v9834, %v9824
  %v9836 = vadd.s32 %v9835, %v9826
  %v9837 = vmul.u32 %v9792, %v9783
  %v9838 = vadd.s32 %v9814, %v9833
  %vm9839 = vc.u32 %v9814, %v9833
  %v9840 = vadd.s32 %v9836, 1
  %v9841 = vsel %vm9839, %v9840, %v9836
  %v9842 = vadd.s32 %v9837, %v9841
  %v9843 = vadd.s32 %v9842, 536870912
  %v9844 = vshrl.u32 %v9843, 30
  %v9845 = vshll.u32 %v9844, 30
  %v9846 = vsub.s32 %v9842, %v9845
  %vm9847 = vcmp.lt.s32.totalorder %v9846, 0
  %v9848 = vsub.s32 0, %v9846
  %v9849 = vsel %vm9847, %v9848, %v9846
  %v9850 = vclz %v9849
  %v9851 = vsub.s32 %v9850, 2
  %vm9852 = vcmp.gt.s32.totalorder 0, %v9851
  %v9853 = vsel %vm9852, 0, %v9851
  %v9854 = vsub.s32 32, %v9853
  %v9855 = vshll.u32 %v9846, %v9853
  %v9856 = vshrl.u32 %v9838, %v9854
  %v9857 = vor.u32 %v9855, %v9856
  %v9858 = vsub.s32 4294967266, %v9853
  %v9859 = vadd.s32 %v9858, 127
  %v9860 = vshll.u32 %v9859, 23
  %v9861 = vor.u32 4788187, %v9860
  %v9862 = vand.u32 2147483647, %v9861
  %v9864 = vcvt.s32.f32 %v9857
  %v9865 = vmul.f32 %v9864, %v9862
  %v9866 = vxor.u32 %v9865, 2147483648
  %v9867 = vsel %vm9746, %v9866, %v9865
  %v9868 = vsub.s32 4, %v9844
  %v9869 = vsel %vm9746, %v9868, %v9844
  %v9870 = vsel %vm9745, %v621, %v9867
  %v9871 = vsel %vm9745, 0, %v9869
  %v9872 = vmul.f32 %v9870, %v9870
  %v9873 = vmul.f32 %v9872, -0.001358992
  %v9874 = vadd.f32 %v9873, 0.041655596
  %v9875 = vmul.f32 %v9872, %v9874
  %v9876 = vadd.f32 %v9875, -0.4999988
  %v9877 = vmul.f32 %v9872, %v9876
  %v9878 = vadd.f32 1.0, %v9877
  %v9879 = vmul.f32 %v9870, %v9870
  %v9880 = vmul.f32 %v9879, -0.00019511016
  %v9881 = vadd.f32 %v9880, 0.008332121
  %v9882 = vmul.f32 %v9879, %v9881
  %v9883 = vadd.f32 %v9882, -0.16666654
  %v9884 = vmul.f32 %v9879, %v9883
  %v9885 = vadd.f32 %v9884, 1.0
  %v9886 = vmul.f32 %v9885, %v9870
  %vm9887 = vweird.f32 %v621
  %v9888 = vand.u32 %v9871, 3
  %vm9889 = vcmp.lt.s32.totalorder %v9888, 2
  %vm9890 = vcmp.eq.s32.totalorder %v9888, 0
  %v9891 = vxor.u32 %v9886, 2147483648
  %v9892 = vsel %vm9890, %v9878, %v9891
  %vm9893 = vcmp.eq.s32.totalorder %v9888, 2
  %v9894 = vxor.u32 %v9878, 2147483648
  %v9895 = vsel %vm9893, %v9894, %v9886
  %v9896 = vsel %vm9889, %v9892, %v9895
  %v9897 = vsel %vm9887, nan, %v9896
  %v9898 = vand.u32 2147483647, %v622
  %vm9899 = vcmp.le.f32.partialorder %v9898, 0.7853982
  %vm9900 = vcmp.lt.s32.totalorder %v622, 0
  %v9901 = vand.u32 %v622, 2139095040
  %v9902 = vshrl.u32 %v9901, 23
  %v9903 = vsub.s32 %v9902, 127
  %v9904 = vand.u32 2147483647, %v622
  %v9905 = vand.u32 %v9904, 8388607
  %v9906 = vor.u32 %v9905, 8388608
  %v9907 = vsub.s32 0, %v9906
  %v9908 = vadd.s32 %v9903, 1
  %vm9909 = vcmp.gt.s32.totalorder %v9908, 0
  %v9910 = vsel %vm9909, %v9908, 0
  %v9911 = vshrl.u32 %v9910, 5
  %v9912 = vand.u32 %v9910, 31
  %v9913 = vsub.s32 32, %v9912
  %v9914 = vshrl.u32 683565275, %v9913
  %v9915 = vshll.u32 683565275, %v9912
  %v9916 = vshrl.u32 2475754826, %v9913
  %v9917 = vor.u32 %v9915, %v9916
  %v9918 = vshll.u32 2475754826, %v9912
  %v9919 = vshrl.u32 2131351028, %v9913
  %v9920 = vor.u32 %v9918, %v9919
  %v9921 = vshll.u32 2131351028, %v9912
  %v9922 = vshrl.u32 2102212464, %v9913
  %v9923 = vor.u32 %v9921, %v9922
  %v9924 = vshll.u32 2102212464, %v9912
  %v9925 = vshrl.u32 920167782, %v9913
  %v9926 = vor.u32 %v9924, %v9925
  %v9927 = vshll.u32 920167782, %v9912
  %v9928 = vshrl.u32 1326507024, %v9913
  %v9929 = vor.u32 %v9927, %v9928
  %vm9930 = vcmp.lt.s32.totalorder %v9911, 1
  %vm9931 = vcmp.lt.s32.totalorder %v9911, 2
  %vm9932 = vcmp.lt.s32.totalorder %v9911, 3
  %vm9933 = vcmp.lt.s32.totalorder %v9911, 4
  %v9934 = vsel %vm9930, %v9914, %v9917
  %v9935 = vsel %vm9933, %v9923, 2102212464
  %v9936 = vsel %vm9932, %v9920, %v9935
  %v9937 = vsel %vm9931, %v9934, %v9936
  %v9938 = vsel %vm9930, %v9917, %v9920
  %v9939 = vsel %vm9933, %v9926, 920167782
  %v9940 = vsel %vm9932, %v9923, %v9939
  %v9941 = vsel %vm9931, %v9938, %v9940
  %v9942 = vsel %vm9930, %v9920, %v9923
  %v9943 = vsel %vm9933, %v9929, 1326507024
  %v9944 = vsel %vm9932, %v9926, %v9943
  %v9945 = vsel %vm9931, %v9942, %v9944
  %v9946 = vshll.u32 %v9906, 8
  %v9947 = vand.u32 %v9946, 65535
  %v9948 = vshrl.u32 %v9946, 16
  %v9949 = vand.u32 %v9945, 65535
  %v9950 = vshrl.u32 %v9945, 16
  %v9951 = vmul.u32 %v9947, %v9949
  %v9952 = vmul.u32 %v9947, %v9950
  %v9953 = vmul.u32 %v9948, %v9949
  %v9954 = vmul.u32 %v9948, %v9950
  %v9955 = vshll.u32 %v9952, 16
  %v9956 = vshrl.u32 %v9952, 16
  %v9957 = vshll.u32 %v9953, 16
  %v9958 = vshrl.u32 %v9953, 16
  %vm9959 = vc.u32 %v9951, %v9955
  %v9960 = vsel %vm9959, 1, 0
  %v9961 = vadd.s32 %v9951, %v9955
  %v9962 = vadd.s32 %v9954, %v9960
  %vm9963 = vc.u32 %v9961, %v9957
  %v9964 = vsel %vm9963, 1, 0
  %v9965 = vadd.s32 %v9961, %v9957
  %v9966 = vadd.s32 %v9962, %v9964
  %v9967 = vadd.s32 %v9966, %v9956
  %v9968 = vadd.s32 %v9967, %v9958
  %v9969 = vand.u32 %v9946, 65535
  %v9970 = vshrl.u32 %v9946, 16
  %v9971 = vand.u32 %v9941, 65535
  %v9972 = vshrl.u32 %v9941, 16
  %v9973 = vmul.u32 %v9969, %v9971
  %v9974 = vmul.u32 %v9969, %v9972
  %v9975 = vmul.u32 %v9970, %v9971
  %v9976 = vmul.u32 %v9970, %v9972
  %v9977 = vshll.u32 %v9974, 16
  %v9978 = vshrl.u32 %v9974, 16
  %v9979 = vshll.u32 %v9975, 16
  %v9980 = vshrl.u32 %v9975, 16
  %vm9981 = vc.u32 %v9973, %v9977
  %v9982 = vsel %vm9981, 1, 0
  %v9983 = vadd.s32 %v9973, %v9977
  %v9984 = vadd.s32 %v9976, %v9982
  %vm9985 = vc.u32 %v9983, %v9979
  %v9986 = vsel %vm9985, 1, 0
  %v9987 = vadd.s32 %v9983, %v9979
  %v9988 = vadd.s32 %v9984, %v9986
  %v9989 = vadd.s32 %v9988, %v9978
  %v9990 = vadd.s32 %v9989, %v9980
  %v9991 = vmul.u32 %v9946, %v9937
  %v9992 = vadd.s32 %v9968, %v9987
  %vm9993 = vc.u32 %v9968, %v9987
  %v9994 = vadd.s32 %v9990, 1
  %v9995 = vsel %vm9993, %v9994, %v9990
  %v9996 = vadd.s32 %v9991, %v9995
  %v9997 = vadd.s32 %v9996, 536870912
  %v9998 = vshrl.u32 %v9997, 30
  %v9999 = vshll.u32 %v9998, 30
  %v10000 = vsub.s32 %v9996, %v9999
  %vm10001 = vcmp.lt.s32.totalorder %v10000, 0
  %v10002 = vsub.s32 0, %v10000
  %v10003 = vsel %vm10001, %v10002, %v10000
  %v10004 = vclz %v10003
  %v10005 = vsub.s32 %v10004, 2
  %vm10006 = vcmp.gt.s32.totalorder 0, %v10005
  %v10007 = vsel %vm10006, 0, %v10005
  %v10008 = vsub.s32 32, %v10007
  %v10009 = vshll.u32 %v10000, %v10007
  %v10010 = vshrl.u32 %v9992, %v10008
  %v10011 = vor.u32 %v10009, %v10010
  %v10012 = vsub.s32 4294967266, %v10007
  %v10013 = vadd.s32 %v10012, 127
  %v10014 = vshll.u32 %v10013, 23
  %v10015 = vor.u32 4788187, %v10014
  %v10016 = vand.u32 2147483647, %v10015
  %v10018 = vcvt.s32.f32 %v10011
  %v10019 = vmul.f32 %v10018, %v10016
  %v10020 = vxor.u32 %v10019, 2147483648
  %v10021 = vsel %vm9900, %v10020, %v10019
  %v10022 = vsub.s32 4, %v9998
  %v10023 = vsel %vm9900, %v10022, %v9998
  %v10024 = vsel %vm9899, %v622, %v10021
  %v10025 = vsel %vm9899, 0, %v10023
  %v10026 = vmul.f32 %v10024, %v10024
  %v10027 = vmul.f32 %v10026, -0.001358992
  %v10028 = vadd.f32 %v10027, 0.041655596
  %v10029 = vmul.f32 %v10026, %v10028
  %v10030 = vadd.f32 %v10029, -0.4999988
  %v10031 = vmul.f32 %v10026, %v10030
  %v10032 = vadd.f32 1.0, %v10031
  %v10033 = vmul.f32 %v10024, %v10024
  %v10034 = vmul.f32 %v10033, -0.00019511016
  %v10035 = vadd.f32 %v10034, 0.008332121
  %v10036 = vmul.f32 %v10033, %v10035
  %v10037 = vadd.f32 %v10036, -0.16666654
  %v10038 = vmul.f32 %v10033, %v10037
  %v10039 = vadd.f32 %v10038, 1.0
  %v10040 = vmul.f32 %v10039, %v10024
  %vm10041 = vweird.f32 %v622
  %v10042 = vand.u32 %v10025, 3
  %vm10043 = vcmp.lt.s32.totalorder %v10042, 2
  %vm10044 = vcmp.eq.s32.totalorder %v10042, 0
  %v10045 = vxor.u32 %v10040, 2147483648
  %v10046 = vsel %vm10044, %v10032, %v10045
  %vm10047 = vcmp.eq.s32.totalorder %v10042, 2
  %v10048 = vxor.u32 %v10032, 2147483648
  %v10049 = vsel %vm10047, %v10048, %v10040
  %v10050 = vsel %vm10043, %v10046, %v10049
  %v10051 = vsel %vm10041, nan, %v10050
  %v10052 = vand.u32 2147483647, %v623
  %vm10053 = vcmp.le.f32.partialorder %v10052, 0.7853982
  %vm10054 = vcmp.lt.s32.totalorder %v623, 0
  %v10055 = vand.u32 %v623, 2139095040
  %v10056 = vshrl.u32 %v10055, 23
  %v10057 = vsub.s32 %v10056, 127
  %v10058 = vand.u32 2147483647, %v623
  %v10059 = vand.u32 %v10058, 8388607
  %v10060 = vor.u32 %v10059, 8388608
  %v10061 = vsub.s32 0, %v10060
  %v10062 = vadd.s32 %v10057, 1
  %vm10063 = vcmp.gt.s32.totalorder %v10062, 0
  %v10064 = vsel %vm10063, %v10062, 0
  %v10065 = vshrl.u32 %v10064, 5
  %v10066 = vand.u32 %v10064, 31
  %v10067 = vsub.s32 32, %v10066
  %v10068 = vshrl.u32 683565275, %v10067
  %v10069 = vshll.u32 683565275, %v10066
  %v10070 = vshrl.u32 2475754826, %v10067
  %v10071 = vor.u32 %v10069, %v10070
  %v10072 = vshll.u32 2475754826, %v10066
  %v10073 = vshrl.u32 2131351028, %v10067
  %v10074 = vor.u32 %v10072, %v10073
  %v10075 = vshll.u32 2131351028, %v10066
  %v10076 = vshrl.u32 2102212464, %v10067
  %v10077 = vor.u32 %v10075, %v10076
  %v10078 = vshll.u32 2102212464, %v10066
  %v10079 = vshrl.u32 920167782, %v10067
  %v10080 = vor.u32 %v10078, %v10079
  %v10081 = vshll.u32 920167782, %v10066
  %v10082 = vshrl.u32 1326507024, %v10067
  %v10083 = vor.u32 %v10081, %v10082
  %vm10084 = vcmp.lt.s32.totalorder %v10065, 1
  %vm10085 = vcmp.lt.s32.totalorder %v10065, 2
  %vm10086 = vcmp.lt.s32.totalorder %v10065, 3
  %vm10087 = vcmp.lt.s32.totalorder %v10065, 4
  %v10088 = vsel %vm10084, %v10068, %v10071
  %v10089 = vsel %vm10087, %v10077, 2102212464
  %v10090 = vsel %vm10086, %v10074, %v10089
  %v10091 = vsel %vm10085, %v10088, %v10090
  %v10092 = vsel %vm10084, %v10071, %v10074
  %v10093 = vsel %vm10087, %v10080, 920167782
  %v10094 = vsel %vm10086, %v10077, %v10093
  %v10095 = vsel %vm10085, %v10092, %v10094
  %v10096 = vsel %vm10084, %v10074, %v10077
  %v10097 = vsel %vm10087, %v10083, 1326507024
  %v10098 = vsel %vm10086, %v10080, %v10097
  %v10099 = vsel %vm10085, %v10096, %v10098
  %v10100 = vshll.u32 %v10060, 8
  %v10101 = vand.u32 %v10100, 65535
  %v10102 = vshrl.u32 %v10100, 16
  %v10103 = vand.u32 %v10099, 65535
  %v10104 = vshrl.u32 %v10099, 16
  %v10105 = vmul.u32 %v10101, %v10103
  %v10106 = vmul.u32 %v10101, %v10104
  %v10107 = vmul.u32 %v10102, %v10103
  %v10108 = vmul.u32 %v10102, %v10104
  %v10109 = vshll.u32 %v10106, 16
  %v10110 = vshrl.u32 %v10106, 16
  %v10111 = vshll.u32 %v10107, 16
  %v10112 = vshrl.u32 %v10107, 16
  %vm10113 = vc.u32 %v10105, %v10109
  %v10114 = vsel %vm10113, 1, 0
  %v10115 = vadd.s32 %v10105, %v10109
  %v10116 = vadd.s32 %v10108, %v10114
  %vm10117 = vc.u32 %v10115, %v10111
  %v10118 = vsel %vm10117, 1, 0
  %v10119 = vadd.s32 %v10115, %v10111
  %v10120 = vadd.s32 %v10116, %v10118
  %v10121 = vadd.s32 %v10120, %v10110
  %v10122 = vadd.s32 %v10121, %v10112
  %v10123 = vand.u32 %v10100, 65535
  %v10124 = vshrl.u32 %v10100, 16
  %v10125 = vand.u32 %v10095, 65535
  %v10126 = vshrl.u32 %v10095, 16
  %v10127 = vmul.u32 %v10123, %v10125
  %v10128 = vmul.u32 %v10123, %v10126
  %v10129 = vmul.u32 %v10124, %v10125
  %v10130 = vmul.u32 %v10124, %v10126
  %v10131 = vshll.u32 %v10128, 16
  %v10132 = vshrl.u32 %v10128, 16
  %v10133 = vshll.u32 %v10129, 16
  %v10134 = vshrl.u32 %v10129, 16
  %vm10135 = vc.u32 %v10127, %v10131
  %v10136 = vsel %vm10135, 1, 0
  %v10137 = vadd.s32 %v10127, %v10131
  %v10138 = vadd.s32 %v10130, %v10136
  %vm10139 = vc.u32 %v10137, %v10133
  %v10140 = vsel %vm10139, 1, 0
  %v10141 = vadd.s32 %v10137, %v10133
  %v10142 = vadd.s32 %v10138, %v10140
  %v10143 = vadd.s32 %v10142, %v10132
  %v10144 = vadd.s32 %v10143, %v10134
  %v10145 = vmul.u32 %v10100, %v10091
  %v10146 = vadd.s32 %v10122, %v10141
  %vm10147 = vc.u32 %v10122, %v10141
  %v10148 = vadd.s32 %v10144, 1
  %v10149 = vsel %vm10147, %v10148, %v10144
  %v10150 = vadd.s32 %v10145, %v10149
  %v10151 = vadd.s32 %v10150, 536870912
  %v10152 = vshrl.u32 %v10151, 30
  %v10153 = vshll.u32 %v10152, 30
  %v10154 = vsub.s32 %v10150, %v10153
  %vm10155 = vcmp.lt.s32.totalorder %v10154, 0
  %v10156 = vsub.s32 0, %v10154
  %v10157 = vsel %vm10155, %v10156, %v10154
  %v10158 = vclz %v10157
  %v10159 = vsub.s32 %v10158, 2
  %vm10160 = vcmp.gt.s32.totalorder 0, %v10159
  %v10161 = vsel %vm10160, 0, %v10159
  %v10162 = vsub.s32 32, %v10161
  %v10163 = vshll.u32 %v10154, %v10161
  %v10164 = vshrl.u32 %v10146, %v10162
  %v10165 = vor.u32 %v10163, %v10164
  %v10166 = vsub.s32 4294967266, %v10161
  %v10167 = vadd.s32 %v10166, 127
  %v10168 = vshll.u32 %v10167, 23
  %v10169 = vor.u32 4788187, %v10168
  %v10170 = vand.u32 2147483647, %v10169
  %v10172 = vcvt.s32.f32 %v10165
  %v10173 = vmul.f32 %v10172, %v10170
  %v10174 = vxor.u32 %v10173, 2147483648
  %v10175 = vsel %vm10054, %v10174, %v10173
  %v10176 = vsub.s32 4, %v10152
  %v10177 = vsel %vm10054, %v10176, %v10152
  %v10178 = vsel %vm10053, %v623, %v10175
  %v10179 = vsel %vm10053, 0, %v10177
  %v10180 = vmul.f32 %v10178, %v10178
  %v10181 = vmul.f32 %v10180, -0.001358992
  %v10182 = vadd.f32 %v10181, 0.041655596
  %v10183 = vmul.f32 %v10180, %v10182
  %v10184 = vadd.f32 %v10183, -0.4999988
  %v10185 = vmul.f32 %v10180, %v10184
  %v10186 = vadd.f32 1.0, %v10185
  %v10187 = vmul.f32 %v10178, %v10178
  %v10188 = vmul.f32 %v10187, -0.00019511016
  %v10189 = vadd.f32 %v10188, 0.008332121
  %v10190 = vmul.f32 %v10187, %v10189
  %v10191 = vadd.f32 %v10190, -0.16666654
  %v10192 = vmul.f32 %v10187, %v10191
  %v10193 = vadd.f32 %v10192, 1.0
  %v10194 = vmul.f32 %v10193, %v10178
  %vm10195 = vweird.f32 %v623
  %v10196 = vand.u32 %v10179, 3
  %vm10197 = vcmp.lt.s32.totalorder %v10196, 2
  %vm10198 = vcmp.eq.s32.totalorder %v10196, 0
  %v10199 = vxor.u32 %v10194, 2147483648
  %v10200 = vsel %vm10198, %v10186, %v10199
  %vm10201 = vcmp.eq.s32.totalorder %v10196, 2
  %v10202 = vxor.u32 %v10186, 2147483648
  %v10203 = vsel %vm10201, %v10202, %v10194
  %v10204 = vsel %vm10197, %v10200, %v10203
  %v10205 = vsel %vm10195, nan, %v10204
  %v10206 = vand.u32 2147483647, %v624
  %vm10207 = vcmp.le.f32.partialorder %v10206, 0.7853982
  %vm10208 = vcmp.lt.s32.totalorder %v624, 0
  %v10209 = vand.u32 %v624, 2139095040
  %v10210 = vshrl.u32 %v10209, 23
  %v10211 = vsub.s32 %v10210, 127
  %v10212 = vand.u32 2147483647, %v624
  %v10213 = vand.u32 %v10212, 8388607
  %v10214 = vor.u32 %v10213, 8388608
  %v10215 = vsub.s32 0, %v10214
  %v10216 = vadd.s32 %v10211, 1
  %vm10217 = vcmp.gt.s32.totalorder %v10216, 0
  %v10218 = vsel %vm10217, %v10216, 0
  %v10219 = vshrl.u32 %v10218, 5
  %v10220 = vand.u32 %v10218, 31
  %v10221 = vsub.s32 32, %v10220
  %v10222 = vshrl.u32 683565275, %v10221
  %v10223 = vshll.u32 683565275, %v10220
  %v10224 = vshrl.u32 2475754826, %v10221
  %v10225 = vor.u32 %v10223, %v10224
  %v10226 = vshll.u32 2475754826, %v10220
  %v10227 = vshrl.u32 2131351028, %v10221
  %v10228 = vor.u32 %v10226, %v10227
  %v10229 = vshll.u32 2131351028, %v10220
  %v10230 = vshrl.u32 2102212464, %v10221
  %v10231 = vor.u32 %v10229, %v10230
  %v10232 = vshll.u32 2102212464, %v10220
  %v10233 = vshrl.u32 920167782, %v10221
  %v10234 = vor.u32 %v10232, %v10233
  %v10235 = vshll.u32 920167782, %v10220
  %v10236 = vshrl.u32 1326507024, %v10221
  %v10237 = vor.u32 %v10235, %v10236
  %vm10238 = vcmp.lt.s32.totalorder %v10219, 1
  %vm10239 = vcmp.lt.s32.totalorder %v10219, 2
  %vm10240 = vcmp.lt.s32.totalorder %v10219, 3
  %vm10241 = vcmp.lt.s32.totalorder %v10219, 4
  %v10242 = vsel %vm10238, %v10222, %v10225
  %v10243 = vsel %vm10241, %v10231, 2102212464
  %v10244 = vsel %vm10240, %v10228, %v10243
  %v10245 = vsel %vm10239, %v10242, %v10244
  %v10246 = vsel %vm10238, %v10225, %v10228
  %v10247 = vsel %vm10241, %v10234, 920167782
  %v10248 = vsel %vm10240, %v10231, %v10247
  %v10249 = vsel %vm10239, %v10246, %v10248
  %v10250 = vsel %vm10238, %v10228, %v10231
  %v10251 = vsel %vm10241, %v10237, 1326507024
  %v10252 = vsel %vm10240, %v10234, %v10251
  %v10253 = vsel %vm10239, %v10250, %v10252
  %v10254 = vshll.u32 %v10214, 8
  %v10255 = vand.u32 %v10254, 65535
  %v10256 = vshrl.u32 %v10254, 16
  %v10257 = vand.u32 %v10253, 65535
  %v10258 = vshrl.u32 %v10253, 16
  %v10259 = vmul.u32 %v10255, %v10257
  %v10260 = vmul.u32 %v10255, %v10258
  %v10261 = vmul.u32 %v10256, %v10257
  %v10262 = vmul.u32 %v10256, %v10258
  %v10263 = vshll.u32 %v10260, 16
  %v10264 = vshrl.u32 %v10260, 16
  %v10265 = vshll.u32 %v10261, 16
  %v10266 = vshrl.u32 %v10261, 16
  %vm10267 = vc.u32 %v10259, %v10263
  %v10268 = vsel %vm10267, 1, 0
  %v10269 = vadd.s32 %v10259, %v10263
  %v10270 = vadd.s32 %v10262, %v10268
  %vm10271 = vc.u32 %v10269, %v10265
  %v10272 = vsel %vm10271, 1, 0
  %v10273 = vadd.s32 %v10269, %v10265
  %v10274 = vadd.s32 %v10270, %v10272
  %v10275 = vadd.s32 %v10274, %v10264
  %v10276 = vadd.s32 %v10275, %v10266
  %v10277 = vand.u32 %v10254, 65535
  %v10278 = vshrl.u32 %v10254, 16
  %v10279 = vand.u32 %v10249, 65535
  %v10280 = vshrl.u32 %v10249, 16
  %v10281 = vmul.u32 %v10277, %v10279
  %v10282 = vmul.u32 %v10277, %v10280
  %v10283 = vmul.u32 %v10278, %v10279
  %v10284 = vmul.u32 %v10278, %v10280
  %v10285 = vshll.u32 %v10282, 16
  %v10286 = vshrl.u32 %v10282, 16
  %v10287 = vshll.u32 %v10283, 16
  %v10288 = vshrl.u32 %v10283, 16
  %vm10289 = vc.u32 %v10281, %v10285
  %v10290 = vsel %vm10289, 1, 0
  %v10291 = vadd.s32 %v10281, %v10285
  %v10292 = vadd.s32 %v10284, %v10290
  %vm10293 = vc.u32 %v10291, %v10287
  %v10294 = vsel %vm10293, 1, 0
  %v10295 = vadd.s32 %v10291, %v10287
  %v10296 = vadd.s32 %v10292, %v10294
  %v10297 = vadd.s32 %v10296, %v10286
  %v10298 = vadd.s32 %v10297, %v10288
  %v10299 = vmul.u32 %v10254, %v10245
  %v10300 = vadd.s32 %v10276, %v10295
  %vm10301 = vc.u32 %v10276, %v10295
  %v10302 = vadd.s32 %v10298, 1
  %v10303 = vsel %vm10301, %v10302, %v10298
  %v10304 = vadd.s32 %v10299, %v10303
  %v10305 = vadd.s32 %v10304, 536870912
  %v10306 = vshrl.u32 %v10305, 30
  %v10307 = vshll.u32 %v10306, 30
  %v10308 = vsub.s32 %v10304, %v10307
  %vm10309 = vcmp.lt.s32.totalorder %v10308, 0
  %v10310 = vsub.s32 0, %v10308
  %v10311 = vsel %vm10309, %v10310, %v10308
  %v10312 = vclz %v10311
  %v10313 = vsub.s32 %v10312, 2
  %vm10314 = vcmp.gt.s32.totalorder 0, %v10313
  %v10315 = vsel %vm10314, 0, %v10313
  %v10316 = vsub.s32 32, %v10315
  %v10317 = vshll.u32 %v10308, %v10315
  %v10318 = vshrl.u32 %v10300, %v10316
  %v10319 = vor.u32 %v10317, %v10318
  %v10320 = vsub.s32 4294967266, %v10315
  %v10321 = vadd.s32 %v10320, 127
  %v10322 = vshll.u32 %v10321, 23
  %v10323 = vor.u32 4788187, %v10322
  %v10324 = vand.u32 2147483647, %v10323
  %v10326 = vcvt.s32.f32 %v10319
  %v10327 = vmul.f32 %v10326, %v10324
  %v10328 = vxor.u32 %v10327, 2147483648
  %v10329 = vsel %vm10208, %v10328, %v10327
  %v10330 = vsub.s32 4, %v10306
  %v10331 = vsel %vm10208, %v10330, %v10306
  %v10332 = vsel %vm10207, %v624, %v10329
  %v10333 = vsel %vm10207, 0, %v10331
  %v10334 = vmul.f32 %v10332, %v10332
  %v10335 = vmul.f32 %v10334, -0.001358992
  %v10336 = vadd.f32 %v10335, 0.041655596
  %v10337 = vmul.f32 %v10334, %v10336
  %v10338 = vadd.f32 %v10337, -0.4999988
  %v10339 = vmul.f32 %v10334, %v10338
  %v10340 = vadd.f32 1.0, %v10339
  %v10341 = vmul.f32 %v10332, %v10332
  %v10342 = vmul.f32 %v10341, -0.00019511016
  %v10343 = vadd.f32 %v10342, 0.008332121
  %v10344 = vmul.f32 %v10341, %v10343
  %v10345 = vadd.f32 %v10344, -0.16666654
  %v10346 = vmul.f32 %v10341, %v10345
  %v10347 = vadd.f32 %v10346, 1.0
  %v10348 = vmul.f32 %v10347, %v10332
  %vm10349 = vweird.f32 %v624
  %v10350 = vand.u32 %v10333, 3
  %vm10351 = vcmp.lt.s32.totalorder %v10350, 2
  %vm10352 = vcmp.eq.s32.totalorder %v10350, 0
  %v10353 = vxor.u32 %v10348, 2147483648
  %v10354 = vsel %vm10352, %v10340, %v10353
  %vm10355 = vcmp.eq.s32.totalorder %v10350, 2
  %v10356 = vxor.u32 %v10340, 2147483648
  %v10357 = vsel %vm10355, %v10356, %v10348
  %v10358 = vsel %vm10351, %v10354, %v10357
  %v10359 = vsel %vm10349, nan, %v10358
  %v10360 = vand.u32 2147483647, %v625
  %vm10361 = vcmp.le.f32.partialorder %v10360, 0.7853982
  %vm10362 = vcmp.lt.s32.totalorder %v625, 0
  %v10363 = vand.u32 %v625, 2139095040
  %v10364 = vshrl.u32 %v10363, 23
  %v10365 = vsub.s32 %v10364, 127
  %v10366 = vand.u32 2147483647, %v625
  %v10367 = vand.u32 %v10366, 8388607
  %v10368 = vor.u32 %v10367, 8388608
  %v10369 = vsub.s32 0, %v10368
  %v10370 = vadd.s32 %v10365, 1
  %vm10371 = vcmp.gt.s32.totalorder %v10370, 0
  %v10372 = vsel %vm10371, %v10370, 0
  %v10373 = vshrl.u32 %v10372, 5
  %v10374 = vand.u32 %v10372, 31
  %v10375 = vsub.s32 32, %v10374
  %v10376 = vshrl.u32 683565275, %v10375
  %v10377 = vshll.u32 683565275, %v10374
  %v10378 = vshrl.u32 2475754826, %v10375
  %v10379 = vor.u32 %v10377, %v10378
  %v10380 = vshll.u32 2475754826, %v10374
  %v10381 = vshrl.u32 2131351028, %v10375
  %v10382 = vor.u32 %v10380, %v10381
  %v10383 = vshll.u32 2131351028, %v10374
  %v10384 = vshrl.u32 2102212464, %v10375
  %v10385 = vor.u32 %v10383, %v10384
  %v10386 = vshll.u32 2102212464, %v10374
  %v10387 = vshrl.u32 920167782, %v10375
  %v10388 = vor.u32 %v10386, %v10387
  %v10389 = vshll.u32 920167782, %v10374
  %v10390 = vshrl.u32 1326507024, %v10375
  %v10391 = vor.u32 %v10389, %v10390
  %vm10392 = vcmp.lt.s32.totalorder %v10373, 1
  %vm10393 = vcmp.lt.s32.totalorder %v10373, 2
  %vm10394 = vcmp.lt.s32.totalorder %v10373, 3
  %vm10395 = vcmp.lt.s32.totalorder %v10373, 4
  %v10396 = vsel %vm10392, %v10376, %v10379
  %v10397 = vsel %vm10395, %v10385, 2102212464
  %v10398 = vsel %vm10394, %v10382, %v10397
  %v10399 = vsel %vm10393, %v10396, %v10398
  %v10400 = vsel %vm10392, %v10379, %v10382
  %v10401 = vsel %vm10395, %v10388, 920167782
  %v10402 = vsel %vm10394, %v10385, %v10401
  %v10403 = vsel %vm10393, %v10400, %v10402
  %v10404 = vsel %vm10392, %v10382, %v10385
  %v10405 = vsel %vm10395, %v10391, 1326507024
  %v10406 = vsel %vm10394, %v10388, %v10405
  %v10407 = vsel %vm10393, %v10404, %v10406
  %v10408 = vshll.u32 %v10368, 8
  %v10409 = vand.u32 %v10408, 65535
  %v10410 = vshrl.u32 %v10408, 16
  %v10411 = vand.u32 %v10407, 65535
  %v10412 = vshrl.u32 %v10407, 16
  %v10413 = vmul.u32 %v10409, %v10411
  %v10414 = vmul.u32 %v10409, %v10412
  %v10415 = vmul.u32 %v10410, %v10411
  %v10416 = vmul.u32 %v10410, %v10412
  %v10417 = vshll.u32 %v10414, 16
  %v10418 = vshrl.u32 %v10414, 16
  %v10419 = vshll.u32 %v10415, 16
  %v10420 = vshrl.u32 %v10415, 16
  %vm10421 = vc.u32 %v10413, %v10417
  %v10422 = vsel %vm10421, 1, 0
  %v10423 = vadd.s32 %v10413, %v10417
  %v10424 = vadd.s32 %v10416, %v10422
  %vm10425 = vc.u32 %v10423, %v10419
  %v10426 = vsel %vm10425, 1, 0
  %v10427 = vadd.s32 %v10423, %v10419
  %v10428 = vadd.s32 %v10424, %v10426
  %v10429 = vadd.s32 %v10428, %v10418
  %v10430 = vadd.s32 %v10429, %v10420
  %v10431 = vand.u32 %v10408, 65535
  %v10432 = vshrl.u32 %v10408, 16
  %v10433 = vand.u32 %v10403, 65535
  %v10434 = vshrl.u32 %v10403, 16
  %v10435 = vmul.u32 %v10431, %v10433
  %v10436 = vmul.u32 %v10431, %v10434
  %v10437 = vmul.u32 %v10432, %v10433
  %v10438 = vmul.u32 %v10432, %v10434
  %v10439 = vshll.u32 %v10436, 16
  %v10440 = vshrl.u32 %v10436, 16
  %v10441 = vshll.u32 %v10437, 16
  %v10442 = vshrl.u32 %v10437, 16
  %vm10443 = vc.u32 %v10435, %v10439
  %v10444 = vsel %vm10443, 1, 0
  %v10445 = vadd.s32 %v10435, %v10439
  %v10446 = vadd.s32 %v10438, %v10444
  %vm10447 = vc.u32 %v10445, %v10441
  %v10448 = vsel %vm10447, 1, 0
  %v10449 = vadd.s32 %v10445, %v10441
  %v10450 = vadd.s32 %v10446, %v10448
  %v10451 = vadd.s32 %v10450, %v10440
  %v10452 = vadd.s32 %v10451, %v10442
  %v10453 = vmul.u32 %v10408, %v10399
  %v10454 = vadd.s32 %v10430, %v10449
  %vm10455 = vc.u32 %v10430, %v10449
  %v10456 = vadd.s32 %v10452, 1
  %v10457 = vsel %vm10455, %v10456, %v10452
  %v10458 = vadd.s32 %v10453, %v10457
  %v10459 = vadd.s32 %v10458, 536870912
  %v10460 = vshrl.u32 %v10459, 30
  %v10461 = vshll.u32 %v10460, 30
  %v10462 = vsub.s32 %v10458, %v10461
  %vm10463 = vcmp.lt.s32.totalorder %v10462, 0
  %v10464 = vsub.s32 0, %v10462
  %v10465 = vsel %vm10463, %v10464, %v10462
  %v10466 = vclz %v10465
  %v10467 = vsub.s32 %v10466, 2
  %vm10468 = vcmp.gt.s32.totalorder 0, %v10467
  %v10469 = vsel %vm10468, 0, %v10467
  %v10470 = vsub.s32 32, %v10469
  %v10471 = vshll.u32 %v10462, %v10469
  %v10472 = vshrl.u32 %v10454, %v10470
  %v10473 = vor.u32 %v10471, %v10472
  %v10474 = vsub.s32 4294967266, %v10469
  %v10475 = vadd.s32 %v10474, 127
  %v10476 = vshll.u32 %v10475, 23
  %v10477 = vor.u32 4788187, %v10476
  %v10478 = vand.u32 2147483647, %v10477
  %v10480 = vcvt.s32.f32 %v10473
  %v10481 = vmul.f32 %v10480, %v10478
  %v10482 = vxor.u32 %v10481, 2147483648
  %v10483 = vsel %vm10362, %v10482, %v10481
  %v10484 = vsub.s32 4, %v10460
  %v10485 = vsel %vm10362, %v10484, %v10460
  %v10486 = vsel %vm10361, %v625, %v10483
  %v10487 = vsel %vm10361, 0, %v10485
  %v10488 = vmul.f32 %v10486, %v10486
  %v10489 = vmul.f32 %v10488, -0.001358992
  %v10490 = vadd.f32 %v10489, 0.041655596
  %v10491 = vmul.f32 %v10488, %v10490
  %v10492 = vadd.f32 %v10491, -0.4999988
  %v10493 = vmul.f32 %v10488, %v10492
  %v10494 = vadd.f32 1.0, %v10493
  %v10495 = vmul.f32 %v10486, %v10486
  %v10496 = vmul.f32 %v10495, -0.00019511016
  %v10497 = vadd.f32 %v10496, 0.008332121
  %v10498 = vmul.f32 %v10495, %v10497
  %v10499 = vadd.f32 %v10498, -0.16666654
  %v10500 = vmul.f32 %v10495, %v10499
  %v10501 = vadd.f32 %v10500, 1.0
  %v10502 = vmul.f32 %v10501, %v10486
  %vm10503 = vweird.f32 %v625
  %v10504 = vand.u32 %v10487, 3
  %vm10505 = vcmp.lt.s32.totalorder %v10504, 2
  %vm10506 = vcmp.eq.s32.totalorder %v10504, 0
  %v10507 = vxor.u32 %v10502, 2147483648
  %v10508 = vsel %vm10506, %v10494, %v10507
  %vm10509 = vcmp.eq.s32.totalorder %v10504, 2
  %v10510 = vxor.u32 %v10494, 2147483648
  %v10511 = vsel %vm10509, %v10510, %v10502
  %v10512 = vsel %vm10505, %v10508, %v10511
  %v10513 = vsel %vm10503, nan, %v10512
  %v10514 = vld [vmem:[%s2] sm:$0x1]
  %vm10515 = vcmp.gt.f32.partialorder %v10514, 0.5
  %v10516 = vsel %vm10515, 1, 0
  %v10517 = vperm.slane %v10516, 0
  %vm10518 = vcmp.eq.s32.totalorder %v10517, 1
  %v10519 = vsel %vm10518, %v780, %v5739
  %v10520 = vsel %vm10518, %v935, %v5893
  %v10521 = vsel %vm10518, %v1090, %v6047
  %v10522 = vsel %vm10518, %v1245, %v6201
  %v10523 = vsel %vm10518, %v1400, %v6355
  %v10524 = vsel %vm10518, %v1555, %v6509
  %v10525 = vsel %vm10518, %v1710, %v6663
  %v10526 = vsel %vm10518, %v1865, %v6817
  %v10527 = vsel %vm10518, %v2020, %v6971
  %v10528 = vsel %vm10518, %v2175, %v7125
  %v10529 = vsel %vm10518, %v2330, %v7279
  %v10530 = vsel %vm10518, %v2485, %v7433
  %v10531 = vsel %vm10518, %v2640, %v7587
  %v10532 = vsel %vm10518, %v2795, %v7741
  %v10533 = vsel %vm10518, %v2950, %v7895
  %v10534 = vsel %vm10518, %v3105, %v8049
  %v10535 = vsel %vm10518, %v3260, %v8203
  %v10536 = vsel %vm10518, %v3415, %v8357
  %v10537 = vsel %vm10518, %v3570, %v8511
  %v10538 = vsel %vm10518, %v3725, %v8665
  %v10539 = vsel %vm10518, %v3880, %v8819
  %v10540 = vsel %vm10518, %v4035, %v8973
  %v10541 = vsel %vm10518, %v4190, %v9127
  %v10542 = vsel %vm10518, %v4345, %v9281
  %v10543 = vsel %vm10518, %v4500, %v9435
  %v10544 = vsel %vm10518, %v4655, %v9589
  %v10545 = vsel %vm10518, %v4810, %v9743
  %v10546 = vsel %vm10518, %v4965, %v9897
  %v10547 = vsel %vm10518, %v5120, %v10051
  %v10548 = vsel %vm10518, %v5275, %v10205
  %v10549 = vsel %vm10518, %v5430, %v10359
  %v10550 = vsel %vm10518, %v5585, %v10513
  %10583 = vrot.lane.b32.xlu0 %v10519, 3
  %v10584 = vpop.permute.xlu0 %10583
  %10585 = vrot.lane.b32.xlu0 %v10520, 3
  %v10586 = vpop.permute.xlu0 %10585
  %10587 = vrot.lane.b32.xlu0 %v10521, 3
  %v10588 = vpop.permute.xlu0 %10587
  %10589 = vrot.lane.b32.xlu0 %v10522, 3
  %v10590 = vpop.permute.xlu0 %10589
  %10591 = vrot.lane.b32.xlu0 %v10523, 3
  %v10592 = vpop.permute.xlu0 %10591
  %10593 = vrot.lane.b32.xlu0 %v10524, 3
  %v10594 = vpop.permute.xlu0 %10593
  %10595 = vrot.lane.b32.xlu0 %v10525, 3
  %v10596 = vpop.permute.xlu0 %10595
  %10597 = vrot.lane.b32.xlu0 %v10526, 3
  %v10598 = vpop.permute.xlu0 %10597
  %10599 = vrot.lane.b32.xlu0 %v10527, 3
  %v10600 = vpop.permute.xlu0 %10599
  %10601 = vrot.lane.b32.xlu0 %v10528, 3
  %v10602 = vpop.permute.xlu0 %10601
  %10603 = vrot.lane.b32.xlu0 %v10529, 3
  %v10604 = vpop.permute.xlu0 %10603
  %10605 = vrot.lane.b32.xlu0 %v10530, 3
  %v10606 = vpop.permute.xlu0 %10605
  %10607 = vrot.lane.b32.xlu0 %v10531, 3
  %v10608 = vpop.permute.xlu0 %10607
  %10609 = vrot.lane.b32.xlu0 %v10532, 3
  %v10610 = vpop.permute.xlu0 %10609
  %10611 = vrot.lane.b32.xlu0 %v10533, 3
  %v10612 = vpop.permute.xlu0 %10611
  %10613 = vrot.lane.b32.xlu0 %v10534, 3
  %v10614 = vpop.permute.xlu0 %10613
  %10615 = vrot.lane.b32.xlu0 %v10535, 3
  %v10616 = vpop.permute.xlu0 %10615
  %10617 = vrot.lane.b32.xlu0 %v10536, 3
  %v10618 = vpop.permute.xlu0 %10617
  %10619 = vrot.lane.b32.xlu0 %v10537, 3
  %v10620 = vpop.permute.xlu0 %10619
  %10621 = vrot.lane.b32.xlu0 %v10538, 3
  %v10622 = vpop.permute.xlu0 %10621
  %10623 = vrot.lane.b32.xlu0 %v10539, 3
  %v10624 = vpop.permute.xlu0 %10623
  %10625 = vrot.lane.b32.xlu0 %v10540, 3
  %v10626 = vpop.permute.xlu0 %10625
  %10627 = vrot.lane.b32.xlu0 %v10541, 3
  %v10628 = vpop.permute.xlu0 %10627
  %10629 = vrot.lane.b32.xlu0 %v10542, 3
  %v10630 = vpop.permute.xlu0 %10629
  %10631 = vrot.lane.b32.xlu0 %v10543, 3
  %v10632 = vpop.permute.xlu0 %10631
  %10633 = vrot.lane.b32.xlu0 %v10544, 3
  %v10634 = vpop.permute.xlu0 %10633
  %10635 = vrot.lane.b32.xlu0 %v10545, 3
  %v10636 = vpop.permute.xlu0 %10635
  %10637 = vrot.lane.b32.xlu0 %v10546, 3
  %v10638 = vpop.permute.xlu0 %10637
  %10639 = vrot.lane.b32.xlu0 %v10547, 3
  %v10640 = vpop.permute.xlu0 %10639
  %10641 = vrot.lane.b32.xlu0 %v10548, 3
  %v10642 = vpop.permute.xlu0 %10641
  %10643 = vrot.lane.b32.xlu0 %v10549, 3
  %v10644 = vpop.permute.xlu0 %10643
  %10645 = vrot.lane.b32.xlu0 %v10550, 3
  %v10646 = vpop.permute.xlu0 %10645
  %vm10679 = vcmask 23552
  %v10680 = vsel %vm10679, %v14, %v10584
  %v10681 = vsel %vm10679, %v15, %v10586
  %v10682 = vsel %vm10679, %v16, %v10588
  %v10683 = vsel %vm10679, %v17, %v10590
  %v10684 = vsel %vm10679, %v18, %v10592
  %v10685 = vsel %vm10679, %v19, %v10594
  %v10686 = vsel %vm10679, %v20, %v10596
  %v10687 = vsel %vm10679, %v21, %v10598
  %v10688 = vsel %vm10679, %v22, %v10600
  %v10689 = vsel %vm10679, %v23, %v10602
  %v10690 = vsel %vm10679, %v24, %v10604
  %v10691 = vsel %vm10679, %v25, %v10606
  %v10692 = vsel %vm10679, %v26, %v10608
  %v10693 = vsel %vm10679, %v27, %v10610
  %v10694 = vsel %vm10679, %v28, %v10612
  %v10695 = vsel %vm10679, %v29, %v10614
  %v10696 = vsel %vm10679, %v30, %v10616
  %v10697 = vsel %vm10679, %v31, %v10618
  %v10698 = vsel %vm10679, %v32, %v10620
  %v10699 = vsel %vm10679, %v33, %v10622
  %v10700 = vsel %vm10679, %v34, %v10624
  %v10701 = vsel %vm10679, %v35, %v10626
  %v10702 = vsel %vm10679, %v36, %v10628
  %v10703 = vsel %vm10679, %v37, %v10630
  %v10704 = vsel %vm10679, %v38, %v10632
  %v10705 = vsel %vm10679, %v39, %v10634
  %v10706 = vsel %vm10679, %v40, %v10636
  %v10707 = vsel %vm10679, %v41, %v10638
  %v10708 = vsel %vm10679, %v42, %v10640
  %v10709 = vsel %vm10679, %v43, %v10642
  %v10710 = vsel %vm10679, %v44, %v10644
  %v10711 = vsel %vm10679, %v45, %v10646
  %vm10712 = vcmask 662528
  %10713 = vst.msk [vmem:[%s3] sm:$0xff] %vm10712, %v10680
  %10714 = vst.msk [vmem:[%s3 + $0x8] sm:$0xff] %vm10712, %v10681
  %10715 = vst.msk [vmem:[%s3 + $0x10] sm:$0xff] %vm10712, %v10682
  %10716 = vst.msk [vmem:[%s3 + $0x18] sm:$0xff] %vm10712, %v10683
  %10717 = vst.msk [vmem:[%s3 + $0x20] sm:$0xff] %vm10712, %v10684
  %10718 = vst.msk [vmem:[%s3 + $0x28] sm:$0xff] %vm10712, %v10685
  %10719 = vst.msk [vmem:[%s3 + $0x30] sm:$0xff] %vm10712, %v10686
  %10720 = vst.msk [vmem:[%s3 + $0x38] sm:$0xff] %vm10712, %v10687
  %10721 = vst.msk [vmem:[%s3 + $0x40] sm:$0xff] %vm10712, %v10688
  %10722 = vst.msk [vmem:[%s3 + $0x48] sm:$0xff] %vm10712, %v10689
  %10723 = vst.msk [vmem:[%s3 + $0x50] sm:$0xff] %vm10712, %v10690
  %10724 = vst.msk [vmem:[%s3 + $0x58] sm:$0xff] %vm10712, %v10691
  %10725 = vst.msk [vmem:[%s3 + $0x60] sm:$0xff] %vm10712, %v10692
  %10726 = vst.msk [vmem:[%s3 + $0x68] sm:$0xff] %vm10712, %v10693
  %10727 = vst.msk [vmem:[%s3 + $0x70] sm:$0xff] %vm10712, %v10694
  %10728 = vst.msk [vmem:[%s3 + $0x78] sm:$0xff] %vm10712, %v10695
  %10729 = vst.msk [vmem:[%s3 + $0x80] sm:$0xff] %vm10712, %v10696
  %10730 = vst.msk [vmem:[%s3 + $0x88] sm:$0xff] %vm10712, %v10697
  %10731 = vst.msk [vmem:[%s3 + $0x90] sm:$0xff] %vm10712, %v10698
  %10732 = vst.msk [vmem:[%s3 + $0x98] sm:$0xff] %vm10712, %v10699
  %10733 = vst.msk [vmem:[%s3 + $0xa0] sm:$0xff] %vm10712, %v10700
  %10734 = vst.msk [vmem:[%s3 + $0xa8] sm:$0xff] %vm10712, %v10701
  %10735 = vst.msk [vmem:[%s3 + $0xb0] sm:$0xff] %vm10712, %v10702
  %10736 = vst.msk [vmem:[%s3 + $0xb8] sm:$0xff] %vm10712, %v10703
  %10737 = vst.msk [vmem:[%s3 + $0xc0] sm:$0xff] %vm10712, %v10704
  %10738 = vst.msk [vmem:[%s3 + $0xc8] sm:$0xff] %vm10712, %v10705
  %10739 = vst.msk [vmem:[%s3 + $0xd0] sm:$0xff] %vm10712, %v10706
  %10740 = vst.msk [vmem:[%s3 + $0xd8] sm:$0xff] %vm10712, %v10707
  %10741 = vst.msk [vmem:[%s3 + $0xe0] sm:$0xff] %vm10712, %v10708
  %10742 = vst.msk [vmem:[%s3 + $0xe8] sm:$0xff] %vm10712, %v10709
  %10743 = vst.msk [vmem:[%s3 + $0xf0] sm:$0xff] %vm10712, %v10710
  %10744 = vst.msk [vmem:[%s3 + $0xf8] sm:$0xff] %vm10712, %v10711
  // Predicated region
  $region14: #{tpu_custom_call.1} parent=0 // pred_check
    _
  $region15: #{tpu_custom_call.1} parent=0 // pred_check_branch
    %10746 = sbr.rel (0) target = $region17
  $region16: #{tpu_custom_call.1} parent=0 // pred_region
    _
  $region17: #{tpu_custom_call.1} parent=0 // pred_fallthru
    _
  // Predicated region
  $region18: #{tpu_custom_call.1} parent=0 // pred_check
    _
  $region19: #{tpu_custom_call.1} parent=0 // pred_check_branch
    %10748 = sbr.rel (0) target = $region21
  $region20: #{tpu_custom_call.1} parent=0 // pred_region
    _
  $region21: #{tpu_custom_call.1} parent=0 // pred_fallthru
    _

</llo_original>
